<compile_context>
chip_gen: v7x
topology: tpu7x:2x2x1
jax: 0.10.0
libtpu: 0.0.40
codegen_flags: <defaults>
</compile_context>

<pallas_src>
import math

import jax
import jax.numpy as jnp
from jax import lax
from jax.experimental import pallas as pl
from jax.experimental.pallas import tpu as pltpu

N_EMBD = 256
N_HEAD = 16
HEAD_SIZE = N_EMBD // N_HEAD
VOCAB_SIZE = 50304
N_LAYER = 12
MAX_LEN = 512
LN_EPS = 1e-5
VMEM_LIMIT = 32 * 1024 * 1024  # safe scoped-VMEM budget on v5e/v6e/v7x


def _layernorm(x, gamma, beta):
    mean = jnp.mean(x, axis=-1, keepdims=True)
    var = jnp.mean((x - mean) ** 2, axis=-1, keepdims=True)
    return (x - mean) * lax.rsqrt(var + LN_EPS) * gamma + beta


def _gelu_tanh(x):
    c = math.sqrt(2.0 / math.pi)
    return 0.5 * x * (1.0 + jnp.tanh(c * (x + 0.044715 * x * x * x)))


def _row_tile(n):
    for t in (512, 256, 128, 64, 32, 16, 8):
        if n % t == 0:
            return t
    return n


def _q_tile(t):
    for q in (128, 64, 32, 16, 8):
        if t % q == 0:
            return q
    return t


# ----------------------------------------------------------------------------
# Embedding gather + positional encoding: plain XLA (fused gather + add).
# ----------------------------------------------------------------------------
def embed_tokens(idx, emb_table, pos_enc):
    tok = jnp.take(emb_table, idx, axis=0)          # (B, T, C)
    return tok + pos_enc[None, :, :]


def positional_encoding(T, pe_table, freqs):
    pos = jnp.arange(T, dtype=jnp.float32)
    angles = pos[:, None] * freqs[None, :]                                 # (T, C/2)
    angles = jnp.concatenate([jnp.sin(angles), jnp.cos(angles)], axis=-1)  # (T, C)
    return pe_table[:T] + angles                                           # dropout = identity


def causal_mask(T):
    row = jnp.arange(T, dtype=jnp.int32)[:, None]
    col = jnp.arange(T, dtype=jnp.int32)[None, :]
    return jnp.where(col <= row, 0.0, -1e30).astype(jnp.float32)           # additive mask


# ----------------------------------------------------------------------------
# Kernel 1: LayerNorm1 + fused QKV projection (row-tiled over B*T).
# ----------------------------------------------------------------------------
def ln1_qkv_kernel(x_ref, g_ref, b_ref, w_ref, o_ref):
    xn = _layernorm(x_ref[...], g_ref[...], b_ref[...]).astype(jnp.bfloat16)
    o_ref[...] = jnp.dot(xn, w_ref[...],
                         preferred_element_type=jnp.float32).astype(jnp.bfloat16)


def ln1_qkv(x2d, gamma, beta, w_qkv):
    BT, C = x2d.shape
    tm = _row_tile(BT)
    return pl.pallas_call(
        ln1_qkv_kernel,
        out_shape=jax.ShapeDtypeStruct((BT, 3 * C), jnp.bfloat16),
        grid_spec=pltpu.PrefetchScalarGridSpec(
            num_scalar_prefetch=0,
            grid=(BT // tm,),
            in_specs=[
                pl.BlockSpec((tm, C), lambda i: (i, 0)),
                pl.BlockSpec((1, C), lambda i: (0, 0)),
                pl.BlockSpec((1, C), lambda i: (0, 0)),
                pl.BlockSpec((C, 3 * C), lambda i: (0, 0)),
            ],
            out_specs=pl.BlockSpec((tm, 3 * C), lambda i: (i, 0)),
        ),
        compiler_params=pltpu.CompilerParams(
            dimension_semantics=("parallel",),
            vmem_limit_bytes=VMEM_LIMIT,
        ),
    )(x2d, gamma, beta, w_qkv)


# ----------------------------------------------------------------------------
# Kernel 2: attention (query-tiled) + proj + residual + LN2 + GELU MLP + residual.
# ----------------------------------------------------------------------------
def attn_mlp_kernel(x_ref, q_ref, qkv_ref, mask_ref, wp_ref, bp_ref,
                    g2_ref, b2_ref, w1_ref, bf1_ref, w2_ref, bf2_ref, o_ref):
    x = x_ref[...]                                   # (tq, C) f32 residual tile
    tq = x.shape[0]
    q = q_ref[...]                                   # (tq, C) bf16 (q slice of qkv)
    kv = qkv_ref[...]                                # (T, 3C) bf16 (full batch row)
    T = kv.shape[0]
    k = kv[:, N_EMBD:2 * N_EMBD]
    v = kv[:, 2 * N_EMBD:]

    qh = q.reshape(tq, N_HEAD, HEAD_SIZE)
    kh = k.reshape(T, N_HEAD, HEAD_SIZE)
    vh = v.reshape(T, N_HEAD, HEAD_SIZE)

    # PyTorch reference scales by C**-0.5 with C = n_embd (NOT head_size**-0.5).
    scale = N_EMBD ** (-0.5)
    s = jnp.einsum("qhd,khd->hqk", qh, kh,
                   preferred_element_type=jnp.float32)            # (H, tq, T) f32
    s = s * scale + mask_ref[...][None, :, :]                     # additive causal mask
    s = s - jnp.max(s, axis=-1, keepdims=True)
    p = jnp.exp(s)
    inv = pl.reciprocal(jnp.sum(p, axis=-1, keepdims=True), approx=True)
    p = p * inv

    out_h = jnp.einsum("hqk,khd->qhd", p.astype(jnp.bfloat16), vh,
                       preferred_element_type=jnp.float32)        # (tq, H, D)
    att = out_h.reshape(tq, N_EMBD).astype(jnp.bfloat16)
    att = jnp.dot(att, wp_ref[...], preferred_element_type=jnp.float32) + bp_ref[...]
    x = x + att

    xn2 = _layernorm(x, g2_ref[...], b2_ref[...]).astype(jnp.bfloat16)
    h1 = jnp.dot(xn2, w1_ref[...], preferred_element_type=jnp.float32) + bf1_ref[...]
    h1 = _gelu_tanh(h1)                                           # tanh GELU (EUP)
    h2 = jnp.dot(h1.astype(jnp.bfloat16), w2_ref[...],
                 preferred_element_type=jnp.float32) + bf2_ref[...]
    o_ref[...] = x + h2


def attn_mlp(x, qkv, mask, blk, tq):
    B, T, C = x.shape

    def full_spec(a):
        nd = a.ndim
        return pl.BlockSpec(a.shape, lambda b, qi, _nd=nd: (0,) * _nd)

    in_specs = [
        pl.BlockSpec((None, tq, C), lambda b, qi: (b, qi, 0)),       # residual query tile
        pl.BlockSpec((None, tq, C), lambda b, qi: (b, qi, 0)),       # q tile (cols 0:C of qkv)
        pl.BlockSpec((None, T, 3 * C), lambda b, qi: (b, 0, 0)),     # full-row qkv (k, v)
        pl.BlockSpec((tq, T), lambda b, qi: (qi, 0)),                # causal mask tile
        full_spec(blk["w_proj"]), full_spec(blk["b_proj"]),
        full_spec(blk["ln2_g"]), full_spec(blk["ln2_b"]),
        full_spec(blk["w_ff1"]), full_spec(blk["b_ff1"]),
        full_spec(blk["w_ff2"]), full_spec(blk["b_ff2"]),
    ]
    return pl.pallas_call(
        attn_mlp_kernel,
        out_shape=jax.ShapeDtypeStruct((B, T, C), jnp.float32),
        grid_spec=pltpu.PrefetchScalarGridSpec(
            num_scalar_prefetch=0,
            grid=(B, T // tq),
            in_specs=in_specs,
            out_specs=pl.BlockSpec((None, tq, C), lambda b, qi: (b, qi, 0)),
        ),
        compiler_params=pltpu.CompilerParams(
            dimension_semantics=("parallel", "parallel"),
            vmem_limit_bytes=VMEM_LIMIT,
        ),
    )(x, qkv, qkv, mask,
      blk["w_proj"], blk["b_proj"], blk["ln2_g"], blk["ln2_b"],
      blk["w_ff1"], blk["b_ff1"], blk["w_ff2"], blk["b_ff2"])


# ----------------------------------------------------------------------------
# Kernel 3: final LayerNorm (computed once, emits bf16 for the bf16 lm_head).
# ----------------------------------------------------------------------------
def lnf_kernel(x_ref, g_ref, b_ref, o_ref):
    o_ref[...] = _layernorm(x_ref[...], g_ref[...], b_ref[...]).astype(o_ref.dtype)


def final_layernorm(x2d, gamma, beta):
    BT, C = x2d.shape
    tm = _row_tile(BT)
    return pl.pallas_call(
        lnf_kernel,
        out_shape=jax.ShapeDtypeStruct((BT, C), jnp.bfloat16),
        grid_spec=pltpu.PrefetchScalarGridSpec(
            num_scalar_prefetch=0,
            grid=(BT // tm,),
            in_specs=[
                pl.BlockSpec((tm, C), lambda i: (i, 0)),
                pl.BlockSpec((1, C), lambda i: (0, 0)),
                pl.BlockSpec((1, C), lambda i: (0, 0)),
            ],
            out_specs=pl.BlockSpec((tm, C), lambda i: (i, 0)),
        ),
        compiler_params=pltpu.CompilerParams(
            dimension_semantics=("parallel",),
            vmem_limit_bytes=VMEM_LIMIT,
        ),
    )(x2d, gamma, beta)


# ----------------------------------------------------------------------------
# Kernel 4: lm_head projection.  Vocab axis OUTER / rows inner so each weight
# tile stays resident across the row sweep (weights streamed from HBM once).
# tile_v = 384 divides 50304 exactly -> no padding, no post-hoc crop.
# ----------------------------------------------------------------------------
def lm_head_kernel(xn_ref, w_ref, bias_ref, o_ref):
    o_ref[...] = (jnp.dot(xn_ref[...], w_ref[...],
                          preferred_element_type=jnp.float32) + bias_ref[...])


def final_logits(xn_bf16, w, b, tile_v=384):
    BT, C = xn_bf16.shape
    V = w.shape[1]
    assert V % tile_v == 0
    tm = _row_tile(BT)
    return pl.pallas_call(
        lm_head_kernel,
        out_shape=jax.ShapeDtypeStruct((BT, V), jnp.float32),
        grid_spec=pltpu.PrefetchScalarGridSpec(
            num_scalar_prefetch=0,
            grid=(V // tile_v, BT // tm),               # vocab outer, rows inner
            in_specs=[
                pl.BlockSpec((tm, C), lambda j, i: (i, 0)),
                pl.BlockSpec((C, tile_v), lambda j, i: (0, j)),   # resident across inner sweep
                pl.BlockSpec((1, tile_v), lambda j, i: (0, j)),
            ],
            out_specs=pl.BlockSpec((tm, tile_v), lambda j, i: (i, j)),
        ),
        compiler_params=pltpu.CompilerParams(
            dimension_semantics=("parallel", "parallel"),
            vmem_limit_bytes=VMEM_LIMIT,
        ),
    )(xn_bf16, w, b)


# ----------------------------------------------------------------------------
# Params & model glue.
# ----------------------------------------------------------------------------
def init_params(key):
    keys = iter(jax.random.split(key, 64))

    def nrm(shape, scale=0.02):
        return scale * jax.random.normal(next(keys), shape, dtype=jnp.float32)

    params = {
        "tok_emb": nrm((VOCAB_SIZE, N_EMBD)),
        "pe": nrm((MAX_LEN, N_EMBD)),
        "freqs": jnp.power(
            10000.0, -jnp.arange(0, N_EMBD, 2, dtype=jnp.float32) / N_EMBD
        ),
        "lnf_gamma": jnp.ones((1, N_EMBD), jnp.float32),
        "lnf_beta": jnp.zeros((1, N_EMBD), jnp.float32),
        "lm_w": nrm((N_EMBD, VOCAB_SIZE)).astype(jnp.bfloat16),
        "lm_b": jnp.zeros((1, VOCAB_SIZE), jnp.float32),
    }
    blocks = []
    for _ in range(N_LAYER):
        blocks.append({
            "ln1_g": jnp.ones((1, N_EMBD), jnp.float32),
            "ln1_b": jnp.zeros((1, N_EMBD), jnp.float32),
            "w_qkv": nrm((N_EMBD, 3 * N_EMBD)).astype(jnp.bfloat16),  # [Wq|Wk|Wv], per-head cols
            "w_proj": nrm((N_EMBD, N_EMBD)).astype(jnp.bfloat16),
            "b_proj": jnp.zeros((1, N_EMBD), jnp.float32),
            "ln2_g": jnp.ones((1, N_EMBD), jnp.float32),
            "ln2_b": jnp.zeros((1, N_EMBD), jnp.float32),
            "w_ff1": nrm((N_EMBD, 4 * N_EMBD)).astype(jnp.bfloat16),
            "b_ff1": jnp.zeros((1, 4 * N_EMBD), jnp.float32),
            "w_ff2": nrm((4 * N_EMBD, N_EMBD)).astype(jnp.bfloat16),
            "b_ff2": jnp.zeros((1, N_EMBD), jnp.float32),
        })
    params["blocks"] = blocks
    return params


def gpt_forward(params, idx):
    B, T = idx.shape
    pos_enc = positional_encoding(T, params["pe"], params["freqs"])
    x = embed_tokens(idx, params["tok_emb"], pos_enc)                # (B, T, C) f32
    mask = causal_mask(T)                                            # (T, T) f32 additive
    tq = _q_tile(T)
    for blk in params["blocks"]:
        qkv = ln1_qkv(x.reshape(B * T, N_EMBD),
                      blk["ln1_g"], blk["ln1_b"], blk["w_qkv"])      # (BT, 3C) bf16
        x = attn_mlp(x, qkv.reshape(B, T, 3 * N_EMBD), mask, blk, tq)
    xn = final_layernorm(x.reshape(B * T, N_EMBD),
                         params["lnf_gamma"], params["lnf_beta"])    # (BT, C) bf16
    logits = final_logits(xn, params["lm_w"], params["lm_b"])        # (BT, V) f32
    # TODO(synk): cross-entropy loss branch not implemented (targets=None path only).
    return logits.reshape(B, T, VOCAB_SIZE), None


if __name__ == "__main__":
    key = jax.random.PRNGKey(0)
    pkey, ikey = jax.random.split(key)
    params = init_params(pkey)

    B, T = 2, 8
    idx = jax.random.randint(ikey, (B, T), 0, VOCAB_SIZE, dtype=jnp.int32)

    logits, loss = jax.jit(gpt_forward)(params, idx)
    jax.block_until_ready(logits)

    assert logits.shape == (B, T, VOCAB_SIZE)
    assert loss is None
    assert bool(jnp.all(jnp.isfinite(logits)))
    print("KERNEL_OK")
</pallas_src>

<mosaic_0001>
module attributes {stable_mosaic.version = 11 : i64} {
  func.func @ln1_qkv_kernel(%arg0: i32, %arg1: memref<16x256xf32, #tpu.memory_space<vmem>>, %arg2: memref<1x256xf32, #tpu.memory_space<vmem>>, %arg3: memref<1x256xf32, #tpu.memory_space<vmem>>, %arg4: memref<256x768xbf16, #tpu.memory_space<vmem>>, %arg5: memref<16x768xbf16, #tpu.memory_space<vmem>>) attributes {dimension_semantics = [#tpu.dimension_semantics<parallel>], iteration_bounds = array<i64: 1>, scalar_prefetch = 0 : i64, scratch_operands = 0 : i64, tpu.core_type = #tpu.core_type<tc>, window_params = [{transform_indices = @transform_0, window_bounds = array<i64: 16, 256>}, {pipeline_mode = #tpu.pipeline_mode<synchronous>, transform_indices = @transform_1, window_bounds = array<i64: 1, 256>}, {pipeline_mode = #tpu.pipeline_mode<synchronous>, transform_indices = @transform_2, window_bounds = array<i64: 1, 256>}, {pipeline_mode = #tpu.pipeline_mode<synchronous>, transform_indices = @transform_3, window_bounds = array<i64: 256, 768>}, {transform_indices = @transform_4, window_bounds = array<i64: 16, 768>}]} {
    %c0 = arith.constant 0 : index
    %c0_0 = arith.constant 0 : index
    %0 = vector.load %arg1[%c0, %c0_0] : memref<16x256xf32, #tpu.memory_space<vmem>>, vector<16x256xf32>
    %c0_1 = arith.constant 0 : index
    %c0_2 = arith.constant 0 : index
    %1 = vector.load %arg2[%c0_1, %c0_2] : memref<1x256xf32, #tpu.memory_space<vmem>>, vector<1x256xf32>
    %c0_3 = arith.constant 0 : index
    %c0_4 = arith.constant 0 : index
    %2 = vector.load %arg3[%c0_3, %c0_4] : memref<1x256xf32, #tpu.memory_space<vmem>>, vector<1x256xf32>
    %cst = arith.constant dense<0.000000e+00> : vector<16xf32>
    %3 = vector.multi_reduction <add>, %0, %cst [1] : vector<16x256xf32> to vector<16xf32>
    %4 = vector.shape_cast %3 : vector<16xf32> to vector<16x1xf32>
    %cst_5 = arith.constant 2.560000e+02 : f32
    %5 = vector.broadcast %cst_5 : f32 to vector<16x1xf32>
    %6 = arith.divf %4, %5 : vector<16x1xf32>
    %7 = vector.broadcast %6 : vector<16x1xf32> to vector<16x256xf32>
    %8 = arith.subf %0, %7 : vector<16x256xf32>
    %9 = arith.mulf %8, %8 : vector<16x256xf32>
    %cst_6 = arith.constant dense<0.000000e+00> : vector<16xf32>
    %10 = vector.multi_reduction <add>, %9, %cst_6 [1] : vector<16x256xf32> to vector<16xf32>
    %11 = vector.shape_cast %10 : vector<16xf32> to vector<16x1xf32>
    %cst_7 = arith.constant 2.560000e+02 : f32
    %12 = vector.broadcast %cst_7 : f32 to vector<16x1xf32>
    %13 = arith.divf %11, %12 : vector<16x1xf32>
    %14 = vector.broadcast %6 : vector<16x1xf32> to vector<16x256xf32>
    %15 = arith.subf %0, %14 : vector<16x256xf32>
    %cst_8 = arith.constant 9.99999974E-6 : f32
    %16 = vector.broadcast %cst_8 : f32 to vector<16x1xf32>
    %17 = arith.addf %13, %16 : vector<16x1xf32>
    %18 = math.rsqrt %17 : vector<16x1xf32>
    %19 = vector.broadcast %18 : vector<16x1xf32> to vector<16x256xf32>
    %20 = arith.mulf %15, %19 : vector<16x256xf32>
    %21 = vector.broadcast %1 : vector<1x256xf32> to vector<16x256xf32>
    %22 = arith.mulf %20, %21 : vector<16x256xf32>
    %23 = vector.broadcast %2 : vector<1x256xf32> to vector<16x256xf32>
    %24 = arith.addf %22, %23 : vector<16x256xf32>
    %25 = arith.truncf %24 : vector<16x256xf32> to vector<16x256xbf16>
    %c0_9 = arith.constant 0 : index
    %c0_10 = arith.constant 0 : index
    %26 = vector.load %arg4[%c0_9, %c0_10] : memref<256x768xbf16, #tpu.memory_space<vmem>>, vector<256x768xbf16>
    %cst_11 = arith.constant dense<0.000000e+00> : vector<16x768xf32>
    %27 = tpu.matmul %25, %26, %cst_11 {dimension_numbers = #tpu.dot_dimension_numbers<[1], [0], [0], [1], [0, 0, 1, 1], [], []>} : vector<16x256xbf16>, vector<256x768xbf16>, vector<16x768xf32> -> vector<16x768xf32>
    %28 = arith.truncf %27 : vector<16x768xf32> to vector<16x768xbf16>
    %c0_12 = arith.constant 0 : index
    %c0_13 = arith.constant 0 : index
    %29 = vector.load %arg5[%c0_12, %c0_13] : memref<16x768xbf16, #tpu.memory_space<vmem>>, vector<16x768xbf16>
    tpu.vector_store %arg5[%c0_12, %c0_13], %28 {strides = array<i32>} : memref<16x768xbf16, #tpu.memory_space<vmem>>, vector<16x768xbf16>,
    return
  }
  func.func @transform_0(%arg0: i32) -> (i32, i32) {
    %c0_i32 = arith.constant 0 : i32
    %c0_i32_0 = arith.constant 0 : i32
    return %arg0, %c0_i32 : i32, i32
  }
  func.func @transform_1(%arg0: i32) -> (i32, i32) {
    %c0_i32 = arith.constant 0 : i32
    %c0_i32_0 = arith.constant 0 : i32
    %c0_i32_1 = arith.constant 0 : i32
    return %c0_i32, %c0_i32_0 : i32, i32
  }
  func.func @transform_2(%arg0: i32) -> (i32, i32) {
    %c0_i32 = arith.constant 0 : i32
    %c0_i32_0 = arith.constant 0 : i32
    %c0_i32_1 = arith.constant 0 : i32
    return %c0_i32, %c0_i32_0 : i32, i32
  }
  func.func @transform_3(%arg0: i32) -> (i32, i32) {
    %c0_i32 = arith.constant 0 : i32
    %c0_i32_0 = arith.constant 0 : i32
    %c0_i32_1 = arith.constant 0 : i32
    return %c0_i32, %c0_i32_0 : i32, i32
  }
  func.func @transform_4(%arg0: i32) -> (i32, i32) {
    %c0_i32 = arith.constant 0 : i32
    %c0_i32_0 = arith.constant 0 : i32
    return %arg0, %c0_i32 : i32, i32
  }
}

module attributes {stable_mosaic.version = 11 : i64} {
  func.func @lnf_kernel(%arg0: i32, %arg1: memref<16x256xf32, #tpu.memory_space<vmem>>, %arg2: memref<1x256xf32, #tpu.memory_space<vmem>>, %arg3: memref<1x256xf32, #tpu.memory_space<vmem>>, %arg4: memref<16x256xbf16, #tpu.memory_space<vmem>>) attributes {dimension_semantics = [#tpu.dimension_semantics<parallel>], iteration_bounds = array<i64: 1>, scalar_prefetch = 0 : i64, scratch_operands = 0 : i64, tpu.core_type = #tpu.core_type<tc>, window_params = [{transform_indices = @transform_0, window_bounds = array<i64: 16, 256>}, {pipeline_mode = #tpu.pipeline_mode<synchronous>, transform_indices = @transform_1, window_bounds = array<i64: 1, 256>}, {pipeline_mode = #tpu.pipeline_mode<synchronous>, transform_indices = @transform_2, window_bounds = array<i64: 1, 256>}, {transform_indices = @transform_3, window_bounds = array<i64: 16, 256>}]} {
    %c0 = arith.constant 0 : index
    %c0_0 = arith.constant 0 : index
    %0 = vector.load %arg1[%c0, %c0_0] : memref<16x256xf32, #tpu.memory_space<vmem>>, vector<16x256xf32>
    %c0_1 = arith.constant 0 : index
    %c0_2 = arith.constant 0 : index
    %1 = vector.load %arg2[%c0_1, %c0_2] : memref<1x256xf32, #tpu.memory_space<vmem>>, vector<1x256xf32>
    %c0_3 = arith.constant 0 : index
    %c0_4 = arith.constant 0 : index
    %2 = vector.load %arg3[%c0_3, %c0_4] : memref<1x256xf32, #tpu.memory_space<vmem>>, vector<1x256xf32>
    %cst = arith.constant dense<0.000000e+00> : vector<16xf32>
    %3 = vector.multi_reduction <add>, %0, %cst [1] : vector<16x256xf32> to vector<16xf32>
    %4 = vector.shape_cast %3 : vector<16xf32> to vector<16x1xf32>
    %cst_5 = arith.constant 2.560000e+02 : f32
    %5 = vector.broadcast %cst_5 : f32 to vector<16x1xf32>
    %6 = arith.divf %4, %5 : vector<16x1xf32>
    %7 = vector.broadcast %6 : vector<16x1xf32> to vector<16x256xf32>
    %8 = arith.subf %0, %7 : vector<16x256xf32>
    %9 = arith.mulf %8, %8 : vector<16x256xf32>
    %cst_6 = arith.constant dense<0.000000e+00> : vector<16xf32>
    %10 = vector.multi_reduction <add>, %9, %cst_6 [1] : vector<16x256xf32> to vector<16xf32>
    %11 = vector.shape_cast %10 : vector<16xf32> to vector<16x1xf32>
    %cst_7 = arith.constant 2.560000e+02 : f32
    %12 = vector.broadcast %cst_7 : f32 to vector<16x1xf32>
    %13 = arith.divf %11, %12 : vector<16x1xf32>
    %14 = vector.broadcast %6 : vector<16x1xf32> to vector<16x256xf32>
    %15 = arith.subf %0, %14 : vector<16x256xf32>
    %cst_8 = arith.constant 9.99999974E-6 : f32
    %16 = vector.broadcast %cst_8 : f32 to vector<16x1xf32>
    %17 = arith.addf %13, %16 : vector<16x1xf32>
    %18 = math.rsqrt %17 : vector<16x1xf32>
    %19 = vector.broadcast %18 : vector<16x1xf32> to vector<16x256xf32>
    %20 = arith.mulf %15, %19 : vector<16x256xf32>
    %21 = vector.broadcast %1 : vector<1x256xf32> to vector<16x256xf32>
    %22 = arith.mulf %20, %21 : vector<16x256xf32>
    %23 = vector.broadcast %2 : vector<1x256xf32> to vector<16x256xf32>
    %24 = arith.addf %22, %23 : vector<16x256xf32>
    %25 = arith.truncf %24 : vector<16x256xf32> to vector<16x256xbf16>
    %c0_9 = arith.constant 0 : index
    %c0_10 = arith.constant 0 : index
    %26 = vector.load %arg4[%c0_9, %c0_10] : memref<16x256xbf16, #tpu.memory_space<vmem>>, vector<16x256xbf16>
    tpu.vector_store %arg4[%c0_9, %c0_10], %25 {strides = array<i32>} : memref<16x256xbf16, #tpu.memory_space<vmem>>, vector<16x256xbf16>,
    return
  }
  func.func @transform_0(%arg0: i32) -> (i32, i32) {
    %c0_i32 = arith.constant 0 : i32
    %c0_i32_0 = arith.constant 0 : i32
    return %arg0, %c0_i32 : i32, i32
  }
  func.func @transform_1(%arg0: i32) -> (i32, i32) {
    %c0_i32 = arith.constant 0 : i32
    %c0_i32_0 = arith.constant 0 : i32
    %c0_i32_1 = arith.constant 0 : i32
    return %c0_i32, %c0_i32_0 : i32, i32
  }
  func.func @transform_2(%arg0: i32) -> (i32, i32) {
    %c0_i32 = arith.constant 0 : i32
    %c0_i32_0 = arith.constant 0 : i32
    %c0_i32_1 = arith.constant 0 : i32
    return %c0_i32, %c0_i32_0 : i32, i32
  }
  func.func @transform_3(%arg0: i32) -> (i32, i32) {
    %c0_i32 = arith.constant 0 : i32
    %c0_i32_0 = arith.constant 0 : i32
    return %arg0, %c0_i32 : i32, i32
  }
}

module attributes {stable_mosaic.version = 11 : i64} {
  func.func @attn_mlp_kernel(%arg0: i32, %arg1: i32, %arg2: memref<1x8x256xf32, #tpu.memory_space<vmem>>, %arg3: memref<1x8x256xbf16, #tpu.memory_space<vmem>>, %arg4: memref<1x8x768xbf16, #tpu.memory_space<vmem>>, %arg5: memref<8x8xf32, #tpu.memory_space<vmem>>, %arg6: memref<256x256xbf16, #tpu.memory_space<vmem>>, %arg7: memref<1x256xf32, #tpu.memory_space<vmem>>, %arg8: memref<1x256xf32, #tpu.memory_space<vmem>>, %arg9: memref<1x256xf32, #tpu.memory_space<vmem>>, %arg10: memref<256x1024xbf16, #tpu.memory_space<vmem>>, %arg11: memref<1x1024xf32, #tpu.memory_space<vmem>>, %arg12: memref<1024x256xbf16, #tpu.memory_space<vmem>>, %arg13: memref<1x256xf32, #tpu.memory_space<vmem>>, %arg14: memref<1x8x256xf32, #tpu.memory_space<vmem>>) attributes {dimension_semantics = [#tpu.dimension_semantics<parallel>, #tpu.dimension_semantics<parallel>], iteration_bounds = array<i64: 2, 1>, scalar_prefetch = 0 : i64, scratch_operands = 0 : i64, tpu.core_type = #tpu.core_type<tc>, window_params = [{transform_indices = @transform_0, window_bounds = array<i64: 1, 8, 256>}, {transform_indices = @transform_1, window_bounds = array<i64: 1, 8, 256>}, {transform_indices = @transform_2, window_bounds = array<i64: 1, 8, 768>}, {transform_indices = @transform_3, window_bounds = array<i64: 8, 8>}, {pipeline_mode = #tpu.pipeline_mode<synchronous>, transform_indices = @transform_4, window_bounds = array<i64: 256, 256>}, {pipeline_mode = #tpu.pipeline_mode<synchronous>, transform_indices = @transform_5, window_bounds = array<i64: 1, 256>}, {pipeline_mode = #tpu.pipeline_mode<synchronous>, transform_indices = @transform_6, window_bounds = array<i64: 1, 256>}, {pipeline_mode = #tpu.pipeline_mode<synchronous>, transform_indices = @transform_7, window_bounds = array<i64: 1, 256>}, {pipeline_mode = #tpu.pipeline_mode<synchronous>, transform_indices = @transform_8, window_bounds = array<i64: 256, 1024>}, {pipeline_mode = #tpu.pipeline_mode<synchronous>, transform_indices = @transform_9, window_bounds = array<i64: 1, 1024>}, {pipeline_mode = #tpu.pipeline_mode<synchronous>, transform_indices = @transform_10, window_bounds = array<i64: 1024, 256>}, {pipeline_mode = #tpu.pipeline_mode<synchronous>, transform_indices = @transform_11, window_bounds = array<i64: 1, 256>}, {transform_indices = @transform_12, window_bounds = array<i64: 1, 8, 256>}]} {
    %c0 = arith.constant 0 : index
    %c0_0 = arith.constant 0 : index
    %c0_1 = arith.constant 0 : index
    %0 = vector.load %arg2[%c0, %c0_0, %c0_1] : memref<1x8x256xf32, #tpu.memory_space<vmem>>, vector<1x8x256xf32>
    %1 = vector.shape_cast %0 : vector<1x8x256xf32> to vector<8x256xf32>
    %c0_2 = arith.constant 0 : index
    %c0_3 = arith.constant 0 : index
    %c0_4 = arith.constant 0 : index
    %2 = vector.load %arg3[%c0_2, %c0_3, %c0_4] : memref<1x8x256xbf16, #tpu.memory_space<vmem>>, vector<1x8x256xbf16>
    %3 = vector.shape_cast %2 : vector<1x8x256xbf16> to vector<8x256xbf16>
    %c0_5 = arith.constant 0 : index
    %c0_6 = arith.constant 0 : index
    %c0_7 = arith.constant 0 : index
    %4 = vector.load %arg4[%c0_5, %c0_6, %c0_7] : memref<1x8x768xbf16, #tpu.memory_space<vmem>>, vector<1x8x768xbf16>
    %5 = vector.shape_cast %4 : vector<1x8x768xbf16> to vector<8x768xbf16>
    %6 = vector.extract_strided_slice %5 {offsets = [0, 256], sizes = [8, 256], strides = [1, 1]} : vector<8x768xbf16> to vector<8x256xbf16>
    %7 = vector.extract_strided_slice %5 {offsets = [0, 512], sizes = [8, 256], strides = [1, 1]} : vector<8x768xbf16> to vector<8x256xbf16>
    %8 = vector.shape_cast %3 : vector<8x256xbf16> to vector<8x16x16xbf16>
    %9 = vector.shape_cast %6 : vector<8x256xbf16> to vector<8x16x16xbf16>
    %10 = vector.shape_cast %7 : vector<8x256xbf16> to vector<8x16x16xbf16>
    "tpu.trace_start"() <{level = 10 : i32, message = "qhd,khd->hqk"}> : () -> ()
    %cst = arith.constant dense<0.000000e+00> : vector<16x8x8xf32>
    %11 = tpu.matmul %8, %9, %cst {dimension_numbers = #tpu.dot_dimension_numbers<[2], [2], [0], [0], [0, 1, 0, 0, 1, 0], [1], [1]>} : vector<8x16x16xbf16>, vector<8x16x16xbf16>, vector<16x8x8xf32> -> vector<16x8x8xf32>
    "tpu.trace_stop"() : () -> ()
    %cst_8 = arith.constant 6.250000e-02 : f32
    %12 = vector.broadcast %cst_8 : f32 to vector<16x8x8xf32>
    %13 = arith.mulf %11, %12 : vector<16x8x8xf32>
    %c0_9 = arith.constant 0 : index
    %c0_10 = arith.constant 0 : index
    %14 = vector.load %arg5[%c0_9, %c0_10] : memref<8x8xf32, #tpu.memory_space<vmem>>, vector<8x8xf32>
    %15 = vector.shape_cast %14 : vector<8x8xf32> to vector<1x8x8xf32>
    %16 = vector.broadcast %15 : vector<1x8x8xf32> to vector<16x8x8xf32>
    %17 = arith.addf %13, %16 : vector<16x8x8xf32>
    %cst_11 = arith.constant dense<0xFF800000> : vector<16x8xf32>
    %18 = vector.multi_reduction <maximumf>, %17, %cst_11 [2] : vector<16x8x8xf32> to vector<16x8xf32>
    %19 = vector.shape_cast %18 : vector<16x8xf32> to vector<16x8x1xf32>
    %20 = vector.broadcast %19 : vector<16x8x1xf32> to vector<16x8x8xf32>
    %21 = arith.subf %17, %20 : vector<16x8x8xf32>
    %22 = math.exp %21 : vector<16x8x8xf32>
    %cst_12 = arith.constant dense<0.000000e+00> : vector<16x8xf32>
    %23 = vector.multi_reduction <add>, %22, %cst_12 [2] : vector<16x8x8xf32> to vector<16x8xf32>
    %24 = vector.shape_cast %23 : vector<16x8xf32> to vector<16x8x1xf32>
    %25 = tpu.reciprocal %24 {approx = true} : vector<16x8x1xf32> -> vector<16x8x1xf32>
    %26 = vector.broadcast %25 : vector<16x8x1xf32> to vector<16x8x8xf32>
    %27 = arith.mulf %22, %26 : vector<16x8x8xf32>
    %28 = arith.truncf %27 : vector<16x8x8xf32> to vector<16x8x8xbf16>
    "tpu.trace_start"() <{level = 10 : i32, message = "hqk,khd->qhd"}> : () -> ()
    %cst_13 = arith.constant dense<0.000000e+00> : vector<16x16x8xf32>
    %29 = tpu.matmul %10, %28, %cst_13 {dimension_numbers = #tpu.dot_dimension_numbers<[0], [2], [2], [1], [0, 1, 0, 2, 1, 1], [1], [0]>} : vector<8x16x16xbf16>, vector<16x8x8xbf16>, vector<16x16x8xf32> -> vector<16x16x8xf32>
    %30 = tpu.transpose %29, [2, 0, 1] : vector<16x16x8xf32> -> vector<8x16x16xf32>
    "tpu.trace_stop"() : () -> ()
    %31 = vector.shape_cast %30 : vector<8x16x16xf32> to vector<8x256xf32>
    %32 = arith.truncf %31 : vector<8x256xf32> to vector<8x256xbf16>
    %c0_14 = arith.constant 0 : index
    %c0_15 = arith.constant 0 : index
    %33 = vector.load %arg6[%c0_14, %c0_15] : memref<256x256xbf16, #tpu.memory_space<vmem>>, vector<256x256xbf16>
    %cst_16 = arith.constant dense<0.000000e+00> : vector<8x256xf32>
    %34 = tpu.matmul %32, %33, %cst_16 {dimension_numbers = #tpu.dot_dimension_numbers<[1], [0], [0], [1], [0, 0, 1, 1], [], []>} : vector<8x256xbf16>, vector<256x256xbf16>, vector<8x256xf32> -> vector<8x256xf32>
    %c0_17 = arith.constant 0 : index
    %c0_18 = arith.constant 0 : index
    %35 = vector.load %arg7[%c0_17, %c0_18] : memref<1x256xf32, #tpu.memory_space<vmem>>, vector<1x256xf32>
    %36 = vector.broadcast %35 : vector<1x256xf32> to vector<8x256xf32>
    %37 = arith.addf %34, %36 : vector<8x256xf32>
    %38 = arith.addf %1, %37 : vector<8x256xf32>
    %c0_19 = arith.constant 0 : index
    %c0_20 = arith.constant 0 : index
    %39 = vector.load %arg8[%c0_19, %c0_20] : memref<1x256xf32, #tpu.memory_space<vmem>>, vector<1x256xf32>
    %c0_21 = arith.constant 0 : index
    %c0_22 = arith.constant 0 : index
    %40 = vector.load %arg9[%c0_21, %c0_22] : memref<1x256xf32, #tpu.memory_space<vmem>>, vector<1x256xf32>
    %cst_23 = arith.constant dense<0.000000e+00> : vector<8xf32>
    %41 = vector.multi_reduction <add>, %38, %cst_23 [1] : vector<8x256xf32> to vector<8xf32>
    %42 = vector.shape_cast %41 : vector<8xf32> to vector<8x1xf32>
    %cst_24 = arith.constant 2.560000e+02 : f32
    %43 = vector.broadcast %cst_24 : f32 to vector<8x1xf32>
    %44 = arith.divf %42, %43 : vector<8x1xf32>
    %45 = vector.broadcast %44 : vector<8x1xf32> to vector<8x256xf32>
    %46 = arith.subf %38, %45 : vector<8x256xf32>
    %47 = arith.mulf %46, %46 : vector<8x256xf32>
    %cst_25 = arith.constant dense<0.000000e+00> : vector<8xf32>
    %48 = vector.multi_reduction <add>, %47, %cst_25 [1] : vector<8x256xf32> to vector<8xf32>
    %49 = vector.shape_cast %48 : vector<8xf32> to vector<8x1xf32>
    %cst_26 = arith.constant 2.560000e+02 : f32
    %50 = vector.broadcast %cst_26 : f32 to vector<8x1xf32>
    %51 = arith.divf %49, %50 : vector<8x1xf32>
    %52 = vector.broadcast %44 : vector<8x1xf32> to vector<8x256xf32>
    %53 = arith.subf %38, %52 : vector<8x256xf32>
    %cst_27 = arith.constant 9.99999974E-6 : f32
    %54 = vector.broadcast %cst_27 : f32 to vector<8x1xf32>
    %55 = arith.addf %51, %54 : vector<8x1xf32>
    %56 = math.rsqrt %55 : vector<8x1xf32>
    %57 = vector.broadcast %56 : vector<8x1xf32> to vector<8x256xf32>
    %58 = arith.mulf %53, %57 : vector<8x256xf32>
    %59 = vector.broadcast %39 : vector<1x256xf32> to vector<8x256xf32>
    %60 = arith.mulf %58, %59 : vector<8x256xf32>
    %61 = vector.broadcast %40 : vector<1x256xf32> to vector<8x256xf32>
    %62 = arith.addf %60, %61 : vector<8x256xf32>
    %63 = arith.truncf %62 : vector<8x256xf32> to vector<8x256xbf16>
    %c0_28 = arith.constant 0 : index
    %c0_29 = arith.constant 0 : index
    %64 = vector.load %arg10[%c0_28, %c0_29] : memref<256x1024xbf16, #tpu.memory_space<vmem>>, vector<256x1024xbf16>
    %cst_30 = arith.constant dense<0.000000e+00> : vector<8x1024xf32>
    %65 = tpu.matmul %63, %64, %cst_30 {dimension_numbers = #tpu.dot_dimension_numbers<[1], [0], [0], [1], [0, 0, 1, 1], [], []>} : vector<8x256xbf16>, vector<256x1024xbf16>, vector<8x1024xf32> -> vector<8x1024xf32>
    %c0_31 = arith.constant 0 : index
    %c0_32 = arith.constant 0 : index
    %66 = vector.load %arg11[%c0_31, %c0_32] : memref<1x1024xf32, #tpu.memory_space<vmem>>, vector<1x1024xf32>
    %67 = vector.broadcast %66 : vector<1x1024xf32> to vector<8x1024xf32>
    %68 = arith.addf %65, %67 : vector<8x1024xf32>
    %cst_33 = arith.constant 5.000000e-01 : f32
    %69 = vector.broadcast %cst_33 : f32 to vector<8x1024xf32>
    %70 = arith.mulf %69, %68 : vector<8x1024xf32>
    %cst_34 = arith.constant 4.471500e-02 : f32
    %71 = vector.broadcast %cst_34 : f32 to vector<8x1024xf32>
    %72 = arith.mulf %71, %68 : vector<8x1024xf32>
    %73 = arith.mulf %72, %68 : vector<8x1024xf32>
    %74 = arith.mulf %73, %68 : vector<8x1024xf32>
    %75 = arith.addf %68, %74 : vector<8x1024xf32>
    %cst_35 = arith.constant 0.797884583 : f32
    %76 = vector.broadcast %cst_35 : f32 to vector<8x1024xf32>
    %77 = arith.mulf %76, %75 : vector<8x1024xf32>
    %78 = math.tanh %77 : vector<8x1024xf32>
    %cst_36 = arith.constant 1.000000e+00 : f32
    %79 = vector.broadcast %cst_36 : f32 to vector<8x1024xf32>
    %80 = arith.addf %79, %78 : vector<8x1024xf32>
    %81 = arith.mulf %70, %80 : vector<8x1024xf32>
    %82 = arith.truncf %81 : vector<8x1024xf32> to vector<8x1024xbf16>
    %c0_37 = arith.constant 0 : index
    %c0_38 = arith.constant 0 : index
    %83 = vector.load %arg12[%c0_37, %c0_38] : memref<1024x256xbf16, #tpu.memory_space<vmem>>, vector<1024x256xbf16>
    %cst_39 = arith.constant dense<0.000000e+00> : vector<8x256xf32>
    %84 = tpu.matmul %82, %83, %cst_39 {dimension_numbers = #tpu.dot_dimension_numbers<[1], [0], [0], [1], [0, 0, 1, 1], [], []>} : vector<8x1024xbf16>, vector<1024x256xbf16>, vector<8x256xf32> -> vector<8x256xf32>
    %c0_40 = arith.constant 0 : index
    %c0_41 = arith.constant 0 : index
    %85 = vector.load %arg13[%c0_40, %c0_41] : memref<1x256xf32, #tpu.memory_space<vmem>>, vector<1x256xf32>
    %86 = vector.broadcast %85 : vector<1x256xf32> to vector<8x256xf32>
    %87 = arith.addf %84, %86 : vector<8x256xf32>
    %88 = arith.addf %38, %87 : vector<8x256xf32>
    %c0_42 = arith.constant 0 : index
    %c0_43 = arith.constant 0 : index
    %c0_44 = arith.constant 0 : index
    %89 = vector.load %arg14[%c0_42, %c0_43, %c0_44] : memref<1x8x256xf32, #tpu.memory_space<vmem>>, vector<1x8x256xf32>
    %90 = vector.shape_cast %89 : vector<1x8x256xf32> to vector<8x256xf32>
    %91 = vector.shape_cast %88 : vector<8x256xf32> to vector<1x8x256xf32>
    tpu.vector_store %arg14[%c0_42, %c0_43, %c0_44], %91 {strides = array<i32>} : memref<1x8x256xf32, #tpu.memory_space<vmem>>, vector<1x8x256xf32>,
    return
  }
  func.func @transform_0(%arg0: i32, %arg1: i32) -> (i32, i32, i32) {
    %c0_i32 = arith.constant 0 : i32
    %c0_i32_0 = arith.constant 0 : i32
    return %arg0, %arg1, %c0_i32 : i32, i32, i32
  }
  func.func @transform_1(%arg0: i32, %arg1: i32) -> (i32, i32, i32) {
    %c0_i32 = arith.constant 0 : i32
    %c0_i32_0 = arith.constant 0 : i32
    return %arg0, %arg1, %c0_i32 : i32, i32, i32
  }
  func.func @transform_2(%arg0: i32, %arg1: i32) -> (i32, i32, i32) {
    %c0_i32 = arith.constant 0 : i32
    %c0_i32_0 = arith.constant 0 : i32
    %c0_i32_1 = arith.constant 0 : i32
    return %arg0, %c0_i32, %c0_i32_0 : i32, i32, i32
  }
  func.func @transform_3(%arg0: i32, %arg1: i32) -> (i32, i32) {
    %c0_i32 = arith.constant 0 : i32
    %c0_i32_0 = arith.constant 0 : i32
    return %arg1, %c0_i32 : i32, i32
  }
  func.func @transform_4(%arg0: i32, %arg1: i32) -> (i32, i32) {
    %c0_i32 = arith.constant 0 : i32
    %c0_i32_0 = arith.constant 0 : i32
    %c0_i32_1 = arith.constant 0 : i32
    return %c0_i32, %c0_i32_0 : i32, i32
  }
  func.func @transform_5(%arg0: i32, %arg1: i32) -> (i32, i32) {
    %c0_i32 = arith.constant 0 : i32
    %c0_i32_0 = arith.constant 0 : i32
    %c0_i32_1 = arith.constant 0 : i32
    return %c0_i32, %c0_i32_0 : i32, i32
  }
  func.func @transform_6(%arg0: i32, %arg1: i32) -> (i32, i32) {
    %c0_i32 = arith.constant 0 : i32
    %c0_i32_0 = arith.constant 0 : i32
    %c0_i32_1 = arith.constant 0 : i32
    return %c0_i32, %c0_i32_0 : i32, i32
  }
  func.func @transform_7(%arg0: i32, %arg1: i32) -> (i32, i32) {
    %c0_i32 = arith.constant 0 : i32
    %c0_i32_0 = arith.constant 0 : i32
    %c0_i32_1 = arith.constant 0 : i32
    return %c0_i32, %c0_i32_0 : i32, i32
  }
  func.func @transform_8(%arg0: i32, %arg1: i32) -> (i32, i32) {
    %c0_i32 = arith.constant 0 : i32
    %c0_i32_0 = arith.constant 0 : i32
    %c0_i32_1 = arith.constant 0 : i32
    return %c0_i32, %c0_i32_0 : i32, i32
  }
  func.func @transform_9(%arg0: i32, %arg1: i32) -> (i32, i32) {
    %c0_i32 = arith.constant 0 : i32
    %c0_i32_0 = arith.constant 0 : i32
    %c0_i32_1 = arith.constant 0 : i32
    return %c0_i32, %c0_i32_0 : i32, i32
  }
  func.func @transform_10(%arg0: i32, %arg1: i32) -> (i32, i32) {
    %c0_i32 = arith.constant 0 : i32
    %c0_i32_0 = arith.constant 0 : i32
    %c0_i32_1 = arith.constant 0 : i32
    return %c0_i32, %c0_i32_0 : i32, i32
  }
  func.func @transform_11(%arg0: i32, %arg1: i32) -> (i32, i32) {
    %c0_i32 = arith.constant 0 : i32
    %c0_i32_0 = arith.constant 0 : i32
    %c0_i32_1 = arith.constant 0 : i32
    return %c0_i32, %c0_i32_0 : i32, i32
  }
  func.func @transform_12(%arg0: i32, %arg1: i32) -> (i32, i32, i32) {
    %c0_i32 = arith.constant 0 : i32
    %c0_i32_0 = arith.constant 0 : i32
    return %arg0, %arg1, %c0_i32 : i32, i32, i32
  }
}

module attributes {stable_mosaic.version = 11 : i64} {
  func.func @lm_head_kernel(%arg0: i32, %arg1: i32, %arg2: memref<16x256xbf16, #tpu.memory_space<vmem>>, %arg3: memref<256x384xbf16, #tpu.memory_space<vmem>>, %arg4: memref<1x384xf32, #tpu.memory_space<vmem>>, %arg5: memref<16x384xf32, #tpu.memory_space<vmem>>) attributes {dimension_semantics = [#tpu.dimension_semantics<parallel>, #tpu.dimension_semantics<parallel>], iteration_bounds = array<i64: 131, 1>, scalar_prefetch = 0 : i64, scratch_operands = 0 : i64, tpu.core_type = #tpu.core_type<tc>, window_params = [{transform_indices = @transform_0, window_bounds = array<i64: 16, 256>}, {transform_indices = @transform_1, window_bounds = array<i64: 256, 384>}, {transform_indices = @transform_2, window_bounds = array<i64: 1, 384>}, {transform_indices = @transform_3, window_bounds = array<i64: 16, 384>}]} {
    %c0 = arith.constant 0 : index
    %c0_0 = arith.constant 0 : index
    %0 = vector.load %arg2[%c0, %c0_0] : memref<16x256xbf16, #tpu.memory_space<vmem>>, vector<16x256xbf16>
    %c0_1 = arith.constant 0 : index
    %c0_2 = arith.constant 0 : index
    %1 = vector.load %arg3[%c0_1, %c0_2] : memref<256x384xbf16, #tpu.memory_space<vmem>>, vector<256x384xbf16>
    %cst = arith.constant dense<0.000000e+00> : vector<16x384xf32>
    %2 = tpu.matmul %0, %1, %cst {dimension_numbers = #tpu.dot_dimension_numbers<[1], [0], [0], [1], [0, 0, 1, 1], [], []>} : vector<16x256xbf16>, vector<256x384xbf16>, vector<16x384xf32> -> vector<16x384xf32>
    %c0_3 = arith.constant 0 : index
    %c0_4 = arith.constant 0 : index
    %3 = vector.load %arg4[%c0_3, %c0_4] : memref<1x384xf32, #tpu.memory_space<vmem>>, vector<1x384xf32>
    %4 = vector.broadcast %3 : vector<1x384xf32> to vector<16x384xf32>
    %5 = arith.addf %2, %4 : vector<16x384xf32>
    %c0_5 = arith.constant 0 : index
    %c0_6 = arith.constant 0 : index
    %6 = vector.load %arg5[%c0_5, %c0_6] : memref<16x384xf32, #tpu.memory_space<vmem>>, vector<16x384xf32>
    tpu.vector_store %arg5[%c0_5, %c0_6], %5 {strides = array<i32>} : memref<16x384xf32, #tpu.memory_space<vmem>>, vector<16x384xf32>,
    return
  }
  func.func @transform_0(%arg0: i32, %arg1: i32) -> (i32, i32) {
    %c0_i32 = arith.constant 0 : i32
    %c0_i32_0 = arith.constant 0 : i32
    return %arg1, %c0_i32 : i32, i32
  }
  func.func @transform_1(%arg0: i32, %arg1: i32) -> (i32, i32) {
    %c0_i32 = arith.constant 0 : i32
    %c0_i32_0 = arith.constant 0 : i32
    return %c0_i32, %arg0 : i32, i32
  }
  func.func @transform_2(%arg0: i32, %arg1: i32) -> (i32, i32) {
    %c0_i32 = arith.constant 0 : i32
    %c0_i32_0 = arith.constant 0 : i32
    return %c0_i32, %arg0 : i32, i32
  }
  func.func @transform_3(%arg0: i32, %arg1: i32) -> (i32, i32) {
    %c0_i32 = arith.constant 0 : i32
    return %arg1, %arg0 : i32, i32
  }
}

</mosaic_0001>

<llo_original>
// kernel: gpt_forward.50
$region0: #{gpt_forward.50}
  #allocation0 [shape = 'u32[]', space=smem, size = 0x4, offset = 0x4, fixed_abs, tag = 'smem constant byte address 0x4 - core index']
  #allocation1 [shape = 'u32[144,128]{1,0:T(1,128)}', space=vmem, size = 0x12000, scoped, tag = 'internal scratch']
  %s0 = inlined_call_operand.vmem [shape: f32[16,256], index: 0, kind: input, shape index: {}]
  %s1 = inlined_call_operand.hbm [shape: f32[1,256], index: 1, kind: input, shape index: {}]
  %s2 = inlined_call_operand.hbm [shape: f32[1,256], index: 2, kind: input, shape index: {}]
  %s3 = inlined_call_operand.vmem [shape: bf16[16,256], index: 3, kind: output, shape index: {}]
  %s4 = sld [smem:[#allocation0]]
  $region30: #{gpt_forward.50} parent=0
    _
  %s6 = ssub.s32 1, %s4
  %s7 = scalar_select 0, %s6, %s4
  $region1: #{gpt_forward.50} parent=0
    #allocation2 [shape = 'u8[1024]{0}', space=vmem, size = 0x400, scoped, tag = 'input window, operand 1, single buffered']
    #allocation3 [shape = 's32[1]{0}', space=sflag, size = 0x4, scoped, tag = 'scoped memory for gpt_forward.50']
    #allocation4 [shape = 'u8[1024]{0}', space=vmem, size = 0x400, scoped, tag = 'input window, operand 2, single buffered']
    #allocation5 [shape = 's32[1]{0}', space=sflag, size = 0x4, scoped, tag = 'scoped memory for gpt_forward.50']
    %8 = vsyncpa [#allocation3], 0
    %9 = vsyncpa [#allocation5], 0
    // Predicated region
    $region2: #{gpt_forward.50} parent=1 // pred_check
      _
    $region3: #{gpt_forward.50} parent=1 // pred_check_branch
      %11 = sbr.rel (0) target = $region5
    $region4: #{gpt_forward.50} parent=1 // pred_region
      _
    $region5: #{gpt_forward.50} parent=1 // pred_fallthru
      _
    // Predicated region
    $region6: #{gpt_forward.50} parent=1 // pred_check
      _
    $region7: #{gpt_forward.50} parent=1 // pred_check_branch
      %13 = sbr.rel (0) target = $region9
    $region8: #{gpt_forward.50} parent=1 // pred_region
      %s15 = ssub.s32 32, 32
      %16 = vsyncadd [#allocation3], %s15
      %s18 = sshll.u32 [#allocation2], 4
      %s19 = int_to_ptr.vmem [resolvable:$true] %s18
      %21 = dma.hbm_to_vmem [thread:$0]  %s1, 32, %s19, [#allocation3]
    $region9: #{gpt_forward.50} parent=1 // pred_fallthru
      _
    // Predicated region
    $region10: #{gpt_forward.50} parent=1 // pred_check
      _
    $region11: #{gpt_forward.50} parent=1 // pred_check_branch
      %23 = sbr.rel (0) target = $region13
    $region12: #{gpt_forward.50} parent=1 // pred_region
      %s25 = ssub.s32 32, 32
      %26 = vsyncadd [#allocation5], %s25
      %s28 = sshll.u32 [#allocation4], 4
      %s29 = int_to_ptr.vmem [resolvable:$true] %s28
      %31 = dma.hbm_to_vmem [thread:$0]  %s2, 32, %s29, [#allocation5]
    $region13: #{gpt_forward.50} parent=1 // pred_fallthru
      _
    // Predicated region
    $region14: #{gpt_forward.50} parent=1 // pred_check
      _
    $region15: #{gpt_forward.50} parent=1 // pred_check_branch
      %33 = sbr.rel (0) target = $region17
    $region16: #{gpt_forward.50} parent=1 // pred_region
      %34 = dma.done [#allocation3], 32
    $region17: #{gpt_forward.50} parent=1 // pred_fallthru
      _
    // Predicated region
    $region18: #{gpt_forward.50} parent=1 // pred_check
      _
    $region19: #{gpt_forward.50} parent=1 // pred_check_branch
      %36 = sbr.rel (0) target = $region21
    $region20: #{gpt_forward.50} parent=1 // pred_region
      %37 = dma.done [#allocation5], 32
    $region21: #{gpt_forward.50} parent=1 // pred_fallthru
      _
    %v38 = vld [vmem:[%s0] sm:$0xff]
    %v39 = vld [vmem:[%s0 + $0x8] sm:$0xff]
    %v40 = vld [vmem:[%s0 + $0x10] sm:$0xff]
    %v41 = vld [vmem:[%s0 + $0x18] sm:$0xff]
    %v42 = vld [vmem:[#allocation2] sm:$0x3]
    %v43 = vld [vmem:[#allocation4] sm:$0x3]
    %v44 = vadd.f32 %v38, %v39
    %45 = vadd.xlane.f32.xlu0 %v44
    %v46 = vpop.xlane.xlu0 %45
    %v47 = vadd.f32 %v40, %v41
    %48 = vadd.xlane.f32.xlu0 %v47
    %v49 = vpop.xlane.xlu0 %48
    %v50 = vrcp.pop 256.0
    %v51 = vmul.f32 %v46, %v50
    %v52 = vmul.f32 %v49, %v50
    %v53 = vsub.f32 %v38, %v51
    %v54 = vsub.f32 %v39, %v51
    %v55 = vsub.f32 %v40, %v52
    %v56 = vsub.f32 %v41, %v52
    %v57 = vmul.f32 %v53, %v53
    %v58 = vmul.f32 %v54, %v54
    %v59 = vmul.f32 %v55, %v55
    %v60 = vmul.f32 %v56, %v56
    %v61 = vadd.f32 %v57, %v58
    %62 = vadd.xlane.f32.xlu0 %v61
    %v63 = vpop.xlane.xlu0 %62
    %v64 = vadd.f32 %v59, %v60
    %65 = vadd.xlane.f32.xlu0 %v64
    %v66 = vpop.xlane.xlu0 %65
    %v67 = vmul.f32 %v63, %v50
    %v68 = vmul.f32 %v66, %v50
    %v69 = vadd.f32 %v67, 1e-05
    %v70 = vadd.f32 %v68, 1e-05
    %v71 = vrsqrt.pop %v69
    %v72 = vrsqrt.pop %v70
    %v73 = vmul.f32 %v53, %v71
    %v74 = vmul.f32 %v54, %v71
    %v75 = vmul.f32 %v55, %v72
    %v76 = vmul.f32 %v56, %v72
    %v78 = vlaneseq
    %v79 = vshrl.u32 %v78, 7
    %v80 = vsub.s32 0, %v79
    %v81 = vrot.slane %v42, %v80
    %v82 = vlaneseq
    %v83 = vshrl.u32 %v82, 7
    %v84 = vsub.s32 1, %v83
    %v85 = vrot.slane %v42, %v84
    %v88 = vmul.f32 %v73, %v81
    %v89 = vmul.f32 %v74, %v85
    %v90 = vmul.f32 %v75, %v81
    %v91 = vmul.f32 %v76, %v85
    %v93 = vlaneseq
    %v94 = vshrl.u32 %v93, 7
    %v95 = vsub.s32 0, %v94
    %v96 = vrot.slane %v43, %v95
    %v97 = vlaneseq
    %v98 = vshrl.u32 %v97, 7
    %v99 = vsub.s32 1, %v98
    %v100 = vrot.slane %v43, %v99
    %v103 = vadd.f32 %v88, %v96
    %v104 = vadd.f32 %v89, %v100
    %v105 = vadd.f32 %v90, %v96
    %v106 = vadd.f32 %v91, %v100
    %v107 = vpack.c.bf16 %v105, %v103
    %v108 = vpack.c.bf16 %v106, %v104
    %v111 = vunpack.c.l.b16 %v107
    %v112 = vunpack.c.l.b16 %v108
    %v113 = vunpack.c.h.b16 %v107
    %v114 = vunpack.c.h.b16 %v108
    %v115 = vpack.c.b16 %v112, %v111
    %v116 = vpack.c.b16 %v114, %v113
    %119 = vst [vmem:[%s3] sm:$0xff] %v115
    %120 = vst [vmem:[%s3 + $0x8] sm:$0xff] %v116
    // Predicated region
    $region22: #{gpt_forward.50} parent=1 // pred_check
      _
    $region23: #{gpt_forward.50} parent=1 // pred_check_branch
      %122 = sbr.rel (0) target = $region25
    $region24: #{gpt_forward.50} parent=1 // pred_region
      _
    $region25: #{gpt_forward.50} parent=1 // pred_fallthru
      _
    // Predicated region
    $region26: #{gpt_forward.50} parent=1 // pred_check
      _
    $region27: #{gpt_forward.50} parent=1 // pred_check_branch
      %124 = sbr.rel (0) target = $region29
    $region28: #{gpt_forward.50} parent=1 // pred_region
      _
    $region29: #{gpt_forward.50} parent=1 // pred_fallthru
      _
    %125 = vsyncpa [#allocation3], 1
    %126 = vsyncpa [#allocation5], 1

// kernel: gpt_forward.51
$region0: #{gpt_forward.51}
  #allocation0 [shape = 'u32[]', space=smem, size = 0x4, offset = 0x4, fixed_abs, tag = 'smem constant byte address 0x4 - core index']
  #allocation1 [shape = 'u32[144,128]{1,0:T(1,128)}', space=vmem, size = 0x12000, scoped, tag = 'internal scratch']
  %s0 = inlined_call_operand.vmem [shape: bf16[16,256], index: 0, kind: input, shape index: {}]
  %s1 = inlined_call_operand.hbm [shape: bf16[256,50304], index: 1, kind: input, shape index: {}]
  %s2 = inlined_call_operand.hbm [shape: f32[1,50304], index: 2, kind: input, shape index: {}]
  %s3 = inlined_call_operand.hbm [shape: f32[16,50304], index: 3, kind: output, shape index: {}]
  %s4 = sld [smem:[#allocation0]]
  $region53: #{gpt_forward.51} parent=0
    _
  %s6 = ssub.s32 1, %s4
  %s7 = scalar_select 0, %s6, %s4
  $region1: #{gpt_forward.51} parent=0
    #allocation2 [shape = 'u8[393216]{0}', space=vmem, size = 0x60000, scoped, tag = 'input window, operand 1']
    #allocation3 [shape = 's32[2]{0}', space=sflag, size = 0x8, scoped, tag = 'scoped memory for gpt_forward.51']
    #allocation4 [shape = 's32[2]{0}', space=sflag, size = 0x8, scoped, tag = 'scoped memory for gpt_forward.51']
    #allocation5 [shape = 'u8[3072]{0}', space=vmem, size = 0xc00, scoped, tag = 'input window, operand 2']
    #allocation6 [shape = 's32[2]{0}', space=sflag, size = 0x8, scoped, tag = 'scoped memory for gpt_forward.51']
    #allocation7 [shape = 'u8[49152]{0}', space=vmem, size = 0xc000, scoped, tag = 'output window, operand 0']
    %8 = vsyncpa [#allocation3], 0
    %s9 = scalar_lea.sflag [#allocation3], 1
    %10 = vsyncpa %s9, 0
    %11 = vsyncpa [#allocation6], 0
    %s12 = scalar_lea.sflag [#allocation6], 1
    %13 = vsyncpa %s12, 0
    %14 = vsyncpa [#allocation4], 0
    %s15 = scalar_lea.sflag [#allocation4], 1
    %16 = vsyncpa %s15, 0
    loop: start=0, step=1, limit=133
    $region2: #{gpt_forward.51} parent=1 // loop_pre_header
      _
    $region3: #{gpt_forward.51} parent=1 // loop_header
      %s18 = sphi 0, %s22
      %p19 = scmp.ge.s32.totalorder %s18, 133
      %s25 = sphi 0, %s37
      %s26 = sphi 0, %s33
      %s27 = sphi 0, %s25
      %s28 = sphi 0, %s26
      %s29 = sphi 0, %s27
      %s30 = sphi 0, %s28
      %s40 = sphi 0, %s42
      %s43 = sphi 0, %s40
      %s44 = sphi 0, %s43
      %s60 = sphi 0, %s44
      %s66 = sphi 0, %s68
      %s69 = sphi 0, %s66
      %s70 = sphi 0, %s69
      %s86 = sphi 0, %s70
      %s92 = sphi 0, %s94
      %s95 = sphi 0, %s92
      %s96 = sphi 0, %s95
      %s112 = sphi 0, %s96
      %s120 = sphi 0, %s122
      %s123 = sphi 0, %s120
      %s124 = sphi 0, %s123
      %s140 = sphi 0, %s124
    $region4: #{gpt_forward.51} parent=1 // loop_header_branch
      %21 = sbr.rel (%p19) target = $region8
    $region5: #{gpt_forward.51} parent=1 // loop_body
      %s23 = ssub.s32 %s18, 1
      %s24 = ssub.s32 %s18, 2
      %s31 = sadd.s32 1, %s26
      %p32 = scmp.ge.s32.totalorder %s31, 1
      %s33 = scalar_select %p32, 0, %s31
      %s34 = sadd.s32 1, %s25
      %s35 = scalar_select %p32, %s34, %s25
      %p36 = scmp.ge.s32.totalorder %s35, 131
      %s37 = scalar_select %p36, 0, %s35
      %s38 = ssub.s32 %s26, %s33
      %p39 = scmp.eq.s32.totalorder %s38, 0
      %s41 = sadd.s32 %s40, 1
      %s42 = scalar_select %p39, %s40, %s41
      %p45 = pneg %p39
      %p46 = scmp.eq.s32.totalorder %s18, 130
      %p47 = por %p45, %p46
      %p48 = scmp.ne.s32.totalorder %s40, %s43
      %p49 = scmp.eq.s32.totalorder %s18, 0
      %p50 = por %p48, %p49
      %p51 = scmp.ne.s32.totalorder %s40, %s43
      %p52 = scmp.eq.s32.totalorder %s23, 130
      %p53 = por %p51, %p52
      %p54 = scmp.ne.s32.totalorder %s43, %s44
      %p55 = scmp.eq.s32.totalorder %s23, 0
      %p56 = por %p54, %p55
      %p57 = scmp.ne.s32.totalorder %s43, %s44
      %p58 = scmp.eq.s32.totalorder %s24, 130
      %p59 = por %p57, %p58
      %p61 = scmp.ne.s32.totalorder %s44, %s60
      %p62 = scmp.eq.s32.totalorder %s24, 0
      %p63 = por %p61, %p62
      %s64 = ssub.s32 %s25, %s37
      %p65 = scmp.eq.s32.totalorder %s64, 0
      %s67 = sadd.s32 %s66, 1
      %s68 = scalar_select %p65, %s66, %s67
      %p71 = pneg %p65
      %p72 = scmp.eq.s32.totalorder %s18, 130
      %p73 = por %p71, %p72
      %p74 = scmp.ne.s32.totalorder %s66, %s69
      %p75 = scmp.eq.s32.totalorder %s18, 0
      %p76 = por %p74, %p75
      %p77 = scmp.ne.s32.totalorder %s66, %s69
      %p78 = scmp.eq.s32.totalorder %s23, 130
      %p79 = por %p77, %p78
      %p80 = scmp.ne.s32.totalorder %s69, %s70
      %p81 = scmp.eq.s32.totalorder %s23, 0
      %p82 = por %p80, %p81
      %p83 = scmp.ne.s32.totalorder %s69, %s70
      %p84 = scmp.eq.s32.totalorder %s24, 130
      %p85 = por %p83, %p84
      %p87 = scmp.ne.s32.totalorder %s70, %s86
      %p88 = scmp.eq.s32.totalorder %s24, 0
      %p89 = por %p87, %p88
      %s90 = ssub.s32 %s25, %s37
      %p91 = scmp.eq.s32.totalorder %s90, 0
      %s93 = sadd.s32 %s92, 1
      %s94 = scalar_select %p91, %s92, %s93
      %p97 = pneg %p91
      %p98 = scmp.eq.s32.totalorder %s18, 130
      %p99 = por %p97, %p98
      %p100 = scmp.ne.s32.totalorder %s92, %s95
      %p101 = scmp.eq.s32.totalorder %s18, 0
      %p102 = por %p100, %p101
      %p103 = scmp.ne.s32.totalorder %s92, %s95
      %p104 = scmp.eq.s32.totalorder %s23, 130
      %p105 = por %p103, %p104
      %p106 = scmp.ne.s32.totalorder %s95, %s96
      %p107 = scmp.eq.s32.totalorder %s23, 0
      %p108 = por %p106, %p107
      %p109 = scmp.ne.s32.totalorder %s95, %s96
      %p110 = scmp.eq.s32.totalorder %s24, 130
      %p111 = por %p109, %p110
      %p113 = scmp.ne.s32.totalorder %s96, %s112
      %p114 = scmp.eq.s32.totalorder %s24, 0
      %p115 = por %p113, %p114
      %s116 = ssub.s32 %s26, %s33
      %s117 = ssub.s32 %s25, %s37
      %s118 = sor.u32 %s116, %s117
      %p119 = scmp.eq.s32.totalorder %s118, 0
      %s121 = sadd.s32 %s120, 1
      %s122 = scalar_select %p119, %s120, %s121
      %p125 = pneg %p119
      %p126 = scmp.eq.s32.totalorder %s18, 130
      %p127 = por %p125, %p126
      %p128 = scmp.ne.s32.totalorder %s120, %s123
      %p129 = scmp.eq.s32.totalorder %s18, 0
      %p130 = por %p128, %p129
      %p131 = scmp.ne.s32.totalorder %s120, %s123
      %p132 = scmp.eq.s32.totalorder %s23, 130
      %p133 = por %p131, %p132
      %p134 = scmp.ne.s32.totalorder %s123, %s124
      %p135 = scmp.eq.s32.totalorder %s23, 0
      %p136 = por %p134, %p135
      %p137 = scmp.ne.s32.totalorder %s123, %s124
      %p138 = scmp.eq.s32.totalorder %s24, 130
      %p139 = por %p137, %p138
      %p141 = scmp.ne.s32.totalorder %s124, %s140
      %p142 = scmp.eq.s32.totalorder %s24, 0
      %p143 = por %p141, %p142
      %p144 = scmp.le.s32.totalorder 1, %s18
      %p145 = scmp.lt.s32.totalorder %s18, 132
      %p146 = pnand %p144, %p145
      %p147 = pneg %p146
      // Predicated region
      $region9: #{gpt_forward.51} parent=5 // pred_check
        _
      $region10: #{gpt_forward.51} parent=5 // pred_check_branch
        %149 = sbr.rel (%p146) target = $region12
      $region11: #{gpt_forward.51} parent=5 // pred_region
        %s150 = ssub.s32 %s18, 1
        // Predicated region
        $region13: #{gpt_forward.51} parent=11 // pred_check
          %p151 = pneg %p56
        $region14: #{gpt_forward.51} parent=11 // pred_check_branch
          %153 = sbr.rel (%p151) target = $region16
        $region15: #{gpt_forward.51} parent=11 // pred_region
          %s154 = smul.u32 2, %s28
          %p155 = scmp.lt.s32.totalorder %s154, 1
          %s156 = scalar_select %p155, %s154, 1
          %s157 = smul.addr %s156, 2
          %s158 = smul.addr %s157, 4
          %s159 = scalar_lea.vmem %s0, %s158
          %s160 = smul.u32 2, %s28
        $region16: #{gpt_forward.51} parent=11 // pred_fallthru
          _
      $region12: #{gpt_forward.51} parent=5 // pred_fallthru
        _
      %p161 = scmp.lt.s32.totalorder %s18, 131
      // Predicated region
      $region17: #{gpt_forward.51} parent=5 // pred_check
        %p162 = pneg %p161
      $region18: #{gpt_forward.51} parent=5 // pred_check_branch
        %164 = sbr.rel (%p162) target = $region20
      $region19: #{gpt_forward.51} parent=5 // pred_region
        // Predicated region
        $region21: #{gpt_forward.51} parent=19 // pred_check
          %p165 = pneg %p76
        $region22: #{gpt_forward.51} parent=19 // pred_check_branch
          %167 = sbr.rel (%p165) target = $region24
        $region23: #{gpt_forward.51} parent=19 // pred_region
          %s168 = sand.u32 %s66, 1
          %s169 = scalar_lea.sflag [#allocation3], %s168
          %s170 = sand.u32 %s66, 1
          %s171 = smul.addr %s170, 384
          %s172 = scalar_lea.vmem [#allocation2], %s171
          %s173 = smul.u32 3, %s25
          %s175 = ssub.s32 6144, 6144
          %176 = vsyncadd %s169, %s175
          %s177 = smul.addr %s173, 64
          %s178 = scalar_lea.hbm %s1, %s177
          %s179 = sshll.u32 %s172, 4
          %s180 = int_to_ptr.vmem [resolvable:$true] %s179
          %185 = dma.hbm_to_vmem [thread:$0]  %s178, 6144, %s180, %s169, 25152, 192, 12
        $region24: #{gpt_forward.51} parent=19 // pred_fallthru
          _
        // Predicated region
        $region25: #{gpt_forward.51} parent=19 // pred_check
          %p186 = pneg %p102
        $region26: #{gpt_forward.51} parent=19 // pred_check_branch
          %188 = sbr.rel (%p186) target = $region28
        $region27: #{gpt_forward.51} parent=19 // pred_region
          %s189 = sand.u32 %s92, 1
          %s190 = scalar_lea.sflag [#allocation6], %s189
          %s191 = sand.u32 %s92, 1
          %s192 = smul.addr %s191, 3
          %s193 = scalar_lea.vmem [#allocation5], %s192
          %s194 = smul.u32 3, %s25
          %s196 = ssub.s32 48, 48
          %197 = vsyncadd %s190, %s196
          %s198 = smul.addr %s194, 16
          %s199 = scalar_lea.hbm %s2, %s198
          %s201 = sshll.u32 %s193, 4
          %s202 = int_to_ptr.vmem [resolvable:$true] %s201
          %204 = dma.hbm_to_vmem [thread:$0]  %s199, 48, %s202, %s190
        $region28: #{gpt_forward.51} parent=19 // pred_fallthru
          _
      $region20: #{gpt_forward.51} parent=5 // pred_fallthru
        _
      %p205 = scmp.le.s32.totalorder 1, %s18
      %p206 = scmp.lt.s32.totalorder %s18, 132
      %p207 = pnand %p205, %p206
      %p208 = pneg %p207
      // Predicated region
      $region29: #{gpt_forward.51} parent=5 // pred_check
        _
      $region30: #{gpt_forward.51} parent=5 // pred_check_branch
        %210 = sbr.rel (%p207) target = $region32
      $region31: #{gpt_forward.51} parent=5 // pred_region
        %s211 = ssub.s32 %s18, 1
        %s212 = sand.u32 %s69, 1
        %s213 = scalar_lea.sflag [#allocation3], %s212
        %s214 = sand.u32 %s69, 1
        %s215 = smul.addr %s214, 384
        %s216 = scalar_lea.vmem [#allocation2], %s215
        // Predicated region
        $region33: #{gpt_forward.51} parent=31 // pred_check
          %p217 = pneg %p82
        $region34: #{gpt_forward.51} parent=31 // pred_check_branch
          %219 = sbr.rel (%p217) target = $region36
        $region35: #{gpt_forward.51} parent=31 // pred_region
          %220 = dma.done %s213, 6144
        $region36: #{gpt_forward.51} parent=31 // pred_fallthru
          _
        %s221 = sand.u32 %s95, 1
        %s222 = scalar_lea.sflag [#allocation6], %s221
        %s223 = sand.u32 %s95, 1
        %s224 = smul.addr %s223, 3
        %s225 = scalar_lea.vmem [#allocation5], %s224
        // Predicated region
        $region37: #{gpt_forward.51} parent=31 // pred_check
          %p226 = pneg %p108
        $region38: #{gpt_forward.51} parent=31 // pred_check_branch
          %228 = sbr.rel (%p226) target = $region40
        $region39: #{gpt_forward.51} parent=31 // pred_region
          %229 = dma.done %s222, 48
        $region40: #{gpt_forward.51} parent=31 // pred_fallthru
          _
        %s230 = smul.u32 2, %s28
        %p231 = scmp.lt.s32.totalorder %s230, 1
        %s232 = scalar_select %p231, %s230, 1
        %s233 = smul.addr %s232, 2
        %s234 = smul.addr %s233, 4
        %s235 = scalar_lea.vmem %s0, %s234
        %p236 = pneg %p56
        %p237 = pneg %p53
        %s238 = sand.u32 %s69, 1
        %s239 = scalar_lea.sflag [#allocation3], %s238
        %s240 = sand.u32 %s69, 1
        %s241 = smul.addr %s240, 384
        %s242 = scalar_lea.vmem [#allocation2], %s241
        %p243 = pneg %p82
        %p244 = pneg %p79
        %s245 = sand.u32 %s95, 1
        %s246 = scalar_lea.sflag [#allocation6], %s245
        %s247 = sand.u32 %s95, 1
        %s248 = smul.addr %s247, 3
        %s249 = scalar_lea.vmem [#allocation5], %s248
        %p250 = pneg %p108
        %p251 = pneg %p105
        %p252 = pneg %p136
        %p253 = pneg %p133
        %s254 = sand.u32 %s123, 1
        %s255 = scalar_lea.sflag [#allocation4], %s254
        %s256 = sand.u32 %s123, 1
        %s257 = smul.addr %s256, 48
        %s258 = scalar_lea.vmem [#allocation7], %s257
        %s259 = smul.u32 2, %s28
        %p260 = scmp.lt.s32.totalorder %s259, 1
        %s261 = scalar_select %p260, %s259, 1
        %s262 = smul.addr %s261, 2
        %s263 = smul.addr %s262, 4
        %s264 = scalar_lea.vmem %s0, %s263
        %s265 = smul.u32 2, %s28
        %s266 = smul.u32 3, %s27
        %s267 = smul.u32 3, %s27
        %s268 = smul.u32 2, %s28
        %s269 = smul.u32 3, %s27
        %v271 = vld [vmem:[%s264] sm:$0xff]
        %v272 = vld [vmem:[%s264 + $0x8] sm:$0xff]
        %v273 = vld [vmem:[%s216] sm:$0xff]
        %v274 = vld [vmem:[%s216 + $0x8] sm:$0xf]
        %v275 = vld [vmem:[%s216 + $0xc] sm:$0xff]
        %v276 = vld [vmem:[%s216 + $0x14] sm:$0xf]
        %v277 = vld [vmem:[%s216 + $0x18] sm:$0xff]
        %v278 = vld [vmem:[%s216 + $0x20] sm:$0xf]
        %v279 = vld [vmem:[%s216 + $0x24] sm:$0xff]
        %v280 = vld [vmem:[%s216 + $0x2c] sm:$0xf]
        %v281 = vld [vmem:[%s216 + $0x30] sm:$0xff]
        %v282 = vld [vmem:[%s216 + $0x38] sm:$0xf]
        %v283 = vld [vmem:[%s216 + $0x3c] sm:$0xff]
        %v284 = vld [vmem:[%s216 + $0x44] sm:$0xf]
        %v285 = vld [vmem:[%s216 + $0x48] sm:$0xff]
        %v286 = vld [vmem:[%s216 + $0x50] sm:$0xf]
        %v287 = vld [vmem:[%s216 + $0x54] sm:$0xff]
        %v288 = vld [vmem:[%s216 + $0x5c] sm:$0xf]
        %v289 = vld [vmem:[%s216 + $0x60] sm:$0xff]
        %v290 = vld [vmem:[%s216 + $0x68] sm:$0xf]
        %v291 = vld [vmem:[%s216 + $0x6c] sm:$0xff]
        %v292 = vld [vmem:[%s216 + $0x74] sm:$0xf]
        %v293 = vld [vmem:[%s216 + $0x78] sm:$0xff]
        %v294 = vld [vmem:[%s216 + $0x80] sm:$0xf]
        %v295 = vld [vmem:[%s216 + $0x84] sm:$0xff]
        %v296 = vld [vmem:[%s216 + $0x8c] sm:$0xf]
        %v297 = vld [vmem:[%s216 + $0x90] sm:$0xff]
        %v298 = vld [vmem:[%s216 + $0x98] sm:$0xf]
        %v299 = vld [vmem:[%s216 + $0x9c] sm:$0xff]
        %v300 = vld [vmem:[%s216 + $0xa4] sm:$0xf]
        %v301 = vld [vmem:[%s216 + $0xa8] sm:$0xff]
        %v302 = vld [vmem:[%s216 + $0xb0] sm:$0xf]
        %v303 = vld [vmem:[%s216 + $0xb4] sm:$0xff]
        %v304 = vld [vmem:[%s216 + $0xbc] sm:$0xf]
        %v305 = vld [vmem:[%s216 + $0xc0] sm:$0xff]
        %v306 = vld [vmem:[%s216 + $0xc8] sm:$0xf]
        %v307 = vld [vmem:[%s216 + $0xcc] sm:$0xff]
        %v308 = vld [vmem:[%s216 + $0xd4] sm:$0xf]
        %v309 = vld [vmem:[%s216 + $0xd8] sm:$0xff]
        %v310 = vld [vmem:[%s216 + $0xe0] sm:$0xf]
        %v311 = vld [vmem:[%s216 + $0xe4] sm:$0xff]
        %v312 = vld [vmem:[%s216 + $0xec] sm:$0xf]
        %v313 = vld [vmem:[%s216 + $0xf0] sm:$0xff]
        %v314 = vld [vmem:[%s216 + $0xf8] sm:$0xf]
        %v315 = vld [vmem:[%s216 + $0xfc] sm:$0xff]
        %v316 = vld [vmem:[%s216 + $0x104] sm:$0xf]
        %v317 = vld [vmem:[%s216 + $0x108] sm:$0xff]
        %v318 = vld [vmem:[%s216 + $0x110] sm:$0xf]
        %v319 = vld [vmem:[%s216 + $0x114] sm:$0xff]
        %v320 = vld [vmem:[%s216 + $0x11c] sm:$0xf]
        %v321 = vld [vmem:[%s216 + $0x120] sm:$0xff]
        %v322 = vld [vmem:[%s216 + $0x128] sm:$0xf]
        %v323 = vld [vmem:[%s216 + $0x12c] sm:$0xff]
        %v324 = vld [vmem:[%s216 + $0x134] sm:$0xf]
        %v325 = vld [vmem:[%s216 + $0x138] sm:$0xff]
        %v326 = vld [vmem:[%s216 + $0x140] sm:$0xf]
        %v327 = vld [vmem:[%s216 + $0x144] sm:$0xff]
        %v328 = vld [vmem:[%s216 + $0x14c] sm:$0xf]
        %v329 = vld [vmem:[%s216 + $0x150] sm:$0xff]
        %v330 = vld [vmem:[%s216 + $0x158] sm:$0xf]
        %v331 = vld [vmem:[%s216 + $0x15c] sm:$0xff]
        %v332 = vld [vmem:[%s216 + $0x164] sm:$0xf]
        %v333 = vld [vmem:[%s216 + $0x168] sm:$0xff]
        %v334 = vld [vmem:[%s216 + $0x170] sm:$0xf]
        %v335 = vld [vmem:[%s216 + $0x174] sm:$0xff]
        %v336 = vld [vmem:[%s216 + $0x17c] sm:$0xf]
        %v337 = vld [vmem:[%s225] sm:$0x7]
        %v339 = vlaneseq
        %v340 = vshrl.u32 %v339, 7
        %v341 = vsub.s32 0, %v340
        %v342 = vrot.slane %v337, %v341
        %v343 = vlaneseq
        %v344 = vshrl.u32 %v343, 7
        %v345 = vsub.s32 1, %v344
        %v346 = vrot.slane %v337, %v345
        %v347 = vlaneseq
        %v348 = vshrl.u32 %v347, 7
        %v349 = vsub.s32 2, %v348
        %v350 = vrot.slane %v337, %v349
        %v356 = vunpack.c.l.b16 %v271
        %v357 = vunpack.c.h.b16 %v271
        %v358 = vunpack.c.l.b16 %v272
        %v359 = vunpack.c.h.b16 %v272
        %v360 = vpack.c.b16 %v358, %v356
        %v361 = vpack.c.b16 %v359, %v357
        %v428 = vunpack.c.l.b16 %v273
        %v429 = vunpack.c.h.b16 %v273
        %v430 = vunpack.c.l.b16 %v274
        %v431 = vunpack.c.l.b16 %v275
        %v432 = vunpack.c.h.b16 %v275
        %v433 = vunpack.c.l.b16 %v276
        %v434 = vunpack.c.l.b16 %v277
        %v435 = vunpack.c.h.b16 %v277
        %v436 = vunpack.c.l.b16 %v278
        %v437 = vunpack.c.l.b16 %v279
        %v438 = vunpack.c.h.b16 %v279
        %v439 = vunpack.c.l.b16 %v280
        %v440 = vunpack.c.l.b16 %v281
        %v441 = vunpack.c.h.b16 %v281
        %v442 = vunpack.c.l.b16 %v282
        %v443 = vunpack.c.l.b16 %v283
        %v444 = vunpack.c.h.b16 %v283
        %v445 = vunpack.c.l.b16 %v284
        %v446 = vunpack.c.l.b16 %v285
        %v447 = vunpack.c.h.b16 %v285
        %v448 = vunpack.c.l.b16 %v286
        %v449 = vunpack.c.l.b16 %v287
        %v450 = vunpack.c.h.b16 %v287
        %v451 = vunpack.c.l.b16 %v288
        %v452 = vunpack.c.l.b16 %v289
        %v453 = vunpack.c.h.b16 %v289
        %v454 = vunpack.c.l.b16 %v290
        %v455 = vunpack.c.l.b16 %v291
        %v456 = vunpack.c.h.b16 %v291
        %v457 = vunpack.c.l.b16 %v292
        %v458 = vunpack.c.l.b16 %v293
        %v459 = vunpack.c.h.b16 %v293
        %v460 = vunpack.c.l.b16 %v294
        %v461 = vunpack.c.l.b16 %v295
        %v462 = vunpack.c.h.b16 %v295
        %v463 = vunpack.c.l.b16 %v296
        %v464 = vunpack.c.l.b16 %v297
        %v465 = vunpack.c.h.b16 %v297
        %v466 = vunpack.c.l.b16 %v298
        %v467 = vunpack.c.l.b16 %v299
        %v468 = vunpack.c.h.b16 %v299
        %v469 = vunpack.c.l.b16 %v300
        %v470 = vunpack.c.l.b16 %v301
        %v471 = vunpack.c.h.b16 %v301
        %v472 = vunpack.c.l.b16 %v302
        %v473 = vunpack.c.l.b16 %v303
        %v474 = vunpack.c.h.b16 %v303
        %v475 = vunpack.c.l.b16 %v304
        %v476 = vunpack.c.l.b16 %v305
        %v477 = vunpack.c.h.b16 %v305
        %v478 = vunpack.c.l.b16 %v306
        %v479 = vunpack.c.l.b16 %v307
        %v480 = vunpack.c.h.b16 %v307
        %v481 = vunpack.c.l.b16 %v308
        %v482 = vunpack.c.l.b16 %v309
        %v483 = vunpack.c.h.b16 %v309
        %v484 = vunpack.c.l.b16 %v310
        %v485 = vunpack.c.l.b16 %v311
        %v486 = vunpack.c.h.b16 %v311
        %v487 = vunpack.c.l.b16 %v312
        %v488 = vunpack.c.l.b16 %v313
        %v489 = vunpack.c.h.b16 %v313
        %v490 = vunpack.c.l.b16 %v314
        %v491 = vunpack.c.l.b16 %v315
        %v492 = vunpack.c.h.b16 %v315
        %v493 = vunpack.c.l.b16 %v316
        %v494 = vunpack.c.l.b16 %v317
        %v495 = vunpack.c.h.b16 %v317
        %v496 = vunpack.c.l.b16 %v318
        %v497 = vunpack.c.l.b16 %v319
        %v498 = vunpack.c.h.b16 %v319
        %v499 = vunpack.c.l.b16 %v320
        %v500 = vunpack.c.l.b16 %v321
        %v501 = vunpack.c.h.b16 %v321
        %v502 = vunpack.c.l.b16 %v322
        %v503 = vunpack.c.l.b16 %v323
        %v504 = vunpack.c.h.b16 %v323
        %v505 = vunpack.c.l.b16 %v324
        %v506 = vunpack.c.l.b16 %v325
        %v507 = vunpack.c.h.b16 %v325
        %v508 = vunpack.c.l.b16 %v326
        %v509 = vunpack.c.l.b16 %v327
        %v510 = vunpack.c.h.b16 %v327
        %v511 = vunpack.c.l.b16 %v328
        %v512 = vunpack.c.l.b16 %v329
        %v513 = vunpack.c.h.b16 %v329
        %v514 = vunpack.c.l.b16 %v330
        %v515 = vunpack.c.l.b16 %v331
        %v516 = vunpack.c.h.b16 %v331
        %v517 = vunpack.c.l.b16 %v332
        %v518 = vunpack.c.l.b16 %v333
        %v519 = vunpack.c.h.b16 %v333
        %v520 = vunpack.c.l.b16 %v334
        %v521 = vunpack.c.l.b16 %v335
        %v522 = vunpack.c.h.b16 %v335
        %v523 = vunpack.c.l.b16 %v336
        %v524 = vpack.c.b16 %v431, %v428
        %v525 = vpack.c.b16 %v432, %v429
        %v526 = vpack.c.b16 %v433, %v430
        %v527 = vpack.c.b16 %v437, %v434
        %v528 = vpack.c.b16 %v438, %v435
        %v529 = vpack.c.b16 %v439, %v436
        %v530 = vpack.c.b16 %v443, %v440
        %v531 = vpack.c.b16 %v444, %v441
        %v532 = vpack.c.b16 %v445, %v442
        %v533 = vpack.c.b16 %v449, %v446
        %v534 = vpack.c.b16 %v450, %v447
        %v535 = vpack.c.b16 %v451, %v448
        %v536 = vpack.c.b16 %v455, %v452
        %v537 = vpack.c.b16 %v456, %v453
        %v538 = vpack.c.b16 %v457, %v454
        %v539 = vpack.c.b16 %v461, %v458
        %v540 = vpack.c.b16 %v462, %v459
        %v541 = vpack.c.b16 %v463, %v460
        %v542 = vpack.c.b16 %v467, %v464
        %v543 = vpack.c.b16 %v468, %v465
        %v544 = vpack.c.b16 %v469, %v466
        %v545 = vpack.c.b16 %v473, %v470
        %v546 = vpack.c.b16 %v474, %v471
        %v547 = vpack.c.b16 %v475, %v472
        %v548 = vpack.c.b16 %v479, %v476
        %v549 = vpack.c.b16 %v480, %v477
        %v550 = vpack.c.b16 %v481, %v478
        %v551 = vpack.c.b16 %v485, %v482
        %v552 = vpack.c.b16 %v486, %v483
        %v553 = vpack.c.b16 %v487, %v484
        %v554 = vpack.c.b16 %v491, %v488
        %v555 = vpack.c.b16 %v492, %v489
        %v556 = vpack.c.b16 %v493, %v490
        %v557 = vpack.c.b16 %v497, %v494
        %v558 = vpack.c.b16 %v498, %v495
        %v559 = vpack.c.b16 %v499, %v496
        %v560 = vpack.c.b16 %v503, %v500
        %v561 = vpack.c.b16 %v504, %v501
        %v562 = vpack.c.b16 %v505, %v502
        %v563 = vpack.c.b16 %v509, %v506
        %v564 = vpack.c.b16 %v510, %v507
        %v565 = vpack.c.b16 %v511, %v508
        %v566 = vpack.c.b16 %v515, %v512
        %v567 = vpack.c.b16 %v516, %v513
        %v568 = vpack.c.b16 %v517, %v514
        %v569 = vpack.c.b16 %v521, %v518
        %v570 = vpack.c.b16 %v522, %v519
        %v571 = vpack.c.b16 %v523, %v520
        %620 = vmatprep.subr.bf16.mxu0 %v525
        %621 = vmatpush1.bf16.msra.mxu0 %v524
        %622 = vmatprep.subr.bf16.mxu0 %v528
        %623 = vmatpush1.bf16.msra.mxu0 %v527
        %624 = vmatprep.subr.bf16.mxu0 %v531
        %625 = vmatpush1.bf16.msra.mxu0 %v530
        %626 = vmatprep.subr.bf16.mxu0 %v534
        %627 = vmatpush1.bf16.msra.mxu0 %v533
        %628 = vmatprep.subr.bf16.mxu0 %v537
        %629 = vmatpush1.bf16.msra.mxu0 %v536
        %630 = vmatprep.subr.bf16.mxu0 %v540
        %631 = vmatpush1.bf16.msra.mxu0 %v539
        %632 = vmatprep.subr.bf16.mxu0 %v543
        %633 = vmatpush1.bf16.msra.mxu0 %v542
        %634 = vmatprep.subr.bf16.mxu0 %v546
        %635 = vmatpush1.bf16.msra.mxu0 %v545
        %636 = vmatprep.subr.bf16.mxu0 %v549
        %637 = vmatpush1.bf16.msra.mxu0 %v548
        %638 = vmatprep.subr.bf16.mxu0 %v552
        %639 = vmatpush1.bf16.msra.mxu0 %v551
        %640 = vmatprep.subr.bf16.mxu0 %v555
        %641 = vmatpush1.bf16.msra.mxu0 %v554
        %642 = vmatprep.subr.bf16.mxu0 %v558
        %643 = vmatpush1.bf16.msra.mxu0 %v557
        %644 = vmatprep.subr.bf16.mxu0 %v561
        %645 = vmatpush1.bf16.msra.mxu0 %v560
        %646 = vmatprep.subr.bf16.mxu0 %v564
        %647 = vmatpush1.bf16.msra.mxu0 %v563
        %648 = vmatprep.subr.bf16.mxu0 %v567
        %649 = vmatpush1.bf16.msra.mxu0 %v566
        %650 = vmatprep.subr.bf16.mxu0 %v570
        %651 = vmatpush1.bf16.msra.mxu0 %v569
        %652 = vmatprep.mubr.bf16.mxu0 %v361
        %653 = vmatmul.mubr.bf16.gmra.mrb[0].mxu0 %v360
        %v654 = vpop.f32.mrb[0].mxu0
        %v655 = vadd.f32 %v342, %v654
        %v656 = vpop.f32.mrb[0].mxu0
        %v657 = vadd.f32 %v346, %v656
        %v658 = vpop.f32.mrb[0].mxu0
        %v659 = vadd.f32 %v342, %v658
        %v660 = vpop.f32.mrb[0].mxu0
        %v661 = vadd.f32 %v346, %v660
        %662 = vdwg.mxu0
        %663 = vmatprep.subr.bf16.mxu0 0
        %664 = vmatpush1.bf16.msra.mxu0 %v526
        %665 = vmatprep.subr.bf16.mxu0 0
        %666 = vmatpush1.bf16.msra.mxu0 %v529
        %667 = vmatprep.subr.bf16.mxu0 0
        %668 = vmatpush1.bf16.msra.mxu0 %v532
        %669 = vmatprep.subr.bf16.mxu0 0
        %670 = vmatpush1.bf16.msra.mxu0 %v535
        %671 = vmatprep.subr.bf16.mxu0 0
        %672 = vmatpush1.bf16.msra.mxu0 %v538
        %673 = vmatprep.subr.bf16.mxu0 0
        %674 = vmatpush1.bf16.msra.mxu0 %v541
        %675 = vmatprep.subr.bf16.mxu0 0
        %676 = vmatpush1.bf16.msra.mxu0 %v544
        %677 = vmatprep.subr.bf16.mxu0 0
        %678 = vmatpush1.bf16.msra.mxu0 %v547
        %679 = vmatprep.subr.bf16.mxu0 0
        %680 = vmatpush1.bf16.msra.mxu0 %v550
        %681 = vmatprep.subr.bf16.mxu0 0
        %682 = vmatpush1.bf16.msra.mxu0 %v553
        %683 = vmatprep.subr.bf16.mxu0 0
        %684 = vmatpush1.bf16.msra.mxu0 %v556
        %685 = vmatprep.subr.bf16.mxu0 0
        %686 = vmatpush1.bf16.msra.mxu0 %v559
        %687 = vmatprep.subr.bf16.mxu0 0
        %688 = vmatpush1.bf16.msra.mxu0 %v562
        %689 = vmatprep.subr.bf16.mxu0 0
        %690 = vmatpush1.bf16.msra.mxu0 %v565
        %691 = vmatprep.subr.bf16.mxu0 0
        %692 = vmatpush1.bf16.msra.mxu0 %v568
        %693 = vmatprep.subr.bf16.mxu0 0
        %694 = vmatpush1.bf16.msra.mxu0 %v571
        %695 = vmatprep.mubr.bf16.mxu0 %v361
        %696 = vmatmul.mubr.bf16.gmra.mrb[0].mxu0 %v360
        %v697 = vpop.f32.mrb[0].mxu0
        %v698 = vadd.f32 %v350, %v697
        %v699 = vpop.f32.mrb[0].mxu0
        %v700 = vpop.f32.mrb[0].mxu0
        %v701 = vadd.f32 %v350, %v700
        %v702 = vpop.f32.mrb[0].mxu0
        %703 = vdwg.mxu0
        %704 = vst [vmem:[%s258] sm:$0xff] %v655
        %705 = vst [vmem:[%s258 + $0x8] sm:$0xff] %v657
        %706 = vst [vmem:[%s258 + $0x10] sm:$0xff] %v698
        %707 = vst [vmem:[%s258 + $0x18] sm:$0xff] %v659
        %708 = vst [vmem:[%s258 + $0x20] sm:$0xff] %v661
        %709 = vst [vmem:[%s258 + $0x28] sm:$0xff] %v701
        %s710 = sand.u32 %s123, 1
        %s711 = scalar_lea.sflag [#allocation4], %s710
        %s712 = sand.u32 %s123, 1
        %s713 = smul.addr %s712, 48
        %s714 = scalar_lea.vmem [#allocation7], %s713
        // Predicated region
        $region41: #{gpt_forward.51} parent=31 // pred_check
          %p715 = pneg %p133
        $region42: #{gpt_forward.51} parent=31 // pred_check_branch
          %717 = sbr.rel (%p715) target = $region44
        $region43: #{gpt_forward.51} parent=31 // pred_region
          %s718 = smul.u32 2, %s28
          %s719 = smul.u32 3, %s27
          %s721 = ssub.s32 768, 768
          %722 = vsyncadd %s711, %s721
          %s723 = smul.addr %s718, 393
          %s724 = sadd.s32 %s719, %s723
          %s725 = smul.addr %s724, 128
          %s726 = scalar_lea.hbm %s3, %s725
          %s727 = sshll.u32 %s714, 4
          %s728 = int_to_ptr.vmem [resolvable:$true] %s727
          %733 = dma.vmem_to_hbm [thread:$0]  %s728, 768, %s726, %s711, 384, 50304, 24
        $region44: #{gpt_forward.51} parent=31 // pred_fallthru
          _
      $region32: #{gpt_forward.51} parent=5 // pred_fallthru
        _
      %p734 = scmp.le.s32.totalorder 2, %s18
      // Predicated region
      $region45: #{gpt_forward.51} parent=5 // pred_check
        %p735 = pneg %p734
      $region46: #{gpt_forward.51} parent=5 // pred_check_branch
        %737 = sbr.rel (%p735) target = $region48
      $region47: #{gpt_forward.51} parent=5 // pred_region
        %s738 = ssub.s32 %s18, 2
        // Predicated region
        $region49: #{gpt_forward.51} parent=47 // pred_check
          %p739 = pneg %p139
        $region50: #{gpt_forward.51} parent=47 // pred_check_branch
          %741 = sbr.rel (%p739) target = $region52
        $region51: #{gpt_forward.51} parent=47 // pred_region
          %s742 = sand.u32 %s124, 1
          %s743 = scalar_lea.sflag [#allocation4], %s742
          %s744 = sand.u32 %s124, 1
          %s745 = smul.addr %s744, 48
          %s746 = scalar_lea.vmem [#allocation7], %s745
          %747 = dma.done %s743, 768
        $region52: #{gpt_forward.51} parent=47 // pred_fallthru
          _
      $region48: #{gpt_forward.51} parent=5 // pred_fallthru
        _
    $region6: #{gpt_forward.51} parent=1 // loop_footer
      %s22 = sadd.s32 1, %s18
    $region7: #{gpt_forward.51} parent=1 // loop_footer_branch
      %17 = sbr.rel target = $region3
    $region8: #{gpt_forward.51} parent=1 // loop_exit
      _
    %748 = vsyncpa [#allocation3], 1
    %s749 = scalar_lea.sflag [#allocation3], 1
    %750 = vsyncpa %s749, 1
    %751 = vsyncpa [#allocation6], 1
    %s752 = scalar_lea.sflag [#allocation6], 1
    %753 = vsyncpa %s752, 1
    %754 = vsyncpa [#allocation4], 1
    %s755 = scalar_lea.sflag [#allocation4], 1
    %756 = vsyncpa %s755, 1

// kernel: gpt_forward.26
$region0: #{gpt_forward.26}
  #allocation0 [shape = 'u32[]', space=smem, size = 0x4, offset = 0x4, fixed_abs, tag = 'smem constant byte address 0x4 - core index']
  #allocation1 [shape = 'u32[144,128]{1,0:T(1,128)}', space=vmem, size = 0x12000, scoped, tag = 'internal scratch']
  %s0 = inlined_call_operand.vmem [shape: f32[16,256], index: 0, kind: input, shape index: {}]
  %s1 = inlined_call_operand.hbm [shape: f32[1,256], index: 1, kind: input, shape index: {}]
  %s2 = inlined_call_operand.hbm [shape: f32[1,256], index: 2, kind: input, shape index: {}]
  %s3 = inlined_call_operand.hbm [shape: bf16[256,768], index: 3, kind: input, shape index: {}]
  %s4 = inlined_call_operand.vmem [shape: bf16[16,768], index: 4, kind: output, shape index: {}]
  %s5 = sld [smem:[#allocation0]]
  $region38: #{gpt_forward.26} parent=0
    _
  %s7 = ssub.s32 1, %s5
  %s8 = scalar_select 0, %s7, %s5
  $region1: #{gpt_forward.26} parent=0
    #allocation2 [shape = 'u8[1024]{0}', space=vmem, size = 0x400, scoped, tag = 'input window, operand 1, single buffered']
    #allocation3 [shape = 's32[1]{0}', space=sflag, size = 0x4, scoped, tag = 'scoped memory for gpt_forward.26']
    #allocation4 [shape = 'u8[1024]{0}', space=vmem, size = 0x400, scoped, tag = 'input window, operand 2, single buffered']
    #allocation5 [shape = 's32[1]{0}', space=sflag, size = 0x4, scoped, tag = 'scoped memory for gpt_forward.26']
    #allocation6 [shape = 'u8[393216]{0}', space=vmem, size = 0x60000, scoped, tag = 'input window, operand 3, single buffered']
    %9 = vsyncpa [#allocation3], 0
    %10 = vsyncpa [#allocation5], 0
    // Predicated region
    $region2: #{gpt_forward.26} parent=1 // pred_check
      _
    $region3: #{gpt_forward.26} parent=1 // pred_check_branch
      %12 = sbr.rel (0) target = $region5
    $region4: #{gpt_forward.26} parent=1 // pred_region
      _
    $region5: #{gpt_forward.26} parent=1 // pred_fallthru
      _
    // Predicated region
    $region6: #{gpt_forward.26} parent=1 // pred_check
      _
    $region7: #{gpt_forward.26} parent=1 // pred_check_branch
      %14 = sbr.rel (0) target = $region9
    $region8: #{gpt_forward.26} parent=1 // pred_region
      %s16 = ssub.s32 32, 32
      %17 = vsyncadd [#allocation3], %s16
      %s19 = sshll.u32 [#allocation2], 4
      %s20 = int_to_ptr.vmem [resolvable:$true] %s19
      %22 = dma.hbm_to_vmem [thread:$0]  %s1, 32, %s20, [#allocation3]
    $region9: #{gpt_forward.26} parent=1 // pred_fallthru
      _
    // Predicated region
    $region10: #{gpt_forward.26} parent=1 // pred_check
      _
    $region11: #{gpt_forward.26} parent=1 // pred_check_branch
      %24 = sbr.rel (0) target = $region13
    $region12: #{gpt_forward.26} parent=1 // pred_region
      %s26 = ssub.s32 32, 32
      %27 = vsyncadd [#allocation5], %s26
      %s29 = sshll.u32 [#allocation4], 4
      %s30 = int_to_ptr.vmem [resolvable:$true] %s29
      %32 = dma.hbm_to_vmem [thread:$0]  %s2, 32, %s30, [#allocation5]
    $region13: #{gpt_forward.26} parent=1 // pred_fallthru
      _
    // Predicated region
    $region14: #{gpt_forward.26} parent=1 // pred_check
      _
    $region15: #{gpt_forward.26} parent=1 // pred_check_branch
      %34 = sbr.rel (0) target = $region17
    $region16: #{gpt_forward.26} parent=1 // pred_region
      %s36 = ssub.s32 12288, 12288
      %37 = vsyncadd [#allocation5], %s36
      %s38 = sshll.u32 [#allocation6], 4
      %s39 = int_to_ptr.vmem [resolvable:$true] %s38
      %44 = dma.hbm_to_vmem [thread:$0]  %s3, 12288, %s39, [#allocation5], 384, 384, 24
    $region17: #{gpt_forward.26} parent=1 // pred_fallthru
      _
    // Predicated region
    $region18: #{gpt_forward.26} parent=1 // pred_check
      _
    $region19: #{gpt_forward.26} parent=1 // pred_check_branch
      %46 = sbr.rel (0) target = $region21
    $region20: #{gpt_forward.26} parent=1 // pred_region
      %47 = dma.done [#allocation3], 32
    $region21: #{gpt_forward.26} parent=1 // pred_fallthru
      _
    // Predicated region
    $region22: #{gpt_forward.26} parent=1 // pred_check
      _
    $region23: #{gpt_forward.26} parent=1 // pred_check_branch
      %49 = sbr.rel (0) target = $region25
    $region24: #{gpt_forward.26} parent=1 // pred_region
      %50 = dma.done [#allocation5], 32
    $region25: #{gpt_forward.26} parent=1 // pred_fallthru
      _
    // Predicated region
    $region26: #{gpt_forward.26} parent=1 // pred_check
      _
    $region27: #{gpt_forward.26} parent=1 // pred_check_branch
      %52 = sbr.rel (0) target = $region29
    $region28: #{gpt_forward.26} parent=1 // pred_region
      %53 = dma.done [#allocation5], 12288
    $region29: #{gpt_forward.26} parent=1 // pred_fallthru
      _
    %v54 = vld [vmem:[%s0] sm:$0xff]
    %v55 = vld [vmem:[%s0 + $0x8] sm:$0xff]
    %v56 = vld [vmem:[%s0 + $0x10] sm:$0xff]
    %v57 = vld [vmem:[%s0 + $0x18] sm:$0xff]
    %v58 = vld [vmem:[#allocation2] sm:$0x3]
    %v59 = vld [vmem:[#allocation4] sm:$0x3]
    %v60 = vadd.f32 %v54, %v55
    %61 = vadd.xlane.f32.xlu0 %v60
    %v62 = vpop.xlane.xlu0 %61
    %v63 = vadd.f32 %v56, %v57
    %64 = vadd.xlane.f32.xlu0 %v63
    %v65 = vpop.xlane.xlu0 %64
    %v66 = vrcp.pop 256.0
    %v67 = vmul.f32 %v62, %v66
    %v68 = vmul.f32 %v65, %v66
    %v69 = vsub.f32 %v54, %v67
    %v70 = vsub.f32 %v55, %v67
    %v71 = vsub.f32 %v56, %v68
    %v72 = vsub.f32 %v57, %v68
    %v73 = vmul.f32 %v69, %v69
    %v74 = vmul.f32 %v70, %v70
    %v75 = vmul.f32 %v71, %v71
    %v76 = vmul.f32 %v72, %v72
    %v77 = vadd.f32 %v73, %v74
    %78 = vadd.xlane.f32.xlu0 %v77
    %v79 = vpop.xlane.xlu0 %78
    %v80 = vadd.f32 %v75, %v76
    %81 = vadd.xlane.f32.xlu0 %v80
    %v82 = vpop.xlane.xlu0 %81
    %v83 = vmul.f32 %v79, %v66
    %v84 = vmul.f32 %v82, %v66
    %v85 = vadd.f32 %v83, 1e-05
    %v86 = vadd.f32 %v84, 1e-05
    %v87 = vrsqrt.pop %v85
    %v88 = vrsqrt.pop %v86
    %v89 = vmul.f32 %v69, %v87
    %v90 = vmul.f32 %v70, %v87
    %v91 = vmul.f32 %v71, %v88
    %v92 = vmul.f32 %v72, %v88
    %v94 = vlaneseq
    %v95 = vshrl.u32 %v94, 7
    %v96 = vsub.s32 0, %v95
    %v97 = vrot.slane %v58, %v96
    %v98 = vlaneseq
    %v99 = vshrl.u32 %v98, 7
    %v100 = vsub.s32 1, %v99
    %v101 = vrot.slane %v58, %v100
    %v104 = vmul.f32 %v89, %v97
    %v105 = vmul.f32 %v90, %v101
    %v106 = vmul.f32 %v91, %v97
    %v107 = vmul.f32 %v92, %v101
    %v109 = vlaneseq
    %v110 = vshrl.u32 %v109, 7
    %v111 = vsub.s32 0, %v110
    %v112 = vrot.slane %v59, %v111
    %v113 = vlaneseq
    %v114 = vshrl.u32 %v113, 7
    %v115 = vsub.s32 1, %v114
    %v116 = vrot.slane %v59, %v115
    %v119 = vadd.f32 %v104, %v112
    %v120 = vadd.f32 %v105, %v116
    %v121 = vadd.f32 %v106, %v112
    %v122 = vadd.f32 %v107, %v116
    %v123 = vpack.c.bf16 %v121, %v119
    %v124 = vpack.c.bf16 %v122, %v120
    %v125 = vld [vmem:[#allocation6] sm:$0xff]
    %v126 = vld [vmem:[#allocation6 + $0x8] sm:$0xff]
    %v127 = vld [vmem:[#allocation6 + $0x10] sm:$0xff]
    %v128 = vld [vmem:[#allocation6 + $0x18] sm:$0xff]
    %v129 = vld [vmem:[#allocation6 + $0x20] sm:$0xff]
    %v130 = vld [vmem:[#allocation6 + $0x28] sm:$0xff]
    %v131 = vld [vmem:[#allocation6 + $0x30] sm:$0xff]
    %v132 = vld [vmem:[#allocation6 + $0x38] sm:$0xff]
    %v133 = vld [vmem:[#allocation6 + $0x40] sm:$0xff]
    %v134 = vld [vmem:[#allocation6 + $0x48] sm:$0xff]
    %v135 = vld [vmem:[#allocation6 + $0x50] sm:$0xff]
    %v136 = vld [vmem:[#allocation6 + $0x58] sm:$0xff]
    %v137 = vld [vmem:[#allocation6 + $0x60] sm:$0xff]
    %v138 = vld [vmem:[#allocation6 + $0x68] sm:$0xff]
    %v139 = vld [vmem:[#allocation6 + $0x70] sm:$0xff]
    %v140 = vld [vmem:[#allocation6 + $0x78] sm:$0xff]
    %v141 = vld [vmem:[#allocation6 + $0x80] sm:$0xff]
    %v142 = vld [vmem:[#allocation6 + $0x88] sm:$0xff]
    %v143 = vld [vmem:[#allocation6 + $0x90] sm:$0xff]
    %v144 = vld [vmem:[#allocation6 + $0x98] sm:$0xff]
    %v145 = vld [vmem:[#allocation6 + $0xa0] sm:$0xff]
    %v146 = vld [vmem:[#allocation6 + $0xa8] sm:$0xff]
    %v147 = vld [vmem:[#allocation6 + $0xb0] sm:$0xff]
    %v148 = vld [vmem:[#allocation6 + $0xb8] sm:$0xff]
    %v149 = vld [vmem:[#allocation6 + $0xc0] sm:$0xff]
    %v150 = vld [vmem:[#allocation6 + $0xc8] sm:$0xff]
    %v151 = vld [vmem:[#allocation6 + $0xd0] sm:$0xff]
    %v152 = vld [vmem:[#allocation6 + $0xd8] sm:$0xff]
    %v153 = vld [vmem:[#allocation6 + $0xe0] sm:$0xff]
    %v154 = vld [vmem:[#allocation6 + $0xe8] sm:$0xff]
    %v155 = vld [vmem:[#allocation6 + $0xf0] sm:$0xff]
    %v156 = vld [vmem:[#allocation6 + $0xf8] sm:$0xff]
    %v157 = vld [vmem:[#allocation6 + $0x100] sm:$0xff]
    %v158 = vld [vmem:[#allocation6 + $0x108] sm:$0xff]
    %v159 = vld [vmem:[#allocation6 + $0x110] sm:$0xff]
    %v160 = vld [vmem:[#allocation6 + $0x118] sm:$0xff]
    %v161 = vld [vmem:[#allocation6 + $0x120] sm:$0xff]
    %v162 = vld [vmem:[#allocation6 + $0x128] sm:$0xff]
    %v163 = vld [vmem:[#allocation6 + $0x130] sm:$0xff]
    %v164 = vld [vmem:[#allocation6 + $0x138] sm:$0xff]
    %v165 = vld [vmem:[#allocation6 + $0x140] sm:$0xff]
    %v166 = vld [vmem:[#allocation6 + $0x148] sm:$0xff]
    %v167 = vld [vmem:[#allocation6 + $0x150] sm:$0xff]
    %v168 = vld [vmem:[#allocation6 + $0x158] sm:$0xff]
    %v169 = vld [vmem:[#allocation6 + $0x160] sm:$0xff]
    %v170 = vld [vmem:[#allocation6 + $0x168] sm:$0xff]
    %v171 = vld [vmem:[#allocation6 + $0x170] sm:$0xff]
    %v172 = vld [vmem:[#allocation6 + $0x178] sm:$0xff]
    %v173 = vld [vmem:[#allocation6 + $0x180] sm:$0xff]
    %v174 = vld [vmem:[#allocation6 + $0x188] sm:$0xff]
    %v175 = vld [vmem:[#allocation6 + $0x190] sm:$0xff]
    %v176 = vld [vmem:[#allocation6 + $0x198] sm:$0xff]
    %v177 = vld [vmem:[#allocation6 + $0x1a0] sm:$0xff]
    %v178 = vld [vmem:[#allocation6 + $0x1a8] sm:$0xff]
    %v179 = vld [vmem:[#allocation6 + $0x1b0] sm:$0xff]
    %v180 = vld [vmem:[#allocation6 + $0x1b8] sm:$0xff]
    %v181 = vld [vmem:[#allocation6 + $0x1c0] sm:$0xff]
    %v182 = vld [vmem:[#allocation6 + $0x1c8] sm:$0xff]
    %v183 = vld [vmem:[#allocation6 + $0x1d0] sm:$0xff]
    %v184 = vld [vmem:[#allocation6 + $0x1d8] sm:$0xff]
    %v185 = vld [vmem:[#allocation6 + $0x1e0] sm:$0xff]
    %v186 = vld [vmem:[#allocation6 + $0x1e8] sm:$0xff]
    %v187 = vld [vmem:[#allocation6 + $0x1f0] sm:$0xff]
    %v188 = vld [vmem:[#allocation6 + $0x1f8] sm:$0xff]
    %v189 = vld [vmem:[#allocation6 + $0x200] sm:$0xff]
    %v190 = vld [vmem:[#allocation6 + $0x208] sm:$0xff]
    %v191 = vld [vmem:[#allocation6 + $0x210] sm:$0xff]
    %v192 = vld [vmem:[#allocation6 + $0x218] sm:$0xff]
    %v193 = vld [vmem:[#allocation6 + $0x220] sm:$0xff]
    %v194 = vld [vmem:[#allocation6 + $0x228] sm:$0xff]
    %v195 = vld [vmem:[#allocation6 + $0x230] sm:$0xff]
    %v196 = vld [vmem:[#allocation6 + $0x238] sm:$0xff]
    %v197 = vld [vmem:[#allocation6 + $0x240] sm:$0xff]
    %v198 = vld [vmem:[#allocation6 + $0x248] sm:$0xff]
    %v199 = vld [vmem:[#allocation6 + $0x250] sm:$0xff]
    %v200 = vld [vmem:[#allocation6 + $0x258] sm:$0xff]
    %v201 = vld [vmem:[#allocation6 + $0x260] sm:$0xff]
    %v202 = vld [vmem:[#allocation6 + $0x268] sm:$0xff]
    %v203 = vld [vmem:[#allocation6 + $0x270] sm:$0xff]
    %v204 = vld [vmem:[#allocation6 + $0x278] sm:$0xff]
    %v205 = vld [vmem:[#allocation6 + $0x280] sm:$0xff]
    %v206 = vld [vmem:[#allocation6 + $0x288] sm:$0xff]
    %v207 = vld [vmem:[#allocation6 + $0x290] sm:$0xff]
    %v208 = vld [vmem:[#allocation6 + $0x298] sm:$0xff]
    %v209 = vld [vmem:[#allocation6 + $0x2a0] sm:$0xff]
    %v210 = vld [vmem:[#allocation6 + $0x2a8] sm:$0xff]
    %v211 = vld [vmem:[#allocation6 + $0x2b0] sm:$0xff]
    %v212 = vld [vmem:[#allocation6 + $0x2b8] sm:$0xff]
    %v213 = vld [vmem:[#allocation6 + $0x2c0] sm:$0xff]
    %v214 = vld [vmem:[#allocation6 + $0x2c8] sm:$0xff]
    %v215 = vld [vmem:[#allocation6 + $0x2d0] sm:$0xff]
    %v216 = vld [vmem:[#allocation6 + $0x2d8] sm:$0xff]
    %v217 = vld [vmem:[#allocation6 + $0x2e0] sm:$0xff]
    %v218 = vld [vmem:[#allocation6 + $0x2e8] sm:$0xff]
    %v219 = vld [vmem:[#allocation6 + $0x2f0] sm:$0xff]
    %v220 = vld [vmem:[#allocation6 + $0x2f8] sm:$0xff]
    %v317 = vunpack.c.l.b16 %v125
    %v318 = vunpack.c.h.b16 %v125
    %v319 = vunpack.c.l.b16 %v126
    %v320 = vunpack.c.h.b16 %v126
    %v321 = vunpack.c.l.b16 %v127
    %v322 = vunpack.c.h.b16 %v127
    %v323 = vunpack.c.l.b16 %v128
    %v324 = vunpack.c.h.b16 %v128
    %v325 = vunpack.c.l.b16 %v129
    %v326 = vunpack.c.h.b16 %v129
    %v327 = vunpack.c.l.b16 %v130
    %v328 = vunpack.c.h.b16 %v130
    %v329 = vunpack.c.l.b16 %v131
    %v330 = vunpack.c.h.b16 %v131
    %v331 = vunpack.c.l.b16 %v132
    %v332 = vunpack.c.h.b16 %v132
    %v333 = vunpack.c.l.b16 %v133
    %v334 = vunpack.c.h.b16 %v133
    %v335 = vunpack.c.l.b16 %v134
    %v336 = vunpack.c.h.b16 %v134
    %v337 = vunpack.c.l.b16 %v135
    %v338 = vunpack.c.h.b16 %v135
    %v339 = vunpack.c.l.b16 %v136
    %v340 = vunpack.c.h.b16 %v136
    %v341 = vunpack.c.l.b16 %v137
    %v342 = vunpack.c.h.b16 %v137
    %v343 = vunpack.c.l.b16 %v138
    %v344 = vunpack.c.h.b16 %v138
    %v345 = vunpack.c.l.b16 %v139
    %v346 = vunpack.c.h.b16 %v139
    %v347 = vunpack.c.l.b16 %v140
    %v348 = vunpack.c.h.b16 %v140
    %v349 = vunpack.c.l.b16 %v141
    %v350 = vunpack.c.h.b16 %v141
    %v351 = vunpack.c.l.b16 %v142
    %v352 = vunpack.c.h.b16 %v142
    %v353 = vunpack.c.l.b16 %v143
    %v354 = vunpack.c.h.b16 %v143
    %v355 = vunpack.c.l.b16 %v144
    %v356 = vunpack.c.h.b16 %v144
    %v357 = vunpack.c.l.b16 %v145
    %v358 = vunpack.c.h.b16 %v145
    %v359 = vunpack.c.l.b16 %v146
    %v360 = vunpack.c.h.b16 %v146
    %v361 = vunpack.c.l.b16 %v147
    %v362 = vunpack.c.h.b16 %v147
    %v363 = vunpack.c.l.b16 %v148
    %v364 = vunpack.c.h.b16 %v148
    %v365 = vunpack.c.l.b16 %v149
    %v366 = vunpack.c.h.b16 %v149
    %v367 = vunpack.c.l.b16 %v150
    %v368 = vunpack.c.h.b16 %v150
    %v369 = vunpack.c.l.b16 %v151
    %v370 = vunpack.c.h.b16 %v151
    %v371 = vunpack.c.l.b16 %v152
    %v372 = vunpack.c.h.b16 %v152
    %v373 = vunpack.c.l.b16 %v153
    %v374 = vunpack.c.h.b16 %v153
    %v375 = vunpack.c.l.b16 %v154
    %v376 = vunpack.c.h.b16 %v154
    %v377 = vunpack.c.l.b16 %v155
    %v378 = vunpack.c.h.b16 %v155
    %v379 = vunpack.c.l.b16 %v156
    %v380 = vunpack.c.h.b16 %v156
    %v381 = vunpack.c.l.b16 %v157
    %v382 = vunpack.c.h.b16 %v157
    %v383 = vunpack.c.l.b16 %v158
    %v384 = vunpack.c.h.b16 %v158
    %v385 = vunpack.c.l.b16 %v159
    %v386 = vunpack.c.h.b16 %v159
    %v387 = vunpack.c.l.b16 %v160
    %v388 = vunpack.c.h.b16 %v160
    %v389 = vunpack.c.l.b16 %v161
    %v390 = vunpack.c.h.b16 %v161
    %v391 = vunpack.c.l.b16 %v162
    %v392 = vunpack.c.h.b16 %v162
    %v393 = vunpack.c.l.b16 %v163
    %v394 = vunpack.c.h.b16 %v163
    %v395 = vunpack.c.l.b16 %v164
    %v396 = vunpack.c.h.b16 %v164
    %v397 = vunpack.c.l.b16 %v165
    %v398 = vunpack.c.h.b16 %v165
    %v399 = vunpack.c.l.b16 %v166
    %v400 = vunpack.c.h.b16 %v166
    %v401 = vunpack.c.l.b16 %v167
    %v402 = vunpack.c.h.b16 %v167
    %v403 = vunpack.c.l.b16 %v168
    %v404 = vunpack.c.h.b16 %v168
    %v405 = vunpack.c.l.b16 %v169
    %v406 = vunpack.c.h.b16 %v169
    %v407 = vunpack.c.l.b16 %v170
    %v408 = vunpack.c.h.b16 %v170
    %v409 = vunpack.c.l.b16 %v171
    %v410 = vunpack.c.h.b16 %v171
    %v411 = vunpack.c.l.b16 %v172
    %v412 = vunpack.c.h.b16 %v172
    %v413 = vunpack.c.l.b16 %v173
    %v414 = vunpack.c.h.b16 %v173
    %v415 = vunpack.c.l.b16 %v174
    %v416 = vunpack.c.h.b16 %v174
    %v417 = vunpack.c.l.b16 %v175
    %v418 = vunpack.c.h.b16 %v175
    %v419 = vunpack.c.l.b16 %v176
    %v420 = vunpack.c.h.b16 %v176
    %v421 = vunpack.c.l.b16 %v177
    %v422 = vunpack.c.h.b16 %v177
    %v423 = vunpack.c.l.b16 %v178
    %v424 = vunpack.c.h.b16 %v178
    %v425 = vunpack.c.l.b16 %v179
    %v426 = vunpack.c.h.b16 %v179
    %v427 = vunpack.c.l.b16 %v180
    %v428 = vunpack.c.h.b16 %v180
    %v429 = vunpack.c.l.b16 %v181
    %v430 = vunpack.c.h.b16 %v181
    %v431 = vunpack.c.l.b16 %v182
    %v432 = vunpack.c.h.b16 %v182
    %v433 = vunpack.c.l.b16 %v183
    %v434 = vunpack.c.h.b16 %v183
    %v435 = vunpack.c.l.b16 %v184
    %v436 = vunpack.c.h.b16 %v184
    %v437 = vunpack.c.l.b16 %v185
    %v438 = vunpack.c.h.b16 %v185
    %v439 = vunpack.c.l.b16 %v186
    %v440 = vunpack.c.h.b16 %v186
    %v441 = vunpack.c.l.b16 %v187
    %v442 = vunpack.c.h.b16 %v187
    %v443 = vunpack.c.l.b16 %v188
    %v444 = vunpack.c.h.b16 %v188
    %v445 = vunpack.c.l.b16 %v189
    %v446 = vunpack.c.h.b16 %v189
    %v447 = vunpack.c.l.b16 %v190
    %v448 = vunpack.c.h.b16 %v190
    %v449 = vunpack.c.l.b16 %v191
    %v450 = vunpack.c.h.b16 %v191
    %v451 = vunpack.c.l.b16 %v192
    %v452 = vunpack.c.h.b16 %v192
    %v453 = vunpack.c.l.b16 %v193
    %v454 = vunpack.c.h.b16 %v193
    %v455 = vunpack.c.l.b16 %v194
    %v456 = vunpack.c.h.b16 %v194
    %v457 = vunpack.c.l.b16 %v195
    %v458 = vunpack.c.h.b16 %v195
    %v459 = vunpack.c.l.b16 %v196
    %v460 = vunpack.c.h.b16 %v196
    %v461 = vunpack.c.l.b16 %v197
    %v462 = vunpack.c.h.b16 %v197
    %v463 = vunpack.c.l.b16 %v198
    %v464 = vunpack.c.h.b16 %v198
    %v465 = vunpack.c.l.b16 %v199
    %v466 = vunpack.c.h.b16 %v199
    %v467 = vunpack.c.l.b16 %v200
    %v468 = vunpack.c.h.b16 %v200
    %v469 = vunpack.c.l.b16 %v201
    %v470 = vunpack.c.h.b16 %v201
    %v471 = vunpack.c.l.b16 %v202
    %v472 = vunpack.c.h.b16 %v202
    %v473 = vunpack.c.l.b16 %v203
    %v474 = vunpack.c.h.b16 %v203
    %v475 = vunpack.c.l.b16 %v204
    %v476 = vunpack.c.h.b16 %v204
    %v477 = vunpack.c.l.b16 %v205
    %v478 = vunpack.c.h.b16 %v205
    %v479 = vunpack.c.l.b16 %v206
    %v480 = vunpack.c.h.b16 %v206
    %v481 = vunpack.c.l.b16 %v207
    %v482 = vunpack.c.h.b16 %v207
    %v483 = vunpack.c.l.b16 %v208
    %v484 = vunpack.c.h.b16 %v208
    %v485 = vunpack.c.l.b16 %v209
    %v486 = vunpack.c.h.b16 %v209
    %v487 = vunpack.c.l.b16 %v210
    %v488 = vunpack.c.h.b16 %v210
    %v489 = vunpack.c.l.b16 %v211
    %v490 = vunpack.c.h.b16 %v211
    %v491 = vunpack.c.l.b16 %v212
    %v492 = vunpack.c.h.b16 %v212
    %v493 = vunpack.c.l.b16 %v213
    %v494 = vunpack.c.h.b16 %v213
    %v495 = vunpack.c.l.b16 %v214
    %v496 = vunpack.c.h.b16 %v214
    %v497 = vunpack.c.l.b16 %v215
    %v498 = vunpack.c.h.b16 %v215
    %v499 = vunpack.c.l.b16 %v216
    %v500 = vunpack.c.h.b16 %v216
    %v501 = vunpack.c.l.b16 %v217
    %v502 = vunpack.c.h.b16 %v217
    %v503 = vunpack.c.l.b16 %v218
    %v504 = vunpack.c.h.b16 %v218
    %v505 = vunpack.c.l.b16 %v219
    %v506 = vunpack.c.h.b16 %v219
    %v507 = vunpack.c.l.b16 %v220
    %v508 = vunpack.c.h.b16 %v220
    %v509 = vpack.c.b16 %v323, %v317
    %v510 = vpack.c.b16 %v324, %v318
    %v511 = vpack.c.b16 %v325, %v319
    %v512 = vpack.c.b16 %v326, %v320
    %v513 = vpack.c.b16 %v327, %v321
    %v514 = vpack.c.b16 %v328, %v322
    %v515 = vpack.c.b16 %v335, %v329
    %v516 = vpack.c.b16 %v336, %v330
    %v517 = vpack.c.b16 %v337, %v331
    %v518 = vpack.c.b16 %v338, %v332
    %v519 = vpack.c.b16 %v339, %v333
    %v520 = vpack.c.b16 %v340, %v334
    %v521 = vpack.c.b16 %v347, %v341
    %v522 = vpack.c.b16 %v348, %v342
    %v523 = vpack.c.b16 %v349, %v343
    %v524 = vpack.c.b16 %v350, %v344
    %v525 = vpack.c.b16 %v351, %v345
    %v526 = vpack.c.b16 %v352, %v346
    %v527 = vpack.c.b16 %v359, %v353
    %v528 = vpack.c.b16 %v360, %v354
    %v529 = vpack.c.b16 %v361, %v355
    %v530 = vpack.c.b16 %v362, %v356
    %v531 = vpack.c.b16 %v363, %v357
    %v532 = vpack.c.b16 %v364, %v358
    %v533 = vpack.c.b16 %v371, %v365
    %v534 = vpack.c.b16 %v372, %v366
    %v535 = vpack.c.b16 %v373, %v367
    %v536 = vpack.c.b16 %v374, %v368
    %v537 = vpack.c.b16 %v375, %v369
    %v538 = vpack.c.b16 %v376, %v370
    %v539 = vpack.c.b16 %v383, %v377
    %v540 = vpack.c.b16 %v384, %v378
    %v541 = vpack.c.b16 %v385, %v379
    %v542 = vpack.c.b16 %v386, %v380
    %v543 = vpack.c.b16 %v387, %v381
    %v544 = vpack.c.b16 %v388, %v382
    %v545 = vpack.c.b16 %v395, %v389
    %v546 = vpack.c.b16 %v396, %v390
    %v547 = vpack.c.b16 %v397, %v391
    %v548 = vpack.c.b16 %v398, %v392
    %v549 = vpack.c.b16 %v399, %v393
    %v550 = vpack.c.b16 %v400, %v394
    %v551 = vpack.c.b16 %v407, %v401
    %v552 = vpack.c.b16 %v408, %v402
    %v553 = vpack.c.b16 %v409, %v403
    %v554 = vpack.c.b16 %v410, %v404
    %v555 = vpack.c.b16 %v411, %v405
    %v556 = vpack.c.b16 %v412, %v406
    %v557 = vpack.c.b16 %v419, %v413
    %v558 = vpack.c.b16 %v420, %v414
    %v559 = vpack.c.b16 %v421, %v415
    %v560 = vpack.c.b16 %v422, %v416
    %v561 = vpack.c.b16 %v423, %v417
    %v562 = vpack.c.b16 %v424, %v418
    %v563 = vpack.c.b16 %v431, %v425
    %v564 = vpack.c.b16 %v432, %v426
    %v565 = vpack.c.b16 %v433, %v427
    %v566 = vpack.c.b16 %v434, %v428
    %v567 = vpack.c.b16 %v435, %v429
    %v568 = vpack.c.b16 %v436, %v430
    %v569 = vpack.c.b16 %v443, %v437
    %v570 = vpack.c.b16 %v444, %v438
    %v571 = vpack.c.b16 %v445, %v439
    %v572 = vpack.c.b16 %v446, %v440
    %v573 = vpack.c.b16 %v447, %v441
    %v574 = vpack.c.b16 %v448, %v442
    %v575 = vpack.c.b16 %v455, %v449
    %v576 = vpack.c.b16 %v456, %v450
    %v577 = vpack.c.b16 %v457, %v451
    %v578 = vpack.c.b16 %v458, %v452
    %v579 = vpack.c.b16 %v459, %v453
    %v580 = vpack.c.b16 %v460, %v454
    %v581 = vpack.c.b16 %v467, %v461
    %v582 = vpack.c.b16 %v468, %v462
    %v583 = vpack.c.b16 %v469, %v463
    %v584 = vpack.c.b16 %v470, %v464
    %v585 = vpack.c.b16 %v471, %v465
    %v586 = vpack.c.b16 %v472, %v466
    %v587 = vpack.c.b16 %v479, %v473
    %v588 = vpack.c.b16 %v480, %v474
    %v589 = vpack.c.b16 %v481, %v475
    %v590 = vpack.c.b16 %v482, %v476
    %v591 = vpack.c.b16 %v483, %v477
    %v592 = vpack.c.b16 %v484, %v478
    %v593 = vpack.c.b16 %v491, %v485
    %v594 = vpack.c.b16 %v492, %v486
    %v595 = vpack.c.b16 %v493, %v487
    %v596 = vpack.c.b16 %v494, %v488
    %v597 = vpack.c.b16 %v495, %v489
    %v598 = vpack.c.b16 %v496, %v490
    %v599 = vpack.c.b16 %v503, %v497
    %v600 = vpack.c.b16 %v504, %v498
    %v601 = vpack.c.b16 %v505, %v499
    %v602 = vpack.c.b16 %v506, %v500
    %v603 = vpack.c.b16 %v507, %v501
    %v604 = vpack.c.b16 %v508, %v502
    %701 = vmatprep.subr.bf16.mxu0 %v510
    %702 = vmatpush1.bf16.msra.mxu0 %v509
    %703 = vmatprep.subr.bf16.mxu0 %v516
    %704 = vmatpush1.bf16.msra.mxu0 %v515
    %705 = vmatprep.subr.bf16.mxu0 %v522
    %706 = vmatpush1.bf16.msra.mxu0 %v521
    %707 = vmatprep.subr.bf16.mxu0 %v528
    %708 = vmatpush1.bf16.msra.mxu0 %v527
    %709 = vmatprep.subr.bf16.mxu0 %v534
    %710 = vmatpush1.bf16.msra.mxu0 %v533
    %711 = vmatprep.subr.bf16.mxu0 %v540
    %712 = vmatpush1.bf16.msra.mxu0 %v539
    %713 = vmatprep.subr.bf16.mxu0 %v546
    %714 = vmatpush1.bf16.msra.mxu0 %v545
    %715 = vmatprep.subr.bf16.mxu0 %v552
    %716 = vmatpush1.bf16.msra.mxu0 %v551
    %717 = vmatprep.subr.bf16.mxu0 %v558
    %718 = vmatpush1.bf16.msra.mxu0 %v557
    %719 = vmatprep.subr.bf16.mxu0 %v564
    %720 = vmatpush1.bf16.msra.mxu0 %v563
    %721 = vmatprep.subr.bf16.mxu0 %v570
    %722 = vmatpush1.bf16.msra.mxu0 %v569
    %723 = vmatprep.subr.bf16.mxu0 %v576
    %724 = vmatpush1.bf16.msra.mxu0 %v575
    %725 = vmatprep.subr.bf16.mxu0 %v582
    %726 = vmatpush1.bf16.msra.mxu0 %v581
    %727 = vmatprep.subr.bf16.mxu0 %v588
    %728 = vmatpush1.bf16.msra.mxu0 %v587
    %729 = vmatprep.subr.bf16.mxu0 %v594
    %730 = vmatpush1.bf16.msra.mxu0 %v593
    %731 = vmatprep.subr.bf16.mxu0 %v600
    %732 = vmatpush1.bf16.msra.mxu0 %v599
    %733 = vmatprep.mubr.bf16.mxu0 %v124
    %734 = vmatmul.mubr.bf16.gmra.mrb[0].mxu0 %v123
    %v735 = vpop.f32.mrb[0].mxu0
    %v736 = vadd.f32 0.0, %v735
    %v737 = vpop.f32.mrb[0].mxu0
    %v738 = vadd.f32 0.0, %v737
    %v739 = vpop.f32.mrb[0].mxu0
    %v740 = vadd.f32 0.0, %v739
    %v741 = vpop.f32.mrb[0].mxu0
    %v742 = vadd.f32 0.0, %v741
    %743 = vdwg.mxu0
    %744 = vmatprep.subr.bf16.mxu0 %v512
    %745 = vmatpush1.bf16.msra.mxu0 %v511
    %746 = vmatprep.subr.bf16.mxu0 %v518
    %747 = vmatpush1.bf16.msra.mxu0 %v517
    %748 = vmatprep.subr.bf16.mxu0 %v524
    %749 = vmatpush1.bf16.msra.mxu0 %v523
    %750 = vmatprep.subr.bf16.mxu0 %v530
    %751 = vmatpush1.bf16.msra.mxu0 %v529
    %752 = vmatprep.subr.bf16.mxu0 %v536
    %753 = vmatpush1.bf16.msra.mxu0 %v535
    %754 = vmatprep.subr.bf16.mxu0 %v542
    %755 = vmatpush1.bf16.msra.mxu0 %v541
    %756 = vmatprep.subr.bf16.mxu0 %v548
    %757 = vmatpush1.bf16.msra.mxu0 %v547
    %758 = vmatprep.subr.bf16.mxu0 %v554
    %759 = vmatpush1.bf16.msra.mxu0 %v553
    %760 = vmatprep.subr.bf16.mxu0 %v560
    %761 = vmatpush1.bf16.msra.mxu0 %v559
    %762 = vmatprep.subr.bf16.mxu0 %v566
    %763 = vmatpush1.bf16.msra.mxu0 %v565
    %764 = vmatprep.subr.bf16.mxu0 %v572
    %765 = vmatpush1.bf16.msra.mxu0 %v571
    %766 = vmatprep.subr.bf16.mxu0 %v578
    %767 = vmatpush1.bf16.msra.mxu0 %v577
    %768 = vmatprep.subr.bf16.mxu0 %v584
    %769 = vmatpush1.bf16.msra.mxu0 %v583
    %770 = vmatprep.subr.bf16.mxu0 %v590
    %771 = vmatpush1.bf16.msra.mxu0 %v589
    %772 = vmatprep.subr.bf16.mxu0 %v596
    %773 = vmatpush1.bf16.msra.mxu0 %v595
    %774 = vmatprep.subr.bf16.mxu0 %v602
    %775 = vmatpush1.bf16.msra.mxu0 %v601
    %776 = vmatprep.mubr.bf16.mxu0 %v124
    %777 = vmatmul.mubr.bf16.gmra.mrb[0].mxu0 %v123
    %v778 = vpop.f32.mrb[0].mxu0
    %v779 = vadd.f32 0.0, %v778
    %v780 = vpop.f32.mrb[0].mxu0
    %v781 = vadd.f32 0.0, %v780
    %v782 = vpop.f32.mrb[0].mxu0
    %v783 = vadd.f32 0.0, %v782
    %v784 = vpop.f32.mrb[0].mxu0
    %v785 = vadd.f32 0.0, %v784
    %786 = vdwg.mxu0
    %787 = vmatprep.subr.bf16.mxu0 %v514
    %788 = vmatpush1.bf16.msra.mxu0 %v513
    %789 = vmatprep.subr.bf16.mxu0 %v520
    %790 = vmatpush1.bf16.msra.mxu0 %v519
    %791 = vmatprep.subr.bf16.mxu0 %v526
    %792 = vmatpush1.bf16.msra.mxu0 %v525
    %793 = vmatprep.subr.bf16.mxu0 %v532
    %794 = vmatpush1.bf16.msra.mxu0 %v531
    %795 = vmatprep.subr.bf16.mxu0 %v538
    %796 = vmatpush1.bf16.msra.mxu0 %v537
    %797 = vmatprep.subr.bf16.mxu0 %v544
    %798 = vmatpush1.bf16.msra.mxu0 %v543
    %799 = vmatprep.subr.bf16.mxu0 %v550
    %800 = vmatpush1.bf16.msra.mxu0 %v549
    %801 = vmatprep.subr.bf16.mxu0 %v556
    %802 = vmatpush1.bf16.msra.mxu0 %v555
    %803 = vmatprep.subr.bf16.mxu0 %v562
    %804 = vmatpush1.bf16.msra.mxu0 %v561
    %805 = vmatprep.subr.bf16.mxu0 %v568
    %806 = vmatpush1.bf16.msra.mxu0 %v567
    %807 = vmatprep.subr.bf16.mxu0 %v574
    %808 = vmatpush1.bf16.msra.mxu0 %v573
    %809 = vmatprep.subr.bf16.mxu0 %v580
    %810 = vmatpush1.bf16.msra.mxu0 %v579
    %811 = vmatprep.subr.bf16.mxu0 %v586
    %812 = vmatpush1.bf16.msra.mxu0 %v585
    %813 = vmatprep.subr.bf16.mxu0 %v592
    %814 = vmatpush1.bf16.msra.mxu0 %v591
    %815 = vmatprep.subr.bf16.mxu0 %v598
    %816 = vmatpush1.bf16.msra.mxu0 %v597
    %817 = vmatprep.subr.bf16.mxu0 %v604
    %818 = vmatpush1.bf16.msra.mxu0 %v603
    %819 = vmatprep.mubr.bf16.mxu0 %v124
    %820 = vmatmul.mubr.bf16.gmra.mrb[0].mxu0 %v123
    %v821 = vpop.f32.mrb[0].mxu0
    %v822 = vadd.f32 0.0, %v821
    %v823 = vpop.f32.mrb[0].mxu0
    %v824 = vadd.f32 0.0, %v823
    %v825 = vpop.f32.mrb[0].mxu0
    %v826 = vadd.f32 0.0, %v825
    %v827 = vpop.f32.mrb[0].mxu0
    %v828 = vadd.f32 0.0, %v827
    %829 = vdwg.mxu0
    %v830 = vpack.c.bf16 %v740, %v736
    %v831 = vpack.c.bf16 %v742, %v738
    %v832 = vpack.c.bf16 %v783, %v779
    %v833 = vpack.c.bf16 %v785, %v781
    %v834 = vpack.c.bf16 %v826, %v822
    %v835 = vpack.c.bf16 %v828, %v824
    %v842 = vunpack.c.l.b16 %v830
    %v843 = vunpack.c.l.b16 %v831
    %v844 = vunpack.c.l.b16 %v832
    %v845 = vunpack.c.l.b16 %v833
    %v846 = vunpack.c.l.b16 %v834
    %v847 = vunpack.c.l.b16 %v835
    %v848 = vunpack.c.h.b16 %v830
    %v849 = vunpack.c.h.b16 %v831
    %v850 = vunpack.c.h.b16 %v832
    %v851 = vunpack.c.h.b16 %v833
    %v852 = vunpack.c.h.b16 %v834
    %v853 = vunpack.c.h.b16 %v835
    %v854 = vpack.c.b16 %v843, %v842
    %v855 = vpack.c.b16 %v845, %v844
    %v856 = vpack.c.b16 %v847, %v846
    %v857 = vpack.c.b16 %v849, %v848
    %v858 = vpack.c.b16 %v851, %v850
    %v859 = vpack.c.b16 %v853, %v852
    %866 = vst [vmem:[%s4] sm:$0xff] %v854
    %867 = vst [vmem:[%s4 + $0x8] sm:$0xff] %v855
    %868 = vst [vmem:[%s4 + $0x10] sm:$0xff] %v856
    %869 = vst [vmem:[%s4 + $0x18] sm:$0xff] %v857
    %870 = vst [vmem:[%s4 + $0x20] sm:$0xff] %v858
    %871 = vst [vmem:[%s4 + $0x28] sm:$0xff] %v859
    // Predicated region
    $region30: #{gpt_forward.26} parent=1 // pred_check
      _
    $region31: #{gpt_forward.26} parent=1 // pred_check_branch
      %873 = sbr.rel (0) target = $region33
    $region32: #{gpt_forward.26} parent=1 // pred_region
      _
    $region33: #{gpt_forward.26} parent=1 // pred_fallthru
      _
    // Predicated region
    $region34: #{gpt_forward.26} parent=1 // pred_check
      _
    $region35: #{gpt_forward.26} parent=1 // pred_check_branch
      %875 = sbr.rel (0) target = $region37
    $region36: #{gpt_forward.26} parent=1 // pred_region
      _
    $region37: #{gpt_forward.26} parent=1 // pred_fallthru
      _
    %876 = vsyncpa [#allocation3], 1
    %877 = vsyncpa [#allocation5], 1

// kernel: gpt_forward.27
$region0: #{gpt_forward.27}
  #allocation0 [shape = 'u32[]', space=smem, size = 0x4, offset = 0x4, fixed_abs, tag = 'smem constant byte address 0x4 - core index']
  #allocation1 [shape = 'u32[144,128]{1,0:T(1,128)}', space=vmem, size = 0x12000, scoped, tag = 'internal scratch']
  %s0 = inlined_call_operand.vmem [shape: f32[2,8,256], index: 0, kind: input, shape index: {}]
  %s1 = inlined_call_operand.vmem [shape: bf16[2,8,768], index: 1, kind: input, shape index: {}, may-alias: {1,2}]
  %s2 = inlined_call_operand.vmem [shape: bf16[2,8,768], index: 2, kind: input, shape index: {}, may-alias: {1,2}]
  %s3 = inlined_call_operand.vmem [shape: f32[8,8], index: 3, kind: input, shape index: {}]
  %s4 = inlined_call_operand.hbm [shape: bf16[256,256], index: 4, kind: input, shape index: {}]
  %s5 = inlined_call_operand.hbm [shape: f32[1,256], index: 5, kind: input, shape index: {}]
  %s6 = inlined_call_operand.hbm [shape: f32[1,256], index: 6, kind: input, shape index: {}]
  %s7 = inlined_call_operand.hbm [shape: f32[1,256], index: 7, kind: input, shape index: {}]
  %s8 = inlined_call_operand.hbm [shape: bf16[256,1024], index: 8, kind: input, shape index: {}]
  %s9 = inlined_call_operand.hbm [shape: f32[1,1024], index: 9, kind: input, shape index: {}]
  %s10 = inlined_call_operand.hbm [shape: bf16[1024,256], index: 10, kind: input, shape index: {}]
  %s11 = inlined_call_operand.hbm [shape: f32[1,256], index: 11, kind: input, shape index: {}]
  %s12 = inlined_call_operand.vmem [shape: f32[2,8,256], index: 12, kind: output, shape index: {}]
  %s13 = sld [smem:[#allocation0]]
  $region113: #{gpt_forward.27} parent=0
    _
  %s15 = ssub.s32 1, %s13
  %s16 = scalar_select 0, %s15, %s13
  $region1: #{gpt_forward.27} parent=0
    #allocation2 [shape = 'u8[131072]{0}', space=vmem, size = 0x20000, scoped, tag = 'input window, operand 4, single buffered']
    #allocation3 [shape = 's32[2]{0}', space=sflag, size = 0x8, scoped, tag = 'scoped memory for gpt_forward.27']
    #allocation4 [shape = 'u8[1024]{0}', space=vmem, size = 0x400, scoped, tag = 'input window, operand 5, single buffered']
    #allocation5 [shape = 's32[1]{0}', space=sflag, size = 0x4, scoped, tag = 'scoped memory for gpt_forward.27']
    #allocation6 [shape = 'u8[1024]{0}', space=vmem, size = 0x400, scoped, tag = 'input window, operand 6, single buffered']
    #allocation7 [shape = 'u8[1024]{0}', space=vmem, size = 0x400, scoped, tag = 'input window, operand 7, single buffered']
    #allocation8 [shape = 's32[1]{0}', space=sflag, size = 0x4, scoped, tag = 'scoped memory for gpt_forward.27']
    #allocation9 [shape = 'u8[524288]{0}', space=vmem, size = 0x80000, scoped, tag = 'input window, operand 8, single buffered']
    #allocation10 [shape = 'u8[4096]{0}', space=vmem, size = 0x1000, scoped, tag = 'input window, operand 9, single buffered']
    #allocation11 [shape = 's32[1]{0}', space=sflag, size = 0x4, scoped, tag = 'scoped memory for gpt_forward.27']
    #allocation12 [shape = 'u8[524288]{0}', space=vmem, size = 0x80000, scoped, tag = 'input window, operand 10, single buffered']
    #allocation13 [shape = 'u8[1024]{0}', space=vmem, size = 0x400, scoped, tag = 'input window, operand 11, single buffered']
    #allocation14 [shape = 's32[1]{0}', space=sflag, size = 0x4, scoped, tag = 'scoped memory for gpt_forward.27']
    %17 = vsyncpa [#allocation3], 0
    %18 = vsyncpa [#allocation5], 0
    %19 = vsyncpa [#allocation8], 0
    %20 = vsyncpa [#allocation11], 0
    %21 = vsyncpa [#allocation14], 0
    loop: start=0, step=1, limit=4
    $region2: #{gpt_forward.27} parent=1 // loop_pre_header
      _
    $region3: #{gpt_forward.27} parent=1 // loop_header
      %s23 = sphi 0, %s27
      %p24 = scmp.ge.s32.totalorder %s23, 4
      %s30 = sphi 0, %s42
      %s31 = sphi 0, %s38
      %s32 = sphi 0, %s30
      %s33 = sphi 0, %s31
      %s34 = sphi 0, %s32
      %s35 = sphi 0, %s33
      %s47 = sphi 0, %s49
      %s50 = sphi 0, %s47
      %s51 = sphi 0, %s50
      %s67 = sphi 0, %s51
      %s75 = sphi 0, %s77
      %s78 = sphi 0, %s75
      %s79 = sphi 0, %s78
      %s95 = sphi 0, %s79
      %s101 = sphi 0, %s103
      %s104 = sphi 0, %s101
      %s105 = sphi 0, %s104
      %s121 = sphi 0, %s105
      %s127 = sphi 0, %s129
      %s130 = sphi 0, %s127
      %s131 = sphi 0, %s130
      %s147 = sphi 0, %s131
      %s151 = sphi 0, %s151
      %s153 = sphi 0, %s151
      %s154 = sphi 0, %s153
      %s168 = sphi 0, %s154
      %s172 = sphi 0, %s172
      %s174 = sphi 0, %s172
      %s175 = sphi 0, %s174
      %s189 = sphi 0, %s175
      %s193 = sphi 0, %s193
      %s195 = sphi 0, %s193
      %s196 = sphi 0, %s195
      %s210 = sphi 0, %s196
      %s214 = sphi 0, %s214
      %s216 = sphi 0, %s214
      %s217 = sphi 0, %s216
      %s231 = sphi 0, %s217
      %s235 = sphi 0, %s235
      %s237 = sphi 0, %s235
      %s238 = sphi 0, %s237
      %s252 = sphi 0, %s238
      %s256 = sphi 0, %s256
      %s258 = sphi 0, %s256
      %s259 = sphi 0, %s258
      %s273 = sphi 0, %s259
      %s277 = sphi 0, %s277
      %s279 = sphi 0, %s277
      %s280 = sphi 0, %s279
      %s294 = sphi 0, %s280
      %s298 = sphi 0, %s298
      %s300 = sphi 0, %s298
      %s301 = sphi 0, %s300
      %s315 = sphi 0, %s301
      %s323 = sphi 0, %s325
      %s326 = sphi 0, %s323
      %s327 = sphi 0, %s326
      %s343 = sphi 0, %s327
    $region4: #{gpt_forward.27} parent=1 // loop_header_branch
      %26 = sbr.rel (%p24) target = $region8
    $region5: #{gpt_forward.27} parent=1 // loop_body
      %s28 = ssub.s32 %s23, 1
      %s29 = ssub.s32 %s23, 2
      %s36 = sadd.s32 1, %s31
      %p37 = scmp.ge.s32.totalorder %s36, 1
      %s38 = scalar_select %p37, 0, %s36
      %s39 = sadd.s32 1, %s30
      %s40 = scalar_select %p37, %s39, %s30
      %p41 = scmp.ge.s32.totalorder %s40, 2
      %s42 = scalar_select %p41, 0, %s40
      %s43 = ssub.s32 %s30, %s42
      %s44 = ssub.s32 %s31, %s38
      %s45 = sor.u32 %s43, %s44
      %p46 = scmp.eq.s32.totalorder %s45, 0
      %s48 = sadd.s32 %s47, 1
      %s49 = scalar_select %p46, %s47, %s48
      %p52 = pneg %p46
      %p53 = scmp.eq.s32.totalorder %s23, 1
      %p54 = por %p52, %p53
      %p55 = scmp.ne.s32.totalorder %s47, %s50
      %p56 = scmp.eq.s32.totalorder %s23, 0
      %p57 = por %p55, %p56
      %p58 = scmp.ne.s32.totalorder %s47, %s50
      %p59 = scmp.eq.s32.totalorder %s28, 1
      %p60 = por %p58, %p59
      %p61 = scmp.ne.s32.totalorder %s50, %s51
      %p62 = scmp.eq.s32.totalorder %s28, 0
      %p63 = por %p61, %p62
      %p64 = scmp.ne.s32.totalorder %s50, %s51
      %p65 = scmp.eq.s32.totalorder %s29, 1
      %p66 = por %p64, %p65
      %p68 = scmp.ne.s32.totalorder %s51, %s67
      %p69 = scmp.eq.s32.totalorder %s29, 0
      %p70 = por %p68, %p69
      %s71 = ssub.s32 %s30, %s42
      %s72 = ssub.s32 %s31, %s38
      %s73 = sor.u32 %s71, %s72
      %p74 = scmp.eq.s32.totalorder %s73, 0
      %s76 = sadd.s32 %s75, 1
      %s77 = scalar_select %p74, %s75, %s76
      %p80 = pneg %p74
      %p81 = scmp.eq.s32.totalorder %s23, 1
      %p82 = por %p80, %p81
      %p83 = scmp.ne.s32.totalorder %s75, %s78
      %p84 = scmp.eq.s32.totalorder %s23, 0
      %p85 = por %p83, %p84
      %p86 = scmp.ne.s32.totalorder %s75, %s78
      %p87 = scmp.eq.s32.totalorder %s28, 1
      %p88 = por %p86, %p87
      %p89 = scmp.ne.s32.totalorder %s78, %s79
      %p90 = scmp.eq.s32.totalorder %s28, 0
      %p91 = por %p89, %p90
      %p92 = scmp.ne.s32.totalorder %s78, %s79
      %p93 = scmp.eq.s32.totalorder %s29, 1
      %p94 = por %p92, %p93
      %p96 = scmp.ne.s32.totalorder %s79, %s95
      %p97 = scmp.eq.s32.totalorder %s29, 0
      %p98 = por %p96, %p97
      %s99 = ssub.s32 %s30, %s42
      %p100 = scmp.eq.s32.totalorder %s99, 0
      %s102 = sadd.s32 %s101, 1
      %s103 = scalar_select %p100, %s101, %s102
      %p106 = pneg %p100
      %p107 = scmp.eq.s32.totalorder %s23, 1
      %p108 = por %p106, %p107
      %p109 = scmp.ne.s32.totalorder %s101, %s104
      %p110 = scmp.eq.s32.totalorder %s23, 0
      %p111 = por %p109, %p110
      %p112 = scmp.ne.s32.totalorder %s101, %s104
      %p113 = scmp.eq.s32.totalorder %s28, 1
      %p114 = por %p112, %p113
      %p115 = scmp.ne.s32.totalorder %s104, %s105
      %p116 = scmp.eq.s32.totalorder %s28, 0
      %p117 = por %p115, %p116
      %p118 = scmp.ne.s32.totalorder %s104, %s105
      %p119 = scmp.eq.s32.totalorder %s29, 1
      %p120 = por %p118, %p119
      %p122 = scmp.ne.s32.totalorder %s105, %s121
      %p123 = scmp.eq.s32.totalorder %s29, 0
      %p124 = por %p122, %p123
      %s125 = ssub.s32 %s31, %s38
      %p126 = scmp.eq.s32.totalorder %s125, 0
      %s128 = sadd.s32 %s127, 1
      %s129 = scalar_select %p126, %s127, %s128
      %p132 = pneg %p126
      %p133 = scmp.eq.s32.totalorder %s23, 1
      %p134 = por %p132, %p133
      %p135 = scmp.ne.s32.totalorder %s127, %s130
      %p136 = scmp.eq.s32.totalorder %s23, 0
      %p137 = por %p135, %p136
      %p138 = scmp.ne.s32.totalorder %s127, %s130
      %p139 = scmp.eq.s32.totalorder %s28, 1
      %p140 = por %p138, %p139
      %p141 = scmp.ne.s32.totalorder %s130, %s131
      %p142 = scmp.eq.s32.totalorder %s28, 0
      %p143 = por %p141, %p142
      %p144 = scmp.ne.s32.totalorder %s130, %s131
      %p145 = scmp.eq.s32.totalorder %s29, 1
      %p146 = por %p144, %p145
      %p148 = scmp.ne.s32.totalorder %s131, %s147
      %p149 = scmp.eq.s32.totalorder %s29, 0
      %p150 = por %p148, %p149
      %s152 = sadd.s32 %s151, 1
      %p155 = scmp.eq.s32.totalorder %s23, 1
      %p156 = scmp.ne.s32.totalorder %s151, %s153
      %p157 = scmp.eq.s32.totalorder %s23, 0
      %p158 = por %p156, %p157
      %p159 = scmp.ne.s32.totalorder %s151, %s153
      %p160 = scmp.eq.s32.totalorder %s28, 1
      %p161 = por %p159, %p160
      %p162 = scmp.ne.s32.totalorder %s153, %s154
      %p163 = scmp.eq.s32.totalorder %s28, 0
      %p164 = por %p162, %p163
      %p165 = scmp.ne.s32.totalorder %s153, %s154
      %p166 = scmp.eq.s32.totalorder %s29, 1
      %p167 = por %p165, %p166
      %p169 = scmp.ne.s32.totalorder %s154, %s168
      %p170 = scmp.eq.s32.totalorder %s29, 0
      %p171 = por %p169, %p170
      %s173 = sadd.s32 %s172, 1
      %p176 = scmp.eq.s32.totalorder %s23, 1
      %p177 = scmp.ne.s32.totalorder %s172, %s174
      %p178 = scmp.eq.s32.totalorder %s23, 0
      %p179 = por %p177, %p178
      %p180 = scmp.ne.s32.totalorder %s172, %s174
      %p181 = scmp.eq.s32.totalorder %s28, 1
      %p182 = por %p180, %p181
      %p183 = scmp.ne.s32.totalorder %s174, %s175
      %p184 = scmp.eq.s32.totalorder %s28, 0
      %p185 = por %p183, %p184
      %p186 = scmp.ne.s32.totalorder %s174, %s175
      %p187 = scmp.eq.s32.totalorder %s29, 1
      %p188 = por %p186, %p187
      %p190 = scmp.ne.s32.totalorder %s175, %s189
      %p191 = scmp.eq.s32.totalorder %s29, 0
      %p192 = por %p190, %p191
      %s194 = sadd.s32 %s193, 1
      %p197 = scmp.eq.s32.totalorder %s23, 1
      %p198 = scmp.ne.s32.totalorder %s193, %s195
      %p199 = scmp.eq.s32.totalorder %s23, 0
      %p200 = por %p198, %p199
      %p201 = scmp.ne.s32.totalorder %s193, %s195
      %p202 = scmp.eq.s32.totalorder %s28, 1
      %p203 = por %p201, %p202
      %p204 = scmp.ne.s32.totalorder %s195, %s196
      %p205 = scmp.eq.s32.totalorder %s28, 0
      %p206 = por %p204, %p205
      %p207 = scmp.ne.s32.totalorder %s195, %s196
      %p208 = scmp.eq.s32.totalorder %s29, 1
      %p209 = por %p207, %p208
      %p211 = scmp.ne.s32.totalorder %s196, %s210
      %p212 = scmp.eq.s32.totalorder %s29, 0
      %p213 = por %p211, %p212
      %s215 = sadd.s32 %s214, 1
      %p218 = scmp.eq.s32.totalorder %s23, 1
      %p219 = scmp.ne.s32.totalorder %s214, %s216
      %p220 = scmp.eq.s32.totalorder %s23, 0
      %p221 = por %p219, %p220
      %p222 = scmp.ne.s32.totalorder %s214, %s216
      %p223 = scmp.eq.s32.totalorder %s28, 1
      %p224 = por %p222, %p223
      %p225 = scmp.ne.s32.totalorder %s216, %s217
      %p226 = scmp.eq.s32.totalorder %s28, 0
      %p227 = por %p225, %p226
      %p228 = scmp.ne.s32.totalorder %s216, %s217
      %p229 = scmp.eq.s32.totalorder %s29, 1
      %p230 = por %p228, %p229
      %p232 = scmp.ne.s32.totalorder %s217, %s231
      %p233 = scmp.eq.s32.totalorder %s29, 0
      %p234 = por %p232, %p233
      %s236 = sadd.s32 %s235, 1
      %p239 = scmp.eq.s32.totalorder %s23, 1
      %p240 = scmp.ne.s32.totalorder %s235, %s237
      %p241 = scmp.eq.s32.totalorder %s23, 0
      %p242 = por %p240, %p241
      %p243 = scmp.ne.s32.totalorder %s235, %s237
      %p244 = scmp.eq.s32.totalorder %s28, 1
      %p245 = por %p243, %p244
      %p246 = scmp.ne.s32.totalorder %s237, %s238
      %p247 = scmp.eq.s32.totalorder %s28, 0
      %p248 = por %p246, %p247
      %p249 = scmp.ne.s32.totalorder %s237, %s238
      %p250 = scmp.eq.s32.totalorder %s29, 1
      %p251 = por %p249, %p250
      %p253 = scmp.ne.s32.totalorder %s238, %s252
      %p254 = scmp.eq.s32.totalorder %s29, 0
      %p255 = por %p253, %p254
      %s257 = sadd.s32 %s256, 1
      %p260 = scmp.eq.s32.totalorder %s23, 1
      %p261 = scmp.ne.s32.totalorder %s256, %s258
      %p262 = scmp.eq.s32.totalorder %s23, 0
      %p263 = por %p261, %p262
      %p264 = scmp.ne.s32.totalorder %s256, %s258
      %p265 = scmp.eq.s32.totalorder %s28, 1
      %p266 = por %p264, %p265
      %p267 = scmp.ne.s32.totalorder %s258, %s259
      %p268 = scmp.eq.s32.totalorder %s28, 0
      %p269 = por %p267, %p268
      %p270 = scmp.ne.s32.totalorder %s258, %s259
      %p271 = scmp.eq.s32.totalorder %s29, 1
      %p272 = por %p270, %p271
      %p274 = scmp.ne.s32.totalorder %s259, %s273
      %p275 = scmp.eq.s32.totalorder %s29, 0
      %p276 = por %p274, %p275
      %s278 = sadd.s32 %s277, 1
      %p281 = scmp.eq.s32.totalorder %s23, 1
      %p282 = scmp.ne.s32.totalorder %s277, %s279
      %p283 = scmp.eq.s32.totalorder %s23, 0
      %p284 = por %p282, %p283
      %p285 = scmp.ne.s32.totalorder %s277, %s279
      %p286 = scmp.eq.s32.totalorder %s28, 1
      %p287 = por %p285, %p286
      %p288 = scmp.ne.s32.totalorder %s279, %s280
      %p289 = scmp.eq.s32.totalorder %s28, 0
      %p290 = por %p288, %p289
      %p291 = scmp.ne.s32.totalorder %s279, %s280
      %p292 = scmp.eq.s32.totalorder %s29, 1
      %p293 = por %p291, %p292
      %p295 = scmp.ne.s32.totalorder %s280, %s294
      %p296 = scmp.eq.s32.totalorder %s29, 0
      %p297 = por %p295, %p296
      %s299 = sadd.s32 %s298, 1
      %p302 = scmp.eq.s32.totalorder %s23, 1
      %p303 = scmp.ne.s32.totalorder %s298, %s300
      %p304 = scmp.eq.s32.totalorder %s23, 0
      %p305 = por %p303, %p304
      %p306 = scmp.ne.s32.totalorder %s298, %s300
      %p307 = scmp.eq.s32.totalorder %s28, 1
      %p308 = por %p306, %p307
      %p309 = scmp.ne.s32.totalorder %s300, %s301
      %p310 = scmp.eq.s32.totalorder %s28, 0
      %p311 = por %p309, %p310
      %p312 = scmp.ne.s32.totalorder %s300, %s301
      %p313 = scmp.eq.s32.totalorder %s29, 1
      %p314 = por %p312, %p313
      %p316 = scmp.ne.s32.totalorder %s301, %s315
      %p317 = scmp.eq.s32.totalorder %s29, 0
      %p318 = por %p316, %p317
      %s319 = ssub.s32 %s30, %s42
      %s320 = ssub.s32 %s31, %s38
      %s321 = sor.u32 %s319, %s320
      %p322 = scmp.eq.s32.totalorder %s321, 0
      %s324 = sadd.s32 %s323, 1
      %s325 = scalar_select %p322, %s323, %s324
      %p328 = pneg %p322
      %p329 = scmp.eq.s32.totalorder %s23, 1
      %p330 = por %p328, %p329
      %p331 = scmp.ne.s32.totalorder %s323, %s326
      %p332 = scmp.eq.s32.totalorder %s23, 0
      %p333 = por %p331, %p332
      %p334 = scmp.ne.s32.totalorder %s323, %s326
      %p335 = scmp.eq.s32.totalorder %s28, 1
      %p336 = por %p334, %p335
      %p337 = scmp.ne.s32.totalorder %s326, %s327
      %p338 = scmp.eq.s32.totalorder %s28, 0
      %p339 = por %p337, %p338
      %p340 = scmp.ne.s32.totalorder %s326, %s327
      %p341 = scmp.eq.s32.totalorder %s29, 1
      %p342 = por %p340, %p341
      %p344 = scmp.ne.s32.totalorder %s327, %s343
      %p345 = scmp.eq.s32.totalorder %s29, 0
      %p346 = por %p344, %p345
      %p347 = scmp.le.s32.totalorder 1, %s23
      %p348 = scmp.lt.s32.totalorder %s23, 3
      %p349 = pnand %p347, %p348
      %p350 = pneg %p349
      // Predicated region
      $region9: #{gpt_forward.27} parent=5 // pred_check
        _
      $region10: #{gpt_forward.27} parent=5 // pred_check_branch
        %352 = sbr.rel (%p349) target = $region12
      $region11: #{gpt_forward.27} parent=5 // pred_region
        %s353 = ssub.s32 %s23, 1
        // Predicated region
        $region13: #{gpt_forward.27} parent=11 // pred_check
          %p354 = pneg %p143
        $region14: #{gpt_forward.27} parent=11 // pred_check_branch
          %356 = sbr.rel (%p354) target = $region16
        $region15: #{gpt_forward.27} parent=11 // pred_region
          %p357 = scmp.lt.s32.totalorder %s33, 0
          %s358 = scalar_select %p357, %s33, 0
          %s359 = smul.addr %s358, 8
          %s360 = scalar_lea.vmem %s3, %s359
        $region16: #{gpt_forward.27} parent=11 // pred_fallthru
          _
        // Predicated region
        $region17: #{gpt_forward.27} parent=11 // pred_check
          %p361 = pneg %p164
        $region18: #{gpt_forward.27} parent=11 // pred_check_branch
          %363 = sbr.rel (%p361) target = $region20
        $region19: #{gpt_forward.27} parent=11 // pred_region
          %s365 = ssub.s32 4096, 4096
          %366 = vsyncadd [#allocation3], %s365
          %s367 = sshll.u32 [#allocation2], 4
          %s368 = int_to_ptr.vmem [resolvable:$true] %s367
          %373 = dma.hbm_to_vmem [thread:$0]  %s4, 4096, %s368, [#allocation3], 128, 128, 8
        $region20: #{gpt_forward.27} parent=11 // pred_fallthru
          _
        // Predicated region
        $region21: #{gpt_forward.27} parent=11 // pred_check
          %p374 = pneg %p185
        $region22: #{gpt_forward.27} parent=11 // pred_check_branch
          %376 = sbr.rel (%p374) target = $region24
        $region23: #{gpt_forward.27} parent=11 // pred_region
          %s378 = ssub.s32 32, 32
          %379 = vsyncadd [#allocation5], %s378
          %s381 = sshll.u32 [#allocation4], 4
          %s382 = int_to_ptr.vmem [resolvable:$true] %s381
          %384 = dma.hbm_to_vmem [thread:$0]  %s5, 32, %s382, [#allocation5]
        $region24: #{gpt_forward.27} parent=11 // pred_fallthru
          _
        // Predicated region
        $region25: #{gpt_forward.27} parent=11 // pred_check
          %p385 = pneg %p206
        $region26: #{gpt_forward.27} parent=11 // pred_check_branch
          %387 = sbr.rel (%p385) target = $region28
        $region27: #{gpt_forward.27} parent=11 // pred_region
          %s389 = ssub.s32 32, 32
          %390 = vsyncadd [#allocation5], %s389
          %s392 = sshll.u32 [#allocation6], 4
          %s393 = int_to_ptr.vmem [resolvable:$true] %s392
          %395 = dma.hbm_to_vmem [thread:$0]  %s6, 32, %s393, [#allocation5]
        $region28: #{gpt_forward.27} parent=11 // pred_fallthru
          _
        // Predicated region
        $region29: #{gpt_forward.27} parent=11 // pred_check
          %p396 = pneg %p227
        $region30: #{gpt_forward.27} parent=11 // pred_check_branch
          %398 = sbr.rel (%p396) target = $region32
        $region31: #{gpt_forward.27} parent=11 // pred_region
          %s400 = ssub.s32 32, 32
          %401 = vsyncadd [#allocation8], %s400
          %s403 = sshll.u32 [#allocation7], 4
          %s404 = int_to_ptr.vmem [resolvable:$true] %s403
          %406 = dma.hbm_to_vmem [thread:$0]  %s7, 32, %s404, [#allocation8]
        $region32: #{gpt_forward.27} parent=11 // pred_fallthru
          _
        // Predicated region
        $region33: #{gpt_forward.27} parent=11 // pred_check
          %p407 = pneg %p248
        $region34: #{gpt_forward.27} parent=11 // pred_check_branch
          %409 = sbr.rel (%p407) target = $region36
        $region35: #{gpt_forward.27} parent=11 // pred_region
          %s411 = ssub.s32 16384, 16384
          %412 = vsyncadd [#allocation8], %s411
          %s413 = sshll.u32 [#allocation9], 4
          %s414 = int_to_ptr.vmem [resolvable:$true] %s413
          %419 = dma.hbm_to_vmem [thread:$0]  %s8, 16384, %s414, [#allocation8], 512, 512, 32
        $region36: #{gpt_forward.27} parent=11 // pred_fallthru
          _
        // Predicated region
        $region37: #{gpt_forward.27} parent=11 // pred_check
          %p420 = pneg %p269
        $region38: #{gpt_forward.27} parent=11 // pred_check_branch
          %422 = sbr.rel (%p420) target = $region40
        $region39: #{gpt_forward.27} parent=11 // pred_region
          %s424 = ssub.s32 128, 128
          %425 = vsyncadd [#allocation11], %s424
          %s427 = sshll.u32 [#allocation10], 4
          %s428 = int_to_ptr.vmem [resolvable:$true] %s427
          %430 = dma.hbm_to_vmem [thread:$0]  %s9, 128, %s428, [#allocation11]
        $region40: #{gpt_forward.27} parent=11 // pred_fallthru
          _
        // Predicated region
        $region41: #{gpt_forward.27} parent=11 // pred_check
          %p431 = pneg %p290
        $region42: #{gpt_forward.27} parent=11 // pred_check_branch
          %433 = sbr.rel (%p431) target = $region44
        $region43: #{gpt_forward.27} parent=11 // pred_region
          %s435 = ssub.s32 16384, 16384
          %436 = vsyncadd [#allocation11], %s435
          %s437 = sshll.u32 [#allocation12], 4
          %s438 = int_to_ptr.vmem [resolvable:$true] %s437
          %443 = dma.hbm_to_vmem [thread:$0]  %s10, 16384, %s438, [#allocation11], 128, 128, 8
        $region44: #{gpt_forward.27} parent=11 // pred_fallthru
          _
        // Predicated region
        $region45: #{gpt_forward.27} parent=11 // pred_check
          %p444 = pneg %p311
        $region46: #{gpt_forward.27} parent=11 // pred_check_branch
          %446 = sbr.rel (%p444) target = $region48
        $region47: #{gpt_forward.27} parent=11 // pred_region
          %s448 = ssub.s32 32, 32
          %449 = vsyncadd [#allocation14], %s448
          %s451 = sshll.u32 [#allocation13], 4
          %s452 = int_to_ptr.vmem [resolvable:$true] %s451
          %454 = dma.hbm_to_vmem [thread:$0]  %s11, 32, %s452, [#allocation14]
        $region48: #{gpt_forward.27} parent=11 // pred_fallthru
          _
      $region12: #{gpt_forward.27} parent=5 // pred_fallthru
        _
      %p455 = scmp.lt.s32.totalorder %s23, 2
      // Predicated region
      $region49: #{gpt_forward.27} parent=5 // pred_check
        %p456 = pneg %p455
      $region50: #{gpt_forward.27} parent=5 // pred_check_branch
        %458 = sbr.rel (%p456) target = $region52
      $region51: #{gpt_forward.27} parent=5 // pred_region
        // Predicated region
        $region53: #{gpt_forward.27} parent=51 // pred_check
          %p459 = pneg %p57
        $region54: #{gpt_forward.27} parent=51 // pred_check_branch
          %461 = sbr.rel (%p459) target = $region56
        $region55: #{gpt_forward.27} parent=51 // pred_region
          %p462 = scmp.lt.s32.totalorder %s30, 1
          %s463 = scalar_select %p462, %s30, 1
          %p464 = scmp.lt.s32.totalorder %s31, 0
          %s465 = scalar_select %p464, %s31, 0
          %s466 = smul.addr %s465, 2
          %s467 = smul.addr %s463, 2
          %s468 = sadd.s32 %s466, %s467
          %s469 = smul.addr %s468, 8
          %s470 = scalar_lea.vmem %s0, %s469
        $region56: #{gpt_forward.27} parent=51 // pred_fallthru
          _
        // Predicated region
        $region57: #{gpt_forward.27} parent=51 // pred_check
          %p471 = pneg %p85
        $region58: #{gpt_forward.27} parent=51 // pred_check_branch
          %473 = sbr.rel (%p471) target = $region60
        $region59: #{gpt_forward.27} parent=51 // pred_region
          %p474 = scmp.lt.s32.totalorder %s30, 1
          %s475 = scalar_select %p474, %s30, 1
          %p476 = scmp.lt.s32.totalorder %s31, 0
          %s477 = scalar_select %p476, %s31, 0
          %s478 = smul.addr %s477, 6
          %s479 = smul.addr %s475, 6
          %s480 = sadd.s32 %s478, %s479
          %s481 = smul.addr %s480, 4
          %s482 = scalar_lea.vmem %s1, %s481
        $region60: #{gpt_forward.27} parent=51 // pred_fallthru
          _
        // Predicated region
        $region61: #{gpt_forward.27} parent=51 // pred_check
          %p483 = pneg %p111
        $region62: #{gpt_forward.27} parent=51 // pred_check_branch
          %485 = sbr.rel (%p483) target = $region64
        $region63: #{gpt_forward.27} parent=51 // pred_region
          %p486 = scmp.lt.s32.totalorder %s30, 1
          %s487 = scalar_select %p486, %s30, 1
          %s488 = smul.addr %s487, 6
          %s489 = smul.addr %s488, 4
          %s490 = scalar_lea.vmem %s2, %s489
        $region64: #{gpt_forward.27} parent=51 // pred_fallthru
          _
      $region52: #{gpt_forward.27} parent=5 // pred_fallthru
        _
      %p491 = scmp.le.s32.totalorder 1, %s23
      %p492 = scmp.lt.s32.totalorder %s23, 3
      %p493 = pnand %p491, %p492
      %p494 = pneg %p493
      // Predicated region
      $region65: #{gpt_forward.27} parent=5 // pred_check
        _
      $region66: #{gpt_forward.27} parent=5 // pred_check_branch
        %496 = sbr.rel (%p493) target = $region68
      $region67: #{gpt_forward.27} parent=5 // pred_region
        %s497 = ssub.s32 %s23, 1
        // Predicated region
        $region69: #{gpt_forward.27} parent=67 // pred_check
          %p498 = pneg %p164
        $region70: #{gpt_forward.27} parent=67 // pred_check_branch
          %500 = sbr.rel (%p498) target = $region72
        $region71: #{gpt_forward.27} parent=67 // pred_region
          %501 = dma.done [#allocation3], 4096
        $region72: #{gpt_forward.27} parent=67 // pred_fallthru
          _
        // Predicated region
        $region73: #{gpt_forward.27} parent=67 // pred_check
          %p502 = pneg %p185
        $region74: #{gpt_forward.27} parent=67 // pred_check_branch
          %504 = sbr.rel (%p502) target = $region76
        $region75: #{gpt_forward.27} parent=67 // pred_region
          %505 = dma.done [#allocation5], 32
        $region76: #{gpt_forward.27} parent=67 // pred_fallthru
          _
        // Predicated region
        $region77: #{gpt_forward.27} parent=67 // pred_check
          %p506 = pneg %p206
        $region78: #{gpt_forward.27} parent=67 // pred_check_branch
          %508 = sbr.rel (%p506) target = $region80
        $region79: #{gpt_forward.27} parent=67 // pred_region
          %509 = dma.done [#allocation5], 32
        $region80: #{gpt_forward.27} parent=67 // pred_fallthru
          _
        // Predicated region
        $region81: #{gpt_forward.27} parent=67 // pred_check
          %p510 = pneg %p227
        $region82: #{gpt_forward.27} parent=67 // pred_check_branch
          %512 = sbr.rel (%p510) target = $region84
        $region83: #{gpt_forward.27} parent=67 // pred_region
          %513 = dma.done [#allocation8], 32
        $region84: #{gpt_forward.27} parent=67 // pred_fallthru
          _
        // Predicated region
        $region85: #{gpt_forward.27} parent=67 // pred_check
          %p514 = pneg %p248
        $region86: #{gpt_forward.27} parent=67 // pred_check_branch
          %516 = sbr.rel (%p514) target = $region88
        $region87: #{gpt_forward.27} parent=67 // pred_region
          %517 = dma.done [#allocation8], 16384
        $region88: #{gpt_forward.27} parent=67 // pred_fallthru
          _
        // Predicated region
        $region89: #{gpt_forward.27} parent=67 // pred_check
          %p518 = pneg %p269
        $region90: #{gpt_forward.27} parent=67 // pred_check_branch
          %520 = sbr.rel (%p518) target = $region92
        $region91: #{gpt_forward.27} parent=67 // pred_region
          %521 = dma.done [#allocation11], 128
        $region92: #{gpt_forward.27} parent=67 // pred_fallthru
          _
        // Predicated region
        $region93: #{gpt_forward.27} parent=67 // pred_check
          %p522 = pneg %p290
        $region94: #{gpt_forward.27} parent=67 // pred_check_branch
          %524 = sbr.rel (%p522) target = $region96
        $region95: #{gpt_forward.27} parent=67 // pred_region
          %525 = dma.done [#allocation11], 16384
        $region96: #{gpt_forward.27} parent=67 // pred_fallthru
          _
        // Predicated region
        $region97: #{gpt_forward.27} parent=67 // pred_check
          %p526 = pneg %p311
        $region98: #{gpt_forward.27} parent=67 // pred_check_branch
          %528 = sbr.rel (%p526) target = $region100
        $region99: #{gpt_forward.27} parent=67 // pred_region
          %529 = dma.done [#allocation14], 32
        $region100: #{gpt_forward.27} parent=67 // pred_fallthru
          _
        %p530 = scmp.lt.s32.totalorder %s32, 1
        %s531 = scalar_select %p530, %s32, 1
        %p532 = scmp.lt.s32.totalorder %s33, 0
        %s533 = scalar_select %p532, %s33, 0
        %s534 = smul.addr %s533, 2
        %s535 = smul.addr %s531, 2
        %s536 = sadd.s32 %s534, %s535
        %s537 = smul.addr %s536, 8
        %s538 = scalar_lea.vmem %s0, %s537
        %p539 = pneg %p63
        %p540 = pneg %p60
        %p541 = scmp.lt.s32.totalorder %s32, 1
        %s542 = scalar_select %p541, %s32, 1
        %p543 = scmp.lt.s32.totalorder %s33, 0
        %s544 = scalar_select %p543, %s33, 0
        %s545 = smul.addr %s544, 6
        %s546 = smul.addr %s542, 6
        %s547 = sadd.s32 %s545, %s546
        %s548 = smul.addr %s547, 4
        %s549 = scalar_lea.vmem %s1, %s548
        %p550 = pneg %p91
        %p551 = pneg %p88
        %p552 = scmp.lt.s32.totalorder %s32, 1
        %s553 = scalar_select %p552, %s32, 1
        %s554 = smul.addr %s553, 6
        %s555 = smul.addr %s554, 4
        %s556 = scalar_lea.vmem %s2, %s555
        %p557 = pneg %p117
        %p558 = pneg %p114
        %p559 = scmp.lt.s32.totalorder %s33, 0
        %s560 = scalar_select %p559, %s33, 0
        %s561 = smul.addr %s560, 8
        %s562 = scalar_lea.vmem %s3, %s561
        %p563 = pneg %p143
        %p564 = pneg %p140
        %p565 = pneg %p164
        %p566 = pneg %p161
        %p567 = pneg %p185
        %p568 = pneg %p182
        %p569 = pneg %p206
        %p570 = pneg %p203
        %p571 = pneg %p227
        %p572 = pneg %p224
        %p573 = pneg %p248
        %p574 = pneg %p245
        %p575 = pneg %p269
        %p576 = pneg %p266
        %p577 = pneg %p290
        %p578 = pneg %p287
        %p579 = pneg %p311
        %p580 = pneg %p308
        %p581 = pneg %p339
        %p582 = pneg %p336
        %p583 = scmp.lt.s32.totalorder %s32, 1
        %s584 = scalar_select %p583, %s32, 1
        %p585 = scmp.lt.s32.totalorder %s33, 0
        %s586 = scalar_select %p585, %s33, 0
        %s587 = smul.addr %s586, 2
        %s588 = smul.addr %s584, 2
        %s589 = sadd.s32 %s587, %s588
        %s590 = smul.addr %s589, 8
        %s591 = scalar_lea.vmem %s12, %s590
        %p592 = scmp.lt.s32.totalorder %s32, 1
        %s593 = scalar_select %p592, %s32, 1
        %p594 = scmp.lt.s32.totalorder %s33, 0
        %s595 = scalar_select %p594, %s33, 0
        %s596 = smul.addr %s595, 2
        %s597 = smul.addr %s593, 2
        %s598 = sadd.s32 %s596, %s597
        %s599 = smul.addr %s598, 8
        %s600 = scalar_lea.vmem %s0, %s599
        %p601 = scmp.lt.s32.totalorder %s32, 1
        %s602 = scalar_select %p601, %s32, 1
        %p603 = scmp.lt.s32.totalorder %s33, 0
        %s604 = scalar_select %p603, %s33, 0
        %s605 = smul.addr %s604, 6
        %s606 = smul.addr %s602, 6
        %s607 = sadd.s32 %s605, %s606
        %s608 = smul.addr %s607, 4
        %s609 = scalar_lea.vmem %s1, %s608
        %p610 = scmp.lt.s32.totalorder %s32, 1
        %s611 = scalar_select %p610, %s32, 1
        %s612 = smul.addr %s611, 6
        %s613 = smul.addr %s612, 4
        %s614 = scalar_lea.vmem %s2, %s613
        %p615 = scmp.lt.s32.totalorder %s33, 0
        %s616 = scalar_select %p615, %s33, 0
        %s617 = smul.addr %s616, 8
        %s618 = scalar_lea.vmem %s3, %s617
        %p619 = scmp.lt.s32.totalorder %s32, 1
        %s620 = scalar_select %p619, %s32, 1
        %p621 = scmp.lt.s32.totalorder %s33, 0
        %s622 = scalar_select %p621, %s33, 0
        %s623 = smul.addr %s622, 2
        %s624 = smul.addr %s620, 2
        %s625 = sadd.s32 %s623, %s624
        %s626 = smul.addr %s625, 8
        %s627 = scalar_lea.vmem %s12, %s626
        %v629 = vld [vmem:[%s600] sm:$0xff]
        %v630 = vld [vmem:[%s600 + $0x8] sm:$0xff]
        %v631 = vld [vmem:[%s609] sm:$0xff]
        %v632 = vld [vmem:[%s614 + $0x8] sm:$0xff]
        %v633 = vld [vmem:[%s614 + $0x10] sm:$0xff]
        %v635 = vrot.slane %v631, 4
        %637 = vrot.lane.b32.xlu0 %v631, 112
        %v638 = vpop.permute.xlu0 %637
        %v639 = vrot.slane %v638, 4
        %641 = vrot.lane.b32.xlu0 %v631, 96
        %v642 = vpop.permute.xlu0 %641
        %v643 = vrot.slane %v642, 4
        %645 = vrot.lane.b32.xlu0 %v631, 80
        %v646 = vpop.permute.xlu0 %645
        %v647 = vrot.slane %v646, 4
        %649 = vrot.lane.b32.xlu0 %v631, 64
        %v650 = vpop.permute.xlu0 %649
        %v651 = vrot.slane %v650, 4
        %653 = vrot.lane.b32.xlu0 %v631, 48
        %v654 = vpop.permute.xlu0 %653
        %v655 = vrot.slane %v654, 4
        %657 = vrot.lane.b32.xlu0 %v631, 32
        %v658 = vpop.permute.xlu0 %657
        %v659 = vrot.slane %v658, 4
        %661 = vrot.lane.b32.xlu0 %v631, 16
        %v662 = vpop.permute.xlu0 %661
        %v663 = vrot.slane %v662, 4
        %v672 = vcombine.low %v631, %v650
        %v674 = vunpack.c.l.s4 1983009808
        %v675 = vunpack.c.0.s8 %v674
        %v676 = vlaneseq
        %v677 = vshrl.u32 %v676, 7
        %v678 = vsub.s32 %v675, %v677
        %v679 = vrot.slane %v672, %v678
        %v680 = vcombine.low %v642, %v658
        %v682 = vunpack.c.l.s4 1983009808
        %v683 = vunpack.c.0.s8 %v682
        %v684 = vlaneseq
        %v685 = vshrl.u32 %v684, 7
        %v686 = vsub.s32 %v683, %v685
        %v687 = vrot.slane %v680, %v686
        %v688 = vcombine.low %v679, %v687
        %v689 = vcombine.high %v679, %v687
        %v691 = vunpack.c.l.s4 1934713408
        %v692 = vunpack.c.0.s8 %v691
        %v693 = vlaneseq
        %v694 = vshrl.u32 %v693, 7
        %v695 = vsub.s32 %v692, %v694
        %v696 = vrot.slane %v688, %v695
        %v698 = vunpack.c.l.s4 1934713408
        %v699 = vunpack.c.0.s8 %v698
        %v700 = vlaneseq
        %v701 = vshrl.u32 %v700, 7
        %v702 = vsub.s32 %v699, %v701
        %v703 = vrot.slane %v689, %v702
        %v704 = vcombine.high %v696, 0
        %v705 = vcombine.high %v703, 0
        %v706 = vcombine.low %v638, %v654
        %v708 = vunpack.c.l.s4 1983009808
        %v709 = vunpack.c.0.s8 %v708
        %v710 = vlaneseq
        %v711 = vshrl.u32 %v710, 7
        %v712 = vsub.s32 %v709, %v711
        %v713 = vrot.slane %v706, %v712
        %v714 = vcombine.low %v646, %v662
        %v716 = vunpack.c.l.s4 1983009808
        %v717 = vunpack.c.0.s8 %v716
        %v718 = vlaneseq
        %v719 = vshrl.u32 %v718, 7
        %v720 = vsub.s32 %v717, %v719
        %v721 = vrot.slane %v714, %v720
        %v722 = vcombine.low %v713, %v721
        %v723 = vcombine.high %v713, %v721
        %v725 = vunpack.c.l.s4 1934713408
        %v726 = vunpack.c.0.s8 %v725
        %v727 = vlaneseq
        %v728 = vshrl.u32 %v727, 7
        %v729 = vsub.s32 %v726, %v728
        %v730 = vrot.slane %v722, %v729
        %v732 = vunpack.c.l.s4 1934713408
        %v733 = vunpack.c.0.s8 %v732
        %v734 = vlaneseq
        %v735 = vshrl.u32 %v734, 7
        %v736 = vsub.s32 %v733, %v735
        %v737 = vrot.slane %v723, %v736
        %v738 = vcombine.high %v730, 0
        %v739 = vcombine.high %v737, 0
        %v740 = vcombine.low %v635, %v651
        %v742 = vunpack.c.l.s4 1983009808
        %v743 = vunpack.c.0.s8 %v742
        %v744 = vlaneseq
        %v745 = vshrl.u32 %v744, 7
        %v746 = vsub.s32 %v743, %v745
        %v747 = vrot.slane %v740, %v746
        %v748 = vcombine.low %v643, %v659
        %v750 = vunpack.c.l.s4 1983009808
        %v751 = vunpack.c.0.s8 %v750
        %v752 = vlaneseq
        %v753 = vshrl.u32 %v752, 7
        %v754 = vsub.s32 %v751, %v753
        %v755 = vrot.slane %v748, %v754
        %v756 = vcombine.low %v747, %v755
        %v757 = vcombine.high %v747, %v755
        %v759 = vunpack.c.l.s4 1934713408
        %v760 = vunpack.c.0.s8 %v759
        %v761 = vlaneseq
        %v762 = vshrl.u32 %v761, 7
        %v763 = vsub.s32 %v760, %v762
        %v764 = vrot.slane %v756, %v763
        %v766 = vunpack.c.l.s4 1934713408
        %v767 = vunpack.c.0.s8 %v766
        %v768 = vlaneseq
        %v769 = vshrl.u32 %v768, 7
        %v770 = vsub.s32 %v767, %v769
        %v771 = vrot.slane %v757, %v770
        %v772 = vcombine.high %v764, 0
        %v773 = vcombine.high %v771, 0
        %v774 = vcombine.low %v639, %v655
        %v776 = vunpack.c.l.s4 1983009808
        %v777 = vunpack.c.0.s8 %v776
        %v778 = vlaneseq
        %v779 = vshrl.u32 %v778, 7
        %v780 = vsub.s32 %v777, %v779
        %v781 = vrot.slane %v774, %v780
        %v782 = vcombine.low %v647, %v663
        %v784 = vunpack.c.l.s4 1983009808
        %v785 = vunpack.c.0.s8 %v784
        %v786 = vlaneseq
        %v787 = vshrl.u32 %v786, 7
        %v788 = vsub.s32 %v785, %v787
        %v789 = vrot.slane %v782, %v788
        %v790 = vcombine.low %v781, %v789
        %v791 = vcombine.high %v781, %v789
        %v793 = vunpack.c.l.s4 1934713408
        %v794 = vunpack.c.0.s8 %v793
        %v795 = vlaneseq
        %v796 = vshrl.u32 %v795, 7
        %v797 = vsub.s32 %v794, %v796
        %v798 = vrot.slane %v790, %v797
        %v800 = vunpack.c.l.s4 1934713408
        %v801 = vunpack.c.0.s8 %v800
        %v802 = vlaneseq
        %v803 = vshrl.u32 %v802, 7
        %v804 = vsub.s32 %v801, %v803
        %v805 = vrot.slane %v791, %v804
        %v806 = vcombine.high %v798, 0
        %v807 = vcombine.high %v805, 0
        %v810 = vpack.i.b16 %v730, %v696
        %v812 = vshrl.u32 %v696, 16
        %v813 = vshrl.u32 %v730, 16
        %v814 = vpack.i.b16 %v813, %v812
        %v818 = vpack.i.b16 %v738, %v704
        %v820 = vshrl.u32 %v704, 16
        %v821 = vshrl.u32 %v738, 16
        %v822 = vpack.i.b16 %v821, %v820
        %v826 = vpack.i.b16 %v737, %v703
        %v828 = vshrl.u32 %v703, 16
        %v829 = vshrl.u32 %v737, 16
        %v830 = vpack.i.b16 %v829, %v828
        %v834 = vpack.i.b16 %v739, %v705
        %v836 = vshrl.u32 %v705, 16
        %v837 = vshrl.u32 %v739, 16
        %v838 = vpack.i.b16 %v837, %v836
        %v842 = vpack.i.b16 %v798, %v764
        %v844 = vshrl.u32 %v764, 16
        %v845 = vshrl.u32 %v798, 16
        %v846 = vpack.i.b16 %v845, %v844
        %v850 = vpack.i.b16 %v806, %v772
        %v852 = vshrl.u32 %v772, 16
        %v853 = vshrl.u32 %v806, 16
        %v854 = vpack.i.b16 %v853, %v852
        %v858 = vpack.i.b16 %v805, %v771
        %v860 = vshrl.u32 %v771, 16
        %v861 = vshrl.u32 %v805, 16
        %v862 = vpack.i.b16 %v861, %v860
        %v866 = vpack.i.b16 %v807, %v773
        %v868 = vshrl.u32 %v773, 16
        %v869 = vshrl.u32 %v807, 16
        %v870 = vpack.i.b16 %v869, %v868
        %v873 = vrot.slane %v632, 4
        %875 = vrot.lane.b32.xlu0 %v632, 112
        %v876 = vpop.permute.xlu0 %875
        %v877 = vrot.slane %v876, 4
        %879 = vrot.lane.b32.xlu0 %v632, 96
        %v880 = vpop.permute.xlu0 %879
        %v881 = vrot.slane %v880, 4
        %883 = vrot.lane.b32.xlu0 %v632, 80
        %v884 = vpop.permute.xlu0 %883
        %v885 = vrot.slane %v884, 4
        %887 = vrot.lane.b32.xlu0 %v632, 64
        %v888 = vpop.permute.xlu0 %887
        %v889 = vrot.slane %v888, 4
        %891 = vrot.lane.b32.xlu0 %v632, 48
        %v892 = vpop.permute.xlu0 %891
        %v893 = vrot.slane %v892, 4
        %895 = vrot.lane.b32.xlu0 %v632, 32
        %v896 = vpop.permute.xlu0 %895
        %v897 = vrot.slane %v896, 4
        %899 = vrot.lane.b32.xlu0 %v632, 16
        %v900 = vpop.permute.xlu0 %899
        %v901 = vrot.slane %v900, 4
        %v911 = vrot.slane %v633, 4
        %913 = vrot.lane.b32.xlu0 %v633, 112
        %v914 = vpop.permute.xlu0 %913
        %v915 = vrot.slane %v914, 4
        %917 = vrot.lane.b32.xlu0 %v633, 96
        %v918 = vpop.permute.xlu0 %917
        %v919 = vrot.slane %v918, 4
        %921 = vrot.lane.b32.xlu0 %v633, 80
        %v922 = vpop.permute.xlu0 %921
        %v923 = vrot.slane %v922, 4
        %925 = vrot.lane.b32.xlu0 %v633, 64
        %v926 = vpop.permute.xlu0 %925
        %v927 = vrot.slane %v926, 4
        %929 = vrot.lane.b32.xlu0 %v633, 48
        %v930 = vpop.permute.xlu0 %929
        %v931 = vrot.slane %v930, 4
        %933 = vrot.lane.b32.xlu0 %v633, 32
        %v934 = vpop.permute.xlu0 %933
        %v935 = vrot.slane %v934, 4
        %937 = vrot.lane.b32.xlu0 %v633, 16
        %v938 = vpop.permute.xlu0 %937
        %v939 = vrot.slane %v938, 4
        %v948 = vcombine.low %v810, %v826
        %v950 = vunpack.c.l.s4 1983009808
        %v951 = vunpack.c.0.s8 %v950
        %v952 = vlaneseq
        %v953 = vshrl.u32 %v952, 7
        %v954 = vsub.s32 %v951, %v953
        %v955 = vrot.slane %v948, %v954
        %v956 = vcombine.low %v818, %v834
        %v958 = vunpack.c.l.s4 1983009808
        %v959 = vunpack.c.0.s8 %v958
        %v960 = vlaneseq
        %v961 = vshrl.u32 %v960, 7
        %v962 = vsub.s32 %v959, %v961
        %v963 = vrot.slane %v956, %v962
        %v964 = vcombine.low %v955, %v963
        %v965 = vcombine.high %v955, %v963
        %v967 = vunpack.c.l.s4 1934713408
        %v968 = vunpack.c.0.s8 %v967
        %v969 = vlaneseq
        %v970 = vshrl.u32 %v969, 7
        %v971 = vsub.s32 %v968, %v970
        %v972 = vrot.slane %v964, %v971
        %v974 = vunpack.c.l.s4 1934713408
        %v975 = vunpack.c.0.s8 %v974
        %v976 = vlaneseq
        %v977 = vshrl.u32 %v976, 7
        %v978 = vsub.s32 %v975, %v977
        %v979 = vrot.slane %v965, %v978
        %v980 = vcombine.high %v972, 0
        %v981 = vcombine.high %v979, 0
        %v982 = vcombine.low %v814, %v830
        %v984 = vunpack.c.l.s4 1983009808
        %v985 = vunpack.c.0.s8 %v984
        %v986 = vlaneseq
        %v987 = vshrl.u32 %v986, 7
        %v988 = vsub.s32 %v985, %v987
        %v989 = vrot.slane %v982, %v988
        %v990 = vcombine.low %v822, %v838
        %v992 = vunpack.c.l.s4 1983009808
        %v993 = vunpack.c.0.s8 %v992
        %v994 = vlaneseq
        %v995 = vshrl.u32 %v994, 7
        %v996 = vsub.s32 %v993, %v995
        %v997 = vrot.slane %v990, %v996
        %v998 = vcombine.low %v989, %v997
        %v999 = vcombine.high %v989, %v997
        %v1001 = vunpack.c.l.s4 1934713408
        %v1002 = vunpack.c.0.s8 %v1001
        %v1003 = vlaneseq
        %v1004 = vshrl.u32 %v1003, 7
        %v1005 = vsub.s32 %v1002, %v1004
        %v1006 = vrot.slane %v998, %v1005
        %v1008 = vunpack.c.l.s4 1934713408
        %v1009 = vunpack.c.0.s8 %v1008
        %v1010 = vlaneseq
        %v1011 = vshrl.u32 %v1010, 7
        %v1012 = vsub.s32 %v1009, %v1011
        %v1013 = vrot.slane %v999, %v1012
        %v1014 = vcombine.high %v1006, 0
        %v1015 = vcombine.high %v1013, 0
        %v1016 = vcombine.low %v842, %v858
        %v1018 = vunpack.c.l.s4 1983009808
        %v1019 = vunpack.c.0.s8 %v1018
        %v1020 = vlaneseq
        %v1021 = vshrl.u32 %v1020, 7
        %v1022 = vsub.s32 %v1019, %v1021
        %v1023 = vrot.slane %v1016, %v1022
        %v1024 = vcombine.low %v850, %v866
        %v1026 = vunpack.c.l.s4 1983009808
        %v1027 = vunpack.c.0.s8 %v1026
        %v1028 = vlaneseq
        %v1029 = vshrl.u32 %v1028, 7
        %v1030 = vsub.s32 %v1027, %v1029
        %v1031 = vrot.slane %v1024, %v1030
        %v1032 = vcombine.low %v1023, %v1031
        %v1033 = vcombine.high %v1023, %v1031
        %v1035 = vunpack.c.l.s4 1934713408
        %v1036 = vunpack.c.0.s8 %v1035
        %v1037 = vlaneseq
        %v1038 = vshrl.u32 %v1037, 7
        %v1039 = vsub.s32 %v1036, %v1038
        %v1040 = vrot.slane %v1032, %v1039
        %v1042 = vunpack.c.l.s4 1934713408
        %v1043 = vunpack.c.0.s8 %v1042
        %v1044 = vlaneseq
        %v1045 = vshrl.u32 %v1044, 7
        %v1046 = vsub.s32 %v1043, %v1045
        %v1047 = vrot.slane %v1033, %v1046
        %v1048 = vcombine.high %v1040, 0
        %v1049 = vcombine.high %v1047, 0
        %v1050 = vcombine.low %v846, %v862
        %v1052 = vunpack.c.l.s4 1983009808
        %v1053 = vunpack.c.0.s8 %v1052
        %v1054 = vlaneseq
        %v1055 = vshrl.u32 %v1054, 7
        %v1056 = vsub.s32 %v1053, %v1055
        %v1057 = vrot.slane %v1050, %v1056
        %v1058 = vcombine.low %v854, %v870
        %v1060 = vunpack.c.l.s4 1983009808
        %v1061 = vunpack.c.0.s8 %v1060
        %v1062 = vlaneseq
        %v1063 = vshrl.u32 %v1062, 7
        %v1064 = vsub.s32 %v1061, %v1063
        %v1065 = vrot.slane %v1058, %v1064
        %v1066 = vcombine.low %v1057, %v1065
        %v1067 = vcombine.high %v1057, %v1065
        %v1069 = vunpack.c.l.s4 1934713408
        %v1070 = vunpack.c.0.s8 %v1069
        %v1071 = vlaneseq
        %v1072 = vshrl.u32 %v1071, 7
        %v1073 = vsub.s32 %v1070, %v1072
        %v1074 = vrot.slane %v1066, %v1073
        %v1076 = vunpack.c.l.s4 1934713408
        %v1077 = vunpack.c.0.s8 %v1076
        %v1078 = vlaneseq
        %v1079 = vshrl.u32 %v1078, 7
        %v1080 = vsub.s32 %v1077, %v1079
        %v1081 = vrot.slane %v1067, %v1080
        %v1082 = vcombine.high %v1074, 0
        %v1083 = vcombine.high %v1081, 0
        %v1086 = vpack.i.b16 %v1006, %v972
        %v1087 = vshrl.u32 %v972, 16
        %v1088 = vshrl.u32 %v1006, 16
        %v1089 = vpack.i.b16 %v1088, %v1087
        %v1092 = vpack.i.b16 %v1014, %v980
        %v1093 = vshrl.u32 %v980, 16
        %v1094 = vshrl.u32 %v1014, 16
        %v1095 = vpack.i.b16 %v1094, %v1093
        %v1098 = vpack.i.b16 %v1013, %v979
        %v1099 = vshrl.u32 %v979, 16
        %v1100 = vshrl.u32 %v1013, 16
        %v1101 = vpack.i.b16 %v1100, %v1099
        %v1104 = vpack.i.b16 %v1015, %v981
        %v1105 = vshrl.u32 %v981, 16
        %v1106 = vshrl.u32 %v1015, 16
        %v1107 = vpack.i.b16 %v1106, %v1105
        %v1110 = vpack.i.b16 %v1074, %v1040
        %v1111 = vshrl.u32 %v1040, 16
        %v1112 = vshrl.u32 %v1074, 16
        %v1113 = vpack.i.b16 %v1112, %v1111
        %v1116 = vpack.i.b16 %v1082, %v1048
        %v1117 = vshrl.u32 %v1048, 16
        %v1118 = vshrl.u32 %v1082, 16
        %v1119 = vpack.i.b16 %v1118, %v1117
        %v1122 = vpack.i.b16 %v1081, %v1047
        %v1123 = vshrl.u32 %v1047, 16
        %v1124 = vshrl.u32 %v1081, 16
        %v1125 = vpack.i.b16 %v1124, %v1123
        %v1128 = vpack.i.b16 %v1083, %v1049
        %v1129 = vshrl.u32 %v1049, 16
        %v1130 = vshrl.u32 %v1083, 16
        %v1131 = vpack.i.b16 %v1130, %v1129
        %1132 = vxpose.xlu0.c.b16.start [1/8] %v632, 128
        %1133 = vxpose.xlu0.c.b16.cont [2/8] 0, 128
        %1134 = vxpose.xlu0.c.b16.cont [3/8] 0, 128
        %1135 = vxpose.xlu0.c.b16.cont [4/8] 0, 128
        %1136 = vxpose.xlu0.c.b16.cont [5/8] 0, 128
        %1137 = vxpose.xlu0.c.b16.cont [6/8] 0, 128
        %1138 = vxpose.xlu0.c.b16.cont [7/8] 0, 128
        %1139 = vxpose.xlu0.c.b16.end [8/8] 0, 128
        %v1140 = vpop.trf.xlu0
        %v1141 = vpop.trf.xlu0
        %v1142 = vpop.trf.xlu0
        %v1143 = vpop.trf.xlu0
        %v1144 = vpop.trf.xlu0
        %v1145 = vpop.trf.xlu0
        %v1146 = vpop.trf.xlu0
        %v1147 = vpop.trf.xlu0
        %1148 = vxpose.xlu0.c.b16.start [1/8] %v876, 128
        %1149 = vxpose.xlu0.c.b16.cont [2/8] 0, 128
        %1150 = vxpose.xlu0.c.b16.cont [3/8] 0, 128
        %1151 = vxpose.xlu0.c.b16.cont [4/8] 0, 128
        %1152 = vxpose.xlu0.c.b16.cont [5/8] 0, 128
        %1153 = vxpose.xlu0.c.b16.cont [6/8] 0, 128
        %1154 = vxpose.xlu0.c.b16.cont [7/8] 0, 128
        %1155 = vxpose.xlu0.c.b16.end [8/8] 0, 128
        %v1156 = vpop.trf.xlu0
        %v1157 = vpop.trf.xlu0
        %v1158 = vpop.trf.xlu0
        %v1159 = vpop.trf.xlu0
        %v1160 = vpop.trf.xlu0
        %v1161 = vpop.trf.xlu0
        %v1162 = vpop.trf.xlu0
        %v1163 = vpop.trf.xlu0
        %1164 = vxpose.xlu0.c.b16.start [1/8] %v880, 128
        %1165 = vxpose.xlu0.c.b16.cont [2/8] 0, 128
        %1166 = vxpose.xlu0.c.b16.cont [3/8] 0, 128
        %1167 = vxpose.xlu0.c.b16.cont [4/8] 0, 128
        %1168 = vxpose.xlu0.c.b16.cont [5/8] 0, 128
        %1169 = vxpose.xlu0.c.b16.cont [6/8] 0, 128
        %1170 = vxpose.xlu0.c.b16.cont [7/8] 0, 128
        %1171 = vxpose.xlu0.c.b16.end [8/8] 0, 128
        %v1172 = vpop.trf.xlu0
        %v1173 = vpop.trf.xlu0
        %v1174 = vpop.trf.xlu0
        %v1175 = vpop.trf.xlu0
        %v1176 = vpop.trf.xlu0
        %v1177 = vpop.trf.xlu0
        %v1178 = vpop.trf.xlu0
        %v1179 = vpop.trf.xlu0
        %1180 = vxpose.xlu0.c.b16.start [1/8] %v884, 128
        %1181 = vxpose.xlu0.c.b16.cont [2/8] 0, 128
        %1182 = vxpose.xlu0.c.b16.cont [3/8] 0, 128
        %1183 = vxpose.xlu0.c.b16.cont [4/8] 0, 128
        %1184 = vxpose.xlu0.c.b16.cont [5/8] 0, 128
        %1185 = vxpose.xlu0.c.b16.cont [6/8] 0, 128
        %1186 = vxpose.xlu0.c.b16.cont [7/8] 0, 128
        %1187 = vxpose.xlu0.c.b16.end [8/8] 0, 128
        %v1188 = vpop.trf.xlu0
        %v1189 = vpop.trf.xlu0
        %v1190 = vpop.trf.xlu0
        %v1191 = vpop.trf.xlu0
        %v1192 = vpop.trf.xlu0
        %v1193 = vpop.trf.xlu0
        %v1194 = vpop.trf.xlu0
        %v1195 = vpop.trf.xlu0
        %1196 = vxpose.xlu0.c.b16.start [1/8] %v888, 128
        %1197 = vxpose.xlu0.c.b16.cont [2/8] 0, 128
        %1198 = vxpose.xlu0.c.b16.cont [3/8] 0, 128
        %1199 = vxpose.xlu0.c.b16.cont [4/8] 0, 128
        %1200 = vxpose.xlu0.c.b16.cont [5/8] 0, 128
        %1201 = vxpose.xlu0.c.b16.cont [6/8] 0, 128
        %1202 = vxpose.xlu0.c.b16.cont [7/8] 0, 128
        %1203 = vxpose.xlu0.c.b16.end [8/8] 0, 128
        %v1204 = vpop.trf.xlu0
        %v1205 = vpop.trf.xlu0
        %v1206 = vpop.trf.xlu0
        %v1207 = vpop.trf.xlu0
        %v1208 = vpop.trf.xlu0
        %v1209 = vpop.trf.xlu0
        %v1210 = vpop.trf.xlu0
        %v1211 = vpop.trf.xlu0
        %1212 = vxpose.xlu0.c.b16.start [1/8] %v892, 128
        %1213 = vxpose.xlu0.c.b16.cont [2/8] 0, 128
        %1214 = vxpose.xlu0.c.b16.cont [3/8] 0, 128
        %1215 = vxpose.xlu0.c.b16.cont [4/8] 0, 128
        %1216 = vxpose.xlu0.c.b16.cont [5/8] 0, 128
        %1217 = vxpose.xlu0.c.b16.cont [6/8] 0, 128
        %1218 = vxpose.xlu0.c.b16.cont [7/8] 0, 128
        %1219 = vxpose.xlu0.c.b16.end [8/8] 0, 128
        %v1220 = vpop.trf.xlu0
        %v1221 = vpop.trf.xlu0
        %v1222 = vpop.trf.xlu0
        %v1223 = vpop.trf.xlu0
        %v1224 = vpop.trf.xlu0
        %v1225 = vpop.trf.xlu0
        %v1226 = vpop.trf.xlu0
        %v1227 = vpop.trf.xlu0
        %1228 = vxpose.xlu0.c.b16.start [1/8] %v896, 128
        %1229 = vxpose.xlu0.c.b16.cont [2/8] 0, 128
        %1230 = vxpose.xlu0.c.b16.cont [3/8] 0, 128
        %1231 = vxpose.xlu0.c.b16.cont [4/8] 0, 128
        %1232 = vxpose.xlu0.c.b16.cont [5/8] 0, 128
        %1233 = vxpose.xlu0.c.b16.cont [6/8] 0, 128
        %1234 = vxpose.xlu0.c.b16.cont [7/8] 0, 128
        %1235 = vxpose.xlu0.c.b16.end [8/8] 0, 128
        %v1236 = vpop.trf.xlu0
        %v1237 = vpop.trf.xlu0
        %v1238 = vpop.trf.xlu0
        %v1239 = vpop.trf.xlu0
        %v1240 = vpop.trf.xlu0
        %v1241 = vpop.trf.xlu0
        %v1242 = vpop.trf.xlu0
        %v1243 = vpop.trf.xlu0
        %1244 = vxpose.xlu0.c.b16.start [1/8] %v900, 128
        %1245 = vxpose.xlu0.c.b16.cont [2/8] 0, 128
        %1246 = vxpose.xlu0.c.b16.cont [3/8] 0, 128
        %1247 = vxpose.xlu0.c.b16.cont [4/8] 0, 128
        %1248 = vxpose.xlu0.c.b16.cont [5/8] 0, 128
        %1249 = vxpose.xlu0.c.b16.cont [6/8] 0, 128
        %1250 = vxpose.xlu0.c.b16.cont [7/8] 0, 128
        %1251 = vxpose.xlu0.c.b16.end [8/8] 0, 128
        %v1252 = vpop.trf.xlu0
        %v1253 = vpop.trf.xlu0
        %v1254 = vpop.trf.xlu0
        %v1255 = vpop.trf.xlu0
        %v1256 = vpop.trf.xlu0
        %v1257 = vpop.trf.xlu0
        %v1258 = vpop.trf.xlu0
        %v1259 = vpop.trf.xlu0
        %1260 = vxpose.xlu0.c.b16.start [1/8] %v873, 128
        %1261 = vxpose.xlu0.c.b16.cont [2/8] 0, 128
        %1262 = vxpose.xlu0.c.b16.cont [3/8] 0, 128
        %1263 = vxpose.xlu0.c.b16.cont [4/8] 0, 128
        %1264 = vxpose.xlu0.c.b16.cont [5/8] 0, 128
        %1265 = vxpose.xlu0.c.b16.cont [6/8] 0, 128
        %1266 = vxpose.xlu0.c.b16.cont [7/8] 0, 128
        %1267 = vxpose.xlu0.c.b16.end [8/8] 0, 128
        %v1268 = vpop.trf.xlu0
        %v1269 = vpop.trf.xlu0
        %v1270 = vpop.trf.xlu0
        %v1271 = vpop.trf.xlu0
        %v1272 = vpop.trf.xlu0
        %v1273 = vpop.trf.xlu0
        %v1274 = vpop.trf.xlu0
        %v1275 = vpop.trf.xlu0
        %1276 = vxpose.xlu0.c.b16.start [1/8] %v877, 128
        %1277 = vxpose.xlu0.c.b16.cont [2/8] 0, 128
        %1278 = vxpose.xlu0.c.b16.cont [3/8] 0, 128
        %1279 = vxpose.xlu0.c.b16.cont [4/8] 0, 128
        %1280 = vxpose.xlu0.c.b16.cont [5/8] 0, 128
        %1281 = vxpose.xlu0.c.b16.cont [6/8] 0, 128
        %1282 = vxpose.xlu0.c.b16.cont [7/8] 0, 128
        %1283 = vxpose.xlu0.c.b16.end [8/8] 0, 128
        %v1284 = vpop.trf.xlu0
        %v1285 = vpop.trf.xlu0
        %v1286 = vpop.trf.xlu0
        %v1287 = vpop.trf.xlu0
        %v1288 = vpop.trf.xlu0
        %v1289 = vpop.trf.xlu0
        %v1290 = vpop.trf.xlu0
        %v1291 = vpop.trf.xlu0
        %1292 = vxpose.xlu0.c.b16.start [1/8] %v881, 128
        %1293 = vxpose.xlu0.c.b16.cont [2/8] 0, 128
        %1294 = vxpose.xlu0.c.b16.cont [3/8] 0, 128
        %1295 = vxpose.xlu0.c.b16.cont [4/8] 0, 128
        %1296 = vxpose.xlu0.c.b16.cont [5/8] 0, 128
        %1297 = vxpose.xlu0.c.b16.cont [6/8] 0, 128
        %1298 = vxpose.xlu0.c.b16.cont [7/8] 0, 128
        %1299 = vxpose.xlu0.c.b16.end [8/8] 0, 128
        %v1300 = vpop.trf.xlu0
        %v1301 = vpop.trf.xlu0
        %v1302 = vpop.trf.xlu0
        %v1303 = vpop.trf.xlu0
        %v1304 = vpop.trf.xlu0
        %v1305 = vpop.trf.xlu0
        %v1306 = vpop.trf.xlu0
        %v1307 = vpop.trf.xlu0
        %1308 = vxpose.xlu0.c.b16.start [1/8] %v885, 128
        %1309 = vxpose.xlu0.c.b16.cont [2/8] 0, 128
        %1310 = vxpose.xlu0.c.b16.cont [3/8] 0, 128
        %1311 = vxpose.xlu0.c.b16.cont [4/8] 0, 128
        %1312 = vxpose.xlu0.c.b16.cont [5/8] 0, 128
        %1313 = vxpose.xlu0.c.b16.cont [6/8] 0, 128
        %1314 = vxpose.xlu0.c.b16.cont [7/8] 0, 128
        %1315 = vxpose.xlu0.c.b16.end [8/8] 0, 128
        %v1316 = vpop.trf.xlu0
        %v1317 = vpop.trf.xlu0
        %v1318 = vpop.trf.xlu0
        %v1319 = vpop.trf.xlu0
        %v1320 = vpop.trf.xlu0
        %v1321 = vpop.trf.xlu0
        %v1322 = vpop.trf.xlu0
        %v1323 = vpop.trf.xlu0
        %1324 = vxpose.xlu0.c.b16.start [1/8] %v889, 128
        %1325 = vxpose.xlu0.c.b16.cont [2/8] 0, 128
        %1326 = vxpose.xlu0.c.b16.cont [3/8] 0, 128
        %1327 = vxpose.xlu0.c.b16.cont [4/8] 0, 128
        %1328 = vxpose.xlu0.c.b16.cont [5/8] 0, 128
        %1329 = vxpose.xlu0.c.b16.cont [6/8] 0, 128
        %1330 = vxpose.xlu0.c.b16.cont [7/8] 0, 128
        %1331 = vxpose.xlu0.c.b16.end [8/8] 0, 128
        %v1332 = vpop.trf.xlu0
        %v1333 = vpop.trf.xlu0
        %v1334 = vpop.trf.xlu0
        %v1335 = vpop.trf.xlu0
        %v1336 = vpop.trf.xlu0
        %v1337 = vpop.trf.xlu0
        %v1338 = vpop.trf.xlu0
        %v1339 = vpop.trf.xlu0
        %1340 = vxpose.xlu0.c.b16.start [1/8] %v893, 128
        %1341 = vxpose.xlu0.c.b16.cont [2/8] 0, 128
        %1342 = vxpose.xlu0.c.b16.cont [3/8] 0, 128
        %1343 = vxpose.xlu0.c.b16.cont [4/8] 0, 128
        %1344 = vxpose.xlu0.c.b16.cont [5/8] 0, 128
        %1345 = vxpose.xlu0.c.b16.cont [6/8] 0, 128
        %1346 = vxpose.xlu0.c.b16.cont [7/8] 0, 128
        %1347 = vxpose.xlu0.c.b16.end [8/8] 0, 128
        %v1348 = vpop.trf.xlu0
        %v1349 = vpop.trf.xlu0
        %v1350 = vpop.trf.xlu0
        %v1351 = vpop.trf.xlu0
        %v1352 = vpop.trf.xlu0
        %v1353 = vpop.trf.xlu0
        %v1354 = vpop.trf.xlu0
        %v1355 = vpop.trf.xlu0
        %1356 = vxpose.xlu0.c.b16.start [1/8] %v897, 128
        %1357 = vxpose.xlu0.c.b16.cont [2/8] 0, 128
        %1358 = vxpose.xlu0.c.b16.cont [3/8] 0, 128
        %1359 = vxpose.xlu0.c.b16.cont [4/8] 0, 128
        %1360 = vxpose.xlu0.c.b16.cont [5/8] 0, 128
        %1361 = vxpose.xlu0.c.b16.cont [6/8] 0, 128
        %1362 = vxpose.xlu0.c.b16.cont [7/8] 0, 128
        %1363 = vxpose.xlu0.c.b16.end [8/8] 0, 128
        %v1364 = vpop.trf.xlu0
        %v1365 = vpop.trf.xlu0
        %v1366 = vpop.trf.xlu0
        %v1367 = vpop.trf.xlu0
        %v1368 = vpop.trf.xlu0
        %v1369 = vpop.trf.xlu0
        %v1370 = vpop.trf.xlu0
        %v1371 = vpop.trf.xlu0
        %1372 = vxpose.xlu0.c.b16.start [1/8] %v901, 128
        %1373 = vxpose.xlu0.c.b16.cont [2/8] 0, 128
        %1374 = vxpose.xlu0.c.b16.cont [3/8] 0, 128
        %1375 = vxpose.xlu0.c.b16.cont [4/8] 0, 128
        %1376 = vxpose.xlu0.c.b16.cont [5/8] 0, 128
        %1377 = vxpose.xlu0.c.b16.cont [6/8] 0, 128
        %1378 = vxpose.xlu0.c.b16.cont [7/8] 0, 128
        %1379 = vxpose.xlu0.c.b16.end [8/8] 0, 128
        %v1380 = vpop.trf.xlu0
        %v1381 = vpop.trf.xlu0
        %v1382 = vpop.trf.xlu0
        %v1383 = vpop.trf.xlu0
        %v1384 = vpop.trf.xlu0
        %v1385 = vpop.trf.xlu0
        %v1386 = vpop.trf.xlu0
        %v1387 = vpop.trf.xlu0
        %vm1388 = vcmask 130048
        %v1390 = vsel %vm1388, %v1086, 0
        %1392 = vmatprep.subr.bf16.mxu0 0
        %1393 = vmatpush1.bf16.msra.mxu0 %v1140
        %1394 = vmatprep.subr.bf16.mxu0 0
        %1395 = vmatpush1.bf16.msra.mxu0 0
        %1396 = vmatprep.subr.bf16.mxu0 0
        %1397 = vmatpush1.bf16.msra.mxu0 0
        %1398 = vmatprep.subr.bf16.mxu0 0
        %1399 = vmatpush1.bf16.msra.mxu0 0
        %1400 = vmatprep.subr.bf16.mxu0 0
        %1401 = vmatpush1.bf16.msra.mxu0 0
        %1402 = vmatprep.subr.bf16.mxu0 0
        %1403 = vmatpush1.bf16.msra.mxu0 0
        %1404 = vmatprep.subr.bf16.mxu0 0
        %1405 = vmatpush1.bf16.msra.mxu0 0
        %1406 = vmatprep.subr.bf16.mxu0 0
        %1407 = vmatpush1.bf16.msra.mxu0 0
        %1408 = vmatprep.subr.bf16.mxu0 0
        %1409 = vmatpush1.bf16.msra.mxu0 0
        %1410 = vmatprep.subr.bf16.mxu0 0
        %1411 = vmatpush1.bf16.msra.mxu0 0
        %1412 = vmatprep.subr.bf16.mxu0 0
        %1413 = vmatpush1.bf16.msra.mxu0 0
        %1414 = vmatprep.subr.bf16.mxu0 0
        %1415 = vmatpush1.bf16.msra.mxu0 0
        %1416 = vmatprep.subr.bf16.mxu0 0
        %1417 = vmatpush1.bf16.msra.mxu0 0
        %1418 = vmatprep.subr.bf16.mxu0 0
        %1419 = vmatpush1.bf16.msra.mxu0 0
        %1420 = vmatprep.subr.bf16.mxu0 0
        %1421 = vmatpush1.bf16.msra.mxu0 0
        %1422 = vmatprep.subr.bf16.mxu0 0
        %1423 = vmatpush1.bf16.msra.mxu0 0
        %1424 = vmatprep.mubr.bf16.mxu0 0
        %1425 = vmatmul.mubr.bf16.gmra.mrb[0].mxu0 %v1390
        %v1426 = vpop.f32.mrb[0].mxu0
        %v1427 = vadd.f32 0.0, %v1426
        %v1428 = vpop.f32.mrb[0].mxu0
        %v1429 = vpop.f32.mrb[0].mxu0
        %v1430 = vpop.f32.mrb[0].mxu0
        %1431 = vdwg.mxu0
        %v1433 = vsel %vm1388, %v1089, 0
        %1435 = vmatprep.subr.bf16.mxu0 0
        %1436 = vmatpush1.bf16.msra.mxu0 %v1156
        %1437 = vmatprep.subr.bf16.mxu0 0
        %1438 = vmatpush1.bf16.msra.mxu0 0
        %1439 = vmatprep.subr.bf16.mxu0 0
        %1440 = vmatpush1.bf16.msra.mxu0 0
        %1441 = vmatprep.subr.bf16.mxu0 0
        %1442 = vmatpush1.bf16.msra.mxu0 0
        %1443 = vmatprep.subr.bf16.mxu0 0
        %1444 = vmatpush1.bf16.msra.mxu0 0
        %1445 = vmatprep.subr.bf16.mxu0 0
        %1446 = vmatpush1.bf16.msra.mxu0 0
        %1447 = vmatprep.subr.bf16.mxu0 0
        %1448 = vmatpush1.bf16.msra.mxu0 0
        %1449 = vmatprep.subr.bf16.mxu0 0
        %1450 = vmatpush1.bf16.msra.mxu0 0
        %1451 = vmatprep.subr.bf16.mxu0 0
        %1452 = vmatpush1.bf16.msra.mxu0 0
        %1453 = vmatprep.subr.bf16.mxu0 0
        %1454 = vmatpush1.bf16.msra.mxu0 0
        %1455 = vmatprep.subr.bf16.mxu0 0
        %1456 = vmatpush1.bf16.msra.mxu0 0
        %1457 = vmatprep.subr.bf16.mxu0 0
        %1458 = vmatpush1.bf16.msra.mxu0 0
        %1459 = vmatprep.subr.bf16.mxu0 0
        %1460 = vmatpush1.bf16.msra.mxu0 0
        %1461 = vmatprep.subr.bf16.mxu0 0
        %1462 = vmatpush1.bf16.msra.mxu0 0
        %1463 = vmatprep.subr.bf16.mxu0 0
        %1464 = vmatpush1.bf16.msra.mxu0 0
        %1465 = vmatprep.subr.bf16.mxu0 0
        %1466 = vmatpush1.bf16.msra.mxu0 0
        %1467 = vmatprep.mubr.bf16.mxu0 0
        %1468 = vmatmul.mubr.bf16.gmra.mrb[0].mxu0 %v1433
        %v1469 = vpop.f32.mrb[0].mxu0
        %v1470 = vadd.f32 0.0, %v1469
        %v1471 = vpop.f32.mrb[0].mxu0
        %v1472 = vpop.f32.mrb[0].mxu0
        %v1473 = vpop.f32.mrb[0].mxu0
        %1474 = vdwg.mxu0
        %v1476 = vsel %vm1388, %v1092, 0
        %1478 = vmatprep.subr.bf16.mxu0 0
        %1479 = vmatpush1.bf16.msra.mxu0 %v1172
        %1480 = vmatprep.subr.bf16.mxu0 0
        %1481 = vmatpush1.bf16.msra.mxu0 0
        %1482 = vmatprep.subr.bf16.mxu0 0
        %1483 = vmatpush1.bf16.msra.mxu0 0
        %1484 = vmatprep.subr.bf16.mxu0 0
        %1485 = vmatpush1.bf16.msra.mxu0 0
        %1486 = vmatprep.subr.bf16.mxu0 0
        %1487 = vmatpush1.bf16.msra.mxu0 0
        %1488 = vmatprep.subr.bf16.mxu0 0
        %1489 = vmatpush1.bf16.msra.mxu0 0
        %1490 = vmatprep.subr.bf16.mxu0 0
        %1491 = vmatpush1.bf16.msra.mxu0 0
        %1492 = vmatprep.subr.bf16.mxu0 0
        %1493 = vmatpush1.bf16.msra.mxu0 0
        %1494 = vmatprep.subr.bf16.mxu0 0
        %1495 = vmatpush1.bf16.msra.mxu0 0
        %1496 = vmatprep.subr.bf16.mxu0 0
        %1497 = vmatpush1.bf16.msra.mxu0 0
        %1498 = vmatprep.subr.bf16.mxu0 0
        %1499 = vmatpush1.bf16.msra.mxu0 0
        %1500 = vmatprep.subr.bf16.mxu0 0
        %1501 = vmatpush1.bf16.msra.mxu0 0
        %1502 = vmatprep.subr.bf16.mxu0 0
        %1503 = vmatpush1.bf16.msra.mxu0 0
        %1504 = vmatprep.subr.bf16.mxu0 0
        %1505 = vmatpush1.bf16.msra.mxu0 0
        %1506 = vmatprep.subr.bf16.mxu0 0
        %1507 = vmatpush1.bf16.msra.mxu0 0
        %1508 = vmatprep.subr.bf16.mxu0 0
        %1509 = vmatpush1.bf16.msra.mxu0 0
        %1510 = vmatprep.mubr.bf16.mxu0 0
        %1511 = vmatmul.mubr.bf16.gmra.mrb[0].mxu0 %v1476
        %v1512 = vpop.f32.mrb[0].mxu0
        %v1513 = vadd.f32 0.0, %v1512
        %v1514 = vpop.f32.mrb[0].mxu0
        %v1515 = vpop.f32.mrb[0].mxu0
        %v1516 = vpop.f32.mrb[0].mxu0
        %1517 = vdwg.mxu0
        %v1519 = vsel %vm1388, %v1095, 0
        %1521 = vmatprep.subr.bf16.mxu0 0
        %1522 = vmatpush1.bf16.msra.mxu0 %v1188
        %1523 = vmatprep.subr.bf16.mxu0 0
        %1524 = vmatpush1.bf16.msra.mxu0 0
        %1525 = vmatprep.subr.bf16.mxu0 0
        %1526 = vmatpush1.bf16.msra.mxu0 0
        %1527 = vmatprep.subr.bf16.mxu0 0
        %1528 = vmatpush1.bf16.msra.mxu0 0
        %1529 = vmatprep.subr.bf16.mxu0 0
        %1530 = vmatpush1.bf16.msra.mxu0 0
        %1531 = vmatprep.subr.bf16.mxu0 0
        %1532 = vmatpush1.bf16.msra.mxu0 0
        %1533 = vmatprep.subr.bf16.mxu0 0
        %1534 = vmatpush1.bf16.msra.mxu0 0
        %1535 = vmatprep.subr.bf16.mxu0 0
        %1536 = vmatpush1.bf16.msra.mxu0 0
        %1537 = vmatprep.subr.bf16.mxu0 0
        %1538 = vmatpush1.bf16.msra.mxu0 0
        %1539 = vmatprep.subr.bf16.mxu0 0
        %1540 = vmatpush1.bf16.msra.mxu0 0
        %1541 = vmatprep.subr.bf16.mxu0 0
        %1542 = vmatpush1.bf16.msra.mxu0 0
        %1543 = vmatprep.subr.bf16.mxu0 0
        %1544 = vmatpush1.bf16.msra.mxu0 0
        %1545 = vmatprep.subr.bf16.mxu0 0
        %1546 = vmatpush1.bf16.msra.mxu0 0
        %1547 = vmatprep.subr.bf16.mxu0 0
        %1548 = vmatpush1.bf16.msra.mxu0 0
        %1549 = vmatprep.subr.bf16.mxu0 0
        %1550 = vmatpush1.bf16.msra.mxu0 0
        %1551 = vmatprep.subr.bf16.mxu0 0
        %1552 = vmatpush1.bf16.msra.mxu0 0
        %1553 = vmatprep.mubr.bf16.mxu0 0
        %1554 = vmatmul.mubr.bf16.gmra.mrb[0].mxu0 %v1519
        %v1555 = vpop.f32.mrb[0].mxu0
        %v1556 = vadd.f32 0.0, %v1555
        %v1557 = vpop.f32.mrb[0].mxu0
        %v1558 = vpop.f32.mrb[0].mxu0
        %v1559 = vpop.f32.mrb[0].mxu0
        %1560 = vdwg.mxu0
        %v1562 = vsel %vm1388, %v1098, 0
        %1564 = vmatprep.subr.bf16.mxu0 0
        %1565 = vmatpush1.bf16.msra.mxu0 %v1204
        %1566 = vmatprep.subr.bf16.mxu0 0
        %1567 = vmatpush1.bf16.msra.mxu0 0
        %1568 = vmatprep.subr.bf16.mxu0 0
        %1569 = vmatpush1.bf16.msra.mxu0 0
        %1570 = vmatprep.subr.bf16.mxu0 0
        %1571 = vmatpush1.bf16.msra.mxu0 0
        %1572 = vmatprep.subr.bf16.mxu0 0
        %1573 = vmatpush1.bf16.msra.mxu0 0
        %1574 = vmatprep.subr.bf16.mxu0 0
        %1575 = vmatpush1.bf16.msra.mxu0 0
        %1576 = vmatprep.subr.bf16.mxu0 0
        %1577 = vmatpush1.bf16.msra.mxu0 0
        %1578 = vmatprep.subr.bf16.mxu0 0
        %1579 = vmatpush1.bf16.msra.mxu0 0
        %1580 = vmatprep.subr.bf16.mxu0 0
        %1581 = vmatpush1.bf16.msra.mxu0 0
        %1582 = vmatprep.subr.bf16.mxu0 0
        %1583 = vmatpush1.bf16.msra.mxu0 0
        %1584 = vmatprep.subr.bf16.mxu0 0
        %1585 = vmatpush1.bf16.msra.mxu0 0
        %1586 = vmatprep.subr.bf16.mxu0 0
        %1587 = vmatpush1.bf16.msra.mxu0 0
        %1588 = vmatprep.subr.bf16.mxu0 0
        %1589 = vmatpush1.bf16.msra.mxu0 0
        %1590 = vmatprep.subr.bf16.mxu0 0
        %1591 = vmatpush1.bf16.msra.mxu0 0
        %1592 = vmatprep.subr.bf16.mxu0 0
        %1593 = vmatpush1.bf16.msra.mxu0 0
        %1594 = vmatprep.subr.bf16.mxu0 0
        %1595 = vmatpush1.bf16.msra.mxu0 0
        %1596 = vmatprep.mubr.bf16.mxu0 0
        %1597 = vmatmul.mubr.bf16.gmra.mrb[0].mxu0 %v1562
        %v1598 = vpop.f32.mrb[0].mxu0
        %v1599 = vadd.f32 0.0, %v1598
        %v1600 = vpop.f32.mrb[0].mxu0
        %v1601 = vpop.f32.mrb[0].mxu0
        %v1602 = vpop.f32.mrb[0].mxu0
        %1603 = vdwg.mxu0
        %v1605 = vsel %vm1388, %v1101, 0
        %1607 = vmatprep.subr.bf16.mxu0 0
        %1608 = vmatpush1.bf16.msra.mxu0 %v1220
        %1609 = vmatprep.subr.bf16.mxu0 0
        %1610 = vmatpush1.bf16.msra.mxu0 0
        %1611 = vmatprep.subr.bf16.mxu0 0
        %1612 = vmatpush1.bf16.msra.mxu0 0
        %1613 = vmatprep.subr.bf16.mxu0 0
        %1614 = vmatpush1.bf16.msra.mxu0 0
        %1615 = vmatprep.subr.bf16.mxu0 0
        %1616 = vmatpush1.bf16.msra.mxu0 0
        %1617 = vmatprep.subr.bf16.mxu0 0
        %1618 = vmatpush1.bf16.msra.mxu0 0
        %1619 = vmatprep.subr.bf16.mxu0 0
        %1620 = vmatpush1.bf16.msra.mxu0 0
        %1621 = vmatprep.subr.bf16.mxu0 0
        %1622 = vmatpush1.bf16.msra.mxu0 0
        %1623 = vmatprep.subr.bf16.mxu0 0
        %1624 = vmatpush1.bf16.msra.mxu0 0
        %1625 = vmatprep.subr.bf16.mxu0 0
        %1626 = vmatpush1.bf16.msra.mxu0 0
        %1627 = vmatprep.subr.bf16.mxu0 0
        %1628 = vmatpush1.bf16.msra.mxu0 0
        %1629 = vmatprep.subr.bf16.mxu0 0
        %1630 = vmatpush1.bf16.msra.mxu0 0
        %1631 = vmatprep.subr.bf16.mxu0 0
        %1632 = vmatpush1.bf16.msra.mxu0 0
        %1633 = vmatprep.subr.bf16.mxu0 0
        %1634 = vmatpush1.bf16.msra.mxu0 0
        %1635 = vmatprep.subr.bf16.mxu0 0
        %1636 = vmatpush1.bf16.msra.mxu0 0
        %1637 = vmatprep.subr.bf16.mxu0 0
        %1638 = vmatpush1.bf16.msra.mxu0 0
        %1639 = vmatprep.mubr.bf16.mxu0 0
        %1640 = vmatmul.mubr.bf16.gmra.mrb[0].mxu0 %v1605
        %v1641 = vpop.f32.mrb[0].mxu0
        %v1642 = vadd.f32 0.0, %v1641
        %v1643 = vpop.f32.mrb[0].mxu0
        %v1644 = vpop.f32.mrb[0].mxu0
        %v1645 = vpop.f32.mrb[0].mxu0
        %1646 = vdwg.mxu0
        %v1648 = vsel %vm1388, %v1104, 0
        %1650 = vmatprep.subr.bf16.mxu0 0
        %1651 = vmatpush1.bf16.msra.mxu0 %v1236
        %1652 = vmatprep.subr.bf16.mxu0 0
        %1653 = vmatpush1.bf16.msra.mxu0 0
        %1654 = vmatprep.subr.bf16.mxu0 0
        %1655 = vmatpush1.bf16.msra.mxu0 0
        %1656 = vmatprep.subr.bf16.mxu0 0
        %1657 = vmatpush1.bf16.msra.mxu0 0
        %1658 = vmatprep.subr.bf16.mxu0 0
        %1659 = vmatpush1.bf16.msra.mxu0 0
        %1660 = vmatprep.subr.bf16.mxu0 0
        %1661 = vmatpush1.bf16.msra.mxu0 0
        %1662 = vmatprep.subr.bf16.mxu0 0
        %1663 = vmatpush1.bf16.msra.mxu0 0
        %1664 = vmatprep.subr.bf16.mxu0 0
        %1665 = vmatpush1.bf16.msra.mxu0 0
        %1666 = vmatprep.subr.bf16.mxu0 0
        %1667 = vmatpush1.bf16.msra.mxu0 0
        %1668 = vmatprep.subr.bf16.mxu0 0
        %1669 = vmatpush1.bf16.msra.mxu0 0
        %1670 = vmatprep.subr.bf16.mxu0 0
        %1671 = vmatpush1.bf16.msra.mxu0 0
        %1672 = vmatprep.subr.bf16.mxu0 0
        %1673 = vmatpush1.bf16.msra.mxu0 0
        %1674 = vmatprep.subr.bf16.mxu0 0
        %1675 = vmatpush1.bf16.msra.mxu0 0
        %1676 = vmatprep.subr.bf16.mxu0 0
        %1677 = vmatpush1.bf16.msra.mxu0 0
        %1678 = vmatprep.subr.bf16.mxu0 0
        %1679 = vmatpush1.bf16.msra.mxu0 0
        %1680 = vmatprep.subr.bf16.mxu0 0
        %1681 = vmatpush1.bf16.msra.mxu0 0
        %1682 = vmatprep.mubr.bf16.mxu0 0
        %1683 = vmatmul.mubr.bf16.gmra.mrb[0].mxu0 %v1648
        %v1684 = vpop.f32.mrb[0].mxu0
        %v1685 = vadd.f32 0.0, %v1684
        %v1686 = vpop.f32.mrb[0].mxu0
        %v1687 = vpop.f32.mrb[0].mxu0
        %v1688 = vpop.f32.mrb[0].mxu0
        %1689 = vdwg.mxu0
        %v1691 = vsel %vm1388, %v1107, 0
        %1693 = vmatprep.subr.bf16.mxu0 0
        %1694 = vmatpush1.bf16.msra.mxu0 %v1252
        %1695 = vmatprep.subr.bf16.mxu0 0
        %1696 = vmatpush1.bf16.msra.mxu0 0
        %1697 = vmatprep.subr.bf16.mxu0 0
        %1698 = vmatpush1.bf16.msra.mxu0 0
        %1699 = vmatprep.subr.bf16.mxu0 0
        %1700 = vmatpush1.bf16.msra.mxu0 0
        %1701 = vmatprep.subr.bf16.mxu0 0
        %1702 = vmatpush1.bf16.msra.mxu0 0
        %1703 = vmatprep.subr.bf16.mxu0 0
        %1704 = vmatpush1.bf16.msra.mxu0 0
        %1705 = vmatprep.subr.bf16.mxu0 0
        %1706 = vmatpush1.bf16.msra.mxu0 0
        %1707 = vmatprep.subr.bf16.mxu0 0
        %1708 = vmatpush1.bf16.msra.mxu0 0
        %1709 = vmatprep.subr.bf16.mxu0 0
        %1710 = vmatpush1.bf16.msra.mxu0 0
        %1711 = vmatprep.subr.bf16.mxu0 0
        %1712 = vmatpush1.bf16.msra.mxu0 0
        %1713 = vmatprep.subr.bf16.mxu0 0
        %1714 = vmatpush1.bf16.msra.mxu0 0
        %1715 = vmatprep.subr.bf16.mxu0 0
        %1716 = vmatpush1.bf16.msra.mxu0 0
        %1717 = vmatprep.subr.bf16.mxu0 0
        %1718 = vmatpush1.bf16.msra.mxu0 0
        %1719 = vmatprep.subr.bf16.mxu0 0
        %1720 = vmatpush1.bf16.msra.mxu0 0
        %1721 = vmatprep.subr.bf16.mxu0 0
        %1722 = vmatpush1.bf16.msra.mxu0 0
        %1723 = vmatprep.subr.bf16.mxu0 0
        %1724 = vmatpush1.bf16.msra.mxu0 0
        %1725 = vmatprep.mubr.bf16.mxu0 0
        %1726 = vmatmul.mubr.bf16.gmra.mrb[0].mxu0 %v1691
        %v1727 = vpop.f32.mrb[0].mxu0
        %v1728 = vadd.f32 0.0, %v1727
        %v1729 = vpop.f32.mrb[0].mxu0
        %v1730 = vpop.f32.mrb[0].mxu0
        %v1731 = vpop.f32.mrb[0].mxu0
        %1732 = vdwg.mxu0
        %v1734 = vsel %vm1388, %v1110, 0
        %1736 = vmatprep.subr.bf16.mxu0 0
        %1737 = vmatpush1.bf16.msra.mxu0 %v1268
        %1738 = vmatprep.subr.bf16.mxu0 0
        %1739 = vmatpush1.bf16.msra.mxu0 0
        %1740 = vmatprep.subr.bf16.mxu0 0
        %1741 = vmatpush1.bf16.msra.mxu0 0
        %1742 = vmatprep.subr.bf16.mxu0 0
        %1743 = vmatpush1.bf16.msra.mxu0 0
        %1744 = vmatprep.subr.bf16.mxu0 0
        %1745 = vmatpush1.bf16.msra.mxu0 0
        %1746 = vmatprep.subr.bf16.mxu0 0
        %1747 = vmatpush1.bf16.msra.mxu0 0
        %1748 = vmatprep.subr.bf16.mxu0 0
        %1749 = vmatpush1.bf16.msra.mxu0 0
        %1750 = vmatprep.subr.bf16.mxu0 0
        %1751 = vmatpush1.bf16.msra.mxu0 0
        %1752 = vmatprep.subr.bf16.mxu0 0
        %1753 = vmatpush1.bf16.msra.mxu0 0
        %1754 = vmatprep.subr.bf16.mxu0 0
        %1755 = vmatpush1.bf16.msra.mxu0 0
        %1756 = vmatprep.subr.bf16.mxu0 0
        %1757 = vmatpush1.bf16.msra.mxu0 0
        %1758 = vmatprep.subr.bf16.mxu0 0
        %1759 = vmatpush1.bf16.msra.mxu0 0
        %1760 = vmatprep.subr.bf16.mxu0 0
        %1761 = vmatpush1.bf16.msra.mxu0 0
        %1762 = vmatprep.subr.bf16.mxu0 0
        %1763 = vmatpush1.bf16.msra.mxu0 0
        %1764 = vmatprep.subr.bf16.mxu0 0
        %1765 = vmatpush1.bf16.msra.mxu0 0
        %1766 = vmatprep.subr.bf16.mxu0 0
        %1767 = vmatpush1.bf16.msra.mxu0 0
        %1768 = vmatprep.mubr.bf16.mxu0 0
        %1769 = vmatmul.mubr.bf16.gmra.mrb[0].mxu0 %v1734
        %v1770 = vpop.f32.mrb[0].mxu0
        %v1771 = vadd.f32 0.0, %v1770
        %v1772 = vpop.f32.mrb[0].mxu0
        %v1773 = vpop.f32.mrb[0].mxu0
        %v1774 = vpop.f32.mrb[0].mxu0
        %1775 = vdwg.mxu0
        %v1777 = vsel %vm1388, %v1113, 0
        %1779 = vmatprep.subr.bf16.mxu0 0
        %1780 = vmatpush1.bf16.msra.mxu0 %v1284
        %1781 = vmatprep.subr.bf16.mxu0 0
        %1782 = vmatpush1.bf16.msra.mxu0 0
        %1783 = vmatprep.subr.bf16.mxu0 0
        %1784 = vmatpush1.bf16.msra.mxu0 0
        %1785 = vmatprep.subr.bf16.mxu0 0
        %1786 = vmatpush1.bf16.msra.mxu0 0
        %1787 = vmatprep.subr.bf16.mxu0 0
        %1788 = vmatpush1.bf16.msra.mxu0 0
        %1789 = vmatprep.subr.bf16.mxu0 0
        %1790 = vmatpush1.bf16.msra.mxu0 0
        %1791 = vmatprep.subr.bf16.mxu0 0
        %1792 = vmatpush1.bf16.msra.mxu0 0
        %1793 = vmatprep.subr.bf16.mxu0 0
        %1794 = vmatpush1.bf16.msra.mxu0 0
        %1795 = vmatprep.subr.bf16.mxu0 0
        %1796 = vmatpush1.bf16.msra.mxu0 0
        %1797 = vmatprep.subr.bf16.mxu0 0
        %1798 = vmatpush1.bf16.msra.mxu0 0
        %1799 = vmatprep.subr.bf16.mxu0 0
        %1800 = vmatpush1.bf16.msra.mxu0 0
        %1801 = vmatprep.subr.bf16.mxu0 0
        %1802 = vmatpush1.bf16.msra.mxu0 0
        %1803 = vmatprep.subr.bf16.mxu0 0
        %1804 = vmatpush1.bf16.msra.mxu0 0
        %1805 = vmatprep.subr.bf16.mxu0 0
        %1806 = vmatpush1.bf16.msra.mxu0 0
        %1807 = vmatprep.subr.bf16.mxu0 0
        %1808 = vmatpush1.bf16.msra.mxu0 0
        %1809 = vmatprep.subr.bf16.mxu0 0
        %1810 = vmatpush1.bf16.msra.mxu0 0
        %1811 = vmatprep.mubr.bf16.mxu0 0
        %1812 = vmatmul.mubr.bf16.gmra.mrb[0].mxu0 %v1777
        %v1813 = vpop.f32.mrb[0].mxu0
        %v1814 = vadd.f32 0.0, %v1813
        %v1815 = vpop.f32.mrb[0].mxu0
        %v1816 = vpop.f32.mrb[0].mxu0
        %v1817 = vpop.f32.mrb[0].mxu0
        %1818 = vdwg.mxu0
        %v1820 = vsel %vm1388, %v1116, 0
        %1822 = vmatprep.subr.bf16.mxu0 0
        %1823 = vmatpush1.bf16.msra.mxu0 %v1300
        %1824 = vmatprep.subr.bf16.mxu0 0
        %1825 = vmatpush1.bf16.msra.mxu0 0
        %1826 = vmatprep.subr.bf16.mxu0 0
        %1827 = vmatpush1.bf16.msra.mxu0 0
        %1828 = vmatprep.subr.bf16.mxu0 0
        %1829 = vmatpush1.bf16.msra.mxu0 0
        %1830 = vmatprep.subr.bf16.mxu0 0
        %1831 = vmatpush1.bf16.msra.mxu0 0
        %1832 = vmatprep.subr.bf16.mxu0 0
        %1833 = vmatpush1.bf16.msra.mxu0 0
        %1834 = vmatprep.subr.bf16.mxu0 0
        %1835 = vmatpush1.bf16.msra.mxu0 0
        %1836 = vmatprep.subr.bf16.mxu0 0
        %1837 = vmatpush1.bf16.msra.mxu0 0
        %1838 = vmatprep.subr.bf16.mxu0 0
        %1839 = vmatpush1.bf16.msra.mxu0 0
        %1840 = vmatprep.subr.bf16.mxu0 0
        %1841 = vmatpush1.bf16.msra.mxu0 0
        %1842 = vmatprep.subr.bf16.mxu0 0
        %1843 = vmatpush1.bf16.msra.mxu0 0
        %1844 = vmatprep.subr.bf16.mxu0 0
        %1845 = vmatpush1.bf16.msra.mxu0 0
        %1846 = vmatprep.subr.bf16.mxu0 0
        %1847 = vmatpush1.bf16.msra.mxu0 0
        %1848 = vmatprep.subr.bf16.mxu0 0
        %1849 = vmatpush1.bf16.msra.mxu0 0
        %1850 = vmatprep.subr.bf16.mxu0 0
        %1851 = vmatpush1.bf16.msra.mxu0 0
        %1852 = vmatprep.subr.bf16.mxu0 0
        %1853 = vmatpush1.bf16.msra.mxu0 0
        %1854 = vmatprep.mubr.bf16.mxu0 0
        %1855 = vmatmul.mubr.bf16.gmra.mrb[0].mxu0 %v1820
        %v1856 = vpop.f32.mrb[0].mxu0
        %v1857 = vadd.f32 0.0, %v1856
        %v1858 = vpop.f32.mrb[0].mxu0
        %v1859 = vpop.f32.mrb[0].mxu0
        %v1860 = vpop.f32.mrb[0].mxu0
        %1861 = vdwg.mxu0
        %v1863 = vsel %vm1388, %v1119, 0
        %1865 = vmatprep.subr.bf16.mxu0 0
        %1866 = vmatpush1.bf16.msra.mxu0 %v1316
        %1867 = vmatprep.subr.bf16.mxu0 0
        %1868 = vmatpush1.bf16.msra.mxu0 0
        %1869 = vmatprep.subr.bf16.mxu0 0
        %1870 = vmatpush1.bf16.msra.mxu0 0
        %1871 = vmatprep.subr.bf16.mxu0 0
        %1872 = vmatpush1.bf16.msra.mxu0 0
        %1873 = vmatprep.subr.bf16.mxu0 0
        %1874 = vmatpush1.bf16.msra.mxu0 0
        %1875 = vmatprep.subr.bf16.mxu0 0
        %1876 = vmatpush1.bf16.msra.mxu0 0
        %1877 = vmatprep.subr.bf16.mxu0 0
        %1878 = vmatpush1.bf16.msra.mxu0 0
        %1879 = vmatprep.subr.bf16.mxu0 0
        %1880 = vmatpush1.bf16.msra.mxu0 0
        %1881 = vmatprep.subr.bf16.mxu0 0
        %1882 = vmatpush1.bf16.msra.mxu0 0
        %1883 = vmatprep.subr.bf16.mxu0 0
        %1884 = vmatpush1.bf16.msra.mxu0 0
        %1885 = vmatprep.subr.bf16.mxu0 0
        %1886 = vmatpush1.bf16.msra.mxu0 0
        %1887 = vmatprep.subr.bf16.mxu0 0
        %1888 = vmatpush1.bf16.msra.mxu0 0
        %1889 = vmatprep.subr.bf16.mxu0 0
        %1890 = vmatpush1.bf16.msra.mxu0 0
        %1891 = vmatprep.subr.bf16.mxu0 0
        %1892 = vmatpush1.bf16.msra.mxu0 0
        %1893 = vmatprep.subr.bf16.mxu0 0
        %1894 = vmatpush1.bf16.msra.mxu0 0
        %1895 = vmatprep.subr.bf16.mxu0 0
        %1896 = vmatpush1.bf16.msra.mxu0 0
        %1897 = vmatprep.mubr.bf16.mxu0 0
        %1898 = vmatmul.mubr.bf16.gmra.mrb[0].mxu0 %v1863
        %v1899 = vpop.f32.mrb[0].mxu0
        %v1900 = vadd.f32 0.0, %v1899
        %v1901 = vpop.f32.mrb[0].mxu0
        %v1902 = vpop.f32.mrb[0].mxu0
        %v1903 = vpop.f32.mrb[0].mxu0
        %1904 = vdwg.mxu0
        %v1906 = vsel %vm1388, %v1122, 0
        %1908 = vmatprep.subr.bf16.mxu0 0
        %1909 = vmatpush1.bf16.msra.mxu0 %v1332
        %1910 = vmatprep.subr.bf16.mxu0 0
        %1911 = vmatpush1.bf16.msra.mxu0 0
        %1912 = vmatprep.subr.bf16.mxu0 0
        %1913 = vmatpush1.bf16.msra.mxu0 0
        %1914 = vmatprep.subr.bf16.mxu0 0
        %1915 = vmatpush1.bf16.msra.mxu0 0
        %1916 = vmatprep.subr.bf16.mxu0 0
        %1917 = vmatpush1.bf16.msra.mxu0 0
        %1918 = vmatprep.subr.bf16.mxu0 0
        %1919 = vmatpush1.bf16.msra.mxu0 0
        %1920 = vmatprep.subr.bf16.mxu0 0
        %1921 = vmatpush1.bf16.msra.mxu0 0
        %1922 = vmatprep.subr.bf16.mxu0 0
        %1923 = vmatpush1.bf16.msra.mxu0 0
        %1924 = vmatprep.subr.bf16.mxu0 0
        %1925 = vmatpush1.bf16.msra.mxu0 0
        %1926 = vmatprep.subr.bf16.mxu0 0
        %1927 = vmatpush1.bf16.msra.mxu0 0
        %1928 = vmatprep.subr.bf16.mxu0 0
        %1929 = vmatpush1.bf16.msra.mxu0 0
        %1930 = vmatprep.subr.bf16.mxu0 0
        %1931 = vmatpush1.bf16.msra.mxu0 0
        %1932 = vmatprep.subr.bf16.mxu0 0
        %1933 = vmatpush1.bf16.msra.mxu0 0
        %1934 = vmatprep.subr.bf16.mxu0 0
        %1935 = vmatpush1.bf16.msra.mxu0 0
        %1936 = vmatprep.subr.bf16.mxu0 0
        %1937 = vmatpush1.bf16.msra.mxu0 0
        %1938 = vmatprep.subr.bf16.mxu0 0
        %1939 = vmatpush1.bf16.msra.mxu0 0
        %1940 = vmatprep.mubr.bf16.mxu0 0
        %1941 = vmatmul.mubr.bf16.gmra.mrb[0].mxu0 %v1906
        %v1942 = vpop.f32.mrb[0].mxu0
        %v1943 = vadd.f32 0.0, %v1942
        %v1944 = vpop.f32.mrb[0].mxu0
        %v1945 = vpop.f32.mrb[0].mxu0
        %v1946 = vpop.f32.mrb[0].mxu0
        %1947 = vdwg.mxu0
        %v1949 = vsel %vm1388, %v1125, 0
        %1951 = vmatprep.subr.bf16.mxu0 0
        %1952 = vmatpush1.bf16.msra.mxu0 %v1348
        %1953 = vmatprep.subr.bf16.mxu0 0
        %1954 = vmatpush1.bf16.msra.mxu0 0
        %1955 = vmatprep.subr.bf16.mxu0 0
        %1956 = vmatpush1.bf16.msra.mxu0 0
        %1957 = vmatprep.subr.bf16.mxu0 0
        %1958 = vmatpush1.bf16.msra.mxu0 0
        %1959 = vmatprep.subr.bf16.mxu0 0
        %1960 = vmatpush1.bf16.msra.mxu0 0
        %1961 = vmatprep.subr.bf16.mxu0 0
        %1962 = vmatpush1.bf16.msra.mxu0 0
        %1963 = vmatprep.subr.bf16.mxu0 0
        %1964 = vmatpush1.bf16.msra.mxu0 0
        %1965 = vmatprep.subr.bf16.mxu0 0
        %1966 = vmatpush1.bf16.msra.mxu0 0
        %1967 = vmatprep.subr.bf16.mxu0 0
        %1968 = vmatpush1.bf16.msra.mxu0 0
        %1969 = vmatprep.subr.bf16.mxu0 0
        %1970 = vmatpush1.bf16.msra.mxu0 0
        %1971 = vmatprep.subr.bf16.mxu0 0
        %1972 = vmatpush1.bf16.msra.mxu0 0
        %1973 = vmatprep.subr.bf16.mxu0 0
        %1974 = vmatpush1.bf16.msra.mxu0 0
        %1975 = vmatprep.subr.bf16.mxu0 0
        %1976 = vmatpush1.bf16.msra.mxu0 0
        %1977 = vmatprep.subr.bf16.mxu0 0
        %1978 = vmatpush1.bf16.msra.mxu0 0
        %1979 = vmatprep.subr.bf16.mxu0 0
        %1980 = vmatpush1.bf16.msra.mxu0 0
        %1981 = vmatprep.subr.bf16.mxu0 0
        %1982 = vmatpush1.bf16.msra.mxu0 0
        %1983 = vmatprep.mubr.bf16.mxu0 0
        %1984 = vmatmul.mubr.bf16.gmra.mrb[0].mxu0 %v1949
        %v1985 = vpop.f32.mrb[0].mxu0
        %v1986 = vadd.f32 0.0, %v1985
        %v1987 = vpop.f32.mrb[0].mxu0
        %v1988 = vpop.f32.mrb[0].mxu0
        %v1989 = vpop.f32.mrb[0].mxu0
        %1990 = vdwg.mxu0
        %v1992 = vsel %vm1388, %v1128, 0
        %1994 = vmatprep.subr.bf16.mxu0 0
        %1995 = vmatpush1.bf16.msra.mxu0 %v1364
        %1996 = vmatprep.subr.bf16.mxu0 0
        %1997 = vmatpush1.bf16.msra.mxu0 0
        %1998 = vmatprep.subr.bf16.mxu0 0
        %1999 = vmatpush1.bf16.msra.mxu0 0
        %2000 = vmatprep.subr.bf16.mxu0 0
        %2001 = vmatpush1.bf16.msra.mxu0 0
        %2002 = vmatprep.subr.bf16.mxu0 0
        %2003 = vmatpush1.bf16.msra.mxu0 0
        %2004 = vmatprep.subr.bf16.mxu0 0
        %2005 = vmatpush1.bf16.msra.mxu0 0
        %2006 = vmatprep.subr.bf16.mxu0 0
        %2007 = vmatpush1.bf16.msra.mxu0 0
        %2008 = vmatprep.subr.bf16.mxu0 0
        %2009 = vmatpush1.bf16.msra.mxu0 0
        %2010 = vmatprep.subr.bf16.mxu0 0
        %2011 = vmatpush1.bf16.msra.mxu0 0
        %2012 = vmatprep.subr.bf16.mxu0 0
        %2013 = vmatpush1.bf16.msra.mxu0 0
        %2014 = vmatprep.subr.bf16.mxu0 0
        %2015 = vmatpush1.bf16.msra.mxu0 0
        %2016 = vmatprep.subr.bf16.mxu0 0
        %2017 = vmatpush1.bf16.msra.mxu0 0
        %2018 = vmatprep.subr.bf16.mxu0 0
        %2019 = vmatpush1.bf16.msra.mxu0 0
        %2020 = vmatprep.subr.bf16.mxu0 0
        %2021 = vmatpush1.bf16.msra.mxu0 0
        %2022 = vmatprep.subr.bf16.mxu0 0
        %2023 = vmatpush1.bf16.msra.mxu0 0
        %2024 = vmatprep.subr.bf16.mxu0 0
        %2025 = vmatpush1.bf16.msra.mxu0 0
        %2026 = vmatprep.mubr.bf16.mxu0 0
        %2027 = vmatmul.mubr.bf16.gmra.mrb[0].mxu0 %v1992
        %v2028 = vpop.f32.mrb[0].mxu0
        %v2029 = vadd.f32 0.0, %v2028
        %v2030 = vpop.f32.mrb[0].mxu0
        %v2031 = vpop.f32.mrb[0].mxu0
        %v2032 = vpop.f32.mrb[0].mxu0
        %2033 = vdwg.mxu0
        %v2035 = vsel %vm1388, %v1131, 0
        %2037 = vmatprep.subr.bf16.mxu0 0
        %2038 = vmatpush1.bf16.msra.mxu0 %v1380
        %2039 = vmatprep.subr.bf16.mxu0 0
        %2040 = vmatpush1.bf16.msra.mxu0 0
        %2041 = vmatprep.subr.bf16.mxu0 0
        %2042 = vmatpush1.bf16.msra.mxu0 0
        %2043 = vmatprep.subr.bf16.mxu0 0
        %2044 = vmatpush1.bf16.msra.mxu0 0
        %2045 = vmatprep.subr.bf16.mxu0 0
        %2046 = vmatpush1.bf16.msra.mxu0 0
        %2047 = vmatprep.subr.bf16.mxu0 0
        %2048 = vmatpush1.bf16.msra.mxu0 0
        %2049 = vmatprep.subr.bf16.mxu0 0
        %2050 = vmatpush1.bf16.msra.mxu0 0
        %2051 = vmatprep.subr.bf16.mxu0 0
        %2052 = vmatpush1.bf16.msra.mxu0 0
        %2053 = vmatprep.subr.bf16.mxu0 0
        %2054 = vmatpush1.bf16.msra.mxu0 0
        %2055 = vmatprep.subr.bf16.mxu0 0
        %2056 = vmatpush1.bf16.msra.mxu0 0
        %2057 = vmatprep.subr.bf16.mxu0 0
        %2058 = vmatpush1.bf16.msra.mxu0 0
        %2059 = vmatprep.subr.bf16.mxu0 0
        %2060 = vmatpush1.bf16.msra.mxu0 0
        %2061 = vmatprep.subr.bf16.mxu0 0
        %2062 = vmatpush1.bf16.msra.mxu0 0
        %2063 = vmatprep.subr.bf16.mxu0 0
        %2064 = vmatpush1.bf16.msra.mxu0 0
        %2065 = vmatprep.subr.bf16.mxu0 0
        %2066 = vmatpush1.bf16.msra.mxu0 0
        %2067 = vmatprep.subr.bf16.mxu0 0
        %2068 = vmatpush1.bf16.msra.mxu0 0
        %2069 = vmatprep.mubr.bf16.mxu0 0
        %2070 = vmatmul.mubr.bf16.gmra.mrb[0].mxu0 %v2035
        %v2071 = vpop.f32.mrb[0].mxu0
        %v2072 = vadd.f32 0.0, %v2071
        %v2073 = vpop.f32.mrb[0].mxu0
        %v2074 = vpop.f32.mrb[0].mxu0
        %v2075 = vpop.f32.mrb[0].mxu0
        %2076 = vdwg.mxu0
        %v2077 = vmul.f32 %v1427, 0.0625
        %v2078 = vmul.f32 %v1470, 0.0625
        %v2079 = vmul.f32 %v1513, 0.0625
        %v2080 = vmul.f32 %v1556, 0.0625
        %v2081 = vmul.f32 %v1599, 0.0625
        %v2082 = vmul.f32 %v1642, 0.0625
        %v2083 = vmul.f32 %v1685, 0.0625
        %v2084 = vmul.f32 %v1728, 0.0625
        %v2085 = vmul.f32 %v1771, 0.0625
        %v2086 = vmul.f32 %v1814, 0.0625
        %v2087 = vmul.f32 %v1857, 0.0625
        %v2088 = vmul.f32 %v1900, 0.0625
        %v2089 = vmul.f32 %v1943, 0.0625
        %v2090 = vmul.f32 %v1986, 0.0625
        %v2091 = vmul.f32 %v2029, 0.0625
        %v2092 = vmul.f32 %v2072, 0.0625
        %v2093 = vld [vmem:[%s618] sm:$0xff]
        %v2094 = vadd.f32 %v2077, %v2093
        %v2095 = vadd.f32 %v2078, %v2093
        %v2096 = vadd.f32 %v2079, %v2093
        %v2097 = vadd.f32 %v2080, %v2093
        %v2098 = vadd.f32 %v2081, %v2093
        %v2099 = vadd.f32 %v2082, %v2093
        %v2100 = vadd.f32 %v2083, %v2093
        %v2101 = vadd.f32 %v2084, %v2093
        %v2102 = vadd.f32 %v2085, %v2093
        %v2103 = vadd.f32 %v2086, %v2093
        %v2104 = vadd.f32 %v2087, %v2093
        %v2105 = vadd.f32 %v2088, %v2093
        %v2106 = vadd.f32 %v2089, %v2093
        %v2107 = vadd.f32 %v2090, %v2093
        %v2108 = vadd.f32 %v2091, %v2093
        %v2109 = vadd.f32 %v2092, %v2093
        %vm2110 = vcmask 64512
        %v2111 = vsel %vm2110, %v2094, -inf
        %2112 = vmax.xlane.f32.xlu0 %v2111
        %v2113 = vpop.xlane.xlu0 %2112
        %v2114 = vsel %vm2110, %v2095, -inf
        %2115 = vmax.xlane.f32.xlu0 %v2114
        %v2116 = vpop.xlane.xlu0 %2115
        %v2117 = vsel %vm2110, %v2096, -inf
        %2118 = vmax.xlane.f32.xlu0 %v2117
        %v2119 = vpop.xlane.xlu0 %2118
        %v2120 = vsel %vm2110, %v2097, -inf
        %2121 = vmax.xlane.f32.xlu0 %v2120
        %v2122 = vpop.xlane.xlu0 %2121
        %v2123 = vsel %vm2110, %v2098, -inf
        %2124 = vmax.xlane.f32.xlu0 %v2123
        %v2125 = vpop.xlane.xlu0 %2124
        %v2126 = vsel %vm2110, %v2099, -inf
        %2127 = vmax.xlane.f32.xlu0 %v2126
        %v2128 = vpop.xlane.xlu0 %2127
        %v2129 = vsel %vm2110, %v2100, -inf
        %2130 = vmax.xlane.f32.xlu0 %v2129
        %v2131 = vpop.xlane.xlu0 %2130
        %v2132 = vsel %vm2110, %v2101, -inf
        %2133 = vmax.xlane.f32.xlu0 %v2132
        %v2134 = vpop.xlane.xlu0 %2133
        %v2135 = vsel %vm2110, %v2102, -inf
        %2136 = vmax.xlane.f32.xlu0 %v2135
        %v2137 = vpop.xlane.xlu0 %2136
        %v2138 = vsel %vm2110, %v2103, -inf
        %2139 = vmax.xlane.f32.xlu0 %v2138
        %v2140 = vpop.xlane.xlu0 %2139
        %v2141 = vsel %vm2110, %v2104, -inf
        %2142 = vmax.xlane.f32.xlu0 %v2141
        %v2143 = vpop.xlane.xlu0 %2142
        %v2144 = vsel %vm2110, %v2105, -inf
        %2145 = vmax.xlane.f32.xlu0 %v2144
        %v2146 = vpop.xlane.xlu0 %2145
        %v2147 = vsel %vm2110, %v2106, -inf
        %2148 = vmax.xlane.f32.xlu0 %v2147
        %v2149 = vpop.xlane.xlu0 %2148
        %v2150 = vsel %vm2110, %v2107, -inf
        %2151 = vmax.xlane.f32.xlu0 %v2150
        %v2152 = vpop.xlane.xlu0 %2151
        %v2153 = vsel %vm2110, %v2108, -inf
        %2154 = vmax.xlane.f32.xlu0 %v2153
        %v2155 = vpop.xlane.xlu0 %2154
        %v2156 = vsel %vm2110, %v2109, -inf
        %2157 = vmax.xlane.f32.xlu0 %v2156
        %v2158 = vpop.xlane.xlu0 %2157
        %v2159 = vsub.f32 %v2094, %v2113
        %v2160 = vsub.f32 %v2095, %v2116
        %v2161 = vsub.f32 %v2096, %v2119
        %v2162 = vsub.f32 %v2097, %v2122
        %v2163 = vsub.f32 %v2098, %v2125
        %v2164 = vsub.f32 %v2099, %v2128
        %v2165 = vsub.f32 %v2100, %v2131
        %v2166 = vsub.f32 %v2101, %v2134
        %v2167 = vsub.f32 %v2102, %v2137
        %v2168 = vsub.f32 %v2103, %v2140
        %v2169 = vsub.f32 %v2104, %v2143
        %v2170 = vsub.f32 %v2105, %v2146
        %v2171 = vsub.f32 %v2106, %v2149
        %v2172 = vsub.f32 %v2107, %v2152
        %v2173 = vsub.f32 %v2108, %v2155
        %v2174 = vsub.f32 %v2109, %v2158
        %v2175 = vmul.f32 %v2159, 1.442695
        %v2176 = vpow.pop %v2175
        %v2177 = vmul.f32 %v2160, 1.442695
        %v2178 = vpow.pop %v2177
        %v2179 = vmul.f32 %v2161, 1.442695
        %v2180 = vpow.pop %v2179
        %v2181 = vmul.f32 %v2162, 1.442695
        %v2182 = vpow.pop %v2181
        %v2183 = vmul.f32 %v2163, 1.442695
        %v2184 = vpow.pop %v2183
        %v2185 = vmul.f32 %v2164, 1.442695
        %v2186 = vpow.pop %v2185
        %v2187 = vmul.f32 %v2165, 1.442695
        %v2188 = vpow.pop %v2187
        %v2189 = vmul.f32 %v2166, 1.442695
        %v2190 = vpow.pop %v2189
        %v2191 = vmul.f32 %v2167, 1.442695
        %v2192 = vpow.pop %v2191
        %v2193 = vmul.f32 %v2168, 1.442695
        %v2194 = vpow.pop %v2193
        %v2195 = vmul.f32 %v2169, 1.442695
        %v2196 = vpow.pop %v2195
        %v2197 = vmul.f32 %v2170, 1.442695
        %v2198 = vpow.pop %v2197
        %v2199 = vmul.f32 %v2171, 1.442695
        %v2200 = vpow.pop %v2199
        %v2201 = vmul.f32 %v2172, 1.442695
        %v2202 = vpow.pop %v2201
        %v2203 = vmul.f32 %v2173, 1.442695
        %v2204 = vpow.pop %v2203
        %v2205 = vmul.f32 %v2174, 1.442695
        %v2206 = vpow.pop %v2205
        %v2207 = vsel %vm2110, %v2176, 0.0
        %2208 = vadd.xlane.f32.xlu0 %v2207
        %v2209 = vpop.xlane.xlu0 %2208
        %v2210 = vsel %vm2110, %v2178, 0.0
        %2211 = vadd.xlane.f32.xlu0 %v2210
        %v2212 = vpop.xlane.xlu0 %2211
        %v2213 = vsel %vm2110, %v2180, 0.0
        %2214 = vadd.xlane.f32.xlu0 %v2213
        %v2215 = vpop.xlane.xlu0 %2214
        %v2216 = vsel %vm2110, %v2182, 0.0
        %2217 = vadd.xlane.f32.xlu0 %v2216
        %v2218 = vpop.xlane.xlu0 %2217
        %v2219 = vsel %vm2110, %v2184, 0.0
        %2220 = vadd.xlane.f32.xlu0 %v2219
        %v2221 = vpop.xlane.xlu0 %2220
        %v2222 = vsel %vm2110, %v2186, 0.0
        %2223 = vadd.xlane.f32.xlu0 %v2222
        %v2224 = vpop.xlane.xlu0 %2223
        %v2225 = vsel %vm2110, %v2188, 0.0
        %2226 = vadd.xlane.f32.xlu0 %v2225
        %v2227 = vpop.xlane.xlu0 %2226
        %v2228 = vsel %vm2110, %v2190, 0.0
        %2229 = vadd.xlane.f32.xlu0 %v2228
        %v2230 = vpop.xlane.xlu0 %2229
        %v2231 = vsel %vm2110, %v2192, 0.0
        %2232 = vadd.xlane.f32.xlu0 %v2231
        %v2233 = vpop.xlane.xlu0 %2232
        %v2234 = vsel %vm2110, %v2194, 0.0
        %2235 = vadd.xlane.f32.xlu0 %v2234
        %v2236 = vpop.xlane.xlu0 %2235
        %v2237 = vsel %vm2110, %v2196, 0.0
        %2238 = vadd.xlane.f32.xlu0 %v2237
        %v2239 = vpop.xlane.xlu0 %2238
        %v2240 = vsel %vm2110, %v2198, 0.0
        %2241 = vadd.xlane.f32.xlu0 %v2240
        %v2242 = vpop.xlane.xlu0 %2241
        %v2243 = vsel %vm2110, %v2200, 0.0
        %2244 = vadd.xlane.f32.xlu0 %v2243
        %v2245 = vpop.xlane.xlu0 %2244
        %v2246 = vsel %vm2110, %v2202, 0.0
        %2247 = vadd.xlane.f32.xlu0 %v2246
        %v2248 = vpop.xlane.xlu0 %2247
        %v2249 = vsel %vm2110, %v2204, 0.0
        %2250 = vadd.xlane.f32.xlu0 %v2249
        %v2251 = vpop.xlane.xlu0 %2250
        %v2252 = vsel %vm2110, %v2206, 0.0
        %2253 = vadd.xlane.f32.xlu0 %v2252
        %v2254 = vpop.xlane.xlu0 %2253
        %v2255 = vrcp.pop %v2209
        %v2256 = vrcp.pop %v2212
        %v2257 = vrcp.pop %v2215
        %v2258 = vrcp.pop %v2218
        %v2259 = vrcp.pop %v2221
        %v2260 = vrcp.pop %v2224
        %v2261 = vrcp.pop %v2227
        %v2262 = vrcp.pop %v2230
        %v2263 = vrcp.pop %v2233
        %v2264 = vrcp.pop %v2236
        %v2265 = vrcp.pop %v2239
        %v2266 = vrcp.pop %v2242
        %v2267 = vrcp.pop %v2245
        %v2268 = vrcp.pop %v2248
        %v2269 = vrcp.pop %v2251
        %v2270 = vrcp.pop %v2254
        %v2271 = vmul.f32 %v2176, %v2255
        %v2272 = vmul.f32 %v2178, %v2256
        %v2273 = vmul.f32 %v2180, %v2257
        %v2274 = vmul.f32 %v2182, %v2258
        %v2275 = vmul.f32 %v2184, %v2259
        %v2276 = vmul.f32 %v2186, %v2260
        %v2277 = vmul.f32 %v2188, %v2261
        %v2278 = vmul.f32 %v2190, %v2262
        %v2279 = vmul.f32 %v2192, %v2263
        %v2280 = vmul.f32 %v2194, %v2264
        %v2281 = vmul.f32 %v2196, %v2265
        %v2282 = vmul.f32 %v2198, %v2266
        %v2283 = vmul.f32 %v2200, %v2267
        %v2284 = vmul.f32 %v2202, %v2268
        %v2285 = vmul.f32 %v2204, %v2269
        %v2286 = vmul.f32 %v2206, %v2270
        %v2287 = vpack.c.bf16 %v2271, %v2271
        %v2288 = vpack.c.bf16 %v2272, %v2272
        %v2289 = vpack.c.bf16 %v2273, %v2273
        %v2290 = vpack.c.bf16 %v2274, %v2274
        %v2291 = vpack.c.bf16 %v2275, %v2275
        %v2292 = vpack.c.bf16 %v2276, %v2276
        %v2293 = vpack.c.bf16 %v2277, %v2277
        %v2294 = vpack.c.bf16 %v2278, %v2278
        %v2295 = vpack.c.bf16 %v2279, %v2279
        %v2296 = vpack.c.bf16 %v2280, %v2280
        %v2297 = vpack.c.bf16 %v2281, %v2281
        %v2298 = vpack.c.bf16 %v2282, %v2282
        %v2299 = vpack.c.bf16 %v2283, %v2283
        %v2300 = vpack.c.bf16 %v2284, %v2284
        %v2301 = vpack.c.bf16 %v2285, %v2285
        %v2302 = vpack.c.bf16 %v2286, %v2286
        %2303 = vxpose.xlu0.c.b16.start [1/8] %v633, 128
        %2304 = vxpose.xlu0.c.b16.cont [2/8] 0, 128
        %2305 = vxpose.xlu0.c.b16.cont [3/8] 0, 128
        %2306 = vxpose.xlu0.c.b16.cont [4/8] 0, 128
        %2307 = vxpose.xlu0.c.b16.cont [5/8] 0, 128
        %2308 = vxpose.xlu0.c.b16.cont [6/8] 0, 128
        %2309 = vxpose.xlu0.c.b16.cont [7/8] 0, 128
        %2310 = vxpose.xlu0.c.b16.end [8/8] 0, 128
        %v2311 = vpop.trf.xlu0
        %v2312 = vpop.trf.xlu0
        %v2313 = vpop.trf.xlu0
        %v2314 = vpop.trf.xlu0
        %v2315 = vpop.trf.xlu0
        %v2316 = vpop.trf.xlu0
        %v2317 = vpop.trf.xlu0
        %v2318 = vpop.trf.xlu0
        %2319 = vxpose.xlu0.c.b16.start [1/8] %v914, 128
        %2320 = vxpose.xlu0.c.b16.cont [2/8] 0, 128
        %2321 = vxpose.xlu0.c.b16.cont [3/8] 0, 128
        %2322 = vxpose.xlu0.c.b16.cont [4/8] 0, 128
        %2323 = vxpose.xlu0.c.b16.cont [5/8] 0, 128
        %2324 = vxpose.xlu0.c.b16.cont [6/8] 0, 128
        %2325 = vxpose.xlu0.c.b16.cont [7/8] 0, 128
        %2326 = vxpose.xlu0.c.b16.end [8/8] 0, 128
        %v2327 = vpop.trf.xlu0
        %v2328 = vpop.trf.xlu0
        %v2329 = vpop.trf.xlu0
        %v2330 = vpop.trf.xlu0
        %v2331 = vpop.trf.xlu0
        %v2332 = vpop.trf.xlu0
        %v2333 = vpop.trf.xlu0
        %v2334 = vpop.trf.xlu0
        %2335 = vxpose.xlu0.c.b16.start [1/8] %v918, 128
        %2336 = vxpose.xlu0.c.b16.cont [2/8] 0, 128
        %2337 = vxpose.xlu0.c.b16.cont [3/8] 0, 128
        %2338 = vxpose.xlu0.c.b16.cont [4/8] 0, 128
        %2339 = vxpose.xlu0.c.b16.cont [5/8] 0, 128
        %2340 = vxpose.xlu0.c.b16.cont [6/8] 0, 128
        %2341 = vxpose.xlu0.c.b16.cont [7/8] 0, 128
        %2342 = vxpose.xlu0.c.b16.end [8/8] 0, 128
        %v2343 = vpop.trf.xlu0
        %v2344 = vpop.trf.xlu0
        %v2345 = vpop.trf.xlu0
        %v2346 = vpop.trf.xlu0
        %v2347 = vpop.trf.xlu0
        %v2348 = vpop.trf.xlu0
        %v2349 = vpop.trf.xlu0
        %v2350 = vpop.trf.xlu0
        %2351 = vxpose.xlu0.c.b16.start [1/8] %v922, 128
        %2352 = vxpose.xlu0.c.b16.cont [2/8] 0, 128
        %2353 = vxpose.xlu0.c.b16.cont [3/8] 0, 128
        %2354 = vxpose.xlu0.c.b16.cont [4/8] 0, 128
        %2355 = vxpose.xlu0.c.b16.cont [5/8] 0, 128
        %2356 = vxpose.xlu0.c.b16.cont [6/8] 0, 128
        %2357 = vxpose.xlu0.c.b16.cont [7/8] 0, 128
        %2358 = vxpose.xlu0.c.b16.end [8/8] 0, 128
        %v2359 = vpop.trf.xlu0
        %v2360 = vpop.trf.xlu0
        %v2361 = vpop.trf.xlu0
        %v2362 = vpop.trf.xlu0
        %v2363 = vpop.trf.xlu0
        %v2364 = vpop.trf.xlu0
        %v2365 = vpop.trf.xlu0
        %v2366 = vpop.trf.xlu0
        %2367 = vxpose.xlu0.c.b16.start [1/8] %v926, 128
        %2368 = vxpose.xlu0.c.b16.cont [2/8] 0, 128
        %2369 = vxpose.xlu0.c.b16.cont [3/8] 0, 128
        %2370 = vxpose.xlu0.c.b16.cont [4/8] 0, 128
        %2371 = vxpose.xlu0.c.b16.cont [5/8] 0, 128
        %2372 = vxpose.xlu0.c.b16.cont [6/8] 0, 128
        %2373 = vxpose.xlu0.c.b16.cont [7/8] 0, 128
        %2374 = vxpose.xlu0.c.b16.end [8/8] 0, 128
        %v2375 = vpop.trf.xlu0
        %v2376 = vpop.trf.xlu0
        %v2377 = vpop.trf.xlu0
        %v2378 = vpop.trf.xlu0
        %v2379 = vpop.trf.xlu0
        %v2380 = vpop.trf.xlu0
        %v2381 = vpop.trf.xlu0
        %v2382 = vpop.trf.xlu0
        %2383 = vxpose.xlu0.c.b16.start [1/8] %v930, 128
        %2384 = vxpose.xlu0.c.b16.cont [2/8] 0, 128
        %2385 = vxpose.xlu0.c.b16.cont [3/8] 0, 128
        %2386 = vxpose.xlu0.c.b16.cont [4/8] 0, 128
        %2387 = vxpose.xlu0.c.b16.cont [5/8] 0, 128
        %2388 = vxpose.xlu0.c.b16.cont [6/8] 0, 128
        %2389 = vxpose.xlu0.c.b16.cont [7/8] 0, 128
        %2390 = vxpose.xlu0.c.b16.end [8/8] 0, 128
        %v2391 = vpop.trf.xlu0
        %v2392 = vpop.trf.xlu0
        %v2393 = vpop.trf.xlu0
        %v2394 = vpop.trf.xlu0
        %v2395 = vpop.trf.xlu0
        %v2396 = vpop.trf.xlu0
        %v2397 = vpop.trf.xlu0
        %v2398 = vpop.trf.xlu0
        %2399 = vxpose.xlu0.c.b16.start [1/8] %v934, 128
        %2400 = vxpose.xlu0.c.b16.cont [2/8] 0, 128
        %2401 = vxpose.xlu0.c.b16.cont [3/8] 0, 128
        %2402 = vxpose.xlu0.c.b16.cont [4/8] 0, 128
        %2403 = vxpose.xlu0.c.b16.cont [5/8] 0, 128
        %2404 = vxpose.xlu0.c.b16.cont [6/8] 0, 128
        %2405 = vxpose.xlu0.c.b16.cont [7/8] 0, 128
        %2406 = vxpose.xlu0.c.b16.end [8/8] 0, 128
        %v2407 = vpop.trf.xlu0
        %v2408 = vpop.trf.xlu0
        %v2409 = vpop.trf.xlu0
        %v2410 = vpop.trf.xlu0
        %v2411 = vpop.trf.xlu0
        %v2412 = vpop.trf.xlu0
        %v2413 = vpop.trf.xlu0
        %v2414 = vpop.trf.xlu0
        %2415 = vxpose.xlu0.c.b16.start [1/8] %v938, 128
        %2416 = vxpose.xlu0.c.b16.cont [2/8] 0, 128
        %2417 = vxpose.xlu0.c.b16.cont [3/8] 0, 128
        %2418 = vxpose.xlu0.c.b16.cont [4/8] 0, 128
        %2419 = vxpose.xlu0.c.b16.cont [5/8] 0, 128
        %2420 = vxpose.xlu0.c.b16.cont [6/8] 0, 128
        %2421 = vxpose.xlu0.c.b16.cont [7/8] 0, 128
        %2422 = vxpose.xlu0.c.b16.end [8/8] 0, 128
        %v2423 = vpop.trf.xlu0
        %v2424 = vpop.trf.xlu0
        %v2425 = vpop.trf.xlu0
        %v2426 = vpop.trf.xlu0
        %v2427 = vpop.trf.xlu0
        %v2428 = vpop.trf.xlu0
        %v2429 = vpop.trf.xlu0
        %v2430 = vpop.trf.xlu0
        %2431 = vxpose.xlu0.c.b16.start [1/8] %v911, 128
        %2432 = vxpose.xlu0.c.b16.cont [2/8] 0, 128
        %2433 = vxpose.xlu0.c.b16.cont [3/8] 0, 128
        %2434 = vxpose.xlu0.c.b16.cont [4/8] 0, 128
        %2435 = vxpose.xlu0.c.b16.cont [5/8] 0, 128
        %2436 = vxpose.xlu0.c.b16.cont [6/8] 0, 128
        %2437 = vxpose.xlu0.c.b16.cont [7/8] 0, 128
        %2438 = vxpose.xlu0.c.b16.end [8/8] 0, 128
        %v2439 = vpop.trf.xlu0
        %v2440 = vpop.trf.xlu0
        %v2441 = vpop.trf.xlu0
        %v2442 = vpop.trf.xlu0
        %v2443 = vpop.trf.xlu0
        %v2444 = vpop.trf.xlu0
        %v2445 = vpop.trf.xlu0
        %v2446 = vpop.trf.xlu0
        %2447 = vxpose.xlu0.c.b16.start [1/8] %v915, 128
        %2448 = vxpose.xlu0.c.b16.cont [2/8] 0, 128
        %2449 = vxpose.xlu0.c.b16.cont [3/8] 0, 128
        %2450 = vxpose.xlu0.c.b16.cont [4/8] 0, 128
        %2451 = vxpose.xlu0.c.b16.cont [5/8] 0, 128
        %2452 = vxpose.xlu0.c.b16.cont [6/8] 0, 128
        %2453 = vxpose.xlu0.c.b16.cont [7/8] 0, 128
        %2454 = vxpose.xlu0.c.b16.end [8/8] 0, 128
        %v2455 = vpop.trf.xlu0
        %v2456 = vpop.trf.xlu0
        %v2457 = vpop.trf.xlu0
        %v2458 = vpop.trf.xlu0
        %v2459 = vpop.trf.xlu0
        %v2460 = vpop.trf.xlu0
        %v2461 = vpop.trf.xlu0
        %v2462 = vpop.trf.xlu0
        %2463 = vxpose.xlu0.c.b16.start [1/8] %v919, 128
        %2464 = vxpose.xlu0.c.b16.cont [2/8] 0, 128
        %2465 = vxpose.xlu0.c.b16.cont [3/8] 0, 128
        %2466 = vxpose.xlu0.c.b16.cont [4/8] 0, 128
        %2467 = vxpose.xlu0.c.b16.cont [5/8] 0, 128
        %2468 = vxpose.xlu0.c.b16.cont [6/8] 0, 128
        %2469 = vxpose.xlu0.c.b16.cont [7/8] 0, 128
        %2470 = vxpose.xlu0.c.b16.end [8/8] 0, 128
        %v2471 = vpop.trf.xlu0
        %v2472 = vpop.trf.xlu0
        %v2473 = vpop.trf.xlu0
        %v2474 = vpop.trf.xlu0
        %v2475 = vpop.trf.xlu0
        %v2476 = vpop.trf.xlu0
        %v2477 = vpop.trf.xlu0
        %v2478 = vpop.trf.xlu0
        %2479 = vxpose.xlu0.c.b16.start [1/8] %v923, 128
        %2480 = vxpose.xlu0.c.b16.cont [2/8] 0, 128
        %2481 = vxpose.xlu0.c.b16.cont [3/8] 0, 128
        %2482 = vxpose.xlu0.c.b16.cont [4/8] 0, 128
        %2483 = vxpose.xlu0.c.b16.cont [5/8] 0, 128
        %2484 = vxpose.xlu0.c.b16.cont [6/8] 0, 128
        %2485 = vxpose.xlu0.c.b16.cont [7/8] 0, 128
        %2486 = vxpose.xlu0.c.b16.end [8/8] 0, 128
        %v2487 = vpop.trf.xlu0
        %v2488 = vpop.trf.xlu0
        %v2489 = vpop.trf.xlu0
        %v2490 = vpop.trf.xlu0
        %v2491 = vpop.trf.xlu0
        %v2492 = vpop.trf.xlu0
        %v2493 = vpop.trf.xlu0
        %v2494 = vpop.trf.xlu0
        %2495 = vxpose.xlu0.c.b16.start [1/8] %v927, 128
        %2496 = vxpose.xlu0.c.b16.cont [2/8] 0, 128
        %2497 = vxpose.xlu0.c.b16.cont [3/8] 0, 128
        %2498 = vxpose.xlu0.c.b16.cont [4/8] 0, 128
        %2499 = vxpose.xlu0.c.b16.cont [5/8] 0, 128
        %2500 = vxpose.xlu0.c.b16.cont [6/8] 0, 128
        %2501 = vxpose.xlu0.c.b16.cont [7/8] 0, 128
        %2502 = vxpose.xlu0.c.b16.end [8/8] 0, 128
        %v2503 = vpop.trf.xlu0
        %v2504 = vpop.trf.xlu0
        %v2505 = vpop.trf.xlu0
        %v2506 = vpop.trf.xlu0
        %v2507 = vpop.trf.xlu0
        %v2508 = vpop.trf.xlu0
        %v2509 = vpop.trf.xlu0
        %v2510 = vpop.trf.xlu0
        %2511 = vxpose.xlu0.c.b16.start [1/8] %v931, 128
        %2512 = vxpose.xlu0.c.b16.cont [2/8] 0, 128
        %2513 = vxpose.xlu0.c.b16.cont [3/8] 0, 128
        %2514 = vxpose.xlu0.c.b16.cont [4/8] 0, 128
        %2515 = vxpose.xlu0.c.b16.cont [5/8] 0, 128
        %2516 = vxpose.xlu0.c.b16.cont [6/8] 0, 128
        %2517 = vxpose.xlu0.c.b16.cont [7/8] 0, 128
        %2518 = vxpose.xlu0.c.b16.end [8/8] 0, 128
        %v2519 = vpop.trf.xlu0
        %v2520 = vpop.trf.xlu0
        %v2521 = vpop.trf.xlu0
        %v2522 = vpop.trf.xlu0
        %v2523 = vpop.trf.xlu0
        %v2524 = vpop.trf.xlu0
        %v2525 = vpop.trf.xlu0
        %v2526 = vpop.trf.xlu0
        %2527 = vxpose.xlu0.c.b16.start [1/8] %v935, 128
        %2528 = vxpose.xlu0.c.b16.cont [2/8] 0, 128
        %2529 = vxpose.xlu0.c.b16.cont [3/8] 0, 128
        %2530 = vxpose.xlu0.c.b16.cont [4/8] 0, 128
        %2531 = vxpose.xlu0.c.b16.cont [5/8] 0, 128
        %2532 = vxpose.xlu0.c.b16.cont [6/8] 0, 128
        %2533 = vxpose.xlu0.c.b16.cont [7/8] 0, 128
        %2534 = vxpose.xlu0.c.b16.end [8/8] 0, 128
        %v2535 = vpop.trf.xlu0
        %v2536 = vpop.trf.xlu0
        %v2537 = vpop.trf.xlu0
        %v2538 = vpop.trf.xlu0
        %v2539 = vpop.trf.xlu0
        %v2540 = vpop.trf.xlu0
        %v2541 = vpop.trf.xlu0
        %v2542 = vpop.trf.xlu0
        %2543 = vxpose.xlu0.c.b16.start [1/8] %v939, 128
        %2544 = vxpose.xlu0.c.b16.cont [2/8] 0, 128
        %2545 = vxpose.xlu0.c.b16.cont [3/8] 0, 128
        %2546 = vxpose.xlu0.c.b16.cont [4/8] 0, 128
        %2547 = vxpose.xlu0.c.b16.cont [5/8] 0, 128
        %2548 = vxpose.xlu0.c.b16.cont [6/8] 0, 128
        %2549 = vxpose.xlu0.c.b16.cont [7/8] 0, 128
        %2550 = vxpose.xlu0.c.b16.end [8/8] 0, 128
        %v2551 = vpop.trf.xlu0
        %v2552 = vpop.trf.xlu0
        %v2553 = vpop.trf.xlu0
        %v2554 = vpop.trf.xlu0
        %v2555 = vpop.trf.xlu0
        %v2556 = vpop.trf.xlu0
        %v2557 = vpop.trf.xlu0
        %v2558 = vpop.trf.xlu0
        %v2560 = vsel %vm2110, %v2311, 0
        %v2563 = vsel %vm2110, %v2287, 0
        %2565 = vmatprep.subr.bf16.mxu0 0
        %2566 = vmatpush1.bf16.xpose.msra.mxu0 %v2563
        %2567 = vmatprep.subr.bf16.mxu0 0
        %2568 = vmatpush1.bf16.xpose.msra.mxu0 0
        %2569 = vmatprep.subr.bf16.mxu0 0
        %2570 = vmatpush1.bf16.xpose.msra.mxu0 0
        %2571 = vmatprep.subr.bf16.mxu0 0
        %2572 = vmatpush1.bf16.xpose.msra.mxu0 0
        %2573 = vmatprep.subr.bf16.mxu0 0
        %2574 = vmatpush1.bf16.xpose.msra.mxu0 0
        %2575 = vmatprep.subr.bf16.mxu0 0
        %2576 = vmatpush1.bf16.xpose.msra.mxu0 0
        %2577 = vmatprep.subr.bf16.mxu0 0
        %2578 = vmatpush1.bf16.xpose.msra.mxu0 0
        %2579 = vmatprep.subr.bf16.mxu0 0
        %2580 = vmatpush1.bf16.xpose.msra.mxu0 0
        %2581 = vmatprep.subr.bf16.mxu0 0
        %2582 = vmatpush1.bf16.xpose.msra.mxu0 0
        %2583 = vmatprep.subr.bf16.mxu0 0
        %2584 = vmatpush1.bf16.xpose.msra.mxu0 0
        %2585 = vmatprep.subr.bf16.mxu0 0
        %2586 = vmatpush1.bf16.xpose.msra.mxu0 0
        %2587 = vmatprep.subr.bf16.mxu0 0
        %2588 = vmatpush1.bf16.xpose.msra.mxu0 0
        %2589 = vmatprep.subr.bf16.mxu0 0
        %2590 = vmatpush1.bf16.xpose.msra.mxu0 0
        %2591 = vmatprep.subr.bf16.mxu0 0
        %2592 = vmatpush1.bf16.xpose.msra.mxu0 0
        %2593 = vmatprep.subr.bf16.mxu0 0
        %2594 = vmatpush1.bf16.xpose.msra.mxu0 0
        %2595 = vmatprep.subr.bf16.mxu0 0
        %2596 = vmatpush1.bf16.xpose.msra.mxu0 0
        %2597 = vmatprep.mubr.bf16.mxu0 0
        %2598 = vmatmul.mubr.bf16.gmra.mrb[0].mxu0 %v2560
        %v2599 = vpop.f32.mrb[0].mxu0
        %v2600 = vadd.f32 0.0, %v2599
        %v2601 = vpop.f32.mrb[0].mxu0
        %v2602 = vpop.f32.mrb[0].mxu0
        %v2603 = vadd.f32 0.0, %v2602
        %v2604 = vpop.f32.mrb[0].mxu0
        %2605 = vdwg.mxu0
        %v2607 = vsel %vm2110, %v2327, 0
        %v2610 = vsel %vm2110, %v2288, 0
        %2612 = vmatprep.subr.bf16.mxu0 0
        %2613 = vmatpush1.bf16.xpose.msra.mxu0 %v2610
        %2614 = vmatprep.subr.bf16.mxu0 0
        %2615 = vmatpush1.bf16.xpose.msra.mxu0 0
        %2616 = vmatprep.subr.bf16.mxu0 0
        %2617 = vmatpush1.bf16.xpose.msra.mxu0 0
        %2618 = vmatprep.subr.bf16.mxu0 0
        %2619 = vmatpush1.bf16.xpose.msra.mxu0 0
        %2620 = vmatprep.subr.bf16.mxu0 0
        %2621 = vmatpush1.bf16.xpose.msra.mxu0 0
        %2622 = vmatprep.subr.bf16.mxu0 0
        %2623 = vmatpush1.bf16.xpose.msra.mxu0 0
        %2624 = vmatprep.subr.bf16.mxu0 0
        %2625 = vmatpush1.bf16.xpose.msra.mxu0 0
        %2626 = vmatprep.subr.bf16.mxu0 0
        %2627 = vmatpush1.bf16.xpose.msra.mxu0 0
        %2628 = vmatprep.subr.bf16.mxu0 0
        %2629 = vmatpush1.bf16.xpose.msra.mxu0 0
        %2630 = vmatprep.subr.bf16.mxu0 0
        %2631 = vmatpush1.bf16.xpose.msra.mxu0 0
        %2632 = vmatprep.subr.bf16.mxu0 0
        %2633 = vmatpush1.bf16.xpose.msra.mxu0 0
        %2634 = vmatprep.subr.bf16.mxu0 0
        %2635 = vmatpush1.bf16.xpose.msra.mxu0 0
        %2636 = vmatprep.subr.bf16.mxu0 0
        %2637 = vmatpush1.bf16.xpose.msra.mxu0 0
        %2638 = vmatprep.subr.bf16.mxu0 0
        %2639 = vmatpush1.bf16.xpose.msra.mxu0 0
        %2640 = vmatprep.subr.bf16.mxu0 0
        %2641 = vmatpush1.bf16.xpose.msra.mxu0 0
        %2642 = vmatprep.subr.bf16.mxu0 0
        %2643 = vmatpush1.bf16.xpose.msra.mxu0 0
        %2644 = vmatprep.mubr.bf16.mxu0 0
        %2645 = vmatmul.mubr.bf16.gmra.mrb[0].mxu0 %v2607
        %v2646 = vpop.f32.mrb[0].mxu0
        %v2647 = vadd.f32 0.0, %v2646
        %v2648 = vpop.f32.mrb[0].mxu0
        %v2649 = vpop.f32.mrb[0].mxu0
        %v2650 = vadd.f32 0.0, %v2649
        %v2651 = vpop.f32.mrb[0].mxu0
        %2652 = vdwg.mxu0
        %v2654 = vsel %vm2110, %v2343, 0
        %v2657 = vsel %vm2110, %v2289, 0
        %2659 = vmatprep.subr.bf16.mxu0 0
        %2660 = vmatpush1.bf16.xpose.msra.mxu0 %v2657
        %2661 = vmatprep.subr.bf16.mxu0 0
        %2662 = vmatpush1.bf16.xpose.msra.mxu0 0
        %2663 = vmatprep.subr.bf16.mxu0 0
        %2664 = vmatpush1.bf16.xpose.msra.mxu0 0
        %2665 = vmatprep.subr.bf16.mxu0 0
        %2666 = vmatpush1.bf16.xpose.msra.mxu0 0
        %2667 = vmatprep.subr.bf16.mxu0 0
        %2668 = vmatpush1.bf16.xpose.msra.mxu0 0
        %2669 = vmatprep.subr.bf16.mxu0 0
        %2670 = vmatpush1.bf16.xpose.msra.mxu0 0
        %2671 = vmatprep.subr.bf16.mxu0 0
        %2672 = vmatpush1.bf16.xpose.msra.mxu0 0
        %2673 = vmatprep.subr.bf16.mxu0 0
        %2674 = vmatpush1.bf16.xpose.msra.mxu0 0
        %2675 = vmatprep.subr.bf16.mxu0 0
        %2676 = vmatpush1.bf16.xpose.msra.mxu0 0
        %2677 = vmatprep.subr.bf16.mxu0 0
        %2678 = vmatpush1.bf16.xpose.msra.mxu0 0
        %2679 = vmatprep.subr.bf16.mxu0 0
        %2680 = vmatpush1.bf16.xpose.msra.mxu0 0
        %2681 = vmatprep.subr.bf16.mxu0 0
        %2682 = vmatpush1.bf16.xpose.msra.mxu0 0
        %2683 = vmatprep.subr.bf16.mxu0 0
        %2684 = vmatpush1.bf16.xpose.msra.mxu0 0
        %2685 = vmatprep.subr.bf16.mxu0 0
        %2686 = vmatpush1.bf16.xpose.msra.mxu0 0
        %2687 = vmatprep.subr.bf16.mxu0 0
        %2688 = vmatpush1.bf16.xpose.msra.mxu0 0
        %2689 = vmatprep.subr.bf16.mxu0 0
        %2690 = vmatpush1.bf16.xpose.msra.mxu0 0
        %2691 = vmatprep.mubr.bf16.mxu0 0
        %2692 = vmatmul.mubr.bf16.gmra.mrb[0].mxu0 %v2654
        %v2693 = vpop.f32.mrb[0].mxu0
        %v2694 = vadd.f32 0.0, %v2693
        %v2695 = vpop.f32.mrb[0].mxu0
        %v2696 = vpop.f32.mrb[0].mxu0
        %v2697 = vadd.f32 0.0, %v2696
        %v2698 = vpop.f32.mrb[0].mxu0
        %2699 = vdwg.mxu0
        %v2701 = vsel %vm2110, %v2359, 0
        %v2704 = vsel %vm2110, %v2290, 0
        %2706 = vmatprep.subr.bf16.mxu0 0
        %2707 = vmatpush1.bf16.xpose.msra.mxu0 %v2704
        %2708 = vmatprep.subr.bf16.mxu0 0
        %2709 = vmatpush1.bf16.xpose.msra.mxu0 0
        %2710 = vmatprep.subr.bf16.mxu0 0
        %2711 = vmatpush1.bf16.xpose.msra.mxu0 0
        %2712 = vmatprep.subr.bf16.mxu0 0
        %2713 = vmatpush1.bf16.xpose.msra.mxu0 0
        %2714 = vmatprep.subr.bf16.mxu0 0
        %2715 = vmatpush1.bf16.xpose.msra.mxu0 0
        %2716 = vmatprep.subr.bf16.mxu0 0
        %2717 = vmatpush1.bf16.xpose.msra.mxu0 0
        %2718 = vmatprep.subr.bf16.mxu0 0
        %2719 = vmatpush1.bf16.xpose.msra.mxu0 0
        %2720 = vmatprep.subr.bf16.mxu0 0
        %2721 = vmatpush1.bf16.xpose.msra.mxu0 0
        %2722 = vmatprep.subr.bf16.mxu0 0
        %2723 = vmatpush1.bf16.xpose.msra.mxu0 0
        %2724 = vmatprep.subr.bf16.mxu0 0
        %2725 = vmatpush1.bf16.xpose.msra.mxu0 0
        %2726 = vmatprep.subr.bf16.mxu0 0
        %2727 = vmatpush1.bf16.xpose.msra.mxu0 0
        %2728 = vmatprep.subr.bf16.mxu0 0
        %2729 = vmatpush1.bf16.xpose.msra.mxu0 0
        %2730 = vmatprep.subr.bf16.mxu0 0
        %2731 = vmatpush1.bf16.xpose.msra.mxu0 0
        %2732 = vmatprep.subr.bf16.mxu0 0
        %2733 = vmatpush1.bf16.xpose.msra.mxu0 0
        %2734 = vmatprep.subr.bf16.mxu0 0
        %2735 = vmatpush1.bf16.xpose.msra.mxu0 0
        %2736 = vmatprep.subr.bf16.mxu0 0
        %2737 = vmatpush1.bf16.xpose.msra.mxu0 0
        %2738 = vmatprep.mubr.bf16.mxu0 0
        %2739 = vmatmul.mubr.bf16.gmra.mrb[0].mxu0 %v2701
        %v2740 = vpop.f32.mrb[0].mxu0
        %v2741 = vadd.f32 0.0, %v2740
        %v2742 = vpop.f32.mrb[0].mxu0
        %v2743 = vpop.f32.mrb[0].mxu0
        %v2744 = vadd.f32 0.0, %v2743
        %v2745 = vpop.f32.mrb[0].mxu0
        %2746 = vdwg.mxu0
        %v2748 = vsel %vm2110, %v2375, 0
        %v2751 = vsel %vm2110, %v2291, 0
        %2753 = vmatprep.subr.bf16.mxu0 0
        %2754 = vmatpush1.bf16.xpose.msra.mxu0 %v2751
        %2755 = vmatprep.subr.bf16.mxu0 0
        %2756 = vmatpush1.bf16.xpose.msra.mxu0 0
        %2757 = vmatprep.subr.bf16.mxu0 0
        %2758 = vmatpush1.bf16.xpose.msra.mxu0 0
        %2759 = vmatprep.subr.bf16.mxu0 0
        %2760 = vmatpush1.bf16.xpose.msra.mxu0 0
        %2761 = vmatprep.subr.bf16.mxu0 0
        %2762 = vmatpush1.bf16.xpose.msra.mxu0 0
        %2763 = vmatprep.subr.bf16.mxu0 0
        %2764 = vmatpush1.bf16.xpose.msra.mxu0 0
        %2765 = vmatprep.subr.bf16.mxu0 0
        %2766 = vmatpush1.bf16.xpose.msra.mxu0 0
        %2767 = vmatprep.subr.bf16.mxu0 0
        %2768 = vmatpush1.bf16.xpose.msra.mxu0 0
        %2769 = vmatprep.subr.bf16.mxu0 0
        %2770 = vmatpush1.bf16.xpose.msra.mxu0 0
        %2771 = vmatprep.subr.bf16.mxu0 0
        %2772 = vmatpush1.bf16.xpose.msra.mxu0 0
        %2773 = vmatprep.subr.bf16.mxu0 0
        %2774 = vmatpush1.bf16.xpose.msra.mxu0 0
        %2775 = vmatprep.subr.bf16.mxu0 0
        %2776 = vmatpush1.bf16.xpose.msra.mxu0 0
        %2777 = vmatprep.subr.bf16.mxu0 0
        %2778 = vmatpush1.bf16.xpose.msra.mxu0 0
        %2779 = vmatprep.subr.bf16.mxu0 0
        %2780 = vmatpush1.bf16.xpose.msra.mxu0 0
        %2781 = vmatprep.subr.bf16.mxu0 0
        %2782 = vmatpush1.bf16.xpose.msra.mxu0 0
        %2783 = vmatprep.subr.bf16.mxu0 0
        %2784 = vmatpush1.bf16.xpose.msra.mxu0 0
        %2785 = vmatprep.mubr.bf16.mxu0 0
        %2786 = vmatmul.mubr.bf16.gmra.mrb[0].mxu0 %v2748
        %v2787 = vpop.f32.mrb[0].mxu0
        %v2788 = vadd.f32 0.0, %v2787
        %v2789 = vpop.f32.mrb[0].mxu0
        %v2790 = vpop.f32.mrb[0].mxu0
        %v2791 = vadd.f32 0.0, %v2790
        %v2792 = vpop.f32.mrb[0].mxu0
        %2793 = vdwg.mxu0
        %v2795 = vsel %vm2110, %v2391, 0
        %v2798 = vsel %vm2110, %v2292, 0
        %2800 = vmatprep.subr.bf16.mxu0 0
        %2801 = vmatpush1.bf16.xpose.msra.mxu0 %v2798
        %2802 = vmatprep.subr.bf16.mxu0 0
        %2803 = vmatpush1.bf16.xpose.msra.mxu0 0
        %2804 = vmatprep.subr.bf16.mxu0 0
        %2805 = vmatpush1.bf16.xpose.msra.mxu0 0
        %2806 = vmatprep.subr.bf16.mxu0 0
        %2807 = vmatpush1.bf16.xpose.msra.mxu0 0
        %2808 = vmatprep.subr.bf16.mxu0 0
        %2809 = vmatpush1.bf16.xpose.msra.mxu0 0
        %2810 = vmatprep.subr.bf16.mxu0 0
        %2811 = vmatpush1.bf16.xpose.msra.mxu0 0
        %2812 = vmatprep.subr.bf16.mxu0 0
        %2813 = vmatpush1.bf16.xpose.msra.mxu0 0
        %2814 = vmatprep.subr.bf16.mxu0 0
        %2815 = vmatpush1.bf16.xpose.msra.mxu0 0
        %2816 = vmatprep.subr.bf16.mxu0 0
        %2817 = vmatpush1.bf16.xpose.msra.mxu0 0
        %2818 = vmatprep.subr.bf16.mxu0 0
        %2819 = vmatpush1.bf16.xpose.msra.mxu0 0
        %2820 = vmatprep.subr.bf16.mxu0 0
        %2821 = vmatpush1.bf16.xpose.msra.mxu0 0
        %2822 = vmatprep.subr.bf16.mxu0 0
        %2823 = vmatpush1.bf16.xpose.msra.mxu0 0
        %2824 = vmatprep.subr.bf16.mxu0 0
        %2825 = vmatpush1.bf16.xpose.msra.mxu0 0
        %2826 = vmatprep.subr.bf16.mxu0 0
        %2827 = vmatpush1.bf16.xpose.msra.mxu0 0
        %2828 = vmatprep.subr.bf16.mxu0 0
        %2829 = vmatpush1.bf16.xpose.msra.mxu0 0
        %2830 = vmatprep.subr.bf16.mxu0 0
        %2831 = vmatpush1.bf16.xpose.msra.mxu0 0
        %2832 = vmatprep.mubr.bf16.mxu0 0
        %2833 = vmatmul.mubr.bf16.gmra.mrb[0].mxu0 %v2795
        %v2834 = vpop.f32.mrb[0].mxu0
        %v2835 = vadd.f32 0.0, %v2834
        %v2836 = vpop.f32.mrb[0].mxu0
        %v2837 = vpop.f32.mrb[0].mxu0
        %v2838 = vadd.f32 0.0, %v2837
        %v2839 = vpop.f32.mrb[0].mxu0
        %2840 = vdwg.mxu0
        %v2842 = vsel %vm2110, %v2407, 0
        %v2845 = vsel %vm2110, %v2293, 0
        %2847 = vmatprep.subr.bf16.mxu0 0
        %2848 = vmatpush1.bf16.xpose.msra.mxu0 %v2845
        %2849 = vmatprep.subr.bf16.mxu0 0
        %2850 = vmatpush1.bf16.xpose.msra.mxu0 0
        %2851 = vmatprep.subr.bf16.mxu0 0
        %2852 = vmatpush1.bf16.xpose.msra.mxu0 0
        %2853 = vmatprep.subr.bf16.mxu0 0
        %2854 = vmatpush1.bf16.xpose.msra.mxu0 0
        %2855 = vmatprep.subr.bf16.mxu0 0
        %2856 = vmatpush1.bf16.xpose.msra.mxu0 0
        %2857 = vmatprep.subr.bf16.mxu0 0
        %2858 = vmatpush1.bf16.xpose.msra.mxu0 0
        %2859 = vmatprep.subr.bf16.mxu0 0
        %2860 = vmatpush1.bf16.xpose.msra.mxu0 0
        %2861 = vmatprep.subr.bf16.mxu0 0
        %2862 = vmatpush1.bf16.xpose.msra.mxu0 0
        %2863 = vmatprep.subr.bf16.mxu0 0
        %2864 = vmatpush1.bf16.xpose.msra.mxu0 0
        %2865 = vmatprep.subr.bf16.mxu0 0
        %2866 = vmatpush1.bf16.xpose.msra.mxu0 0
        %2867 = vmatprep.subr.bf16.mxu0 0
        %2868 = vmatpush1.bf16.xpose.msra.mxu0 0
        %2869 = vmatprep.subr.bf16.mxu0 0
        %2870 = vmatpush1.bf16.xpose.msra.mxu0 0
        %2871 = vmatprep.subr.bf16.mxu0 0
        %2872 = vmatpush1.bf16.xpose.msra.mxu0 0
        %2873 = vmatprep.subr.bf16.mxu0 0
        %2874 = vmatpush1.bf16.xpose.msra.mxu0 0
        %2875 = vmatprep.subr.bf16.mxu0 0
        %2876 = vmatpush1.bf16.xpose.msra.mxu0 0
        %2877 = vmatprep.subr.bf16.mxu0 0
        %2878 = vmatpush1.bf16.xpose.msra.mxu0 0
        %2879 = vmatprep.mubr.bf16.mxu0 0
        %2880 = vmatmul.mubr.bf16.gmra.mrb[0].mxu0 %v2842
        %v2881 = vpop.f32.mrb[0].mxu0
        %v2882 = vadd.f32 0.0, %v2881
        %v2883 = vpop.f32.mrb[0].mxu0
        %v2884 = vpop.f32.mrb[0].mxu0
        %v2885 = vadd.f32 0.0, %v2884
        %v2886 = vpop.f32.mrb[0].mxu0
        %2887 = vdwg.mxu0
        %v2889 = vsel %vm2110, %v2423, 0
        %v2892 = vsel %vm2110, %v2294, 0
        %2894 = vmatprep.subr.bf16.mxu0 0
        %2895 = vmatpush1.bf16.xpose.msra.mxu0 %v2892
        %2896 = vmatprep.subr.bf16.mxu0 0
        %2897 = vmatpush1.bf16.xpose.msra.mxu0 0
        %2898 = vmatprep.subr.bf16.mxu0 0
        %2899 = vmatpush1.bf16.xpose.msra.mxu0 0
        %2900 = vmatprep.subr.bf16.mxu0 0
        %2901 = vmatpush1.bf16.xpose.msra.mxu0 0
        %2902 = vmatprep.subr.bf16.mxu0 0
        %2903 = vmatpush1.bf16.xpose.msra.mxu0 0
        %2904 = vmatprep.subr.bf16.mxu0 0
        %2905 = vmatpush1.bf16.xpose.msra.mxu0 0
        %2906 = vmatprep.subr.bf16.mxu0 0
        %2907 = vmatpush1.bf16.xpose.msra.mxu0 0
        %2908 = vmatprep.subr.bf16.mxu0 0
        %2909 = vmatpush1.bf16.xpose.msra.mxu0 0
        %2910 = vmatprep.subr.bf16.mxu0 0
        %2911 = vmatpush1.bf16.xpose.msra.mxu0 0
        %2912 = vmatprep.subr.bf16.mxu0 0
        %2913 = vmatpush1.bf16.xpose.msra.mxu0 0
        %2914 = vmatprep.subr.bf16.mxu0 0
        %2915 = vmatpush1.bf16.xpose.msra.mxu0 0
        %2916 = vmatprep.subr.bf16.mxu0 0
        %2917 = vmatpush1.bf16.xpose.msra.mxu0 0
        %2918 = vmatprep.subr.bf16.mxu0 0
        %2919 = vmatpush1.bf16.xpose.msra.mxu0 0
        %2920 = vmatprep.subr.bf16.mxu0 0
        %2921 = vmatpush1.bf16.xpose.msra.mxu0 0
        %2922 = vmatprep.subr.bf16.mxu0 0
        %2923 = vmatpush1.bf16.xpose.msra.mxu0 0
        %2924 = vmatprep.subr.bf16.mxu0 0
        %2925 = vmatpush1.bf16.xpose.msra.mxu0 0
        %2926 = vmatprep.mubr.bf16.mxu0 0
        %2927 = vmatmul.mubr.bf16.gmra.mrb[0].mxu0 %v2889
        %v2928 = vpop.f32.mrb[0].mxu0
        %v2929 = vadd.f32 0.0, %v2928
        %v2930 = vpop.f32.mrb[0].mxu0
        %v2931 = vpop.f32.mrb[0].mxu0
        %v2932 = vadd.f32 0.0, %v2931
        %v2933 = vpop.f32.mrb[0].mxu0
        %2934 = vdwg.mxu0
        %v2936 = vsel %vm2110, %v2439, 0
        %v2939 = vsel %vm2110, %v2295, 0
        %2941 = vmatprep.subr.bf16.mxu0 0
        %2942 = vmatpush1.bf16.xpose.msra.mxu0 %v2939
        %2943 = vmatprep.subr.bf16.mxu0 0
        %2944 = vmatpush1.bf16.xpose.msra.mxu0 0
        %2945 = vmatprep.subr.bf16.mxu0 0
        %2946 = vmatpush1.bf16.xpose.msra.mxu0 0
        %2947 = vmatprep.subr.bf16.mxu0 0
        %2948 = vmatpush1.bf16.xpose.msra.mxu0 0
        %2949 = vmatprep.subr.bf16.mxu0 0
        %2950 = vmatpush1.bf16.xpose.msra.mxu0 0
        %2951 = vmatprep.subr.bf16.mxu0 0
        %2952 = vmatpush1.bf16.xpose.msra.mxu0 0
        %2953 = vmatprep.subr.bf16.mxu0 0
        %2954 = vmatpush1.bf16.xpose.msra.mxu0 0
        %2955 = vmatprep.subr.bf16.mxu0 0
        %2956 = vmatpush1.bf16.xpose.msra.mxu0 0
        %2957 = vmatprep.subr.bf16.mxu0 0
        %2958 = vmatpush1.bf16.xpose.msra.mxu0 0
        %2959 = vmatprep.subr.bf16.mxu0 0
        %2960 = vmatpush1.bf16.xpose.msra.mxu0 0
        %2961 = vmatprep.subr.bf16.mxu0 0
        %2962 = vmatpush1.bf16.xpose.msra.mxu0 0
        %2963 = vmatprep.subr.bf16.mxu0 0
        %2964 = vmatpush1.bf16.xpose.msra.mxu0 0
        %2965 = vmatprep.subr.bf16.mxu0 0
        %2966 = vmatpush1.bf16.xpose.msra.mxu0 0
        %2967 = vmatprep.subr.bf16.mxu0 0
        %2968 = vmatpush1.bf16.xpose.msra.mxu0 0
        %2969 = vmatprep.subr.bf16.mxu0 0
        %2970 = vmatpush1.bf16.xpose.msra.mxu0 0
        %2971 = vmatprep.subr.bf16.mxu0 0
        %2972 = vmatpush1.bf16.xpose.msra.mxu0 0
        %2973 = vmatprep.mubr.bf16.mxu0 0
        %2974 = vmatmul.mubr.bf16.gmra.mrb[0].mxu0 %v2936
        %v2975 = vpop.f32.mrb[0].mxu0
        %v2976 = vadd.f32 0.0, %v2975
        %v2977 = vpop.f32.mrb[0].mxu0
        %v2978 = vpop.f32.mrb[0].mxu0
        %v2979 = vadd.f32 0.0, %v2978
        %v2980 = vpop.f32.mrb[0].mxu0
        %2981 = vdwg.mxu0
        %v2983 = vsel %vm2110, %v2455, 0
        %v2986 = vsel %vm2110, %v2296, 0
        %2988 = vmatprep.subr.bf16.mxu0 0
        %2989 = vmatpush1.bf16.xpose.msra.mxu0 %v2986
        %2990 = vmatprep.subr.bf16.mxu0 0
        %2991 = vmatpush1.bf16.xpose.msra.mxu0 0
        %2992 = vmatprep.subr.bf16.mxu0 0
        %2993 = vmatpush1.bf16.xpose.msra.mxu0 0
        %2994 = vmatprep.subr.bf16.mxu0 0
        %2995 = vmatpush1.bf16.xpose.msra.mxu0 0
        %2996 = vmatprep.subr.bf16.mxu0 0
        %2997 = vmatpush1.bf16.xpose.msra.mxu0 0
        %2998 = vmatprep.subr.bf16.mxu0 0
        %2999 = vmatpush1.bf16.xpose.msra.mxu0 0
        %3000 = vmatprep.subr.bf16.mxu0 0
        %3001 = vmatpush1.bf16.xpose.msra.mxu0 0
        %3002 = vmatprep.subr.bf16.mxu0 0
        %3003 = vmatpush1.bf16.xpose.msra.mxu0 0
        %3004 = vmatprep.subr.bf16.mxu0 0
        %3005 = vmatpush1.bf16.xpose.msra.mxu0 0
        %3006 = vmatprep.subr.bf16.mxu0 0
        %3007 = vmatpush1.bf16.xpose.msra.mxu0 0
        %3008 = vmatprep.subr.bf16.mxu0 0
        %3009 = vmatpush1.bf16.xpose.msra.mxu0 0
        %3010 = vmatprep.subr.bf16.mxu0 0
        %3011 = vmatpush1.bf16.xpose.msra.mxu0 0
        %3012 = vmatprep.subr.bf16.mxu0 0
        %3013 = vmatpush1.bf16.xpose.msra.mxu0 0
        %3014 = vmatprep.subr.bf16.mxu0 0
        %3015 = vmatpush1.bf16.xpose.msra.mxu0 0
        %3016 = vmatprep.subr.bf16.mxu0 0
        %3017 = vmatpush1.bf16.xpose.msra.mxu0 0
        %3018 = vmatprep.subr.bf16.mxu0 0
        %3019 = vmatpush1.bf16.xpose.msra.mxu0 0
        %3020 = vmatprep.mubr.bf16.mxu0 0
        %3021 = vmatmul.mubr.bf16.gmra.mrb[0].mxu0 %v2983
        %v3022 = vpop.f32.mrb[0].mxu0
        %v3023 = vadd.f32 0.0, %v3022
        %v3024 = vpop.f32.mrb[0].mxu0
        %v3025 = vpop.f32.mrb[0].mxu0
        %v3026 = vadd.f32 0.0, %v3025
        %v3027 = vpop.f32.mrb[0].mxu0
        %3028 = vdwg.mxu0
        %v3030 = vsel %vm2110, %v2471, 0
        %v3033 = vsel %vm2110, %v2297, 0
        %3035 = vmatprep.subr.bf16.mxu0 0
        %3036 = vmatpush1.bf16.xpose.msra.mxu0 %v3033
        %3037 = vmatprep.subr.bf16.mxu0 0
        %3038 = vmatpush1.bf16.xpose.msra.mxu0 0
        %3039 = vmatprep.subr.bf16.mxu0 0
        %3040 = vmatpush1.bf16.xpose.msra.mxu0 0
        %3041 = vmatprep.subr.bf16.mxu0 0
        %3042 = vmatpush1.bf16.xpose.msra.mxu0 0
        %3043 = vmatprep.subr.bf16.mxu0 0
        %3044 = vmatpush1.bf16.xpose.msra.mxu0 0
        %3045 = vmatprep.subr.bf16.mxu0 0
        %3046 = vmatpush1.bf16.xpose.msra.mxu0 0
        %3047 = vmatprep.subr.bf16.mxu0 0
        %3048 = vmatpush1.bf16.xpose.msra.mxu0 0
        %3049 = vmatprep.subr.bf16.mxu0 0
        %3050 = vmatpush1.bf16.xpose.msra.mxu0 0
        %3051 = vmatprep.subr.bf16.mxu0 0
        %3052 = vmatpush1.bf16.xpose.msra.mxu0 0
        %3053 = vmatprep.subr.bf16.mxu0 0
        %3054 = vmatpush1.bf16.xpose.msra.mxu0 0
        %3055 = vmatprep.subr.bf16.mxu0 0
        %3056 = vmatpush1.bf16.xpose.msra.mxu0 0
        %3057 = vmatprep.subr.bf16.mxu0 0
        %3058 = vmatpush1.bf16.xpose.msra.mxu0 0
        %3059 = vmatprep.subr.bf16.mxu0 0
        %3060 = vmatpush1.bf16.xpose.msra.mxu0 0
        %3061 = vmatprep.subr.bf16.mxu0 0
        %3062 = vmatpush1.bf16.xpose.msra.mxu0 0
        %3063 = vmatprep.subr.bf16.mxu0 0
        %3064 = vmatpush1.bf16.xpose.msra.mxu0 0
        %3065 = vmatprep.subr.bf16.mxu0 0
        %3066 = vmatpush1.bf16.xpose.msra.mxu0 0
        %3067 = vmatprep.mubr.bf16.mxu0 0
        %3068 = vmatmul.mubr.bf16.gmra.mrb[0].mxu0 %v3030
        %v3069 = vpop.f32.mrb[0].mxu0
        %v3070 = vadd.f32 0.0, %v3069
        %v3071 = vpop.f32.mrb[0].mxu0
        %v3072 = vpop.f32.mrb[0].mxu0
        %v3073 = vadd.f32 0.0, %v3072
        %v3074 = vpop.f32.mrb[0].mxu0
        %3075 = vdwg.mxu0
        %v3077 = vsel %vm2110, %v2487, 0
        %v3080 = vsel %vm2110, %v2298, 0
        %3082 = vmatprep.subr.bf16.mxu0 0
        %3083 = vmatpush1.bf16.xpose.msra.mxu0 %v3080
        %3084 = vmatprep.subr.bf16.mxu0 0
        %3085 = vmatpush1.bf16.xpose.msra.mxu0 0
        %3086 = vmatprep.subr.bf16.mxu0 0
        %3087 = vmatpush1.bf16.xpose.msra.mxu0 0
        %3088 = vmatprep.subr.bf16.mxu0 0
        %3089 = vmatpush1.bf16.xpose.msra.mxu0 0
        %3090 = vmatprep.subr.bf16.mxu0 0
        %3091 = vmatpush1.bf16.xpose.msra.mxu0 0
        %3092 = vmatprep.subr.bf16.mxu0 0
        %3093 = vmatpush1.bf16.xpose.msra.mxu0 0
        %3094 = vmatprep.subr.bf16.mxu0 0
        %3095 = vmatpush1.bf16.xpose.msra.mxu0 0
        %3096 = vmatprep.subr.bf16.mxu0 0
        %3097 = vmatpush1.bf16.xpose.msra.mxu0 0
        %3098 = vmatprep.subr.bf16.mxu0 0
        %3099 = vmatpush1.bf16.xpose.msra.mxu0 0
        %3100 = vmatprep.subr.bf16.mxu0 0
        %3101 = vmatpush1.bf16.xpose.msra.mxu0 0
        %3102 = vmatprep.subr.bf16.mxu0 0
        %3103 = vmatpush1.bf16.xpose.msra.mxu0 0
        %3104 = vmatprep.subr.bf16.mxu0 0
        %3105 = vmatpush1.bf16.xpose.msra.mxu0 0
        %3106 = vmatprep.subr.bf16.mxu0 0
        %3107 = vmatpush1.bf16.xpose.msra.mxu0 0
        %3108 = vmatprep.subr.bf16.mxu0 0
        %3109 = vmatpush1.bf16.xpose.msra.mxu0 0
        %3110 = vmatprep.subr.bf16.mxu0 0
        %3111 = vmatpush1.bf16.xpose.msra.mxu0 0
        %3112 = vmatprep.subr.bf16.mxu0 0
        %3113 = vmatpush1.bf16.xpose.msra.mxu0 0
        %3114 = vmatprep.mubr.bf16.mxu0 0
        %3115 = vmatmul.mubr.bf16.gmra.mrb[0].mxu0 %v3077
        %v3116 = vpop.f32.mrb[0].mxu0
        %v3117 = vadd.f32 0.0, %v3116
        %v3118 = vpop.f32.mrb[0].mxu0
        %v3119 = vpop.f32.mrb[0].mxu0
        %v3120 = vadd.f32 0.0, %v3119
        %v3121 = vpop.f32.mrb[0].mxu0
        %3122 = vdwg.mxu0
        %v3124 = vsel %vm2110, %v2503, 0
        %v3127 = vsel %vm2110, %v2299, 0
        %3129 = vmatprep.subr.bf16.mxu0 0
        %3130 = vmatpush1.bf16.xpose.msra.mxu0 %v3127
        %3131 = vmatprep.subr.bf16.mxu0 0
        %3132 = vmatpush1.bf16.xpose.msra.mxu0 0
        %3133 = vmatprep.subr.bf16.mxu0 0
        %3134 = vmatpush1.bf16.xpose.msra.mxu0 0
        %3135 = vmatprep.subr.bf16.mxu0 0
        %3136 = vmatpush1.bf16.xpose.msra.mxu0 0
        %3137 = vmatprep.subr.bf16.mxu0 0
        %3138 = vmatpush1.bf16.xpose.msra.mxu0 0
        %3139 = vmatprep.subr.bf16.mxu0 0
        %3140 = vmatpush1.bf16.xpose.msra.mxu0 0
        %3141 = vmatprep.subr.bf16.mxu0 0
        %3142 = vmatpush1.bf16.xpose.msra.mxu0 0
        %3143 = vmatprep.subr.bf16.mxu0 0
        %3144 = vmatpush1.bf16.xpose.msra.mxu0 0
        %3145 = vmatprep.subr.bf16.mxu0 0
        %3146 = vmatpush1.bf16.xpose.msra.mxu0 0
        %3147 = vmatprep.subr.bf16.mxu0 0
        %3148 = vmatpush1.bf16.xpose.msra.mxu0 0
        %3149 = vmatprep.subr.bf16.mxu0 0
        %3150 = vmatpush1.bf16.xpose.msra.mxu0 0
        %3151 = vmatprep.subr.bf16.mxu0 0
        %3152 = vmatpush1.bf16.xpose.msra.mxu0 0
        %3153 = vmatprep.subr.bf16.mxu0 0
        %3154 = vmatpush1.bf16.xpose.msra.mxu0 0
        %3155 = vmatprep.subr.bf16.mxu0 0
        %3156 = vmatpush1.bf16.xpose.msra.mxu0 0
        %3157 = vmatprep.subr.bf16.mxu0 0
        %3158 = vmatpush1.bf16.xpose.msra.mxu0 0
        %3159 = vmatprep.subr.bf16.mxu0 0
        %3160 = vmatpush1.bf16.xpose.msra.mxu0 0
        %3161 = vmatprep.mubr.bf16.mxu0 0
        %3162 = vmatmul.mubr.bf16.gmra.mrb[0].mxu0 %v3124
        %v3163 = vpop.f32.mrb[0].mxu0
        %v3164 = vadd.f32 0.0, %v3163
        %v3165 = vpop.f32.mrb[0].mxu0
        %v3166 = vpop.f32.mrb[0].mxu0
        %v3167 = vadd.f32 0.0, %v3166
        %v3168 = vpop.f32.mrb[0].mxu0
        %3169 = vdwg.mxu0
        %v3171 = vsel %vm2110, %v2519, 0
        %v3174 = vsel %vm2110, %v2300, 0
        %3176 = vmatprep.subr.bf16.mxu0 0
        %3177 = vmatpush1.bf16.xpose.msra.mxu0 %v3174
        %3178 = vmatprep.subr.bf16.mxu0 0
        %3179 = vmatpush1.bf16.xpose.msra.mxu0 0
        %3180 = vmatprep.subr.bf16.mxu0 0
        %3181 = vmatpush1.bf16.xpose.msra.mxu0 0
        %3182 = vmatprep.subr.bf16.mxu0 0
        %3183 = vmatpush1.bf16.xpose.msra.mxu0 0
        %3184 = vmatprep.subr.bf16.mxu0 0
        %3185 = vmatpush1.bf16.xpose.msra.mxu0 0
        %3186 = vmatprep.subr.bf16.mxu0 0
        %3187 = vmatpush1.bf16.xpose.msra.mxu0 0
        %3188 = vmatprep.subr.bf16.mxu0 0
        %3189 = vmatpush1.bf16.xpose.msra.mxu0 0
        %3190 = vmatprep.subr.bf16.mxu0 0
        %3191 = vmatpush1.bf16.xpose.msra.mxu0 0
        %3192 = vmatprep.subr.bf16.mxu0 0
        %3193 = vmatpush1.bf16.xpose.msra.mxu0 0
        %3194 = vmatprep.subr.bf16.mxu0 0
        %3195 = vmatpush1.bf16.xpose.msra.mxu0 0
        %3196 = vmatprep.subr.bf16.mxu0 0
        %3197 = vmatpush1.bf16.xpose.msra.mxu0 0
        %3198 = vmatprep.subr.bf16.mxu0 0
        %3199 = vmatpush1.bf16.xpose.msra.mxu0 0
        %3200 = vmatprep.subr.bf16.mxu0 0
        %3201 = vmatpush1.bf16.xpose.msra.mxu0 0
        %3202 = vmatprep.subr.bf16.mxu0 0
        %3203 = vmatpush1.bf16.xpose.msra.mxu0 0
        %3204 = vmatprep.subr.bf16.mxu0 0
        %3205 = vmatpush1.bf16.xpose.msra.mxu0 0
        %3206 = vmatprep.subr.bf16.mxu0 0
        %3207 = vmatpush1.bf16.xpose.msra.mxu0 0
        %3208 = vmatprep.mubr.bf16.mxu0 0
        %3209 = vmatmul.mubr.bf16.gmra.mrb[0].mxu0 %v3171
        %v3210 = vpop.f32.mrb[0].mxu0
        %v3211 = vadd.f32 0.0, %v3210
        %v3212 = vpop.f32.mrb[0].mxu0
        %v3213 = vpop.f32.mrb[0].mxu0
        %v3214 = vadd.f32 0.0, %v3213
        %v3215 = vpop.f32.mrb[0].mxu0
        %3216 = vdwg.mxu0
        %v3218 = vsel %vm2110, %v2535, 0
        %v3221 = vsel %vm2110, %v2301, 0
        %3223 = vmatprep.subr.bf16.mxu0 0
        %3224 = vmatpush1.bf16.xpose.msra.mxu0 %v3221
        %3225 = vmatprep.subr.bf16.mxu0 0
        %3226 = vmatpush1.bf16.xpose.msra.mxu0 0
        %3227 = vmatprep.subr.bf16.mxu0 0
        %3228 = vmatpush1.bf16.xpose.msra.mxu0 0
        %3229 = vmatprep.subr.bf16.mxu0 0
        %3230 = vmatpush1.bf16.xpose.msra.mxu0 0
        %3231 = vmatprep.subr.bf16.mxu0 0
        %3232 = vmatpush1.bf16.xpose.msra.mxu0 0
        %3233 = vmatprep.subr.bf16.mxu0 0
        %3234 = vmatpush1.bf16.xpose.msra.mxu0 0
        %3235 = vmatprep.subr.bf16.mxu0 0
        %3236 = vmatpush1.bf16.xpose.msra.mxu0 0
        %3237 = vmatprep.subr.bf16.mxu0 0
        %3238 = vmatpush1.bf16.xpose.msra.mxu0 0
        %3239 = vmatprep.subr.bf16.mxu0 0
        %3240 = vmatpush1.bf16.xpose.msra.mxu0 0
        %3241 = vmatprep.subr.bf16.mxu0 0
        %3242 = vmatpush1.bf16.xpose.msra.mxu0 0
        %3243 = vmatprep.subr.bf16.mxu0 0
        %3244 = vmatpush1.bf16.xpose.msra.mxu0 0
        %3245 = vmatprep.subr.bf16.mxu0 0
        %3246 = vmatpush1.bf16.xpose.msra.mxu0 0
        %3247 = vmatprep.subr.bf16.mxu0 0
        %3248 = vmatpush1.bf16.xpose.msra.mxu0 0
        %3249 = vmatprep.subr.bf16.mxu0 0
        %3250 = vmatpush1.bf16.xpose.msra.mxu0 0
        %3251 = vmatprep.subr.bf16.mxu0 0
        %3252 = vmatpush1.bf16.xpose.msra.mxu0 0
        %3253 = vmatprep.subr.bf16.mxu0 0
        %3254 = vmatpush1.bf16.xpose.msra.mxu0 0
        %3255 = vmatprep.mubr.bf16.mxu0 0
        %3256 = vmatmul.mubr.bf16.gmra.mrb[0].mxu0 %v3218
        %v3257 = vpop.f32.mrb[0].mxu0
        %v3258 = vadd.f32 0.0, %v3257
        %v3259 = vpop.f32.mrb[0].mxu0
        %v3260 = vpop.f32.mrb[0].mxu0
        %v3261 = vadd.f32 0.0, %v3260
        %v3262 = vpop.f32.mrb[0].mxu0
        %3263 = vdwg.mxu0
        %v3265 = vsel %vm2110, %v2551, 0
        %v3268 = vsel %vm2110, %v2302, 0
        %3270 = vmatprep.subr.bf16.mxu0 0
        %3271 = vmatpush1.bf16.xpose.msra.mxu0 %v3268
        %3272 = vmatprep.subr.bf16.mxu0 0
        %3273 = vmatpush1.bf16.xpose.msra.mxu0 0
        %3274 = vmatprep.subr.bf16.mxu0 0
        %3275 = vmatpush1.bf16.xpose.msra.mxu0 0
        %3276 = vmatprep.subr.bf16.mxu0 0
        %3277 = vmatpush1.bf16.xpose.msra.mxu0 0
        %3278 = vmatprep.subr.bf16.mxu0 0
        %3279 = vmatpush1.bf16.xpose.msra.mxu0 0
        %3280 = vmatprep.subr.bf16.mxu0 0
        %3281 = vmatpush1.bf16.xpose.msra.mxu0 0
        %3282 = vmatprep.subr.bf16.mxu0 0
        %3283 = vmatpush1.bf16.xpose.msra.mxu0 0
        %3284 = vmatprep.subr.bf16.mxu0 0
        %3285 = vmatpush1.bf16.xpose.msra.mxu0 0
        %3286 = vmatprep.subr.bf16.mxu0 0
        %3287 = vmatpush1.bf16.xpose.msra.mxu0 0
        %3288 = vmatprep.subr.bf16.mxu0 0
        %3289 = vmatpush1.bf16.xpose.msra.mxu0 0
        %3290 = vmatprep.subr.bf16.mxu0 0
        %3291 = vmatpush1.bf16.xpose.msra.mxu0 0
        %3292 = vmatprep.subr.bf16.mxu0 0
        %3293 = vmatpush1.bf16.xpose.msra.mxu0 0
        %3294 = vmatprep.subr.bf16.mxu0 0
        %3295 = vmatpush1.bf16.xpose.msra.mxu0 0
        %3296 = vmatprep.subr.bf16.mxu0 0
        %3297 = vmatpush1.bf16.xpose.msra.mxu0 0
        %3298 = vmatprep.subr.bf16.mxu0 0
        %3299 = vmatpush1.bf16.xpose.msra.mxu0 0
        %3300 = vmatprep.subr.bf16.mxu0 0
        %3301 = vmatpush1.bf16.xpose.msra.mxu0 0
        %3302 = vmatprep.mubr.bf16.mxu0 0
        %3303 = vmatmul.mubr.bf16.gmra.mrb[0].mxu0 %v3265
        %v3304 = vpop.f32.mrb[0].mxu0
        %v3305 = vadd.f32 0.0, %v3304
        %v3306 = vpop.f32.mrb[0].mxu0
        %v3307 = vpop.f32.mrb[0].mxu0
        %v3308 = vadd.f32 0.0, %v3307
        %v3309 = vpop.f32.mrb[0].mxu0
        %3310 = vdwg.mxu0
        %3311 = vxpose.xlu0.b32.start [1/16] %v2600, 128
        %3312 = vxpose.xlu0.b32.cont [2/16] %v2603, 128
        %3313 = vxpose.xlu0.b32.cont [3/16] 0.0, 128
        %3314 = vxpose.xlu0.b32.cont [4/16] 0.0, 128
        %3315 = vxpose.xlu0.b32.cont [5/16] 0.0, 128
        %3316 = vxpose.xlu0.b32.cont [6/16] 0.0, 128
        %3317 = vxpose.xlu0.b32.cont [7/16] 0.0, 128
        %3318 = vxpose.xlu0.b32.cont [8/16] 0.0, 128
        %3319 = vxpose.xlu0.b32.cont [9/16] 0.0, 128
        %3320 = vxpose.xlu0.b32.cont [10/16] 0.0, 128
        %3321 = vxpose.xlu0.b32.cont [11/16] 0.0, 128
        %3322 = vxpose.xlu0.b32.cont [12/16] 0.0, 128
        %3323 = vxpose.xlu0.b32.cont [13/16] 0.0, 128
        %3324 = vxpose.xlu0.b32.cont [14/16] 0.0, 128
        %3325 = vxpose.xlu0.b32.cont [15/16] 0.0, 128
        %3326 = vxpose.xlu0.b32.end [16/16] 0.0, 128
        %v3327 = vpop.trf.xlu0
        %v3328 = vpop.trf.xlu0
        %v3329 = vpop.trf.xlu0
        %v3330 = vpop.trf.xlu0
        %v3331 = vpop.trf.xlu0
        %v3332 = vpop.trf.xlu0
        %v3333 = vpop.trf.xlu0
        %v3334 = vpop.trf.xlu0
        %v3335 = vpop.trf.xlu0
        %v3336 = vpop.trf.xlu0
        %v3337 = vpop.trf.xlu0
        %v3338 = vpop.trf.xlu0
        %v3339 = vpop.trf.xlu0
        %v3340 = vpop.trf.xlu0
        %v3341 = vpop.trf.xlu0
        %v3342 = vpop.trf.xlu0
        %3343 = vxpose.xlu0.b32.start [1/16] %v2647, 128
        %3344 = vxpose.xlu0.b32.cont [2/16] %v2650, 128
        %3345 = vxpose.xlu0.b32.cont [3/16] 0.0, 128
        %3346 = vxpose.xlu0.b32.cont [4/16] 0.0, 128
        %3347 = vxpose.xlu0.b32.cont [5/16] 0.0, 128
        %3348 = vxpose.xlu0.b32.cont [6/16] 0.0, 128
        %3349 = vxpose.xlu0.b32.cont [7/16] 0.0, 128
        %3350 = vxpose.xlu0.b32.cont [8/16] 0.0, 128
        %3351 = vxpose.xlu0.b32.cont [9/16] 0.0, 128
        %3352 = vxpose.xlu0.b32.cont [10/16] 0.0, 128
        %3353 = vxpose.xlu0.b32.cont [11/16] 0.0, 128
        %3354 = vxpose.xlu0.b32.cont [12/16] 0.0, 128
        %3355 = vxpose.xlu0.b32.cont [13/16] 0.0, 128
        %3356 = vxpose.xlu0.b32.cont [14/16] 0.0, 128
        %3357 = vxpose.xlu0.b32.cont [15/16] 0.0, 128
        %3358 = vxpose.xlu0.b32.end [16/16] 0.0, 128
        %v3359 = vpop.trf.xlu0
        %v3360 = vpop.trf.xlu0
        %v3361 = vpop.trf.xlu0
        %v3362 = vpop.trf.xlu0
        %v3363 = vpop.trf.xlu0
        %v3364 = vpop.trf.xlu0
        %v3365 = vpop.trf.xlu0
        %v3366 = vpop.trf.xlu0
        %v3367 = vpop.trf.xlu0
        %v3368 = vpop.trf.xlu0
        %v3369 = vpop.trf.xlu0
        %v3370 = vpop.trf.xlu0
        %v3371 = vpop.trf.xlu0
        %v3372 = vpop.trf.xlu0
        %v3373 = vpop.trf.xlu0
        %v3374 = vpop.trf.xlu0
        %3375 = vxpose.xlu0.b32.start [1/16] %v2694, 128
        %3376 = vxpose.xlu0.b32.cont [2/16] %v2697, 128
        %3377 = vxpose.xlu0.b32.cont [3/16] 0.0, 128
        %3378 = vxpose.xlu0.b32.cont [4/16] 0.0, 128
        %3379 = vxpose.xlu0.b32.cont [5/16] 0.0, 128
        %3380 = vxpose.xlu0.b32.cont [6/16] 0.0, 128
        %3381 = vxpose.xlu0.b32.cont [7/16] 0.0, 128
        %3382 = vxpose.xlu0.b32.cont [8/16] 0.0, 128
        %3383 = vxpose.xlu0.b32.cont [9/16] 0.0, 128
        %3384 = vxpose.xlu0.b32.cont [10/16] 0.0, 128
        %3385 = vxpose.xlu0.b32.cont [11/16] 0.0, 128
        %3386 = vxpose.xlu0.b32.cont [12/16] 0.0, 128
        %3387 = vxpose.xlu0.b32.cont [13/16] 0.0, 128
        %3388 = vxpose.xlu0.b32.cont [14/16] 0.0, 128
        %3389 = vxpose.xlu0.b32.cont [15/16] 0.0, 128
        %3390 = vxpose.xlu0.b32.end [16/16] 0.0, 128
        %v3391 = vpop.trf.xlu0
        %v3392 = vpop.trf.xlu0
        %v3393 = vpop.trf.xlu0
        %v3394 = vpop.trf.xlu0
        %v3395 = vpop.trf.xlu0
        %v3396 = vpop.trf.xlu0
        %v3397 = vpop.trf.xlu0
        %v3398 = vpop.trf.xlu0
        %v3399 = vpop.trf.xlu0
        %v3400 = vpop.trf.xlu0
        %v3401 = vpop.trf.xlu0
        %v3402 = vpop.trf.xlu0
        %v3403 = vpop.trf.xlu0
        %v3404 = vpop.trf.xlu0
        %v3405 = vpop.trf.xlu0
        %v3406 = vpop.trf.xlu0
        %3407 = vxpose.xlu0.b32.start [1/16] %v2741, 128
        %3408 = vxpose.xlu0.b32.cont [2/16] %v2744, 128
        %3409 = vxpose.xlu0.b32.cont [3/16] 0.0, 128
        %3410 = vxpose.xlu0.b32.cont [4/16] 0.0, 128
        %3411 = vxpose.xlu0.b32.cont [5/16] 0.0, 128
        %3412 = vxpose.xlu0.b32.cont [6/16] 0.0, 128
        %3413 = vxpose.xlu0.b32.cont [7/16] 0.0, 128
        %3414 = vxpose.xlu0.b32.cont [8/16] 0.0, 128
        %3415 = vxpose.xlu0.b32.cont [9/16] 0.0, 128
        %3416 = vxpose.xlu0.b32.cont [10/16] 0.0, 128
        %3417 = vxpose.xlu0.b32.cont [11/16] 0.0, 128
        %3418 = vxpose.xlu0.b32.cont [12/16] 0.0, 128
        %3419 = vxpose.xlu0.b32.cont [13/16] 0.0, 128
        %3420 = vxpose.xlu0.b32.cont [14/16] 0.0, 128
        %3421 = vxpose.xlu0.b32.cont [15/16] 0.0, 128
        %3422 = vxpose.xlu0.b32.end [16/16] 0.0, 128
        %v3423 = vpop.trf.xlu0
        %v3424 = vpop.trf.xlu0
        %v3425 = vpop.trf.xlu0
        %v3426 = vpop.trf.xlu0
        %v3427 = vpop.trf.xlu0
        %v3428 = vpop.trf.xlu0
        %v3429 = vpop.trf.xlu0
        %v3430 = vpop.trf.xlu0
        %v3431 = vpop.trf.xlu0
        %v3432 = vpop.trf.xlu0
        %v3433 = vpop.trf.xlu0
        %v3434 = vpop.trf.xlu0
        %v3435 = vpop.trf.xlu0
        %v3436 = vpop.trf.xlu0
        %v3437 = vpop.trf.xlu0
        %v3438 = vpop.trf.xlu0
        %3439 = vxpose.xlu0.b32.start [1/16] %v2788, 128
        %3440 = vxpose.xlu0.b32.cont [2/16] %v2791, 128
        %3441 = vxpose.xlu0.b32.cont [3/16] 0.0, 128
        %3442 = vxpose.xlu0.b32.cont [4/16] 0.0, 128
        %3443 = vxpose.xlu0.b32.cont [5/16] 0.0, 128
        %3444 = vxpose.xlu0.b32.cont [6/16] 0.0, 128
        %3445 = vxpose.xlu0.b32.cont [7/16] 0.0, 128
        %3446 = vxpose.xlu0.b32.cont [8/16] 0.0, 128
        %3447 = vxpose.xlu0.b32.cont [9/16] 0.0, 128
        %3448 = vxpose.xlu0.b32.cont [10/16] 0.0, 128
        %3449 = vxpose.xlu0.b32.cont [11/16] 0.0, 128
        %3450 = vxpose.xlu0.b32.cont [12/16] 0.0, 128
        %3451 = vxpose.xlu0.b32.cont [13/16] 0.0, 128
        %3452 = vxpose.xlu0.b32.cont [14/16] 0.0, 128
        %3453 = vxpose.xlu0.b32.cont [15/16] 0.0, 128
        %3454 = vxpose.xlu0.b32.end [16/16] 0.0, 128
        %v3455 = vpop.trf.xlu0
        %v3456 = vpop.trf.xlu0
        %v3457 = vpop.trf.xlu0
        %v3458 = vpop.trf.xlu0
        %v3459 = vpop.trf.xlu0
        %v3460 = vpop.trf.xlu0
        %v3461 = vpop.trf.xlu0
        %v3462 = vpop.trf.xlu0
        %v3463 = vpop.trf.xlu0
        %v3464 = vpop.trf.xlu0
        %v3465 = vpop.trf.xlu0
        %v3466 = vpop.trf.xlu0
        %v3467 = vpop.trf.xlu0
        %v3468 = vpop.trf.xlu0
        %v3469 = vpop.trf.xlu0
        %v3470 = vpop.trf.xlu0
        %3471 = vxpose.xlu0.b32.start [1/16] %v2835, 128
        %3472 = vxpose.xlu0.b32.cont [2/16] %v2838, 128
        %3473 = vxpose.xlu0.b32.cont [3/16] 0.0, 128
        %3474 = vxpose.xlu0.b32.cont [4/16] 0.0, 128
        %3475 = vxpose.xlu0.b32.cont [5/16] 0.0, 128
        %3476 = vxpose.xlu0.b32.cont [6/16] 0.0, 128
        %3477 = vxpose.xlu0.b32.cont [7/16] 0.0, 128
        %3478 = vxpose.xlu0.b32.cont [8/16] 0.0, 128
        %3479 = vxpose.xlu0.b32.cont [9/16] 0.0, 128
        %3480 = vxpose.xlu0.b32.cont [10/16] 0.0, 128
        %3481 = vxpose.xlu0.b32.cont [11/16] 0.0, 128
        %3482 = vxpose.xlu0.b32.cont [12/16] 0.0, 128
        %3483 = vxpose.xlu0.b32.cont [13/16] 0.0, 128
        %3484 = vxpose.xlu0.b32.cont [14/16] 0.0, 128
        %3485 = vxpose.xlu0.b32.cont [15/16] 0.0, 128
        %3486 = vxpose.xlu0.b32.end [16/16] 0.0, 128
        %v3487 = vpop.trf.xlu0
        %v3488 = vpop.trf.xlu0
        %v3489 = vpop.trf.xlu0
        %v3490 = vpop.trf.xlu0
        %v3491 = vpop.trf.xlu0
        %v3492 = vpop.trf.xlu0
        %v3493 = vpop.trf.xlu0
        %v3494 = vpop.trf.xlu0
        %v3495 = vpop.trf.xlu0
        %v3496 = vpop.trf.xlu0
        %v3497 = vpop.trf.xlu0
        %v3498 = vpop.trf.xlu0
        %v3499 = vpop.trf.xlu0
        %v3500 = vpop.trf.xlu0
        %v3501 = vpop.trf.xlu0
        %v3502 = vpop.trf.xlu0
        %3503 = vxpose.xlu0.b32.start [1/16] %v2882, 128
        %3504 = vxpose.xlu0.b32.cont [2/16] %v2885, 128
        %3505 = vxpose.xlu0.b32.cont [3/16] 0.0, 128
        %3506 = vxpose.xlu0.b32.cont [4/16] 0.0, 128
        %3507 = vxpose.xlu0.b32.cont [5/16] 0.0, 128
        %3508 = vxpose.xlu0.b32.cont [6/16] 0.0, 128
        %3509 = vxpose.xlu0.b32.cont [7/16] 0.0, 128
        %3510 = vxpose.xlu0.b32.cont [8/16] 0.0, 128
        %3511 = vxpose.xlu0.b32.cont [9/16] 0.0, 128
        %3512 = vxpose.xlu0.b32.cont [10/16] 0.0, 128
        %3513 = vxpose.xlu0.b32.cont [11/16] 0.0, 128
        %3514 = vxpose.xlu0.b32.cont [12/16] 0.0, 128
        %3515 = vxpose.xlu0.b32.cont [13/16] 0.0, 128
        %3516 = vxpose.xlu0.b32.cont [14/16] 0.0, 128
        %3517 = vxpose.xlu0.b32.cont [15/16] 0.0, 128
        %3518 = vxpose.xlu0.b32.end [16/16] 0.0, 128
        %v3519 = vpop.trf.xlu0
        %v3520 = vpop.trf.xlu0
        %v3521 = vpop.trf.xlu0
        %v3522 = vpop.trf.xlu0
        %v3523 = vpop.trf.xlu0
        %v3524 = vpop.trf.xlu0
        %v3525 = vpop.trf.xlu0
        %v3526 = vpop.trf.xlu0
        %v3527 = vpop.trf.xlu0
        %v3528 = vpop.trf.xlu0
        %v3529 = vpop.trf.xlu0
        %v3530 = vpop.trf.xlu0
        %v3531 = vpop.trf.xlu0
        %v3532 = vpop.trf.xlu0
        %v3533 = vpop.trf.xlu0
        %v3534 = vpop.trf.xlu0
        %3535 = vxpose.xlu0.b32.start [1/16] %v2929, 128
        %3536 = vxpose.xlu0.b32.cont [2/16] %v2932, 128
        %3537 = vxpose.xlu0.b32.cont [3/16] 0.0, 128
        %3538 = vxpose.xlu0.b32.cont [4/16] 0.0, 128
        %3539 = vxpose.xlu0.b32.cont [5/16] 0.0, 128
        %3540 = vxpose.xlu0.b32.cont [6/16] 0.0, 128
        %3541 = vxpose.xlu0.b32.cont [7/16] 0.0, 128
        %3542 = vxpose.xlu0.b32.cont [8/16] 0.0, 128
        %3543 = vxpose.xlu0.b32.cont [9/16] 0.0, 128
        %3544 = vxpose.xlu0.b32.cont [10/16] 0.0, 128
        %3545 = vxpose.xlu0.b32.cont [11/16] 0.0, 128
        %3546 = vxpose.xlu0.b32.cont [12/16] 0.0, 128
        %3547 = vxpose.xlu0.b32.cont [13/16] 0.0, 128
        %3548 = vxpose.xlu0.b32.cont [14/16] 0.0, 128
        %3549 = vxpose.xlu0.b32.cont [15/16] 0.0, 128
        %3550 = vxpose.xlu0.b32.end [16/16] 0.0, 128
        %v3551 = vpop.trf.xlu0
        %v3552 = vpop.trf.xlu0
        %v3553 = vpop.trf.xlu0
        %v3554 = vpop.trf.xlu0
        %v3555 = vpop.trf.xlu0
        %v3556 = vpop.trf.xlu0
        %v3557 = vpop.trf.xlu0
        %v3558 = vpop.trf.xlu0
        %v3559 = vpop.trf.xlu0
        %v3560 = vpop.trf.xlu0
        %v3561 = vpop.trf.xlu0
        %v3562 = vpop.trf.xlu0
        %v3563 = vpop.trf.xlu0
        %v3564 = vpop.trf.xlu0
        %v3565 = vpop.trf.xlu0
        %v3566 = vpop.trf.xlu0
        %3567 = vxpose.xlu0.b32.start [1/16] %v2976, 128
        %3568 = vxpose.xlu0.b32.cont [2/16] %v2979, 128
        %3569 = vxpose.xlu0.b32.cont [3/16] 0.0, 128
        %3570 = vxpose.xlu0.b32.cont [4/16] 0.0, 128
        %3571 = vxpose.xlu0.b32.cont [5/16] 0.0, 128
        %3572 = vxpose.xlu0.b32.cont [6/16] 0.0, 128
        %3573 = vxpose.xlu0.b32.cont [7/16] 0.0, 128
        %3574 = vxpose.xlu0.b32.cont [8/16] 0.0, 128
        %3575 = vxpose.xlu0.b32.cont [9/16] 0.0, 128
        %3576 = vxpose.xlu0.b32.cont [10/16] 0.0, 128
        %3577 = vxpose.xlu0.b32.cont [11/16] 0.0, 128
        %3578 = vxpose.xlu0.b32.cont [12/16] 0.0, 128
        %3579 = vxpose.xlu0.b32.cont [13/16] 0.0, 128
        %3580 = vxpose.xlu0.b32.cont [14/16] 0.0, 128
        %3581 = vxpose.xlu0.b32.cont [15/16] 0.0, 128
        %3582 = vxpose.xlu0.b32.end [16/16] 0.0, 128
        %v3583 = vpop.trf.xlu0
        %v3584 = vpop.trf.xlu0
        %v3585 = vpop.trf.xlu0
        %v3586 = vpop.trf.xlu0
        %v3587 = vpop.trf.xlu0
        %v3588 = vpop.trf.xlu0
        %v3589 = vpop.trf.xlu0
        %v3590 = vpop.trf.xlu0
        %v3591 = vpop.trf.xlu0
        %v3592 = vpop.trf.xlu0
        %v3593 = vpop.trf.xlu0
        %v3594 = vpop.trf.xlu0
        %v3595 = vpop.trf.xlu0
        %v3596 = vpop.trf.xlu0
        %v3597 = vpop.trf.xlu0
        %v3598 = vpop.trf.xlu0
        %3599 = vxpose.xlu0.b32.start [1/16] %v3023, 128
        %3600 = vxpose.xlu0.b32.cont [2/16] %v3026, 128
        %3601 = vxpose.xlu0.b32.cont [3/16] 0.0, 128
        %3602 = vxpose.xlu0.b32.cont [4/16] 0.0, 128
        %3603 = vxpose.xlu0.b32.cont [5/16] 0.0, 128
        %3604 = vxpose.xlu0.b32.cont [6/16] 0.0, 128
        %3605 = vxpose.xlu0.b32.cont [7/16] 0.0, 128
        %3606 = vxpose.xlu0.b32.cont [8/16] 0.0, 128
        %3607 = vxpose.xlu0.b32.cont [9/16] 0.0, 128
        %3608 = vxpose.xlu0.b32.cont [10/16] 0.0, 128
        %3609 = vxpose.xlu0.b32.cont [11/16] 0.0, 128
        %3610 = vxpose.xlu0.b32.cont [12/16] 0.0, 128
        %3611 = vxpose.xlu0.b32.cont [13/16] 0.0, 128
        %3612 = vxpose.xlu0.b32.cont [14/16] 0.0, 128
        %3613 = vxpose.xlu0.b32.cont [15/16] 0.0, 128
        %3614 = vxpose.xlu0.b32.end [16/16] 0.0, 128
        %v3615 = vpop.trf.xlu0
        %v3616 = vpop.trf.xlu0
        %v3617 = vpop.trf.xlu0
        %v3618 = vpop.trf.xlu0
        %v3619 = vpop.trf.xlu0
        %v3620 = vpop.trf.xlu0
        %v3621 = vpop.trf.xlu0
        %v3622 = vpop.trf.xlu0
        %v3623 = vpop.trf.xlu0
        %v3624 = vpop.trf.xlu0
        %v3625 = vpop.trf.xlu0
        %v3626 = vpop.trf.xlu0
        %v3627 = vpop.trf.xlu0
        %v3628 = vpop.trf.xlu0
        %v3629 = vpop.trf.xlu0
        %v3630 = vpop.trf.xlu0
        %3631 = vxpose.xlu0.b32.start [1/16] %v3070, 128
        %3632 = vxpose.xlu0.b32.cont [2/16] %v3073, 128
        %3633 = vxpose.xlu0.b32.cont [3/16] 0.0, 128
        %3634 = vxpose.xlu0.b32.cont [4/16] 0.0, 128
        %3635 = vxpose.xlu0.b32.cont [5/16] 0.0, 128
        %3636 = vxpose.xlu0.b32.cont [6/16] 0.0, 128
        %3637 = vxpose.xlu0.b32.cont [7/16] 0.0, 128
        %3638 = vxpose.xlu0.b32.cont [8/16] 0.0, 128
        %3639 = vxpose.xlu0.b32.cont [9/16] 0.0, 128
        %3640 = vxpose.xlu0.b32.cont [10/16] 0.0, 128
        %3641 = vxpose.xlu0.b32.cont [11/16] 0.0, 128
        %3642 = vxpose.xlu0.b32.cont [12/16] 0.0, 128
        %3643 = vxpose.xlu0.b32.cont [13/16] 0.0, 128
        %3644 = vxpose.xlu0.b32.cont [14/16] 0.0, 128
        %3645 = vxpose.xlu0.b32.cont [15/16] 0.0, 128
        %3646 = vxpose.xlu0.b32.end [16/16] 0.0, 128
        %v3647 = vpop.trf.xlu0
        %v3648 = vpop.trf.xlu0
        %v3649 = vpop.trf.xlu0
        %v3650 = vpop.trf.xlu0
        %v3651 = vpop.trf.xlu0
        %v3652 = vpop.trf.xlu0
        %v3653 = vpop.trf.xlu0
        %v3654 = vpop.trf.xlu0
        %v3655 = vpop.trf.xlu0
        %v3656 = vpop.trf.xlu0
        %v3657 = vpop.trf.xlu0
        %v3658 = vpop.trf.xlu0
        %v3659 = vpop.trf.xlu0
        %v3660 = vpop.trf.xlu0
        %v3661 = vpop.trf.xlu0
        %v3662 = vpop.trf.xlu0
        %3663 = vxpose.xlu0.b32.start [1/16] %v3117, 128
        %3664 = vxpose.xlu0.b32.cont [2/16] %v3120, 128
        %3665 = vxpose.xlu0.b32.cont [3/16] 0.0, 128
        %3666 = vxpose.xlu0.b32.cont [4/16] 0.0, 128
        %3667 = vxpose.xlu0.b32.cont [5/16] 0.0, 128
        %3668 = vxpose.xlu0.b32.cont [6/16] 0.0, 128
        %3669 = vxpose.xlu0.b32.cont [7/16] 0.0, 128
        %3670 = vxpose.xlu0.b32.cont [8/16] 0.0, 128
        %3671 = vxpose.xlu0.b32.cont [9/16] 0.0, 128
        %3672 = vxpose.xlu0.b32.cont [10/16] 0.0, 128
        %3673 = vxpose.xlu0.b32.cont [11/16] 0.0, 128
        %3674 = vxpose.xlu0.b32.cont [12/16] 0.0, 128
        %3675 = vxpose.xlu0.b32.cont [13/16] 0.0, 128
        %3676 = vxpose.xlu0.b32.cont [14/16] 0.0, 128
        %3677 = vxpose.xlu0.b32.cont [15/16] 0.0, 128
        %3678 = vxpose.xlu0.b32.end [16/16] 0.0, 128
        %v3679 = vpop.trf.xlu0
        %v3680 = vpop.trf.xlu0
        %v3681 = vpop.trf.xlu0
        %v3682 = vpop.trf.xlu0
        %v3683 = vpop.trf.xlu0
        %v3684 = vpop.trf.xlu0
        %v3685 = vpop.trf.xlu0
        %v3686 = vpop.trf.xlu0
        %v3687 = vpop.trf.xlu0
        %v3688 = vpop.trf.xlu0
        %v3689 = vpop.trf.xlu0
        %v3690 = vpop.trf.xlu0
        %v3691 = vpop.trf.xlu0
        %v3692 = vpop.trf.xlu0
        %v3693 = vpop.trf.xlu0
        %v3694 = vpop.trf.xlu0
        %3695 = vxpose.xlu0.b32.start [1/16] %v3164, 128
        %3696 = vxpose.xlu0.b32.cont [2/16] %v3167, 128
        %3697 = vxpose.xlu0.b32.cont [3/16] 0.0, 128
        %3698 = vxpose.xlu0.b32.cont [4/16] 0.0, 128
        %3699 = vxpose.xlu0.b32.cont [5/16] 0.0, 128
        %3700 = vxpose.xlu0.b32.cont [6/16] 0.0, 128
        %3701 = vxpose.xlu0.b32.cont [7/16] 0.0, 128
        %3702 = vxpose.xlu0.b32.cont [8/16] 0.0, 128
        %3703 = vxpose.xlu0.b32.cont [9/16] 0.0, 128
        %3704 = vxpose.xlu0.b32.cont [10/16] 0.0, 128
        %3705 = vxpose.xlu0.b32.cont [11/16] 0.0, 128
        %3706 = vxpose.xlu0.b32.cont [12/16] 0.0, 128
        %3707 = vxpose.xlu0.b32.cont [13/16] 0.0, 128
        %3708 = vxpose.xlu0.b32.cont [14/16] 0.0, 128
        %3709 = vxpose.xlu0.b32.cont [15/16] 0.0, 128
        %3710 = vxpose.xlu0.b32.end [16/16] 0.0, 128
        %v3711 = vpop.trf.xlu0
        %v3712 = vpop.trf.xlu0
        %v3713 = vpop.trf.xlu0
        %v3714 = vpop.trf.xlu0
        %v3715 = vpop.trf.xlu0
        %v3716 = vpop.trf.xlu0
        %v3717 = vpop.trf.xlu0
        %v3718 = vpop.trf.xlu0
        %v3719 = vpop.trf.xlu0
        %v3720 = vpop.trf.xlu0
        %v3721 = vpop.trf.xlu0
        %v3722 = vpop.trf.xlu0
        %v3723 = vpop.trf.xlu0
        %v3724 = vpop.trf.xlu0
        %v3725 = vpop.trf.xlu0
        %v3726 = vpop.trf.xlu0
        %3727 = vxpose.xlu0.b32.start [1/16] %v3211, 128
        %3728 = vxpose.xlu0.b32.cont [2/16] %v3214, 128
        %3729 = vxpose.xlu0.b32.cont [3/16] 0.0, 128
        %3730 = vxpose.xlu0.b32.cont [4/16] 0.0, 128
        %3731 = vxpose.xlu0.b32.cont [5/16] 0.0, 128
        %3732 = vxpose.xlu0.b32.cont [6/16] 0.0, 128
        %3733 = vxpose.xlu0.b32.cont [7/16] 0.0, 128
        %3734 = vxpose.xlu0.b32.cont [8/16] 0.0, 128
        %3735 = vxpose.xlu0.b32.cont [9/16] 0.0, 128
        %3736 = vxpose.xlu0.b32.cont [10/16] 0.0, 128
        %3737 = vxpose.xlu0.b32.cont [11/16] 0.0, 128
        %3738 = vxpose.xlu0.b32.cont [12/16] 0.0, 128
        %3739 = vxpose.xlu0.b32.cont [13/16] 0.0, 128
        %3740 = vxpose.xlu0.b32.cont [14/16] 0.0, 128
        %3741 = vxpose.xlu0.b32.cont [15/16] 0.0, 128
        %3742 = vxpose.xlu0.b32.end [16/16] 0.0, 128
        %v3743 = vpop.trf.xlu0
        %v3744 = vpop.trf.xlu0
        %v3745 = vpop.trf.xlu0
        %v3746 = vpop.trf.xlu0
        %v3747 = vpop.trf.xlu0
        %v3748 = vpop.trf.xlu0
        %v3749 = vpop.trf.xlu0
        %v3750 = vpop.trf.xlu0
        %v3751 = vpop.trf.xlu0
        %v3752 = vpop.trf.xlu0
        %v3753 = vpop.trf.xlu0
        %v3754 = vpop.trf.xlu0
        %v3755 = vpop.trf.xlu0
        %v3756 = vpop.trf.xlu0
        %v3757 = vpop.trf.xlu0
        %v3758 = vpop.trf.xlu0
        %3759 = vxpose.xlu0.b32.start [1/16] %v3258, 128
        %3760 = vxpose.xlu0.b32.cont [2/16] %v3261, 128
        %3761 = vxpose.xlu0.b32.cont [3/16] 0.0, 128
        %3762 = vxpose.xlu0.b32.cont [4/16] 0.0, 128
        %3763 = vxpose.xlu0.b32.cont [5/16] 0.0, 128
        %3764 = vxpose.xlu0.b32.cont [6/16] 0.0, 128
        %3765 = vxpose.xlu0.b32.cont [7/16] 0.0, 128
        %3766 = vxpose.xlu0.b32.cont [8/16] 0.0, 128
        %3767 = vxpose.xlu0.b32.cont [9/16] 0.0, 128
        %3768 = vxpose.xlu0.b32.cont [10/16] 0.0, 128
        %3769 = vxpose.xlu0.b32.cont [11/16] 0.0, 128
        %3770 = vxpose.xlu0.b32.cont [12/16] 0.0, 128
        %3771 = vxpose.xlu0.b32.cont [13/16] 0.0, 128
        %3772 = vxpose.xlu0.b32.cont [14/16] 0.0, 128
        %3773 = vxpose.xlu0.b32.cont [15/16] 0.0, 128
        %3774 = vxpose.xlu0.b32.end [16/16] 0.0, 128
        %v3775 = vpop.trf.xlu0
        %v3776 = vpop.trf.xlu0
        %v3777 = vpop.trf.xlu0
        %v3778 = vpop.trf.xlu0
        %v3779 = vpop.trf.xlu0
        %v3780 = vpop.trf.xlu0
        %v3781 = vpop.trf.xlu0
        %v3782 = vpop.trf.xlu0
        %v3783 = vpop.trf.xlu0
        %v3784 = vpop.trf.xlu0
        %v3785 = vpop.trf.xlu0
        %v3786 = vpop.trf.xlu0
        %v3787 = vpop.trf.xlu0
        %v3788 = vpop.trf.xlu0
        %v3789 = vpop.trf.xlu0
        %v3790 = vpop.trf.xlu0
        %3791 = vxpose.xlu0.b32.start [1/16] %v3305, 128
        %3792 = vxpose.xlu0.b32.cont [2/16] %v3308, 128
        %3793 = vxpose.xlu0.b32.cont [3/16] 0.0, 128
        %3794 = vxpose.xlu0.b32.cont [4/16] 0.0, 128
        %3795 = vxpose.xlu0.b32.cont [5/16] 0.0, 128
        %3796 = vxpose.xlu0.b32.cont [6/16] 0.0, 128
        %3797 = vxpose.xlu0.b32.cont [7/16] 0.0, 128
        %3798 = vxpose.xlu0.b32.cont [8/16] 0.0, 128
        %3799 = vxpose.xlu0.b32.cont [9/16] 0.0, 128
        %3800 = vxpose.xlu0.b32.cont [10/16] 0.0, 128
        %3801 = vxpose.xlu0.b32.cont [11/16] 0.0, 128
        %3802 = vxpose.xlu0.b32.cont [12/16] 0.0, 128
        %3803 = vxpose.xlu0.b32.cont [13/16] 0.0, 128
        %3804 = vxpose.xlu0.b32.cont [14/16] 0.0, 128
        %3805 = vxpose.xlu0.b32.cont [15/16] 0.0, 128
        %3806 = vxpose.xlu0.b32.end [16/16] 0.0, 128
        %v3807 = vpop.trf.xlu0
        %v3808 = vpop.trf.xlu0
        %v3809 = vpop.trf.xlu0
        %v3810 = vpop.trf.xlu0
        %v3811 = vpop.trf.xlu0
        %v3812 = vpop.trf.xlu0
        %v3813 = vpop.trf.xlu0
        %v3814 = vpop.trf.xlu0
        %v3815 = vpop.trf.xlu0
        %v3816 = vpop.trf.xlu0
        %v3817 = vpop.trf.xlu0
        %v3818 = vpop.trf.xlu0
        %v3819 = vpop.trf.xlu0
        %v3820 = vpop.trf.xlu0
        %v3821 = vpop.trf.xlu0
        %v3822 = vpop.trf.xlu0
        %v3823 = vcombine.low %v3327, %v3391
        %v3824 = vcombine.high %v3327, %v3391
        %v3826 = vunpack.c.l.s4 1983009808
        %v3827 = vunpack.c.0.s8 %v3826
        %v3828 = vlaneseq
        %v3829 = vshrl.u32 %v3828, 7
        %v3830 = vsub.s32 %v3827, %v3829
        %v3831 = vrot.slane %v3823, %v3830
        %v3833 = vunpack.c.l.s4 1983009808
        %v3834 = vunpack.c.0.s8 %v3833
        %v3835 = vlaneseq
        %v3836 = vshrl.u32 %v3835, 7
        %v3837 = vsub.s32 %v3834, %v3836
        %v3838 = vrot.slane %v3824, %v3837
        %v3839 = vcombine.low %v3359, %v3423
        %v3840 = vcombine.high %v3359, %v3423
        %v3842 = vunpack.c.l.s4 1983009808
        %v3843 = vunpack.c.0.s8 %v3842
        %v3844 = vlaneseq
        %v3845 = vshrl.u32 %v3844, 7
        %v3846 = vsub.s32 %v3843, %v3845
        %v3847 = vrot.slane %v3839, %v3846
        %v3849 = vunpack.c.l.s4 1983009808
        %v3850 = vunpack.c.0.s8 %v3849
        %v3851 = vlaneseq
        %v3852 = vshrl.u32 %v3851, 7
        %v3853 = vsub.s32 %v3850, %v3852
        %v3854 = vrot.slane %v3840, %v3853
        %v3855 = vcombine.low %v3455, %v3519
        %v3856 = vcombine.high %v3455, %v3519
        %v3858 = vunpack.c.l.s4 1983009808
        %v3859 = vunpack.c.0.s8 %v3858
        %v3860 = vlaneseq
        %v3861 = vshrl.u32 %v3860, 7
        %v3862 = vsub.s32 %v3859, %v3861
        %v3863 = vrot.slane %v3855, %v3862
        %v3865 = vunpack.c.l.s4 1983009808
        %v3866 = vunpack.c.0.s8 %v3865
        %v3867 = vlaneseq
        %v3868 = vshrl.u32 %v3867, 7
        %v3869 = vsub.s32 %v3866, %v3868
        %v3870 = vrot.slane %v3856, %v3869
        %v3871 = vcombine.low %v3487, %v3551
        %v3872 = vcombine.high %v3487, %v3551
        %v3874 = vunpack.c.l.s4 1983009808
        %v3875 = vunpack.c.0.s8 %v3874
        %v3876 = vlaneseq
        %v3877 = vshrl.u32 %v3876, 7
        %v3878 = vsub.s32 %v3875, %v3877
        %v3879 = vrot.slane %v3871, %v3878
        %v3881 = vunpack.c.l.s4 1983009808
        %v3882 = vunpack.c.0.s8 %v3881
        %v3883 = vlaneseq
        %v3884 = vshrl.u32 %v3883, 7
        %v3885 = vsub.s32 %v3882, %v3884
        %v3886 = vrot.slane %v3872, %v3885
        %v3887 = vcombine.low %v3831, %v3847
        %v3888 = vcombine.high %v3831, %v3847
        %v3890 = vunpack.c.l.s4 1934713408
        %v3891 = vunpack.c.0.s8 %v3890
        %v3892 = vlaneseq
        %v3893 = vshrl.u32 %v3892, 7
        %v3894 = vsub.s32 %v3891, %v3893
        %v3895 = vrot.slane %v3887, %v3894
        %v3897 = vunpack.c.l.s4 1934713408
        %v3898 = vunpack.c.0.s8 %v3897
        %v3899 = vlaneseq
        %v3900 = vshrl.u32 %v3899, 7
        %v3901 = vsub.s32 %v3898, %v3900
        %v3902 = vrot.slane %v3888, %v3901
        %v3903 = vcombine.low %v3838, %v3854
        %v3904 = vcombine.high %v3838, %v3854
        %v3906 = vunpack.c.l.s4 1934713408
        %v3907 = vunpack.c.0.s8 %v3906
        %v3908 = vlaneseq
        %v3909 = vshrl.u32 %v3908, 7
        %v3910 = vsub.s32 %v3907, %v3909
        %v3911 = vrot.slane %v3903, %v3910
        %v3913 = vunpack.c.l.s4 1934713408
        %v3914 = vunpack.c.0.s8 %v3913
        %v3915 = vlaneseq
        %v3916 = vshrl.u32 %v3915, 7
        %v3917 = vsub.s32 %v3914, %v3916
        %v3918 = vrot.slane %v3904, %v3917
        %v3919 = vcombine.low %v3863, %v3879
        %v3920 = vcombine.high %v3863, %v3879
        %v3922 = vunpack.c.l.s4 1934713408
        %v3923 = vunpack.c.0.s8 %v3922
        %v3924 = vlaneseq
        %v3925 = vshrl.u32 %v3924, 7
        %v3926 = vsub.s32 %v3923, %v3925
        %v3927 = vrot.slane %v3919, %v3926
        %v3929 = vunpack.c.l.s4 1934713408
        %v3930 = vunpack.c.0.s8 %v3929
        %v3931 = vlaneseq
        %v3932 = vshrl.u32 %v3931, 7
        %v3933 = vsub.s32 %v3930, %v3932
        %v3934 = vrot.slane %v3920, %v3933
        %v3935 = vcombine.low %v3870, %v3886
        %v3936 = vcombine.high %v3870, %v3886
        %v3938 = vunpack.c.l.s4 1934713408
        %v3939 = vunpack.c.0.s8 %v3938
        %v3940 = vlaneseq
        %v3941 = vshrl.u32 %v3940, 7
        %v3942 = vsub.s32 %v3939, %v3941
        %v3943 = vrot.slane %v3935, %v3942
        %v3945 = vunpack.c.l.s4 1934713408
        %v3946 = vunpack.c.0.s8 %v3945
        %v3947 = vlaneseq
        %v3948 = vshrl.u32 %v3947, 7
        %v3949 = vsub.s32 %v3946, %v3948
        %v3950 = vrot.slane %v3936, %v3949
        %v3951 = vcombine.low %v3895, %v3927
        %v3952 = vcombine.high %v3895, %v3927
        %v3953 = vcombine.low %v3902, %v3934
        %v3954 = vcombine.high %v3902, %v3934
        %v3955 = vcombine.low %v3911, %v3943
        %v3956 = vcombine.high %v3911, %v3943
        %v3957 = vcombine.low %v3918, %v3950
        %v3958 = vcombine.high %v3918, %v3950
        %v3959 = vcombine.low %v3583, %v3647
        %v3960 = vcombine.high %v3583, %v3647
        %v3962 = vunpack.c.l.s4 1983009808
        %v3963 = vunpack.c.0.s8 %v3962
        %v3964 = vlaneseq
        %v3965 = vshrl.u32 %v3964, 7
        %v3966 = vsub.s32 %v3963, %v3965
        %v3967 = vrot.slane %v3959, %v3966
        %v3969 = vunpack.c.l.s4 1983009808
        %v3970 = vunpack.c.0.s8 %v3969
        %v3971 = vlaneseq
        %v3972 = vshrl.u32 %v3971, 7
        %v3973 = vsub.s32 %v3970, %v3972
        %v3974 = vrot.slane %v3960, %v3973
        %v3975 = vcombine.low %v3615, %v3679
        %v3976 = vcombine.high %v3615, %v3679
        %v3978 = vunpack.c.l.s4 1983009808
        %v3979 = vunpack.c.0.s8 %v3978
        %v3980 = vlaneseq
        %v3981 = vshrl.u32 %v3980, 7
        %v3982 = vsub.s32 %v3979, %v3981
        %v3983 = vrot.slane %v3975, %v3982
        %v3985 = vunpack.c.l.s4 1983009808
        %v3986 = vunpack.c.0.s8 %v3985
        %v3987 = vlaneseq
        %v3988 = vshrl.u32 %v3987, 7
        %v3989 = vsub.s32 %v3986, %v3988
        %v3990 = vrot.slane %v3976, %v3989
        %v3991 = vcombine.low %v3711, %v3775
        %v3992 = vcombine.high %v3711, %v3775
        %v3994 = vunpack.c.l.s4 1983009808
        %v3995 = vunpack.c.0.s8 %v3994
        %v3996 = vlaneseq
        %v3997 = vshrl.u32 %v3996, 7
        %v3998 = vsub.s32 %v3995, %v3997
        %v3999 = vrot.slane %v3991, %v3998
        %v4001 = vunpack.c.l.s4 1983009808
        %v4002 = vunpack.c.0.s8 %v4001
        %v4003 = vlaneseq
        %v4004 = vshrl.u32 %v4003, 7
        %v4005 = vsub.s32 %v4002, %v4004
        %v4006 = vrot.slane %v3992, %v4005
        %v4007 = vcombine.low %v3743, %v3807
        %v4008 = vcombine.high %v3743, %v3807
        %v4010 = vunpack.c.l.s4 1983009808
        %v4011 = vunpack.c.0.s8 %v4010
        %v4012 = vlaneseq
        %v4013 = vshrl.u32 %v4012, 7
        %v4014 = vsub.s32 %v4011, %v4013
        %v4015 = vrot.slane %v4007, %v4014
        %v4017 = vunpack.c.l.s4 1983009808
        %v4018 = vunpack.c.0.s8 %v4017
        %v4019 = vlaneseq
        %v4020 = vshrl.u32 %v4019, 7
        %v4021 = vsub.s32 %v4018, %v4020
        %v4022 = vrot.slane %v4008, %v4021
        %v4023 = vcombine.low %v3967, %v3983
        %v4024 = vcombine.high %v3967, %v3983
        %v4026 = vunpack.c.l.s4 1934713408
        %v4027 = vunpack.c.0.s8 %v4026
        %v4028 = vlaneseq
        %v4029 = vshrl.u32 %v4028, 7
        %v4030 = vsub.s32 %v4027, %v4029
        %v4031 = vrot.slane %v4023, %v4030
        %v4033 = vunpack.c.l.s4 1934713408
        %v4034 = vunpack.c.0.s8 %v4033
        %v4035 = vlaneseq
        %v4036 = vshrl.u32 %v4035, 7
        %v4037 = vsub.s32 %v4034, %v4036
        %v4038 = vrot.slane %v4024, %v4037
        %v4039 = vcombine.low %v3974, %v3990
        %v4040 = vcombine.high %v3974, %v3990
        %v4042 = vunpack.c.l.s4 1934713408
        %v4043 = vunpack.c.0.s8 %v4042
        %v4044 = vlaneseq
        %v4045 = vshrl.u32 %v4044, 7
        %v4046 = vsub.s32 %v4043, %v4045
        %v4047 = vrot.slane %v4039, %v4046
        %v4049 = vunpack.c.l.s4 1934713408
        %v4050 = vunpack.c.0.s8 %v4049
        %v4051 = vlaneseq
        %v4052 = vshrl.u32 %v4051, 7
        %v4053 = vsub.s32 %v4050, %v4052
        %v4054 = vrot.slane %v4040, %v4053
        %v4055 = vcombine.low %v3999, %v4015
        %v4056 = vcombine.high %v3999, %v4015
        %v4058 = vunpack.c.l.s4 1934713408
        %v4059 = vunpack.c.0.s8 %v4058
        %v4060 = vlaneseq
        %v4061 = vshrl.u32 %v4060, 7
        %v4062 = vsub.s32 %v4059, %v4061
        %v4063 = vrot.slane %v4055, %v4062
        %v4065 = vunpack.c.l.s4 1934713408
        %v4066 = vunpack.c.0.s8 %v4065
        %v4067 = vlaneseq
        %v4068 = vshrl.u32 %v4067, 7
        %v4069 = vsub.s32 %v4066, %v4068
        %v4070 = vrot.slane %v4056, %v4069
        %v4071 = vcombine.low %v4006, %v4022
        %v4072 = vcombine.high %v4006, %v4022
        %v4074 = vunpack.c.l.s4 1934713408
        %v4075 = vunpack.c.0.s8 %v4074
        %v4076 = vlaneseq
        %v4077 = vshrl.u32 %v4076, 7
        %v4078 = vsub.s32 %v4075, %v4077
        %v4079 = vrot.slane %v4071, %v4078
        %v4081 = vunpack.c.l.s4 1934713408
        %v4082 = vunpack.c.0.s8 %v4081
        %v4083 = vlaneseq
        %v4084 = vshrl.u32 %v4083, 7
        %v4085 = vsub.s32 %v4082, %v4084
        %v4086 = vrot.slane %v4072, %v4085
        %v4087 = vcombine.low %v4031, %v4063
        %v4088 = vcombine.high %v4031, %v4063
        %v4089 = vcombine.low %v4038, %v4070
        %v4090 = vcombine.high %v4038, %v4070
        %v4091 = vcombine.low %v4047, %v4079
        %v4092 = vcombine.high %v4047, %v4079
        %v4093 = vcombine.low %v4054, %v4086
        %v4094 = vcombine.high %v4054, %v4086
        %v4095 = vcombine.low %v3951, %v3953
        %v4096 = vcombine.high %v3951, %v3953
        %v4098 = vunpack.c.l.s4 1983009808
        %v4099 = vunpack.c.0.s8 %v4098
        %v4100 = vlaneseq
        %v4101 = vshrl.u32 %v4100, 7
        %v4102 = vsub.s32 %v4099, %v4101
        %v4103 = vrot.slane %v4095, %v4102
        %v4105 = vunpack.c.l.s4 1983009808
        %v4106 = vunpack.c.0.s8 %v4105
        %v4107 = vlaneseq
        %v4108 = vshrl.u32 %v4107, 7
        %v4109 = vsub.s32 %v4106, %v4108
        %v4110 = vrot.slane %v4096, %v4109
        %v4111 = vcombine.low %v3952, %v3954
        %v4112 = vcombine.high %v3952, %v3954
        %v4114 = vunpack.c.l.s4 1983009808
        %v4115 = vunpack.c.0.s8 %v4114
        %v4116 = vlaneseq
        %v4117 = vshrl.u32 %v4116, 7
        %v4118 = vsub.s32 %v4115, %v4117
        %v4119 = vrot.slane %v4111, %v4118
        %v4121 = vunpack.c.l.s4 1983009808
        %v4122 = vunpack.c.0.s8 %v4121
        %v4123 = vlaneseq
        %v4124 = vshrl.u32 %v4123, 7
        %v4125 = vsub.s32 %v4122, %v4124
        %v4126 = vrot.slane %v4112, %v4125
        %v4127 = vcombine.low %v3955, %v3957
        %v4128 = vcombine.high %v3955, %v3957
        %v4130 = vunpack.c.l.s4 1983009808
        %v4131 = vunpack.c.0.s8 %v4130
        %v4132 = vlaneseq
        %v4133 = vshrl.u32 %v4132, 7
        %v4134 = vsub.s32 %v4131, %v4133
        %v4135 = vrot.slane %v4127, %v4134
        %v4137 = vunpack.c.l.s4 1983009808
        %v4138 = vunpack.c.0.s8 %v4137
        %v4139 = vlaneseq
        %v4140 = vshrl.u32 %v4139, 7
        %v4141 = vsub.s32 %v4138, %v4140
        %v4142 = vrot.slane %v4128, %v4141
        %v4143 = vcombine.low %v3956, %v3958
        %v4144 = vcombine.high %v3956, %v3958
        %v4146 = vunpack.c.l.s4 1983009808
        %v4147 = vunpack.c.0.s8 %v4146
        %v4148 = vlaneseq
        %v4149 = vshrl.u32 %v4148, 7
        %v4150 = vsub.s32 %v4147, %v4149
        %v4151 = vrot.slane %v4143, %v4150
        %v4153 = vunpack.c.l.s4 1983009808
        %v4154 = vunpack.c.0.s8 %v4153
        %v4155 = vlaneseq
        %v4156 = vshrl.u32 %v4155, 7
        %v4157 = vsub.s32 %v4154, %v4156
        %v4158 = vrot.slane %v4144, %v4157
        %v4159 = vcombine.low %v4103, %v4119
        %v4160 = vcombine.high %v4103, %v4119
        %v4162 = vunpack.c.l.s4 1934713408
        %v4163 = vunpack.c.0.s8 %v4162
        %v4164 = vlaneseq
        %v4165 = vshrl.u32 %v4164, 7
        %v4166 = vsub.s32 %v4163, %v4165
        %v4167 = vrot.slane %v4159, %v4166
        %v4169 = vunpack.c.l.s4 1934713408
        %v4170 = vunpack.c.0.s8 %v4169
        %v4171 = vlaneseq
        %v4172 = vshrl.u32 %v4171, 7
        %v4173 = vsub.s32 %v4170, %v4172
        %v4174 = vrot.slane %v4160, %v4173
        %v4175 = vcombine.low %v4110, %v4126
        %v4176 = vcombine.high %v4110, %v4126
        %v4178 = vunpack.c.l.s4 1934713408
        %v4179 = vunpack.c.0.s8 %v4178
        %v4180 = vlaneseq
        %v4181 = vshrl.u32 %v4180, 7
        %v4182 = vsub.s32 %v4179, %v4181
        %v4183 = vrot.slane %v4175, %v4182
        %v4185 = vunpack.c.l.s4 1934713408
        %v4186 = vunpack.c.0.s8 %v4185
        %v4187 = vlaneseq
        %v4188 = vshrl.u32 %v4187, 7
        %v4189 = vsub.s32 %v4186, %v4188
        %v4190 = vrot.slane %v4176, %v4189
        %v4191 = vcombine.low %v4135, %v4151
        %v4192 = vcombine.high %v4135, %v4151
        %v4194 = vunpack.c.l.s4 1934713408
        %v4195 = vunpack.c.0.s8 %v4194
        %v4196 = vlaneseq
        %v4197 = vshrl.u32 %v4196, 7
        %v4198 = vsub.s32 %v4195, %v4197
        %v4199 = vrot.slane %v4191, %v4198
        %v4201 = vunpack.c.l.s4 1934713408
        %v4202 = vunpack.c.0.s8 %v4201
        %v4203 = vlaneseq
        %v4204 = vshrl.u32 %v4203, 7
        %v4205 = vsub.s32 %v4202, %v4204
        %v4206 = vrot.slane %v4192, %v4205
        %v4207 = vcombine.low %v4142, %v4158
        %v4208 = vcombine.high %v4142, %v4158
        %v4210 = vunpack.c.l.s4 1934713408
        %v4211 = vunpack.c.0.s8 %v4210
        %v4212 = vlaneseq
        %v4213 = vshrl.u32 %v4212, 7
        %v4214 = vsub.s32 %v4211, %v4213
        %v4215 = vrot.slane %v4207, %v4214
        %v4217 = vunpack.c.l.s4 1934713408
        %v4218 = vunpack.c.0.s8 %v4217
        %v4219 = vlaneseq
        %v4220 = vshrl.u32 %v4219, 7
        %v4221 = vsub.s32 %v4218, %v4220
        %v4222 = vrot.slane %v4208, %v4221
        %v4223 = vcombine.low %v4167, %v4199
        %v4224 = vcombine.high %v4167, %v4199
        %v4225 = vcombine.low %v4174, %v4206
        %v4226 = vcombine.high %v4174, %v4206
        %v4227 = vcombine.low %v4183, %v4215
        %v4228 = vcombine.high %v4183, %v4215
        %v4229 = vcombine.low %v4190, %v4222
        %v4230 = vcombine.high %v4190, %v4222
        %v4231 = vcombine.low %v4087, %v4089
        %v4232 = vcombine.high %v4087, %v4089
        %v4234 = vunpack.c.l.s4 1983009808
        %v4235 = vunpack.c.0.s8 %v4234
        %v4236 = vlaneseq
        %v4237 = vshrl.u32 %v4236, 7
        %v4238 = vsub.s32 %v4235, %v4237
        %v4239 = vrot.slane %v4231, %v4238
        %v4241 = vunpack.c.l.s4 1983009808
        %v4242 = vunpack.c.0.s8 %v4241
        %v4243 = vlaneseq
        %v4244 = vshrl.u32 %v4243, 7
        %v4245 = vsub.s32 %v4242, %v4244
        %v4246 = vrot.slane %v4232, %v4245
        %v4247 = vcombine.low %v4088, %v4090
        %v4248 = vcombine.high %v4088, %v4090
        %v4250 = vunpack.c.l.s4 1983009808
        %v4251 = vunpack.c.0.s8 %v4250
        %v4252 = vlaneseq
        %v4253 = vshrl.u32 %v4252, 7
        %v4254 = vsub.s32 %v4251, %v4253
        %v4255 = vrot.slane %v4247, %v4254
        %v4257 = vunpack.c.l.s4 1983009808
        %v4258 = vunpack.c.0.s8 %v4257
        %v4259 = vlaneseq
        %v4260 = vshrl.u32 %v4259, 7
        %v4261 = vsub.s32 %v4258, %v4260
        %v4262 = vrot.slane %v4248, %v4261
        %v4263 = vcombine.low %v4091, %v4093
        %v4264 = vcombine.high %v4091, %v4093
        %v4266 = vunpack.c.l.s4 1983009808
        %v4267 = vunpack.c.0.s8 %v4266
        %v4268 = vlaneseq
        %v4269 = vshrl.u32 %v4268, 7
        %v4270 = vsub.s32 %v4267, %v4269
        %v4271 = vrot.slane %v4263, %v4270
        %v4273 = vunpack.c.l.s4 1983009808
        %v4274 = vunpack.c.0.s8 %v4273
        %v4275 = vlaneseq
        %v4276 = vshrl.u32 %v4275, 7
        %v4277 = vsub.s32 %v4274, %v4276
        %v4278 = vrot.slane %v4264, %v4277
        %v4279 = vcombine.low %v4092, %v4094
        %v4280 = vcombine.high %v4092, %v4094
        %v4282 = vunpack.c.l.s4 1983009808
        %v4283 = vunpack.c.0.s8 %v4282
        %v4284 = vlaneseq
        %v4285 = vshrl.u32 %v4284, 7
        %v4286 = vsub.s32 %v4283, %v4285
        %v4287 = vrot.slane %v4279, %v4286
        %v4289 = vunpack.c.l.s4 1983009808
        %v4290 = vunpack.c.0.s8 %v4289
        %v4291 = vlaneseq
        %v4292 = vshrl.u32 %v4291, 7
        %v4293 = vsub.s32 %v4290, %v4292
        %v4294 = vrot.slane %v4280, %v4293
        %v4295 = vcombine.low %v4239, %v4255
        %v4296 = vcombine.high %v4239, %v4255
        %v4298 = vunpack.c.l.s4 1934713408
        %v4299 = vunpack.c.0.s8 %v4298
        %v4300 = vlaneseq
        %v4301 = vshrl.u32 %v4300, 7
        %v4302 = vsub.s32 %v4299, %v4301
        %v4303 = vrot.slane %v4295, %v4302
        %v4305 = vunpack.c.l.s4 1934713408
        %v4306 = vunpack.c.0.s8 %v4305
        %v4307 = vlaneseq
        %v4308 = vshrl.u32 %v4307, 7
        %v4309 = vsub.s32 %v4306, %v4308
        %v4310 = vrot.slane %v4296, %v4309
        %v4311 = vcombine.low %v4246, %v4262
        %v4312 = vcombine.high %v4246, %v4262
        %v4314 = vunpack.c.l.s4 1934713408
        %v4315 = vunpack.c.0.s8 %v4314
        %v4316 = vlaneseq
        %v4317 = vshrl.u32 %v4316, 7
        %v4318 = vsub.s32 %v4315, %v4317
        %v4319 = vrot.slane %v4311, %v4318
        %v4321 = vunpack.c.l.s4 1934713408
        %v4322 = vunpack.c.0.s8 %v4321
        %v4323 = vlaneseq
        %v4324 = vshrl.u32 %v4323, 7
        %v4325 = vsub.s32 %v4322, %v4324
        %v4326 = vrot.slane %v4312, %v4325
        %v4327 = vcombine.low %v4271, %v4287
        %v4328 = vcombine.high %v4271, %v4287
        %v4330 = vunpack.c.l.s4 1934713408
        %v4331 = vunpack.c.0.s8 %v4330
        %v4332 = vlaneseq
        %v4333 = vshrl.u32 %v4332, 7
        %v4334 = vsub.s32 %v4331, %v4333
        %v4335 = vrot.slane %v4327, %v4334
        %v4337 = vunpack.c.l.s4 1934713408
        %v4338 = vunpack.c.0.s8 %v4337
        %v4339 = vlaneseq
        %v4340 = vshrl.u32 %v4339, 7
        %v4341 = vsub.s32 %v4338, %v4340
        %v4342 = vrot.slane %v4328, %v4341
        %v4343 = vcombine.low %v4278, %v4294
        %v4344 = vcombine.high %v4278, %v4294
        %v4346 = vunpack.c.l.s4 1934713408
        %v4347 = vunpack.c.0.s8 %v4346
        %v4348 = vlaneseq
        %v4349 = vshrl.u32 %v4348, 7
        %v4350 = vsub.s32 %v4347, %v4349
        %v4351 = vrot.slane %v4343, %v4350
        %v4353 = vunpack.c.l.s4 1934713408
        %v4354 = vunpack.c.0.s8 %v4353
        %v4355 = vlaneseq
        %v4356 = vshrl.u32 %v4355, 7
        %v4357 = vsub.s32 %v4354, %v4356
        %v4358 = vrot.slane %v4344, %v4357
        %v4359 = vcombine.low %v4303, %v4335
        %v4360 = vcombine.high %v4303, %v4335
        %v4361 = vcombine.low %v4310, %v4342
        %v4362 = vcombine.high %v4310, %v4342
        %v4363 = vcombine.low %v4319, %v4351
        %v4364 = vcombine.high %v4319, %v4351
        %v4365 = vcombine.low %v4326, %v4358
        %v4366 = vcombine.high %v4326, %v4358
        %4368 = vrot.lane.b32.xlu0 %v4224, 16
        %v4369 = vpop.permute.xlu0 %4368
        %4372 = vrot.lane.b32.xlu0 %v4225, 32
        %v4373 = vpop.permute.xlu0 %4372
        %4376 = vrot.lane.b32.xlu0 %v4226, 48
        %v4377 = vpop.permute.xlu0 %4376
        %4380 = vrot.lane.b32.xlu0 %v4227, 64
        %v4381 = vpop.permute.xlu0 %4380
        %4384 = vrot.lane.b32.xlu0 %v4228, 80
        %v4385 = vpop.permute.xlu0 %4384
        %4388 = vrot.lane.b32.xlu0 %v4229, 96
        %v4389 = vpop.permute.xlu0 %4388
        %4392 = vrot.lane.b32.xlu0 %v4230, 112
        %v4393 = vpop.permute.xlu0 %4392
        %4396 = vrot.lane.b32.xlu0 %v4360, 16
        %v4397 = vpop.permute.xlu0 %4396
        %4400 = vrot.lane.b32.xlu0 %v4361, 32
        %v4401 = vpop.permute.xlu0 %4400
        %4404 = vrot.lane.b32.xlu0 %v4362, 48
        %v4405 = vpop.permute.xlu0 %4404
        %4408 = vrot.lane.b32.xlu0 %v4363, 64
        %v4409 = vpop.permute.xlu0 %4408
        %4412 = vrot.lane.b32.xlu0 %v4364, 80
        %v4413 = vpop.permute.xlu0 %4412
        %4416 = vrot.lane.b32.xlu0 %v4365, 96
        %v4417 = vpop.permute.xlu0 %4416
        %4420 = vrot.lane.b32.xlu0 %v4366, 112
        %v4421 = vpop.permute.xlu0 %4420
        %v4423 = vsel %vm1388, %v4223, %v4369
        %vm4424 = vcmask 261120
        %v4425 = vsel %vm4424, %v4423, %v4373
        %vm4426 = vcmask 392192
        %v4427 = vsel %vm4426, %v4425, %v4377
        %vm4428 = vcmask 523264
        %v4429 = vsel %vm4428, %v4427, %v4381
        %vm4430 = vcmask 654336
        %v4431 = vsel %vm4430, %v4429, %v4385
        %vm4432 = vcmask 785408
        %v4433 = vsel %vm4432, %v4431, %v4389
        %vm4434 = vcmask 916480
        %v4435 = vsel %vm4434, %v4433, %v4393
        %v4436 = vsel %vm1388, %v4359, %v4397
        %v4437 = vsel %vm4424, %v4436, %v4401
        %v4438 = vsel %vm4426, %v4437, %v4405
        %v4439 = vsel %vm4428, %v4438, %v4409
        %v4440 = vsel %vm4430, %v4439, %v4413
        %v4441 = vsel %vm4432, %v4440, %v4417
        %v4442 = vsel %vm4434, %v4441, %v4421
        %v4443 = vpack.c.bf16 %v4435, %v4435
        %v4444 = vpack.c.bf16 %v4442, %v4442
        %v4445 = vld [vmem:[#allocation2] sm:$0xff]
        %v4446 = vld [vmem:[#allocation2 + $0x8] sm:$0xff]
        %v4447 = vld [vmem:[#allocation2 + $0x10] sm:$0xff]
        %v4448 = vld [vmem:[#allocation2 + $0x18] sm:$0xff]
        %v4449 = vld [vmem:[#allocation2 + $0x20] sm:$0xff]
        %v4450 = vld [vmem:[#allocation2 + $0x28] sm:$0xff]
        %v4451 = vld [vmem:[#allocation2 + $0x30] sm:$0xff]
        %v4452 = vld [vmem:[#allocation2 + $0x38] sm:$0xff]
        %v4453 = vld [vmem:[#allocation2 + $0x40] sm:$0xff]
        %v4454 = vld [vmem:[#allocation2 + $0x48] sm:$0xff]
        %v4455 = vld [vmem:[#allocation2 + $0x50] sm:$0xff]
        %v4456 = vld [vmem:[#allocation2 + $0x58] sm:$0xff]
        %v4457 = vld [vmem:[#allocation2 + $0x60] sm:$0xff]
        %v4458 = vld [vmem:[#allocation2 + $0x68] sm:$0xff]
        %v4459 = vld [vmem:[#allocation2 + $0x70] sm:$0xff]
        %v4460 = vld [vmem:[#allocation2 + $0x78] sm:$0xff]
        %v4461 = vld [vmem:[#allocation2 + $0x80] sm:$0xff]
        %v4462 = vld [vmem:[#allocation2 + $0x88] sm:$0xff]
        %v4463 = vld [vmem:[#allocation2 + $0x90] sm:$0xff]
        %v4464 = vld [vmem:[#allocation2 + $0x98] sm:$0xff]
        %v4465 = vld [vmem:[#allocation2 + $0xa0] sm:$0xff]
        %v4466 = vld [vmem:[#allocation2 + $0xa8] sm:$0xff]
        %v4467 = vld [vmem:[#allocation2 + $0xb0] sm:$0xff]
        %v4468 = vld [vmem:[#allocation2 + $0xb8] sm:$0xff]
        %v4469 = vld [vmem:[#allocation2 + $0xc0] sm:$0xff]
        %v4470 = vld [vmem:[#allocation2 + $0xc8] sm:$0xff]
        %v4471 = vld [vmem:[#allocation2 + $0xd0] sm:$0xff]
        %v4472 = vld [vmem:[#allocation2 + $0xd8] sm:$0xff]
        %v4473 = vld [vmem:[#allocation2 + $0xe0] sm:$0xff]
        %v4474 = vld [vmem:[#allocation2 + $0xe8] sm:$0xff]
        %v4475 = vld [vmem:[#allocation2 + $0xf0] sm:$0xff]
        %v4476 = vld [vmem:[#allocation2 + $0xf8] sm:$0xff]
        %v4477 = vld [vmem:[#allocation4] sm:$0x3]
        %v4479 = vlaneseq
        %v4480 = vshrl.u32 %v4479, 7
        %v4481 = vsub.s32 0, %v4480
        %v4482 = vrot.slane %v4477, %v4481
        %v4483 = vlaneseq
        %v4484 = vshrl.u32 %v4483, 7
        %v4485 = vsub.s32 1, %v4484
        %v4486 = vrot.slane %v4477, %v4485
        %v4521 = vunpack.c.l.b16 %v4445
        %v4522 = vunpack.c.h.b16 %v4445
        %v4523 = vunpack.c.l.b16 %v4446
        %v4524 = vunpack.c.h.b16 %v4446
        %v4525 = vunpack.c.l.b16 %v4447
        %v4526 = vunpack.c.h.b16 %v4447
        %v4527 = vunpack.c.l.b16 %v4448
        %v4528 = vunpack.c.h.b16 %v4448
        %v4529 = vunpack.c.l.b16 %v4449
        %v4530 = vunpack.c.h.b16 %v4449
        %v4531 = vunpack.c.l.b16 %v4450
        %v4532 = vunpack.c.h.b16 %v4450
        %v4533 = vunpack.c.l.b16 %v4451
        %v4534 = vunpack.c.h.b16 %v4451
        %v4535 = vunpack.c.l.b16 %v4452
        %v4536 = vunpack.c.h.b16 %v4452
        %v4537 = vunpack.c.l.b16 %v4453
        %v4538 = vunpack.c.h.b16 %v4453
        %v4539 = vunpack.c.l.b16 %v4454
        %v4540 = vunpack.c.h.b16 %v4454
        %v4541 = vunpack.c.l.b16 %v4455
        %v4542 = vunpack.c.h.b16 %v4455
        %v4543 = vunpack.c.l.b16 %v4456
        %v4544 = vunpack.c.h.b16 %v4456
        %v4545 = vunpack.c.l.b16 %v4457
        %v4546 = vunpack.c.h.b16 %v4457
        %v4547 = vunpack.c.l.b16 %v4458
        %v4548 = vunpack.c.h.b16 %v4458
        %v4549 = vunpack.c.l.b16 %v4459
        %v4550 = vunpack.c.h.b16 %v4459
        %v4551 = vunpack.c.l.b16 %v4460
        %v4552 = vunpack.c.h.b16 %v4460
        %v4553 = vunpack.c.l.b16 %v4461
        %v4554 = vunpack.c.h.b16 %v4461
        %v4555 = vunpack.c.l.b16 %v4462
        %v4556 = vunpack.c.h.b16 %v4462
        %v4557 = vunpack.c.l.b16 %v4463
        %v4558 = vunpack.c.h.b16 %v4463
        %v4559 = vunpack.c.l.b16 %v4464
        %v4560 = vunpack.c.h.b16 %v4464
        %v4561 = vunpack.c.l.b16 %v4465
        %v4562 = vunpack.c.h.b16 %v4465
        %v4563 = vunpack.c.l.b16 %v4466
        %v4564 = vunpack.c.h.b16 %v4466
        %v4565 = vunpack.c.l.b16 %v4467
        %v4566 = vunpack.c.h.b16 %v4467
        %v4567 = vunpack.c.l.b16 %v4468
        %v4568 = vunpack.c.h.b16 %v4468
        %v4569 = vunpack.c.l.b16 %v4469
        %v4570 = vunpack.c.h.b16 %v4469
        %v4571 = vunpack.c.l.b16 %v4470
        %v4572 = vunpack.c.h.b16 %v4470
        %v4573 = vunpack.c.l.b16 %v4471
        %v4574 = vunpack.c.h.b16 %v4471
        %v4575 = vunpack.c.l.b16 %v4472
        %v4576 = vunpack.c.h.b16 %v4472
        %v4577 = vunpack.c.l.b16 %v4473
        %v4578 = vunpack.c.h.b16 %v4473
        %v4579 = vunpack.c.l.b16 %v4474
        %v4580 = vunpack.c.h.b16 %v4474
        %v4581 = vunpack.c.l.b16 %v4475
        %v4582 = vunpack.c.h.b16 %v4475
        %v4583 = vunpack.c.l.b16 %v4476
        %v4584 = vunpack.c.h.b16 %v4476
        %v4585 = vpack.c.b16 %v4523, %v4521
        %v4586 = vpack.c.b16 %v4524, %v4522
        %v4587 = vpack.c.b16 %v4527, %v4525
        %v4588 = vpack.c.b16 %v4528, %v4526
        %v4589 = vpack.c.b16 %v4531, %v4529
        %v4590 = vpack.c.b16 %v4532, %v4530
        %v4591 = vpack.c.b16 %v4535, %v4533
        %v4592 = vpack.c.b16 %v4536, %v4534
        %v4593 = vpack.c.b16 %v4539, %v4537
        %v4594 = vpack.c.b16 %v4540, %v4538
        %v4595 = vpack.c.b16 %v4543, %v4541
        %v4596 = vpack.c.b16 %v4544, %v4542
        %v4597 = vpack.c.b16 %v4547, %v4545
        %v4598 = vpack.c.b16 %v4548, %v4546
        %v4599 = vpack.c.b16 %v4551, %v4549
        %v4600 = vpack.c.b16 %v4552, %v4550
        %v4601 = vpack.c.b16 %v4555, %v4553
        %v4602 = vpack.c.b16 %v4556, %v4554
        %v4603 = vpack.c.b16 %v4559, %v4557
        %v4604 = vpack.c.b16 %v4560, %v4558
        %v4605 = vpack.c.b16 %v4563, %v4561
        %v4606 = vpack.c.b16 %v4564, %v4562
        %v4607 = vpack.c.b16 %v4567, %v4565
        %v4608 = vpack.c.b16 %v4568, %v4566
        %v4609 = vpack.c.b16 %v4571, %v4569
        %v4610 = vpack.c.b16 %v4572, %v4570
        %v4611 = vpack.c.b16 %v4575, %v4573
        %v4612 = vpack.c.b16 %v4576, %v4574
        %v4613 = vpack.c.b16 %v4579, %v4577
        %v4614 = vpack.c.b16 %v4580, %v4578
        %v4615 = vpack.c.b16 %v4583, %v4581
        %v4616 = vpack.c.b16 %v4584, %v4582
        %4649 = vmatprep.subr.bf16.mxu0 %v4586
        %4650 = vmatpush1.bf16.msra.mxu0 %v4585
        %4651 = vmatprep.subr.bf16.mxu0 %v4588
        %4652 = vmatpush1.bf16.msra.mxu0 %v4587
        %4653 = vmatprep.subr.bf16.mxu0 %v4590
        %4654 = vmatpush1.bf16.msra.mxu0 %v4589
        %4655 = vmatprep.subr.bf16.mxu0 %v4592
        %4656 = vmatpush1.bf16.msra.mxu0 %v4591
        %4657 = vmatprep.subr.bf16.mxu0 %v4594
        %4658 = vmatpush1.bf16.msra.mxu0 %v4593
        %4659 = vmatprep.subr.bf16.mxu0 %v4596
        %4660 = vmatpush1.bf16.msra.mxu0 %v4595
        %4661 = vmatprep.subr.bf16.mxu0 %v4598
        %4662 = vmatpush1.bf16.msra.mxu0 %v4597
        %4663 = vmatprep.subr.bf16.mxu0 %v4600
        %4664 = vmatpush1.bf16.msra.mxu0 %v4599
        %4665 = vmatprep.subr.bf16.mxu0 %v4602
        %4666 = vmatpush1.bf16.msra.mxu0 %v4601
        %4667 = vmatprep.subr.bf16.mxu0 %v4604
        %4668 = vmatpush1.bf16.msra.mxu0 %v4603
        %4669 = vmatprep.subr.bf16.mxu0 %v4606
        %4670 = vmatpush1.bf16.msra.mxu0 %v4605
        %4671 = vmatprep.subr.bf16.mxu0 %v4608
        %4672 = vmatpush1.bf16.msra.mxu0 %v4607
        %4673 = vmatprep.subr.bf16.mxu0 %v4610
        %4674 = vmatpush1.bf16.msra.mxu0 %v4609
        %4675 = vmatprep.subr.bf16.mxu0 %v4612
        %4676 = vmatpush1.bf16.msra.mxu0 %v4611
        %4677 = vmatprep.subr.bf16.mxu0 %v4614
        %4678 = vmatpush1.bf16.msra.mxu0 %v4613
        %4679 = vmatprep.subr.bf16.mxu0 %v4616
        %4680 = vmatpush1.bf16.msra.mxu0 %v4615
        %4681 = vmatprep.mubr.bf16.mxu0 %v4444
        %4682 = vmatmul.mubr.bf16.gmra.mrb[0].mxu0 %v4443
        %v4683 = vpop.f32.mrb[0].mxu0
        %v4684 = vadd.f32 %v4482, %v4683
        %v4685 = vpop.f32.mrb[0].mxu0
        %v4686 = vadd.f32 %v4486, %v4685
        %v4687 = vpop.f32.mrb[0].mxu0
        %v4688 = vpop.f32.mrb[0].mxu0
        %4689 = vdwg.mxu0
        %v4690 = vadd.f32 %v629, %v4684
        %v4691 = vadd.f32 %v630, %v4686
        %v4692 = vld [vmem:[#allocation6] sm:$0x3]
        %v4693 = vld [vmem:[#allocation7] sm:$0x3]
        %v4694 = vadd.f32 %v4690, %v4691
        %4695 = vadd.xlane.f32.xlu0 %v4694
        %v4696 = vpop.xlane.xlu0 %4695
        %v4697 = vrcp.pop 256.0
        %v4698 = vmul.f32 %v4696, %v4697
        %v4699 = vsub.f32 %v4690, %v4698
        %v4700 = vsub.f32 %v4691, %v4698
        %v4701 = vmul.f32 %v4699, %v4699
        %v4702 = vmul.f32 %v4700, %v4700
        %v4703 = vadd.f32 %v4701, %v4702
        %4704 = vadd.xlane.f32.xlu0 %v4703
        %v4705 = vpop.xlane.xlu0 %4704
        %v4706 = vmul.f32 %v4705, %v4697
        %v4707 = vadd.f32 %v4706, 1e-05
        %v4708 = vrsqrt.pop %v4707
        %v4709 = vmul.f32 %v4699, %v4708
        %v4710 = vmul.f32 %v4700, %v4708
        %v4712 = vlaneseq
        %v4713 = vshrl.u32 %v4712, 7
        %v4714 = vsub.s32 0, %v4713
        %v4715 = vrot.slane %v4692, %v4714
        %v4716 = vlaneseq
        %v4717 = vshrl.u32 %v4716, 7
        %v4718 = vsub.s32 1, %v4717
        %v4719 = vrot.slane %v4692, %v4718
        %v4722 = vmul.f32 %v4709, %v4715
        %v4723 = vmul.f32 %v4710, %v4719
        %v4725 = vlaneseq
        %v4726 = vshrl.u32 %v4725, 7
        %v4727 = vsub.s32 0, %v4726
        %v4728 = vrot.slane %v4693, %v4727
        %v4729 = vlaneseq
        %v4730 = vshrl.u32 %v4729, 7
        %v4731 = vsub.s32 1, %v4730
        %v4732 = vrot.slane %v4693, %v4731
        %v4735 = vadd.f32 %v4722, %v4728
        %v4736 = vadd.f32 %v4723, %v4732
        %v4737 = vpack.c.bf16 %v4735, %v4735
        %v4738 = vpack.c.bf16 %v4736, %v4736
        %v4739 = vld [vmem:[#allocation9] sm:$0xff]
        %v4740 = vld [vmem:[#allocation9 + $0x8] sm:$0xff]
        %v4741 = vld [vmem:[#allocation9 + $0x10] sm:$0xff]
        %v4742 = vld [vmem:[#allocation9 + $0x18] sm:$0xff]
        %v4743 = vld [vmem:[#allocation9 + $0x20] sm:$0xff]
        %v4744 = vld [vmem:[#allocation9 + $0x28] sm:$0xff]
        %v4745 = vld [vmem:[#allocation9 + $0x30] sm:$0xff]
        %v4746 = vld [vmem:[#allocation9 + $0x38] sm:$0xff]
        %v4747 = vld [vmem:[#allocation9 + $0x40] sm:$0xff]
        %v4748 = vld [vmem:[#allocation9 + $0x48] sm:$0xff]
        %v4749 = vld [vmem:[#allocation9 + $0x50] sm:$0xff]
        %v4750 = vld [vmem:[#allocation9 + $0x58] sm:$0xff]
        %v4751 = vld [vmem:[#allocation9 + $0x60] sm:$0xff]
        %v4752 = vld [vmem:[#allocation9 + $0x68] sm:$0xff]
        %v4753 = vld [vmem:[#allocation9 + $0x70] sm:$0xff]
        %v4754 = vld [vmem:[#allocation9 + $0x78] sm:$0xff]
        %v4755 = vld [vmem:[#allocation9 + $0x80] sm:$0xff]
        %v4756 = vld [vmem:[#allocation9 + $0x88] sm:$0xff]
        %v4757 = vld [vmem:[#allocation9 + $0x90] sm:$0xff]
        %v4758 = vld [vmem:[#allocation9 + $0x98] sm:$0xff]
        %v4759 = vld [vmem:[#allocation9 + $0xa0] sm:$0xff]
        %v4760 = vld [vmem:[#allocation9 + $0xa8] sm:$0xff]
        %v4761 = vld [vmem:[#allocation9 + $0xb0] sm:$0xff]
        %v4762 = vld [vmem:[#allocation9 + $0xb8] sm:$0xff]
        %v4763 = vld [vmem:[#allocation9 + $0xc0] sm:$0xff]
        %v4764 = vld [vmem:[#allocation9 + $0xc8] sm:$0xff]
        %v4765 = vld [vmem:[#allocation9 + $0xd0] sm:$0xff]
        %v4766 = vld [vmem:[#allocation9 + $0xd8] sm:$0xff]
        %v4767 = vld [vmem:[#allocation9 + $0xe0] sm:$0xff]
        %v4768 = vld [vmem:[#allocation9 + $0xe8] sm:$0xff]
        %v4769 = vld [vmem:[#allocation9 + $0xf0] sm:$0xff]
        %v4770 = vld [vmem:[#allocation9 + $0xf8] sm:$0xff]
        %v4771 = vld [vmem:[#allocation9 + $0x100] sm:$0xff]
        %v4772 = vld [vmem:[#allocation9 + $0x108] sm:$0xff]
        %v4773 = vld [vmem:[#allocation9 + $0x110] sm:$0xff]
        %v4774 = vld [vmem:[#allocation9 + $0x118] sm:$0xff]
        %v4775 = vld [vmem:[#allocation9 + $0x120] sm:$0xff]
        %v4776 = vld [vmem:[#allocation9 + $0x128] sm:$0xff]
        %v4777 = vld [vmem:[#allocation9 + $0x130] sm:$0xff]
        %v4778 = vld [vmem:[#allocation9 + $0x138] sm:$0xff]
        %v4779 = vld [vmem:[#allocation9 + $0x140] sm:$0xff]
        %v4780 = vld [vmem:[#allocation9 + $0x148] sm:$0xff]
        %v4781 = vld [vmem:[#allocation9 + $0x150] sm:$0xff]
        %v4782 = vld [vmem:[#allocation9 + $0x158] sm:$0xff]
        %v4783 = vld [vmem:[#allocation9 + $0x160] sm:$0xff]
        %v4784 = vld [vmem:[#allocation9 + $0x168] sm:$0xff]
        %v4785 = vld [vmem:[#allocation9 + $0x170] sm:$0xff]
        %v4786 = vld [vmem:[#allocation9 + $0x178] sm:$0xff]
        %v4787 = vld [vmem:[#allocation9 + $0x180] sm:$0xff]
        %v4788 = vld [vmem:[#allocation9 + $0x188] sm:$0xff]
        %v4789 = vld [vmem:[#allocation9 + $0x190] sm:$0xff]
        %v4790 = vld [vmem:[#allocation9 + $0x198] sm:$0xff]
        %v4791 = vld [vmem:[#allocation9 + $0x1a0] sm:$0xff]
        %v4792 = vld [vmem:[#allocation9 + $0x1a8] sm:$0xff]
        %v4793 = vld [vmem:[#allocation9 + $0x1b0] sm:$0xff]
        %v4794 = vld [vmem:[#allocation9 + $0x1b8] sm:$0xff]
        %v4795 = vld [vmem:[#allocation9 + $0x1c0] sm:$0xff]
        %v4796 = vld [vmem:[#allocation9 + $0x1c8] sm:$0xff]
        %v4797 = vld [vmem:[#allocation9 + $0x1d0] sm:$0xff]
        %v4798 = vld [vmem:[#allocation9 + $0x1d8] sm:$0xff]
        %v4799 = vld [vmem:[#allocation9 + $0x1e0] sm:$0xff]
        %v4800 = vld [vmem:[#allocation9 + $0x1e8] sm:$0xff]
        %v4801 = vld [vmem:[#allocation9 + $0x1f0] sm:$0xff]
        %v4802 = vld [vmem:[#allocation9 + $0x1f8] sm:$0xff]
        %v4803 = vld [vmem:[#allocation9 + $0x200] sm:$0xff]
        %v4804 = vld [vmem:[#allocation9 + $0x208] sm:$0xff]
        %v4805 = vld [vmem:[#allocation9 + $0x210] sm:$0xff]
        %v4806 = vld [vmem:[#allocation9 + $0x218] sm:$0xff]
        %v4807 = vld [vmem:[#allocation9 + $0x220] sm:$0xff]
        %v4808 = vld [vmem:[#allocation9 + $0x228] sm:$0xff]
        %v4809 = vld [vmem:[#allocation9 + $0x230] sm:$0xff]
        %v4810 = vld [vmem:[#allocation9 + $0x238] sm:$0xff]
        %v4811 = vld [vmem:[#allocation9 + $0x240] sm:$0xff]
        %v4812 = vld [vmem:[#allocation9 + $0x248] sm:$0xff]
        %v4813 = vld [vmem:[#allocation9 + $0x250] sm:$0xff]
        %v4814 = vld [vmem:[#allocation9 + $0x258] sm:$0xff]
        %v4815 = vld [vmem:[#allocation9 + $0x260] sm:$0xff]
        %v4816 = vld [vmem:[#allocation9 + $0x268] sm:$0xff]
        %v4817 = vld [vmem:[#allocation9 + $0x270] sm:$0xff]
        %v4818 = vld [vmem:[#allocation9 + $0x278] sm:$0xff]
        %v4819 = vld [vmem:[#allocation9 + $0x280] sm:$0xff]
        %v4820 = vld [vmem:[#allocation9 + $0x288] sm:$0xff]
        %v4821 = vld [vmem:[#allocation9 + $0x290] sm:$0xff]
        %v4822 = vld [vmem:[#allocation9 + $0x298] sm:$0xff]
        %v4823 = vld [vmem:[#allocation9 + $0x2a0] sm:$0xff]
        %v4824 = vld [vmem:[#allocation9 + $0x2a8] sm:$0xff]
        %v4825 = vld [vmem:[#allocation9 + $0x2b0] sm:$0xff]
        %v4826 = vld [vmem:[#allocation9 + $0x2b8] sm:$0xff]
        %v4827 = vld [vmem:[#allocation9 + $0x2c0] sm:$0xff]
        %v4828 = vld [vmem:[#allocation9 + $0x2c8] sm:$0xff]
        %v4829 = vld [vmem:[#allocation9 + $0x2d0] sm:$0xff]
        %v4830 = vld [vmem:[#allocation9 + $0x2d8] sm:$0xff]
        %v4831 = vld [vmem:[#allocation9 + $0x2e0] sm:$0xff]
        %v4832 = vld [vmem:[#allocation9 + $0x2e8] sm:$0xff]
        %v4833 = vld [vmem:[#allocation9 + $0x2f0] sm:$0xff]
        %v4834 = vld [vmem:[#allocation9 + $0x2f8] sm:$0xff]
        %v4835 = vld [vmem:[#allocation9 + $0x300] sm:$0xff]
        %v4836 = vld [vmem:[#allocation9 + $0x308] sm:$0xff]
        %v4837 = vld [vmem:[#allocation9 + $0x310] sm:$0xff]
        %v4838 = vld [vmem:[#allocation9 + $0x318] sm:$0xff]
        %v4839 = vld [vmem:[#allocation9 + $0x320] sm:$0xff]
        %v4840 = vld [vmem:[#allocation9 + $0x328] sm:$0xff]
        %v4841 = vld [vmem:[#allocation9 + $0x330] sm:$0xff]
        %v4842 = vld [vmem:[#allocation9 + $0x338] sm:$0xff]
        %v4843 = vld [vmem:[#allocation9 + $0x340] sm:$0xff]
        %v4844 = vld [vmem:[#allocation9 + $0x348] sm:$0xff]
        %v4845 = vld [vmem:[#allocation9 + $0x350] sm:$0xff]
        %v4846 = vld [vmem:[#allocation9 + $0x358] sm:$0xff]
        %v4847 = vld [vmem:[#allocation9 + $0x360] sm:$0xff]
        %v4848 = vld [vmem:[#allocation9 + $0x368] sm:$0xff]
        %v4849 = vld [vmem:[#allocation9 + $0x370] sm:$0xff]
        %v4850 = vld [vmem:[#allocation9 + $0x378] sm:$0xff]
        %v4851 = vld [vmem:[#allocation9 + $0x380] sm:$0xff]
        %v4852 = vld [vmem:[#allocation9 + $0x388] sm:$0xff]
        %v4853 = vld [vmem:[#allocation9 + $0x390] sm:$0xff]
        %v4854 = vld [vmem:[#allocation9 + $0x398] sm:$0xff]
        %v4855 = vld [vmem:[#allocation9 + $0x3a0] sm:$0xff]
        %v4856 = vld [vmem:[#allocation9 + $0x3a8] sm:$0xff]
        %v4857 = vld [vmem:[#allocation9 + $0x3b0] sm:$0xff]
        %v4858 = vld [vmem:[#allocation9 + $0x3b8] sm:$0xff]
        %v4859 = vld [vmem:[#allocation9 + $0x3c0] sm:$0xff]
        %v4860 = vld [vmem:[#allocation9 + $0x3c8] sm:$0xff]
        %v4861 = vld [vmem:[#allocation9 + $0x3d0] sm:$0xff]
        %v4862 = vld [vmem:[#allocation9 + $0x3d8] sm:$0xff]
        %v4863 = vld [vmem:[#allocation9 + $0x3e0] sm:$0xff]
        %v4864 = vld [vmem:[#allocation9 + $0x3e8] sm:$0xff]
        %v4865 = vld [vmem:[#allocation9 + $0x3f0] sm:$0xff]
        %v4866 = vld [vmem:[#allocation9 + $0x3f8] sm:$0xff]
        %v4867 = vld [vmem:[#allocation10] sm:$0xff]
        %v4869 = vlaneseq
        %v4870 = vshrl.u32 %v4869, 7
        %v4871 = vsub.s32 0, %v4870
        %v4872 = vrot.slane %v4867, %v4871
        %v4873 = vlaneseq
        %v4874 = vshrl.u32 %v4873, 7
        %v4875 = vsub.s32 1, %v4874
        %v4876 = vrot.slane %v4867, %v4875
        %v4877 = vlaneseq
        %v4878 = vshrl.u32 %v4877, 7
        %v4879 = vsub.s32 2, %v4878
        %v4880 = vrot.slane %v4867, %v4879
        %v4881 = vlaneseq
        %v4882 = vshrl.u32 %v4881, 7
        %v4883 = vsub.s32 3, %v4882
        %v4884 = vrot.slane %v4867, %v4883
        %v4885 = vlaneseq
        %v4886 = vshrl.u32 %v4885, 7
        %v4887 = vsub.s32 4, %v4886
        %v4888 = vrot.slane %v4867, %v4887
        %v4889 = vlaneseq
        %v4890 = vshrl.u32 %v4889, 7
        %v4891 = vsub.s32 5, %v4890
        %v4892 = vrot.slane %v4867, %v4891
        %v4893 = vlaneseq
        %v4894 = vshrl.u32 %v4893, 7
        %v4895 = vsub.s32 6, %v4894
        %v4896 = vrot.slane %v4867, %v4895
        %v4897 = vlaneseq
        %v4898 = vshrl.u32 %v4897, 7
        %v4899 = vsub.s32 7, %v4898
        %v4900 = vrot.slane %v4867, %v4899
        %v5037 = vunpack.c.l.b16 %v4739
        %v5038 = vunpack.c.h.b16 %v4739
        %v5039 = vunpack.c.l.b16 %v4740
        %v5040 = vunpack.c.h.b16 %v4740
        %v5041 = vunpack.c.l.b16 %v4741
        %v5042 = vunpack.c.h.b16 %v4741
        %v5043 = vunpack.c.l.b16 %v4742
        %v5044 = vunpack.c.h.b16 %v4742
        %v5045 = vunpack.c.l.b16 %v4743
        %v5046 = vunpack.c.h.b16 %v4743
        %v5047 = vunpack.c.l.b16 %v4744
        %v5048 = vunpack.c.h.b16 %v4744
        %v5049 = vunpack.c.l.b16 %v4745
        %v5050 = vunpack.c.h.b16 %v4745
        %v5051 = vunpack.c.l.b16 %v4746
        %v5052 = vunpack.c.h.b16 %v4746
        %v5053 = vunpack.c.l.b16 %v4747
        %v5054 = vunpack.c.h.b16 %v4747
        %v5055 = vunpack.c.l.b16 %v4748
        %v5056 = vunpack.c.h.b16 %v4748
        %v5057 = vunpack.c.l.b16 %v4749
        %v5058 = vunpack.c.h.b16 %v4749
        %v5059 = vunpack.c.l.b16 %v4750
        %v5060 = vunpack.c.h.b16 %v4750
        %v5061 = vunpack.c.l.b16 %v4751
        %v5062 = vunpack.c.h.b16 %v4751
        %v5063 = vunpack.c.l.b16 %v4752
        %v5064 = vunpack.c.h.b16 %v4752
        %v5065 = vunpack.c.l.b16 %v4753
        %v5066 = vunpack.c.h.b16 %v4753
        %v5067 = vunpack.c.l.b16 %v4754
        %v5068 = vunpack.c.h.b16 %v4754
        %v5069 = vunpack.c.l.b16 %v4755
        %v5070 = vunpack.c.h.b16 %v4755
        %v5071 = vunpack.c.l.b16 %v4756
        %v5072 = vunpack.c.h.b16 %v4756
        %v5073 = vunpack.c.l.b16 %v4757
        %v5074 = vunpack.c.h.b16 %v4757
        %v5075 = vunpack.c.l.b16 %v4758
        %v5076 = vunpack.c.h.b16 %v4758
        %v5077 = vunpack.c.l.b16 %v4759
        %v5078 = vunpack.c.h.b16 %v4759
        %v5079 = vunpack.c.l.b16 %v4760
        %v5080 = vunpack.c.h.b16 %v4760
        %v5081 = vunpack.c.l.b16 %v4761
        %v5082 = vunpack.c.h.b16 %v4761
        %v5083 = vunpack.c.l.b16 %v4762
        %v5084 = vunpack.c.h.b16 %v4762
        %v5085 = vunpack.c.l.b16 %v4763
        %v5086 = vunpack.c.h.b16 %v4763
        %v5087 = vunpack.c.l.b16 %v4764
        %v5088 = vunpack.c.h.b16 %v4764
        %v5089 = vunpack.c.l.b16 %v4765
        %v5090 = vunpack.c.h.b16 %v4765
        %v5091 = vunpack.c.l.b16 %v4766
        %v5092 = vunpack.c.h.b16 %v4766
        %v5093 = vunpack.c.l.b16 %v4767
        %v5094 = vunpack.c.h.b16 %v4767
        %v5095 = vunpack.c.l.b16 %v4768
        %v5096 = vunpack.c.h.b16 %v4768
        %v5097 = vunpack.c.l.b16 %v4769
        %v5098 = vunpack.c.h.b16 %v4769
        %v5099 = vunpack.c.l.b16 %v4770
        %v5100 = vunpack.c.h.b16 %v4770
        %v5101 = vunpack.c.l.b16 %v4771
        %v5102 = vunpack.c.h.b16 %v4771
        %v5103 = vunpack.c.l.b16 %v4772
        %v5104 = vunpack.c.h.b16 %v4772
        %v5105 = vunpack.c.l.b16 %v4773
        %v5106 = vunpack.c.h.b16 %v4773
        %v5107 = vunpack.c.l.b16 %v4774
        %v5108 = vunpack.c.h.b16 %v4774
        %v5109 = vunpack.c.l.b16 %v4775
        %v5110 = vunpack.c.h.b16 %v4775
        %v5111 = vunpack.c.l.b16 %v4776
        %v5112 = vunpack.c.h.b16 %v4776
        %v5113 = vunpack.c.l.b16 %v4777
        %v5114 = vunpack.c.h.b16 %v4777
        %v5115 = vunpack.c.l.b16 %v4778
        %v5116 = vunpack.c.h.b16 %v4778
        %v5117 = vunpack.c.l.b16 %v4779
        %v5118 = vunpack.c.h.b16 %v4779
        %v5119 = vunpack.c.l.b16 %v4780
        %v5120 = vunpack.c.h.b16 %v4780
        %v5121 = vunpack.c.l.b16 %v4781
        %v5122 = vunpack.c.h.b16 %v4781
        %v5123 = vunpack.c.l.b16 %v4782
        %v5124 = vunpack.c.h.b16 %v4782
        %v5125 = vunpack.c.l.b16 %v4783
        %v5126 = vunpack.c.h.b16 %v4783
        %v5127 = vunpack.c.l.b16 %v4784
        %v5128 = vunpack.c.h.b16 %v4784
        %v5129 = vunpack.c.l.b16 %v4785
        %v5130 = vunpack.c.h.b16 %v4785
        %v5131 = vunpack.c.l.b16 %v4786
        %v5132 = vunpack.c.h.b16 %v4786
        %v5133 = vunpack.c.l.b16 %v4787
        %v5134 = vunpack.c.h.b16 %v4787
        %v5135 = vunpack.c.l.b16 %v4788
        %v5136 = vunpack.c.h.b16 %v4788
        %v5137 = vunpack.c.l.b16 %v4789
        %v5138 = vunpack.c.h.b16 %v4789
        %v5139 = vunpack.c.l.b16 %v4790
        %v5140 = vunpack.c.h.b16 %v4790
        %v5141 = vunpack.c.l.b16 %v4791
        %v5142 = vunpack.c.h.b16 %v4791
        %v5143 = vunpack.c.l.b16 %v4792
        %v5144 = vunpack.c.h.b16 %v4792
        %v5145 = vunpack.c.l.b16 %v4793
        %v5146 = vunpack.c.h.b16 %v4793
        %v5147 = vunpack.c.l.b16 %v4794
        %v5148 = vunpack.c.h.b16 %v4794
        %v5149 = vunpack.c.l.b16 %v4795
        %v5150 = vunpack.c.h.b16 %v4795
        %v5151 = vunpack.c.l.b16 %v4796
        %v5152 = vunpack.c.h.b16 %v4796
        %v5153 = vunpack.c.l.b16 %v4797
        %v5154 = vunpack.c.h.b16 %v4797
        %v5155 = vunpack.c.l.b16 %v4798
        %v5156 = vunpack.c.h.b16 %v4798
        %v5157 = vunpack.c.l.b16 %v4799
        %v5158 = vunpack.c.h.b16 %v4799
        %v5159 = vunpack.c.l.b16 %v4800
        %v5160 = vunpack.c.h.b16 %v4800
        %v5161 = vunpack.c.l.b16 %v4801
        %v5162 = vunpack.c.h.b16 %v4801
        %v5163 = vunpack.c.l.b16 %v4802
        %v5164 = vunpack.c.h.b16 %v4802
        %v5165 = vunpack.c.l.b16 %v4803
        %v5166 = vunpack.c.h.b16 %v4803
        %v5167 = vunpack.c.l.b16 %v4804
        %v5168 = vunpack.c.h.b16 %v4804
        %v5169 = vunpack.c.l.b16 %v4805
        %v5170 = vunpack.c.h.b16 %v4805
        %v5171 = vunpack.c.l.b16 %v4806
        %v5172 = vunpack.c.h.b16 %v4806
        %v5173 = vunpack.c.l.b16 %v4807
        %v5174 = vunpack.c.h.b16 %v4807
        %v5175 = vunpack.c.l.b16 %v4808
        %v5176 = vunpack.c.h.b16 %v4808
        %v5177 = vunpack.c.l.b16 %v4809
        %v5178 = vunpack.c.h.b16 %v4809
        %v5179 = vunpack.c.l.b16 %v4810
        %v5180 = vunpack.c.h.b16 %v4810
        %v5181 = vunpack.c.l.b16 %v4811
        %v5182 = vunpack.c.h.b16 %v4811
        %v5183 = vunpack.c.l.b16 %v4812
        %v5184 = vunpack.c.h.b16 %v4812
        %v5185 = vunpack.c.l.b16 %v4813
        %v5186 = vunpack.c.h.b16 %v4813
        %v5187 = vunpack.c.l.b16 %v4814
        %v5188 = vunpack.c.h.b16 %v4814
        %v5189 = vunpack.c.l.b16 %v4815
        %v5190 = vunpack.c.h.b16 %v4815
        %v5191 = vunpack.c.l.b16 %v4816
        %v5192 = vunpack.c.h.b16 %v4816
        %v5193 = vunpack.c.l.b16 %v4817
        %v5194 = vunpack.c.h.b16 %v4817
        %v5195 = vunpack.c.l.b16 %v4818
        %v5196 = vunpack.c.h.b16 %v4818
        %v5197 = vunpack.c.l.b16 %v4819
        %v5198 = vunpack.c.h.b16 %v4819
        %v5199 = vunpack.c.l.b16 %v4820
        %v5200 = vunpack.c.h.b16 %v4820
        %v5201 = vunpack.c.l.b16 %v4821
        %v5202 = vunpack.c.h.b16 %v4821
        %v5203 = vunpack.c.l.b16 %v4822
        %v5204 = vunpack.c.h.b16 %v4822
        %v5205 = vunpack.c.l.b16 %v4823
        %v5206 = vunpack.c.h.b16 %v4823
        %v5207 = vunpack.c.l.b16 %v4824
        %v5208 = vunpack.c.h.b16 %v4824
        %v5209 = vunpack.c.l.b16 %v4825
        %v5210 = vunpack.c.h.b16 %v4825
        %v5211 = vunpack.c.l.b16 %v4826
        %v5212 = vunpack.c.h.b16 %v4826
        %v5213 = vunpack.c.l.b16 %v4827
        %v5214 = vunpack.c.h.b16 %v4827
        %v5215 = vunpack.c.l.b16 %v4828
        %v5216 = vunpack.c.h.b16 %v4828
        %v5217 = vunpack.c.l.b16 %v4829
        %v5218 = vunpack.c.h.b16 %v4829
        %v5219 = vunpack.c.l.b16 %v4830
        %v5220 = vunpack.c.h.b16 %v4830
        %v5221 = vunpack.c.l.b16 %v4831
        %v5222 = vunpack.c.h.b16 %v4831
        %v5223 = vunpack.c.l.b16 %v4832
        %v5224 = vunpack.c.h.b16 %v4832
        %v5225 = vunpack.c.l.b16 %v4833
        %v5226 = vunpack.c.h.b16 %v4833
        %v5227 = vunpack.c.l.b16 %v4834
        %v5228 = vunpack.c.h.b16 %v4834
        %v5229 = vunpack.c.l.b16 %v4835
        %v5230 = vunpack.c.h.b16 %v4835
        %v5231 = vunpack.c.l.b16 %v4836
        %v5232 = vunpack.c.h.b16 %v4836
        %v5233 = vunpack.c.l.b16 %v4837
        %v5234 = vunpack.c.h.b16 %v4837
        %v5235 = vunpack.c.l.b16 %v4838
        %v5236 = vunpack.c.h.b16 %v4838
        %v5237 = vunpack.c.l.b16 %v4839
        %v5238 = vunpack.c.h.b16 %v4839
        %v5239 = vunpack.c.l.b16 %v4840
        %v5240 = vunpack.c.h.b16 %v4840
        %v5241 = vunpack.c.l.b16 %v4841
        %v5242 = vunpack.c.h.b16 %v4841
        %v5243 = vunpack.c.l.b16 %v4842
        %v5244 = vunpack.c.h.b16 %v4842
        %v5245 = vunpack.c.l.b16 %v4843
        %v5246 = vunpack.c.h.b16 %v4843
        %v5247 = vunpack.c.l.b16 %v4844
        %v5248 = vunpack.c.h.b16 %v4844
        %v5249 = vunpack.c.l.b16 %v4845
        %v5250 = vunpack.c.h.b16 %v4845
        %v5251 = vunpack.c.l.b16 %v4846
        %v5252 = vunpack.c.h.b16 %v4846
        %v5253 = vunpack.c.l.b16 %v4847
        %v5254 = vunpack.c.h.b16 %v4847
        %v5255 = vunpack.c.l.b16 %v4848
        %v5256 = vunpack.c.h.b16 %v4848
        %v5257 = vunpack.c.l.b16 %v4849
        %v5258 = vunpack.c.h.b16 %v4849
        %v5259 = vunpack.c.l.b16 %v4850
        %v5260 = vunpack.c.h.b16 %v4850
        %v5261 = vunpack.c.l.b16 %v4851
        %v5262 = vunpack.c.h.b16 %v4851
        %v5263 = vunpack.c.l.b16 %v4852
        %v5264 = vunpack.c.h.b16 %v4852
        %v5265 = vunpack.c.l.b16 %v4853
        %v5266 = vunpack.c.h.b16 %v4853
        %v5267 = vunpack.c.l.b16 %v4854
        %v5268 = vunpack.c.h.b16 %v4854
        %v5269 = vunpack.c.l.b16 %v4855
        %v5270 = vunpack.c.h.b16 %v4855
        %v5271 = vunpack.c.l.b16 %v4856
        %v5272 = vunpack.c.h.b16 %v4856
        %v5273 = vunpack.c.l.b16 %v4857
        %v5274 = vunpack.c.h.b16 %v4857
        %v5275 = vunpack.c.l.b16 %v4858
        %v5276 = vunpack.c.h.b16 %v4858
        %v5277 = vunpack.c.l.b16 %v4859
        %v5278 = vunpack.c.h.b16 %v4859
        %v5279 = vunpack.c.l.b16 %v4860
        %v5280 = vunpack.c.h.b16 %v4860
        %v5281 = vunpack.c.l.b16 %v4861
        %v5282 = vunpack.c.h.b16 %v4861
        %v5283 = vunpack.c.l.b16 %v4862
        %v5284 = vunpack.c.h.b16 %v4862
        %v5285 = vunpack.c.l.b16 %v4863
        %v5286 = vunpack.c.h.b16 %v4863
        %v5287 = vunpack.c.l.b16 %v4864
        %v5288 = vunpack.c.h.b16 %v4864
        %v5289 = vunpack.c.l.b16 %v4865
        %v5290 = vunpack.c.h.b16 %v4865
        %v5291 = vunpack.c.l.b16 %v4866
        %v5292 = vunpack.c.h.b16 %v4866
        %v5293 = vpack.c.b16 %v5045, %v5037
        %v5294 = vpack.c.b16 %v5046, %v5038
        %v5295 = vpack.c.b16 %v5047, %v5039
        %v5296 = vpack.c.b16 %v5048, %v5040
        %v5297 = vpack.c.b16 %v5049, %v5041
        %v5298 = vpack.c.b16 %v5050, %v5042
        %v5299 = vpack.c.b16 %v5051, %v5043
        %v5300 = vpack.c.b16 %v5052, %v5044
        %v5301 = vpack.c.b16 %v5061, %v5053
        %v5302 = vpack.c.b16 %v5062, %v5054
        %v5303 = vpack.c.b16 %v5063, %v5055
        %v5304 = vpack.c.b16 %v5064, %v5056
        %v5305 = vpack.c.b16 %v5065, %v5057
        %v5306 = vpack.c.b16 %v5066, %v5058
        %v5307 = vpack.c.b16 %v5067, %v5059
        %v5308 = vpack.c.b16 %v5068, %v5060
        %v5309 = vpack.c.b16 %v5077, %v5069
        %v5310 = vpack.c.b16 %v5078, %v5070
        %v5311 = vpack.c.b16 %v5079, %v5071
        %v5312 = vpack.c.b16 %v5080, %v5072
        %v5313 = vpack.c.b16 %v5081, %v5073
        %v5314 = vpack.c.b16 %v5082, %v5074
        %v5315 = vpack.c.b16 %v5083, %v5075
        %v5316 = vpack.c.b16 %v5084, %v5076
        %v5317 = vpack.c.b16 %v5093, %v5085
        %v5318 = vpack.c.b16 %v5094, %v5086
        %v5319 = vpack.c.b16 %v5095, %v5087
        %v5320 = vpack.c.b16 %v5096, %v5088
        %v5321 = vpack.c.b16 %v5097, %v5089
        %v5322 = vpack.c.b16 %v5098, %v5090
        %v5323 = vpack.c.b16 %v5099, %v5091
        %v5324 = vpack.c.b16 %v5100, %v5092
        %v5325 = vpack.c.b16 %v5109, %v5101
        %v5326 = vpack.c.b16 %v5110, %v5102
        %v5327 = vpack.c.b16 %v5111, %v5103
        %v5328 = vpack.c.b16 %v5112, %v5104
        %v5329 = vpack.c.b16 %v5113, %v5105
        %v5330 = vpack.c.b16 %v5114, %v5106
        %v5331 = vpack.c.b16 %v5115, %v5107
        %v5332 = vpack.c.b16 %v5116, %v5108
        %v5333 = vpack.c.b16 %v5125, %v5117
        %v5334 = vpack.c.b16 %v5126, %v5118
        %v5335 = vpack.c.b16 %v5127, %v5119
        %v5336 = vpack.c.b16 %v5128, %v5120
        %v5337 = vpack.c.b16 %v5129, %v5121
        %v5338 = vpack.c.b16 %v5130, %v5122
        %v5339 = vpack.c.b16 %v5131, %v5123
        %v5340 = vpack.c.b16 %v5132, %v5124
        %v5341 = vpack.c.b16 %v5141, %v5133
        %v5342 = vpack.c.b16 %v5142, %v5134
        %v5343 = vpack.c.b16 %v5143, %v5135
        %v5344 = vpack.c.b16 %v5144, %v5136
        %v5345 = vpack.c.b16 %v5145, %v5137
        %v5346 = vpack.c.b16 %v5146, %v5138
        %v5347 = vpack.c.b16 %v5147, %v5139
        %v5348 = vpack.c.b16 %v5148, %v5140
        %v5349 = vpack.c.b16 %v5157, %v5149
        %v5350 = vpack.c.b16 %v5158, %v5150
        %v5351 = vpack.c.b16 %v5159, %v5151
        %v5352 = vpack.c.b16 %v5160, %v5152
        %v5353 = vpack.c.b16 %v5161, %v5153
        %v5354 = vpack.c.b16 %v5162, %v5154
        %v5355 = vpack.c.b16 %v5163, %v5155
        %v5356 = vpack.c.b16 %v5164, %v5156
        %v5357 = vpack.c.b16 %v5173, %v5165
        %v5358 = vpack.c.b16 %v5174, %v5166
        %v5359 = vpack.c.b16 %v5175, %v5167
        %v5360 = vpack.c.b16 %v5176, %v5168
        %v5361 = vpack.c.b16 %v5177, %v5169
        %v5362 = vpack.c.b16 %v5178, %v5170
        %v5363 = vpack.c.b16 %v5179, %v5171
        %v5364 = vpack.c.b16 %v5180, %v5172
        %v5365 = vpack.c.b16 %v5189, %v5181
        %v5366 = vpack.c.b16 %v5190, %v5182
        %v5367 = vpack.c.b16 %v5191, %v5183
        %v5368 = vpack.c.b16 %v5192, %v5184
        %v5369 = vpack.c.b16 %v5193, %v5185
        %v5370 = vpack.c.b16 %v5194, %v5186
        %v5371 = vpack.c.b16 %v5195, %v5187
        %v5372 = vpack.c.b16 %v5196, %v5188
        %v5373 = vpack.c.b16 %v5205, %v5197
        %v5374 = vpack.c.b16 %v5206, %v5198
        %v5375 = vpack.c.b16 %v5207, %v5199
        %v5376 = vpack.c.b16 %v5208, %v5200
        %v5377 = vpack.c.b16 %v5209, %v5201
        %v5378 = vpack.c.b16 %v5210, %v5202
        %v5379 = vpack.c.b16 %v5211, %v5203
        %v5380 = vpack.c.b16 %v5212, %v5204
        %v5381 = vpack.c.b16 %v5221, %v5213
        %v5382 = vpack.c.b16 %v5222, %v5214
        %v5383 = vpack.c.b16 %v5223, %v5215
        %v5384 = vpack.c.b16 %v5224, %v5216
        %v5385 = vpack.c.b16 %v5225, %v5217
        %v5386 = vpack.c.b16 %v5226, %v5218
        %v5387 = vpack.c.b16 %v5227, %v5219
        %v5388 = vpack.c.b16 %v5228, %v5220
        %v5389 = vpack.c.b16 %v5237, %v5229
        %v5390 = vpack.c.b16 %v5238, %v5230
        %v5391 = vpack.c.b16 %v5239, %v5231
        %v5392 = vpack.c.b16 %v5240, %v5232
        %v5393 = vpack.c.b16 %v5241, %v5233
        %v5394 = vpack.c.b16 %v5242, %v5234
        %v5395 = vpack.c.b16 %v5243, %v5235
        %v5396 = vpack.c.b16 %v5244, %v5236
        %v5397 = vpack.c.b16 %v5253, %v5245
        %v5398 = vpack.c.b16 %v5254, %v5246
        %v5399 = vpack.c.b16 %v5255, %v5247
        %v5400 = vpack.c.b16 %v5256, %v5248
        %v5401 = vpack.c.b16 %v5257, %v5249
        %v5402 = vpack.c.b16 %v5258, %v5250
        %v5403 = vpack.c.b16 %v5259, %v5251
        %v5404 = vpack.c.b16 %v5260, %v5252
        %v5405 = vpack.c.b16 %v5269, %v5261
        %v5406 = vpack.c.b16 %v5270, %v5262
        %v5407 = vpack.c.b16 %v5271, %v5263
        %v5408 = vpack.c.b16 %v5272, %v5264
        %v5409 = vpack.c.b16 %v5273, %v5265
        %v5410 = vpack.c.b16 %v5274, %v5266
        %v5411 = vpack.c.b16 %v5275, %v5267
        %v5412 = vpack.c.b16 %v5276, %v5268
        %v5413 = vpack.c.b16 %v5285, %v5277
        %v5414 = vpack.c.b16 %v5286, %v5278
        %v5415 = vpack.c.b16 %v5287, %v5279
        %v5416 = vpack.c.b16 %v5288, %v5280
        %v5417 = vpack.c.b16 %v5289, %v5281
        %v5418 = vpack.c.b16 %v5290, %v5282
        %v5419 = vpack.c.b16 %v5291, %v5283
        %v5420 = vpack.c.b16 %v5292, %v5284
        %5549 = vmatprep.subr.bf16.mxu0 %v5294
        %5550 = vmatpush1.bf16.msra.mxu0 %v5293
        %5551 = vmatprep.subr.bf16.mxu0 %v5302
        %5552 = vmatpush1.bf16.msra.mxu0 %v5301
        %5553 = vmatprep.subr.bf16.mxu0 %v5310
        %5554 = vmatpush1.bf16.msra.mxu0 %v5309
        %5555 = vmatprep.subr.bf16.mxu0 %v5318
        %5556 = vmatpush1.bf16.msra.mxu0 %v5317
        %5557 = vmatprep.subr.bf16.mxu0 %v5326
        %5558 = vmatpush1.bf16.msra.mxu0 %v5325
        %5559 = vmatprep.subr.bf16.mxu0 %v5334
        %5560 = vmatpush1.bf16.msra.mxu0 %v5333
        %5561 = vmatprep.subr.bf16.mxu0 %v5342
        %5562 = vmatpush1.bf16.msra.mxu0 %v5341
        %5563 = vmatprep.subr.bf16.mxu0 %v5350
        %5564 = vmatpush1.bf16.msra.mxu0 %v5349
        %5565 = vmatprep.subr.bf16.mxu0 %v5358
        %5566 = vmatpush1.bf16.msra.mxu0 %v5357
        %5567 = vmatprep.subr.bf16.mxu0 %v5366
        %5568 = vmatpush1.bf16.msra.mxu0 %v5365
        %5569 = vmatprep.subr.bf16.mxu0 %v5374
        %5570 = vmatpush1.bf16.msra.mxu0 %v5373
        %5571 = vmatprep.subr.bf16.mxu0 %v5382
        %5572 = vmatpush1.bf16.msra.mxu0 %v5381
        %5573 = vmatprep.subr.bf16.mxu0 %v5390
        %5574 = vmatpush1.bf16.msra.mxu0 %v5389
        %5575 = vmatprep.subr.bf16.mxu0 %v5398
        %5576 = vmatpush1.bf16.msra.mxu0 %v5397
        %5577 = vmatprep.subr.bf16.mxu0 %v5406
        %5578 = vmatpush1.bf16.msra.mxu0 %v5405
        %5579 = vmatprep.subr.bf16.mxu0 %v5414
        %5580 = vmatpush1.bf16.msra.mxu0 %v5413
        %5581 = vmatprep.mubr.bf16.mxu0 %v4738
        %5582 = vmatmul.mubr.bf16.gmra.mrb[0].mxu0 %v4737
        %v5583 = vpop.f32.mrb[0].mxu0
        %v5584 = vadd.f32 %v4872, %v5583
        %v5585 = vpop.f32.mrb[0].mxu0
        %v5586 = vadd.f32 %v4876, %v5585
        %v5587 = vpop.f32.mrb[0].mxu0
        %v5588 = vpop.f32.mrb[0].mxu0
        %5589 = vdwg.mxu0
        %5590 = vmatprep.subr.bf16.mxu0 %v5296
        %5591 = vmatpush1.bf16.msra.mxu0 %v5295
        %5592 = vmatprep.subr.bf16.mxu0 %v5304
        %5593 = vmatpush1.bf16.msra.mxu0 %v5303
        %5594 = vmatprep.subr.bf16.mxu0 %v5312
        %5595 = vmatpush1.bf16.msra.mxu0 %v5311
        %5596 = vmatprep.subr.bf16.mxu0 %v5320
        %5597 = vmatpush1.bf16.msra.mxu0 %v5319
        %5598 = vmatprep.subr.bf16.mxu0 %v5328
        %5599 = vmatpush1.bf16.msra.mxu0 %v5327
        %5600 = vmatprep.subr.bf16.mxu0 %v5336
        %5601 = vmatpush1.bf16.msra.mxu0 %v5335
        %5602 = vmatprep.subr.bf16.mxu0 %v5344
        %5603 = vmatpush1.bf16.msra.mxu0 %v5343
        %5604 = vmatprep.subr.bf16.mxu0 %v5352
        %5605 = vmatpush1.bf16.msra.mxu0 %v5351
        %5606 = vmatprep.subr.bf16.mxu0 %v5360
        %5607 = vmatpush1.bf16.msra.mxu0 %v5359
        %5608 = vmatprep.subr.bf16.mxu0 %v5368
        %5609 = vmatpush1.bf16.msra.mxu0 %v5367
        %5610 = vmatprep.subr.bf16.mxu0 %v5376
        %5611 = vmatpush1.bf16.msra.mxu0 %v5375
        %5612 = vmatprep.subr.bf16.mxu0 %v5384
        %5613 = vmatpush1.bf16.msra.mxu0 %v5383
        %5614 = vmatprep.subr.bf16.mxu0 %v5392
        %5615 = vmatpush1.bf16.msra.mxu0 %v5391
        %5616 = vmatprep.subr.bf16.mxu0 %v5400
        %5617 = vmatpush1.bf16.msra.mxu0 %v5399
        %5618 = vmatprep.subr.bf16.mxu0 %v5408
        %5619 = vmatpush1.bf16.msra.mxu0 %v5407
        %5620 = vmatprep.subr.bf16.mxu0 %v5416
        %5621 = vmatpush1.bf16.msra.mxu0 %v5415
        %5622 = vmatprep.mubr.bf16.mxu0 %v4738
        %5623 = vmatmul.mubr.bf16.gmra.mrb[0].mxu0 %v4737
        %v5624 = vpop.f32.mrb[0].mxu0
        %v5625 = vadd.f32 %v4880, %v5624
        %v5626 = vpop.f32.mrb[0].mxu0
        %v5627 = vadd.f32 %v4884, %v5626
        %v5628 = vpop.f32.mrb[0].mxu0
        %v5629 = vpop.f32.mrb[0].mxu0
        %5630 = vdwg.mxu0
        %5631 = vmatprep.subr.bf16.mxu0 %v5298
        %5632 = vmatpush1.bf16.msra.mxu0 %v5297
        %5633 = vmatprep.subr.bf16.mxu0 %v5306
        %5634 = vmatpush1.bf16.msra.mxu0 %v5305
        %5635 = vmatprep.subr.bf16.mxu0 %v5314
        %5636 = vmatpush1.bf16.msra.mxu0 %v5313
        %5637 = vmatprep.subr.bf16.mxu0 %v5322
        %5638 = vmatpush1.bf16.msra.mxu0 %v5321
        %5639 = vmatprep.subr.bf16.mxu0 %v5330
        %5640 = vmatpush1.bf16.msra.mxu0 %v5329
        %5641 = vmatprep.subr.bf16.mxu0 %v5338
        %5642 = vmatpush1.bf16.msra.mxu0 %v5337
        %5643 = vmatprep.subr.bf16.mxu0 %v5346
        %5644 = vmatpush1.bf16.msra.mxu0 %v5345
        %5645 = vmatprep.subr.bf16.mxu0 %v5354
        %5646 = vmatpush1.bf16.msra.mxu0 %v5353
        %5647 = vmatprep.subr.bf16.mxu0 %v5362
        %5648 = vmatpush1.bf16.msra.mxu0 %v5361
        %5649 = vmatprep.subr.bf16.mxu0 %v5370
        %5650 = vmatpush1.bf16.msra.mxu0 %v5369
        %5651 = vmatprep.subr.bf16.mxu0 %v5378
        %5652 = vmatpush1.bf16.msra.mxu0 %v5377
        %5653 = vmatprep.subr.bf16.mxu0 %v5386
        %5654 = vmatpush1.bf16.msra.mxu0 %v5385
        %5655 = vmatprep.subr.bf16.mxu0 %v5394
        %5656 = vmatpush1.bf16.msra.mxu0 %v5393
        %5657 = vmatprep.subr.bf16.mxu0 %v5402
        %5658 = vmatpush1.bf16.msra.mxu0 %v5401
        %5659 = vmatprep.subr.bf16.mxu0 %v5410
        %5660 = vmatpush1.bf16.msra.mxu0 %v5409
        %5661 = vmatprep.subr.bf16.mxu0 %v5418
        %5662 = vmatpush1.bf16.msra.mxu0 %v5417
        %5663 = vmatprep.mubr.bf16.mxu0 %v4738
        %5664 = vmatmul.mubr.bf16.gmra.mrb[0].mxu0 %v4737
        %v5665 = vpop.f32.mrb[0].mxu0
        %v5666 = vadd.f32 %v4888, %v5665
        %v5667 = vpop.f32.mrb[0].mxu0
        %v5668 = vadd.f32 %v4892, %v5667
        %v5669 = vpop.f32.mrb[0].mxu0
        %v5670 = vpop.f32.mrb[0].mxu0
        %5671 = vdwg.mxu0
        %5672 = vmatprep.subr.bf16.mxu0 %v5300
        %5673 = vmatpush1.bf16.msra.mxu0 %v5299
        %5674 = vmatprep.subr.bf16.mxu0 %v5308
        %5675 = vmatpush1.bf16.msra.mxu0 %v5307
        %5676 = vmatprep.subr.bf16.mxu0 %v5316
        %5677 = vmatpush1.bf16.msra.mxu0 %v5315
        %5678 = vmatprep.subr.bf16.mxu0 %v5324
        %5679 = vmatpush1.bf16.msra.mxu0 %v5323
        %5680 = vmatprep.subr.bf16.mxu0 %v5332
        %5681 = vmatpush1.bf16.msra.mxu0 %v5331
        %5682 = vmatprep.subr.bf16.mxu0 %v5340
        %5683 = vmatpush1.bf16.msra.mxu0 %v5339
        %5684 = vmatprep.subr.bf16.mxu0 %v5348
        %5685 = vmatpush1.bf16.msra.mxu0 %v5347
        %5686 = vmatprep.subr.bf16.mxu0 %v5356
        %5687 = vmatpush1.bf16.msra.mxu0 %v5355
        %5688 = vmatprep.subr.bf16.mxu0 %v5364
        %5689 = vmatpush1.bf16.msra.mxu0 %v5363
        %5690 = vmatprep.subr.bf16.mxu0 %v5372
        %5691 = vmatpush1.bf16.msra.mxu0 %v5371
        %5692 = vmatprep.subr.bf16.mxu0 %v5380
        %5693 = vmatpush1.bf16.msra.mxu0 %v5379
        %5694 = vmatprep.subr.bf16.mxu0 %v5388
        %5695 = vmatpush1.bf16.msra.mxu0 %v5387
        %5696 = vmatprep.subr.bf16.mxu0 %v5396
        %5697 = vmatpush1.bf16.msra.mxu0 %v5395
        %5698 = vmatprep.subr.bf16.mxu0 %v5404
        %5699 = vmatpush1.bf16.msra.mxu0 %v5403
        %5700 = vmatprep.subr.bf16.mxu0 %v5412
        %5701 = vmatpush1.bf16.msra.mxu0 %v5411
        %5702 = vmatprep.subr.bf16.mxu0 %v5420
        %5703 = vmatpush1.bf16.msra.mxu0 %v5419
        %5704 = vmatprep.mubr.bf16.mxu0 %v4738
        %5705 = vmatmul.mubr.bf16.gmra.mrb[0].mxu0 %v4737
        %v5706 = vpop.f32.mrb[0].mxu0
        %v5707 = vadd.f32 %v4896, %v5706
        %v5708 = vpop.f32.mrb[0].mxu0
        %v5709 = vadd.f32 %v4900, %v5708
        %v5710 = vpop.f32.mrb[0].mxu0
        %v5711 = vpop.f32.mrb[0].mxu0
        %5712 = vdwg.mxu0
        %v5713 = vmul.f32 %v5584, 0.5
        %v5714 = vmul.f32 %v5586, 0.5
        %v5715 = vmul.f32 %v5625, 0.5
        %v5716 = vmul.f32 %v5627, 0.5
        %v5717 = vmul.f32 %v5666, 0.5
        %v5718 = vmul.f32 %v5668, 0.5
        %v5719 = vmul.f32 %v5707, 0.5
        %v5720 = vmul.f32 %v5709, 0.5
        %v5721 = vmul.f32 %v5584, 0.044715
        %v5722 = vmul.f32 %v5586, 0.044715
        %v5723 = vmul.f32 %v5625, 0.044715
        %v5724 = vmul.f32 %v5627, 0.044715
        %v5725 = vmul.f32 %v5666, 0.044715
        %v5726 = vmul.f32 %v5668, 0.044715
        %v5727 = vmul.f32 %v5707, 0.044715
        %v5728 = vmul.f32 %v5709, 0.044715
        %v5729 = vmul.f32 %v5721, %v5584
        %v5730 = vmul.f32 %v5722, %v5586
        %v5731 = vmul.f32 %v5723, %v5625
        %v5732 = vmul.f32 %v5724, %v5627
        %v5733 = vmul.f32 %v5725, %v5666
        %v5734 = vmul.f32 %v5726, %v5668
        %v5735 = vmul.f32 %v5727, %v5707
        %v5736 = vmul.f32 %v5728, %v5709
        %v5737 = vmul.f32 %v5729, %v5584
        %v5738 = vmul.f32 %v5730, %v5586
        %v5739 = vmul.f32 %v5731, %v5625
        %v5740 = vmul.f32 %v5732, %v5627
        %v5741 = vmul.f32 %v5733, %v5666
        %v5742 = vmul.f32 %v5734, %v5668
        %v5743 = vmul.f32 %v5735, %v5707
        %v5744 = vmul.f32 %v5736, %v5709
        %v5745 = vadd.f32 %v5584, %v5737
        %v5746 = vadd.f32 %v5586, %v5738
        %v5747 = vadd.f32 %v5625, %v5739
        %v5748 = vadd.f32 %v5627, %v5740
        %v5749 = vadd.f32 %v5666, %v5741
        %v5750 = vadd.f32 %v5668, %v5742
        %v5751 = vadd.f32 %v5707, %v5743
        %v5752 = vadd.f32 %v5709, %v5744
        %v5753 = vmul.f32 %v5745, 0.7978846
        %v5754 = vmul.f32 %v5746, 0.7978846
        %v5755 = vmul.f32 %v5747, 0.7978846
        %v5756 = vmul.f32 %v5748, 0.7978846
        %v5757 = vmul.f32 %v5749, 0.7978846
        %v5758 = vmul.f32 %v5750, 0.7978846
        %v5759 = vmul.f32 %v5751, 0.7978846
        %v5760 = vmul.f32 %v5752, 0.7978846
        %v5761 = vtanh.pop %v5753
        %v5762 = vtanh.pop %v5754
        %v5763 = vtanh.pop %v5755
        %v5764 = vtanh.pop %v5756
        %v5765 = vtanh.pop %v5757
        %v5766 = vtanh.pop %v5758
        %v5767 = vtanh.pop %v5759
        %v5768 = vtanh.pop %v5760
        %v5769 = vadd.f32 %v5761, 1.0
        %v5770 = vadd.f32 %v5762, 1.0
        %v5771 = vadd.f32 %v5763, 1.0
        %v5772 = vadd.f32 %v5764, 1.0
        %v5773 = vadd.f32 %v5765, 1.0
        %v5774 = vadd.f32 %v5766, 1.0
        %v5775 = vadd.f32 %v5767, 1.0
        %v5776 = vadd.f32 %v5768, 1.0
        %v5777 = vmul.f32 %v5713, %v5769
        %v5778 = vmul.f32 %v5714, %v5770
        %v5779 = vmul.f32 %v5715, %v5771
        %v5780 = vmul.f32 %v5716, %v5772
        %v5781 = vmul.f32 %v5717, %v5773
        %v5782 = vmul.f32 %v5718, %v5774
        %v5783 = vmul.f32 %v5719, %v5775
        %v5784 = vmul.f32 %v5720, %v5776
        %v5785 = vpack.c.bf16 %v5777, %v5777
        %v5786 = vpack.c.bf16 %v5778, %v5778
        %v5787 = vpack.c.bf16 %v5779, %v5779
        %v5788 = vpack.c.bf16 %v5780, %v5780
        %v5789 = vpack.c.bf16 %v5781, %v5781
        %v5790 = vpack.c.bf16 %v5782, %v5782
        %v5791 = vpack.c.bf16 %v5783, %v5783
        %v5792 = vpack.c.bf16 %v5784, %v5784
        %v5793 = vld [vmem:[#allocation12] sm:$0xff]
        %v5794 = vld [vmem:[#allocation12 + $0x8] sm:$0xff]
        %v5795 = vld [vmem:[#allocation12 + $0x10] sm:$0xff]
        %v5796 = vld [vmem:[#allocation12 + $0x18] sm:$0xff]
        %v5797 = vld [vmem:[#allocation12 + $0x20] sm:$0xff]
        %v5798 = vld [vmem:[#allocation12 + $0x28] sm:$0xff]
        %v5799 = vld [vmem:[#allocation12 + $0x30] sm:$0xff]
        %v5800 = vld [vmem:[#allocation12 + $0x38] sm:$0xff]
        %v5801 = vld [vmem:[#allocation12 + $0x40] sm:$0xff]
        %v5802 = vld [vmem:[#allocation12 + $0x48] sm:$0xff]
        %v5803 = vld [vmem:[#allocation12 + $0x50] sm:$0xff]
        %v5804 = vld [vmem:[#allocation12 + $0x58] sm:$0xff]
        %v5805 = vld [vmem:[#allocation12 + $0x60] sm:$0xff]
        %v5806 = vld [vmem:[#allocation12 + $0x68] sm:$0xff]
        %v5807 = vld [vmem:[#allocation12 + $0x70] sm:$0xff]
        %v5808 = vld [vmem:[#allocation12 + $0x78] sm:$0xff]
        %v5809 = vld [vmem:[#allocation12 + $0x80] sm:$0xff]
        %v5810 = vld [vmem:[#allocation12 + $0x88] sm:$0xff]
        %v5811 = vld [vmem:[#allocation12 + $0x90] sm:$0xff]
        %v5812 = vld [vmem:[#allocation12 + $0x98] sm:$0xff]
        %v5813 = vld [vmem:[#allocation12 + $0xa0] sm:$0xff]
        %v5814 = vld [vmem:[#allocation12 + $0xa8] sm:$0xff]
        %v5815 = vld [vmem:[#allocation12 + $0xb0] sm:$0xff]
        %v5816 = vld [vmem:[#allocation12 + $0xb8] sm:$0xff]
        %v5817 = vld [vmem:[#allocation12 + $0xc0] sm:$0xff]
        %v5818 = vld [vmem:[#allocation12 + $0xc8] sm:$0xff]
        %v5819 = vld [vmem:[#allocation12 + $0xd0] sm:$0xff]
        %v5820 = vld [vmem:[#allocation12 + $0xd8] sm:$0xff]
        %v5821 = vld [vmem:[#allocation12 + $0xe0] sm:$0xff]
        %v5822 = vld [vmem:[#allocation12 + $0xe8] sm:$0xff]
        %v5823 = vld [vmem:[#allocation12 + $0xf0] sm:$0xff]
        %v5824 = vld [vmem:[#allocation12 + $0xf8] sm:$0xff]
        %v5825 = vld [vmem:[#allocation12 + $0x100] sm:$0xff]
        %v5826 = vld [vmem:[#allocation12 + $0x108] sm:$0xff]
        %v5827 = vld [vmem:[#allocation12 + $0x110] sm:$0xff]
        %v5828 = vld [vmem:[#allocation12 + $0x118] sm:$0xff]
        %v5829 = vld [vmem:[#allocation12 + $0x120] sm:$0xff]
        %v5830 = vld [vmem:[#allocation12 + $0x128] sm:$0xff]
        %v5831 = vld [vmem:[#allocation12 + $0x130] sm:$0xff]
        %v5832 = vld [vmem:[#allocation12 + $0x138] sm:$0xff]
        %v5833 = vld [vmem:[#allocation12 + $0x140] sm:$0xff]
        %v5834 = vld [vmem:[#allocation12 + $0x148] sm:$0xff]
        %v5835 = vld [vmem:[#allocation12 + $0x150] sm:$0xff]
        %v5836 = vld [vmem:[#allocation12 + $0x158] sm:$0xff]
        %v5837 = vld [vmem:[#allocation12 + $0x160] sm:$0xff]
        %v5838 = vld [vmem:[#allocation12 + $0x168] sm:$0xff]
        %v5839 = vld [vmem:[#allocation12 + $0x170] sm:$0xff]
        %v5840 = vld [vmem:[#allocation12 + $0x178] sm:$0xff]
        %v5841 = vld [vmem:[#allocation12 + $0x180] sm:$0xff]
        %v5842 = vld [vmem:[#allocation12 + $0x188] sm:$0xff]
        %v5843 = vld [vmem:[#allocation12 + $0x190] sm:$0xff]
        %v5844 = vld [vmem:[#allocation12 + $0x198] sm:$0xff]
        %v5845 = vld [vmem:[#allocation12 + $0x1a0] sm:$0xff]
        %v5846 = vld [vmem:[#allocation12 + $0x1a8] sm:$0xff]
        %v5847 = vld [vmem:[#allocation12 + $0x1b0] sm:$0xff]
        %v5848 = vld [vmem:[#allocation12 + $0x1b8] sm:$0xff]
        %v5849 = vld [vmem:[#allocation12 + $0x1c0] sm:$0xff]
        %v5850 = vld [vmem:[#allocation12 + $0x1c8] sm:$0xff]
        %v5851 = vld [vmem:[#allocation12 + $0x1d0] sm:$0xff]
        %v5852 = vld [vmem:[#allocation12 + $0x1d8] sm:$0xff]
        %v5853 = vld [vmem:[#allocation12 + $0x1e0] sm:$0xff]
        %v5854 = vld [vmem:[#allocation12 + $0x1e8] sm:$0xff]
        %v5855 = vld [vmem:[#allocation12 + $0x1f0] sm:$0xff]
        %v5856 = vld [vmem:[#allocation12 + $0x1f8] sm:$0xff]
        %v5857 = vld [vmem:[#allocation12 + $0x200] sm:$0xff]
        %v5858 = vld [vmem:[#allocation12 + $0x208] sm:$0xff]
        %v5859 = vld [vmem:[#allocation12 + $0x210] sm:$0xff]
        %v5860 = vld [vmem:[#allocation12 + $0x218] sm:$0xff]
        %v5861 = vld [vmem:[#allocation12 + $0x220] sm:$0xff]
        %v5862 = vld [vmem:[#allocation12 + $0x228] sm:$0xff]
        %v5863 = vld [vmem:[#allocation12 + $0x230] sm:$0xff]
        %v5864 = vld [vmem:[#allocation12 + $0x238] sm:$0xff]
        %v5865 = vld [vmem:[#allocation12 + $0x240] sm:$0xff]
        %v5866 = vld [vmem:[#allocation12 + $0x248] sm:$0xff]
        %v5867 = vld [vmem:[#allocation12 + $0x250] sm:$0xff]
        %v5868 = vld [vmem:[#allocation12 + $0x258] sm:$0xff]
        %v5869 = vld [vmem:[#allocation12 + $0x260] sm:$0xff]
        %v5870 = vld [vmem:[#allocation12 + $0x268] sm:$0xff]
        %v5871 = vld [vmem:[#allocation12 + $0x270] sm:$0xff]
        %v5872 = vld [vmem:[#allocation12 + $0x278] sm:$0xff]
        %v5873 = vld [vmem:[#allocation12 + $0x280] sm:$0xff]
        %v5874 = vld [vmem:[#allocation12 + $0x288] sm:$0xff]
        %v5875 = vld [vmem:[#allocation12 + $0x290] sm:$0xff]
        %v5876 = vld [vmem:[#allocation12 + $0x298] sm:$0xff]
        %v5877 = vld [vmem:[#allocation12 + $0x2a0] sm:$0xff]
        %v5878 = vld [vmem:[#allocation12 + $0x2a8] sm:$0xff]
        %v5879 = vld [vmem:[#allocation12 + $0x2b0] sm:$0xff]
        %v5880 = vld [vmem:[#allocation12 + $0x2b8] sm:$0xff]
        %v5881 = vld [vmem:[#allocation12 + $0x2c0] sm:$0xff]
        %v5882 = vld [vmem:[#allocation12 + $0x2c8] sm:$0xff]
        %v5883 = vld [vmem:[#allocation12 + $0x2d0] sm:$0xff]
        %v5884 = vld [vmem:[#allocation12 + $0x2d8] sm:$0xff]
        %v5885 = vld [vmem:[#allocation12 + $0x2e0] sm:$0xff]
        %v5886 = vld [vmem:[#allocation12 + $0x2e8] sm:$0xff]
        %v5887 = vld [vmem:[#allocation12 + $0x2f0] sm:$0xff]
        %v5888 = vld [vmem:[#allocation12 + $0x2f8] sm:$0xff]
        %v5889 = vld [vmem:[#allocation12 + $0x300] sm:$0xff]
        %v5890 = vld [vmem:[#allocation12 + $0x308] sm:$0xff]
        %v5891 = vld [vmem:[#allocation12 + $0x310] sm:$0xff]
        %v5892 = vld [vmem:[#allocation12 + $0x318] sm:$0xff]
        %v5893 = vld [vmem:[#allocation12 + $0x320] sm:$0xff]
        %v5894 = vld [vmem:[#allocation12 + $0x328] sm:$0xff]
        %v5895 = vld [vmem:[#allocation12 + $0x330] sm:$0xff]
        %v5896 = vld [vmem:[#allocation12 + $0x338] sm:$0xff]
        %v5897 = vld [vmem:[#allocation12 + $0x340] sm:$0xff]
        %v5898 = vld [vmem:[#allocation12 + $0x348] sm:$0xff]
        %v5899 = vld [vmem:[#allocation12 + $0x350] sm:$0xff]
        %v5900 = vld [vmem:[#allocation12 + $0x358] sm:$0xff]
        %v5901 = vld [vmem:[#allocation12 + $0x360] sm:$0xff]
        %v5902 = vld [vmem:[#allocation12 + $0x368] sm:$0xff]
        %v5903 = vld [vmem:[#allocation12 + $0x370] sm:$0xff]
        %v5904 = vld [vmem:[#allocation12 + $0x378] sm:$0xff]
        %v5905 = vld [vmem:[#allocation12 + $0x380] sm:$0xff]
        %v5906 = vld [vmem:[#allocation12 + $0x388] sm:$0xff]
        %v5907 = vld [vmem:[#allocation12 + $0x390] sm:$0xff]
        %v5908 = vld [vmem:[#allocation12 + $0x398] sm:$0xff]
        %v5909 = vld [vmem:[#allocation12 + $0x3a0] sm:$0xff]
        %v5910 = vld [vmem:[#allocation12 + $0x3a8] sm:$0xff]
        %v5911 = vld [vmem:[#allocation12 + $0x3b0] sm:$0xff]
        %v5912 = vld [vmem:[#allocation12 + $0x3b8] sm:$0xff]
        %v5913 = vld [vmem:[#allocation12 + $0x3c0] sm:$0xff]
        %v5914 = vld [vmem:[#allocation12 + $0x3c8] sm:$0xff]
        %v5915 = vld [vmem:[#allocation12 + $0x3d0] sm:$0xff]
        %v5916 = vld [vmem:[#allocation12 + $0x3d8] sm:$0xff]
        %v5917 = vld [vmem:[#allocation12 + $0x3e0] sm:$0xff]
        %v5918 = vld [vmem:[#allocation12 + $0x3e8] sm:$0xff]
        %v5919 = vld [vmem:[#allocation12 + $0x3f0] sm:$0xff]
        %v5920 = vld [vmem:[#allocation12 + $0x3f8] sm:$0xff]
        %v5921 = vld [vmem:[#allocation13] sm:$0x3]
        %v5923 = vlaneseq
        %v5924 = vshrl.u32 %v5923, 7
        %v5925 = vsub.s32 0, %v5924
        %v5926 = vrot.slane %v5921, %v5925
        %v5927 = vlaneseq
        %v5928 = vshrl.u32 %v5927, 7
        %v5929 = vsub.s32 1, %v5928
        %v5930 = vrot.slane %v5921, %v5929
        %v6061 = vunpack.c.l.b16 %v5793
        %v6062 = vunpack.c.h.b16 %v5793
        %v6063 = vunpack.c.l.b16 %v5794
        %v6064 = vunpack.c.h.b16 %v5794
        %v6065 = vunpack.c.l.b16 %v5795
        %v6066 = vunpack.c.h.b16 %v5795
        %v6067 = vunpack.c.l.b16 %v5796
        %v6068 = vunpack.c.h.b16 %v5796
        %v6069 = vunpack.c.l.b16 %v5797
        %v6070 = vunpack.c.h.b16 %v5797
        %v6071 = vunpack.c.l.b16 %v5798
        %v6072 = vunpack.c.h.b16 %v5798
        %v6073 = vunpack.c.l.b16 %v5799
        %v6074 = vunpack.c.h.b16 %v5799
        %v6075 = vunpack.c.l.b16 %v5800
        %v6076 = vunpack.c.h.b16 %v5800
        %v6077 = vunpack.c.l.b16 %v5801
        %v6078 = vunpack.c.h.b16 %v5801
        %v6079 = vunpack.c.l.b16 %v5802
        %v6080 = vunpack.c.h.b16 %v5802
        %v6081 = vunpack.c.l.b16 %v5803
        %v6082 = vunpack.c.h.b16 %v5803
        %v6083 = vunpack.c.l.b16 %v5804
        %v6084 = vunpack.c.h.b16 %v5804
        %v6085 = vunpack.c.l.b16 %v5805
        %v6086 = vunpack.c.h.b16 %v5805
        %v6087 = vunpack.c.l.b16 %v5806
        %v6088 = vunpack.c.h.b16 %v5806
        %v6089 = vunpack.c.l.b16 %v5807
        %v6090 = vunpack.c.h.b16 %v5807
        %v6091 = vunpack.c.l.b16 %v5808
        %v6092 = vunpack.c.h.b16 %v5808
        %v6093 = vunpack.c.l.b16 %v5809
        %v6094 = vunpack.c.h.b16 %v5809
        %v6095 = vunpack.c.l.b16 %v5810
        %v6096 = vunpack.c.h.b16 %v5810
        %v6097 = vunpack.c.l.b16 %v5811
        %v6098 = vunpack.c.h.b16 %v5811
        %v6099 = vunpack.c.l.b16 %v5812
        %v6100 = vunpack.c.h.b16 %v5812
        %v6101 = vunpack.c.l.b16 %v5813
        %v6102 = vunpack.c.h.b16 %v5813
        %v6103 = vunpack.c.l.b16 %v5814
        %v6104 = vunpack.c.h.b16 %v5814
        %v6105 = vunpack.c.l.b16 %v5815
        %v6106 = vunpack.c.h.b16 %v5815
        %v6107 = vunpack.c.l.b16 %v5816
        %v6108 = vunpack.c.h.b16 %v5816
        %v6109 = vunpack.c.l.b16 %v5817
        %v6110 = vunpack.c.h.b16 %v5817
        %v6111 = vunpack.c.l.b16 %v5818
        %v6112 = vunpack.c.h.b16 %v5818
        %v6113 = vunpack.c.l.b16 %v5819
        %v6114 = vunpack.c.h.b16 %v5819
        %v6115 = vunpack.c.l.b16 %v5820
        %v6116 = vunpack.c.h.b16 %v5820
        %v6117 = vunpack.c.l.b16 %v5821
        %v6118 = vunpack.c.h.b16 %v5821
        %v6119 = vunpack.c.l.b16 %v5822
        %v6120 = vunpack.c.h.b16 %v5822
        %v6121 = vunpack.c.l.b16 %v5823
        %v6122 = vunpack.c.h.b16 %v5823
        %v6123 = vunpack.c.l.b16 %v5824
        %v6124 = vunpack.c.h.b16 %v5824
        %v6125 = vunpack.c.l.b16 %v5825
        %v6126 = vunpack.c.h.b16 %v5825
        %v6127 = vunpack.c.l.b16 %v5826
        %v6128 = vunpack.c.h.b16 %v5826
        %v6129 = vunpack.c.l.b16 %v5827
        %v6130 = vunpack.c.h.b16 %v5827
        %v6131 = vunpack.c.l.b16 %v5828
        %v6132 = vunpack.c.h.b16 %v5828
        %v6133 = vunpack.c.l.b16 %v5829
        %v6134 = vunpack.c.h.b16 %v5829
        %v6135 = vunpack.c.l.b16 %v5830
        %v6136 = vunpack.c.h.b16 %v5830
        %v6137 = vunpack.c.l.b16 %v5831
        %v6138 = vunpack.c.h.b16 %v5831
        %v6139 = vunpack.c.l.b16 %v5832
        %v6140 = vunpack.c.h.b16 %v5832
        %v6141 = vunpack.c.l.b16 %v5833
        %v6142 = vunpack.c.h.b16 %v5833
        %v6143 = vunpack.c.l.b16 %v5834
        %v6144 = vunpack.c.h.b16 %v5834
        %v6145 = vunpack.c.l.b16 %v5835
        %v6146 = vunpack.c.h.b16 %v5835
        %v6147 = vunpack.c.l.b16 %v5836
        %v6148 = vunpack.c.h.b16 %v5836
        %v6149 = vunpack.c.l.b16 %v5837
        %v6150 = vunpack.c.h.b16 %v5837
        %v6151 = vunpack.c.l.b16 %v5838
        %v6152 = vunpack.c.h.b16 %v5838
        %v6153 = vunpack.c.l.b16 %v5839
        %v6154 = vunpack.c.h.b16 %v5839
        %v6155 = vunpack.c.l.b16 %v5840
        %v6156 = vunpack.c.h.b16 %v5840
        %v6157 = vunpack.c.l.b16 %v5841
        %v6158 = vunpack.c.h.b16 %v5841
        %v6159 = vunpack.c.l.b16 %v5842
        %v6160 = vunpack.c.h.b16 %v5842
        %v6161 = vunpack.c.l.b16 %v5843
        %v6162 = vunpack.c.h.b16 %v5843
        %v6163 = vunpack.c.l.b16 %v5844
        %v6164 = vunpack.c.h.b16 %v5844
        %v6165 = vunpack.c.l.b16 %v5845
        %v6166 = vunpack.c.h.b16 %v5845
        %v6167 = vunpack.c.l.b16 %v5846
        %v6168 = vunpack.c.h.b16 %v5846
        %v6169 = vunpack.c.l.b16 %v5847
        %v6170 = vunpack.c.h.b16 %v5847
        %v6171 = vunpack.c.l.b16 %v5848
        %v6172 = vunpack.c.h.b16 %v5848
        %v6173 = vunpack.c.l.b16 %v5849
        %v6174 = vunpack.c.h.b16 %v5849
        %v6175 = vunpack.c.l.b16 %v5850
        %v6176 = vunpack.c.h.b16 %v5850
        %v6177 = vunpack.c.l.b16 %v5851
        %v6178 = vunpack.c.h.b16 %v5851
        %v6179 = vunpack.c.l.b16 %v5852
        %v6180 = vunpack.c.h.b16 %v5852
        %v6181 = vunpack.c.l.b16 %v5853
        %v6182 = vunpack.c.h.b16 %v5853
        %v6183 = vunpack.c.l.b16 %v5854
        %v6184 = vunpack.c.h.b16 %v5854
        %v6185 = vunpack.c.l.b16 %v5855
        %v6186 = vunpack.c.h.b16 %v5855
        %v6187 = vunpack.c.l.b16 %v5856
        %v6188 = vunpack.c.h.b16 %v5856
        %v6189 = vunpack.c.l.b16 %v5857
        %v6190 = vunpack.c.h.b16 %v5857
        %v6191 = vunpack.c.l.b16 %v5858
        %v6192 = vunpack.c.h.b16 %v5858
        %v6193 = vunpack.c.l.b16 %v5859
        %v6194 = vunpack.c.h.b16 %v5859
        %v6195 = vunpack.c.l.b16 %v5860
        %v6196 = vunpack.c.h.b16 %v5860
        %v6197 = vunpack.c.l.b16 %v5861
        %v6198 = vunpack.c.h.b16 %v5861
        %v6199 = vunpack.c.l.b16 %v5862
        %v6200 = vunpack.c.h.b16 %v5862
        %v6201 = vunpack.c.l.b16 %v5863
        %v6202 = vunpack.c.h.b16 %v5863
        %v6203 = vunpack.c.l.b16 %v5864
        %v6204 = vunpack.c.h.b16 %v5864
        %v6205 = vunpack.c.l.b16 %v5865
        %v6206 = vunpack.c.h.b16 %v5865
        %v6207 = vunpack.c.l.b16 %v5866
        %v6208 = vunpack.c.h.b16 %v5866
        %v6209 = vunpack.c.l.b16 %v5867
        %v6210 = vunpack.c.h.b16 %v5867
        %v6211 = vunpack.c.l.b16 %v5868
        %v6212 = vunpack.c.h.b16 %v5868
        %v6213 = vunpack.c.l.b16 %v5869
        %v6214 = vunpack.c.h.b16 %v5869
        %v6215 = vunpack.c.l.b16 %v5870
        %v6216 = vunpack.c.h.b16 %v5870
        %v6217 = vunpack.c.l.b16 %v5871
        %v6218 = vunpack.c.h.b16 %v5871
        %v6219 = vunpack.c.l.b16 %v5872
        %v6220 = vunpack.c.h.b16 %v5872
        %v6221 = vunpack.c.l.b16 %v5873
        %v6222 = vunpack.c.h.b16 %v5873
        %v6223 = vunpack.c.l.b16 %v5874
        %v6224 = vunpack.c.h.b16 %v5874
        %v6225 = vunpack.c.l.b16 %v5875
        %v6226 = vunpack.c.h.b16 %v5875
        %v6227 = vunpack.c.l.b16 %v5876
        %v6228 = vunpack.c.h.b16 %v5876
        %v6229 = vunpack.c.l.b16 %v5877
        %v6230 = vunpack.c.h.b16 %v5877
        %v6231 = vunpack.c.l.b16 %v5878
        %v6232 = vunpack.c.h.b16 %v5878
        %v6233 = vunpack.c.l.b16 %v5879
        %v6234 = vunpack.c.h.b16 %v5879
        %v6235 = vunpack.c.l.b16 %v5880
        %v6236 = vunpack.c.h.b16 %v5880
        %v6237 = vunpack.c.l.b16 %v5881
        %v6238 = vunpack.c.h.b16 %v5881
        %v6239 = vunpack.c.l.b16 %v5882
        %v6240 = vunpack.c.h.b16 %v5882
        %v6241 = vunpack.c.l.b16 %v5883
        %v6242 = vunpack.c.h.b16 %v5883
        %v6243 = vunpack.c.l.b16 %v5884
        %v6244 = vunpack.c.h.b16 %v5884
        %v6245 = vunpack.c.l.b16 %v5885
        %v6246 = vunpack.c.h.b16 %v5885
        %v6247 = vunpack.c.l.b16 %v5886
        %v6248 = vunpack.c.h.b16 %v5886
        %v6249 = vunpack.c.l.b16 %v5887
        %v6250 = vunpack.c.h.b16 %v5887
        %v6251 = vunpack.c.l.b16 %v5888
        %v6252 = vunpack.c.h.b16 %v5888
        %v6253 = vunpack.c.l.b16 %v5889
        %v6254 = vunpack.c.h.b16 %v5889
        %v6255 = vunpack.c.l.b16 %v5890
        %v6256 = vunpack.c.h.b16 %v5890
        %v6257 = vunpack.c.l.b16 %v5891
        %v6258 = vunpack.c.h.b16 %v5891
        %v6259 = vunpack.c.l.b16 %v5892
        %v6260 = vunpack.c.h.b16 %v5892
        %v6261 = vunpack.c.l.b16 %v5893
        %v6262 = vunpack.c.h.b16 %v5893
        %v6263 = vunpack.c.l.b16 %v5894
        %v6264 = vunpack.c.h.b16 %v5894
        %v6265 = vunpack.c.l.b16 %v5895
        %v6266 = vunpack.c.h.b16 %v5895
        %v6267 = vunpack.c.l.b16 %v5896
        %v6268 = vunpack.c.h.b16 %v5896
        %v6269 = vunpack.c.l.b16 %v5897
        %v6270 = vunpack.c.h.b16 %v5897
        %v6271 = vunpack.c.l.b16 %v5898
        %v6272 = vunpack.c.h.b16 %v5898
        %v6273 = vunpack.c.l.b16 %v5899
        %v6274 = vunpack.c.h.b16 %v5899
        %v6275 = vunpack.c.l.b16 %v5900
        %v6276 = vunpack.c.h.b16 %v5900
        %v6277 = vunpack.c.l.b16 %v5901
        %v6278 = vunpack.c.h.b16 %v5901
        %v6279 = vunpack.c.l.b16 %v5902
        %v6280 = vunpack.c.h.b16 %v5902
        %v6281 = vunpack.c.l.b16 %v5903
        %v6282 = vunpack.c.h.b16 %v5903
        %v6283 = vunpack.c.l.b16 %v5904
        %v6284 = vunpack.c.h.b16 %v5904
        %v6285 = vunpack.c.l.b16 %v5905
        %v6286 = vunpack.c.h.b16 %v5905
        %v6287 = vunpack.c.l.b16 %v5906
        %v6288 = vunpack.c.h.b16 %v5906
        %v6289 = vunpack.c.l.b16 %v5907
        %v6290 = vunpack.c.h.b16 %v5907
        %v6291 = vunpack.c.l.b16 %v5908
        %v6292 = vunpack.c.h.b16 %v5908
        %v6293 = vunpack.c.l.b16 %v5909
        %v6294 = vunpack.c.h.b16 %v5909
        %v6295 = vunpack.c.l.b16 %v5910
        %v6296 = vunpack.c.h.b16 %v5910
        %v6297 = vunpack.c.l.b16 %v5911
        %v6298 = vunpack.c.h.b16 %v5911
        %v6299 = vunpack.c.l.b16 %v5912
        %v6300 = vunpack.c.h.b16 %v5912
        %v6301 = vunpack.c.l.b16 %v5913
        %v6302 = vunpack.c.h.b16 %v5913
        %v6303 = vunpack.c.l.b16 %v5914
        %v6304 = vunpack.c.h.b16 %v5914
        %v6305 = vunpack.c.l.b16 %v5915
        %v6306 = vunpack.c.h.b16 %v5915
        %v6307 = vunpack.c.l.b16 %v5916
        %v6308 = vunpack.c.h.b16 %v5916
        %v6309 = vunpack.c.l.b16 %v5917
        %v6310 = vunpack.c.h.b16 %v5917
        %v6311 = vunpack.c.l.b16 %v5918
        %v6312 = vunpack.c.h.b16 %v5918
        %v6313 = vunpack.c.l.b16 %v5919
        %v6314 = vunpack.c.h.b16 %v5919
        %v6315 = vunpack.c.l.b16 %v5920
        %v6316 = vunpack.c.h.b16 %v5920
        %v6317 = vpack.c.b16 %v6063, %v6061
        %v6318 = vpack.c.b16 %v6064, %v6062
        %v6319 = vpack.c.b16 %v6067, %v6065
        %v6320 = vpack.c.b16 %v6068, %v6066
        %v6321 = vpack.c.b16 %v6071, %v6069
        %v6322 = vpack.c.b16 %v6072, %v6070
        %v6323 = vpack.c.b16 %v6075, %v6073
        %v6324 = vpack.c.b16 %v6076, %v6074
        %v6325 = vpack.c.b16 %v6079, %v6077
        %v6326 = vpack.c.b16 %v6080, %v6078
        %v6327 = vpack.c.b16 %v6083, %v6081
        %v6328 = vpack.c.b16 %v6084, %v6082
        %v6329 = vpack.c.b16 %v6087, %v6085
        %v6330 = vpack.c.b16 %v6088, %v6086
        %v6331 = vpack.c.b16 %v6091, %v6089
        %v6332 = vpack.c.b16 %v6092, %v6090
        %v6333 = vpack.c.b16 %v6095, %v6093
        %v6334 = vpack.c.b16 %v6096, %v6094
        %v6335 = vpack.c.b16 %v6099, %v6097
        %v6336 = vpack.c.b16 %v6100, %v6098
        %v6337 = vpack.c.b16 %v6103, %v6101
        %v6338 = vpack.c.b16 %v6104, %v6102
        %v6339 = vpack.c.b16 %v6107, %v6105
        %v6340 = vpack.c.b16 %v6108, %v6106
        %v6341 = vpack.c.b16 %v6111, %v6109
        %v6342 = vpack.c.b16 %v6112, %v6110
        %v6343 = vpack.c.b16 %v6115, %v6113
        %v6344 = vpack.c.b16 %v6116, %v6114
        %v6345 = vpack.c.b16 %v6119, %v6117
        %v6346 = vpack.c.b16 %v6120, %v6118
        %v6347 = vpack.c.b16 %v6123, %v6121
        %v6348 = vpack.c.b16 %v6124, %v6122
        %v6349 = vpack.c.b16 %v6127, %v6125
        %v6350 = vpack.c.b16 %v6128, %v6126
        %v6351 = vpack.c.b16 %v6131, %v6129
        %v6352 = vpack.c.b16 %v6132, %v6130
        %v6353 = vpack.c.b16 %v6135, %v6133
        %v6354 = vpack.c.b16 %v6136, %v6134
        %v6355 = vpack.c.b16 %v6139, %v6137
        %v6356 = vpack.c.b16 %v6140, %v6138
        %v6357 = vpack.c.b16 %v6143, %v6141
        %v6358 = vpack.c.b16 %v6144, %v6142
        %v6359 = vpack.c.b16 %v6147, %v6145
        %v6360 = vpack.c.b16 %v6148, %v6146
        %v6361 = vpack.c.b16 %v6151, %v6149
        %v6362 = vpack.c.b16 %v6152, %v6150
        %v6363 = vpack.c.b16 %v6155, %v6153
        %v6364 = vpack.c.b16 %v6156, %v6154
        %v6365 = vpack.c.b16 %v6159, %v6157
        %v6366 = vpack.c.b16 %v6160, %v6158
        %v6367 = vpack.c.b16 %v6163, %v6161
        %v6368 = vpack.c.b16 %v6164, %v6162
        %v6369 = vpack.c.b16 %v6167, %v6165
        %v6370 = vpack.c.b16 %v6168, %v6166
        %v6371 = vpack.c.b16 %v6171, %v6169
        %v6372 = vpack.c.b16 %v6172, %v6170
        %v6373 = vpack.c.b16 %v6175, %v6173
        %v6374 = vpack.c.b16 %v6176, %v6174
        %v6375 = vpack.c.b16 %v6179, %v6177
        %v6376 = vpack.c.b16 %v6180, %v6178
        %v6377 = vpack.c.b16 %v6183, %v6181
        %v6378 = vpack.c.b16 %v6184, %v6182
        %v6379 = vpack.c.b16 %v6187, %v6185
        %v6380 = vpack.c.b16 %v6188, %v6186
        %v6381 = vpack.c.b16 %v6191, %v6189
        %v6382 = vpack.c.b16 %v6192, %v6190
        %v6383 = vpack.c.b16 %v6195, %v6193
        %v6384 = vpack.c.b16 %v6196, %v6194
        %v6385 = vpack.c.b16 %v6199, %v6197
        %v6386 = vpack.c.b16 %v6200, %v6198
        %v6387 = vpack.c.b16 %v6203, %v6201
        %v6388 = vpack.c.b16 %v6204, %v6202
        %v6389 = vpack.c.b16 %v6207, %v6205
        %v6390 = vpack.c.b16 %v6208, %v6206
        %v6391 = vpack.c.b16 %v6211, %v6209
        %v6392 = vpack.c.b16 %v6212, %v6210
        %v6393 = vpack.c.b16 %v6215, %v6213
        %v6394 = vpack.c.b16 %v6216, %v6214
        %v6395 = vpack.c.b16 %v6219, %v6217
        %v6396 = vpack.c.b16 %v6220, %v6218
        %v6397 = vpack.c.b16 %v6223, %v6221
        %v6398 = vpack.c.b16 %v6224, %v6222
        %v6399 = vpack.c.b16 %v6227, %v6225
        %v6400 = vpack.c.b16 %v6228, %v6226
        %v6401 = vpack.c.b16 %v6231, %v6229
        %v6402 = vpack.c.b16 %v6232, %v6230
        %v6403 = vpack.c.b16 %v6235, %v6233
        %v6404 = vpack.c.b16 %v6236, %v6234
        %v6405 = vpack.c.b16 %v6239, %v6237
        %v6406 = vpack.c.b16 %v6240, %v6238
        %v6407 = vpack.c.b16 %v6243, %v6241
        %v6408 = vpack.c.b16 %v6244, %v6242
        %v6409 = vpack.c.b16 %v6247, %v6245
        %v6410 = vpack.c.b16 %v6248, %v6246
        %v6411 = vpack.c.b16 %v6251, %v6249
        %v6412 = vpack.c.b16 %v6252, %v6250
        %v6413 = vpack.c.b16 %v6255, %v6253
        %v6414 = vpack.c.b16 %v6256, %v6254
        %v6415 = vpack.c.b16 %v6259, %v6257
        %v6416 = vpack.c.b16 %v6260, %v6258
        %v6417 = vpack.c.b16 %v6263, %v6261
        %v6418 = vpack.c.b16 %v6264, %v6262
        %v6419 = vpack.c.b16 %v6267, %v6265
        %v6420 = vpack.c.b16 %v6268, %v6266
        %v6421 = vpack.c.b16 %v6271, %v6269
        %v6422 = vpack.c.b16 %v6272, %v6270
        %v6423 = vpack.c.b16 %v6275, %v6273
        %v6424 = vpack.c.b16 %v6276, %v6274
        %v6425 = vpack.c.b16 %v6279, %v6277
        %v6426 = vpack.c.b16 %v6280, %v6278
        %v6427 = vpack.c.b16 %v6283, %v6281
        %v6428 = vpack.c.b16 %v6284, %v6282
        %v6429 = vpack.c.b16 %v6287, %v6285
        %v6430 = vpack.c.b16 %v6288, %v6286
        %v6431 = vpack.c.b16 %v6291, %v6289
        %v6432 = vpack.c.b16 %v6292, %v6290
        %v6433 = vpack.c.b16 %v6295, %v6293
        %v6434 = vpack.c.b16 %v6296, %v6294
        %v6435 = vpack.c.b16 %v6299, %v6297
        %v6436 = vpack.c.b16 %v6300, %v6298
        %v6437 = vpack.c.b16 %v6303, %v6301
        %v6438 = vpack.c.b16 %v6304, %v6302
        %v6439 = vpack.c.b16 %v6307, %v6305
        %v6440 = vpack.c.b16 %v6308, %v6306
        %v6441 = vpack.c.b16 %v6311, %v6309
        %v6442 = vpack.c.b16 %v6312, %v6310
        %v6443 = vpack.c.b16 %v6315, %v6313
        %v6444 = vpack.c.b16 %v6316, %v6314
        %6573 = vmatprep.subr.bf16.mxu0 %v6318
        %6574 = vmatpush1.bf16.msra.mxu0 %v6317
        %6575 = vmatprep.subr.bf16.mxu0 %v6320
        %6576 = vmatpush1.bf16.msra.mxu0 %v6319
        %6577 = vmatprep.subr.bf16.mxu0 %v6322
        %6578 = vmatpush1.bf16.msra.mxu0 %v6321
        %6579 = vmatprep.subr.bf16.mxu0 %v6324
        %6580 = vmatpush1.bf16.msra.mxu0 %v6323
        %6581 = vmatprep.subr.bf16.mxu0 %v6326
        %6582 = vmatpush1.bf16.msra.mxu0 %v6325
        %6583 = vmatprep.subr.bf16.mxu0 %v6328
        %6584 = vmatpush1.bf16.msra.mxu0 %v6327
        %6585 = vmatprep.subr.bf16.mxu0 %v6330
        %6586 = vmatpush1.bf16.msra.mxu0 %v6329
        %6587 = vmatprep.subr.bf16.mxu0 %v6332
        %6588 = vmatpush1.bf16.msra.mxu0 %v6331
        %6589 = vmatprep.subr.bf16.mxu0 %v6334
        %6590 = vmatpush1.bf16.msra.mxu0 %v6333
        %6591 = vmatprep.subr.bf16.mxu0 %v6336
        %6592 = vmatpush1.bf16.msra.mxu0 %v6335
        %6593 = vmatprep.subr.bf16.mxu0 %v6338
        %6594 = vmatpush1.bf16.msra.mxu0 %v6337
        %6595 = vmatprep.subr.bf16.mxu0 %v6340
        %6596 = vmatpush1.bf16.msra.mxu0 %v6339
        %6597 = vmatprep.subr.bf16.mxu0 %v6342
        %6598 = vmatpush1.bf16.msra.mxu0 %v6341
        %6599 = vmatprep.subr.bf16.mxu0 %v6344
        %6600 = vmatpush1.bf16.msra.mxu0 %v6343
        %6601 = vmatprep.subr.bf16.mxu0 %v6346
        %6602 = vmatpush1.bf16.msra.mxu0 %v6345
        %6603 = vmatprep.subr.bf16.mxu0 %v6348
        %6604 = vmatpush1.bf16.msra.mxu0 %v6347
        %6605 = vmatprep.mubr.bf16.mxu0 %v5786
        %6606 = vmatmul.mubr.bf16.gmra.mrb[0].mxu0 %v5785
        %v6607 = vpop.f32.mrb[0].mxu0
        %v6608 = vadd.f32 %v5926, %v6607
        %v6609 = vpop.f32.mrb[0].mxu0
        %v6610 = vadd.f32 %v5930, %v6609
        %v6611 = vpop.f32.mrb[0].mxu0
        %v6612 = vpop.f32.mrb[0].mxu0
        %6613 = vdwg.mxu0
        %6614 = vmatprep.subr.bf16.mxu0 %v6350
        %6615 = vmatpush1.bf16.msra.mxu0 %v6349
        %6616 = vmatprep.subr.bf16.mxu0 %v6352
        %6617 = vmatpush1.bf16.msra.mxu0 %v6351
        %6618 = vmatprep.subr.bf16.mxu0 %v6354
        %6619 = vmatpush1.bf16.msra.mxu0 %v6353
        %6620 = vmatprep.subr.bf16.mxu0 %v6356
        %6621 = vmatpush1.bf16.msra.mxu0 %v6355
        %6622 = vmatprep.subr.bf16.mxu0 %v6358
        %6623 = vmatpush1.bf16.msra.mxu0 %v6357
        %6624 = vmatprep.subr.bf16.mxu0 %v6360
        %6625 = vmatpush1.bf16.msra.mxu0 %v6359
        %6626 = vmatprep.subr.bf16.mxu0 %v6362
        %6627 = vmatpush1.bf16.msra.mxu0 %v6361
        %6628 = vmatprep.subr.bf16.mxu0 %v6364
        %6629 = vmatpush1.bf16.msra.mxu0 %v6363
        %6630 = vmatprep.subr.bf16.mxu0 %v6366
        %6631 = vmatpush1.bf16.msra.mxu0 %v6365
        %6632 = vmatprep.subr.bf16.mxu0 %v6368
        %6633 = vmatpush1.bf16.msra.mxu0 %v6367
        %6634 = vmatprep.subr.bf16.mxu0 %v6370
        %6635 = vmatpush1.bf16.msra.mxu0 %v6369
        %6636 = vmatprep.subr.bf16.mxu0 %v6372
        %6637 = vmatpush1.bf16.msra.mxu0 %v6371
        %6638 = vmatprep.subr.bf16.mxu0 %v6374
        %6639 = vmatpush1.bf16.msra.mxu0 %v6373
        %6640 = vmatprep.subr.bf16.mxu0 %v6376
        %6641 = vmatpush1.bf16.msra.mxu0 %v6375
        %6642 = vmatprep.subr.bf16.mxu0 %v6378
        %6643 = vmatpush1.bf16.msra.mxu0 %v6377
        %6644 = vmatprep.subr.bf16.mxu0 %v6380
        %6645 = vmatpush1.bf16.msra.mxu0 %v6379
        %6646 = vmatprep.mubr.bf16.mxu0 %v5788
        %6647 = vmatmul.mubr.bf16.gmra.mrb[0].mxu0 %v5787
        %v6648 = vpop.f32.mrb[0].mxu0
        %v6649 = vadd.f32 %v6608, %v6648
        %v6650 = vpop.f32.mrb[0].mxu0
        %v6651 = vadd.f32 %v6610, %v6650
        %v6652 = vpop.f32.mrb[0].mxu0
        %v6653 = vpop.f32.mrb[0].mxu0
        %6654 = vdwg.mxu0
        %6655 = vmatprep.subr.bf16.mxu0 %v6382
        %6656 = vmatpush1.bf16.msra.mxu0 %v6381
        %6657 = vmatprep.subr.bf16.mxu0 %v6384
        %6658 = vmatpush1.bf16.msra.mxu0 %v6383
        %6659 = vmatprep.subr.bf16.mxu0 %v6386
        %6660 = vmatpush1.bf16.msra.mxu0 %v6385
        %6661 = vmatprep.subr.bf16.mxu0 %v6388
        %6662 = vmatpush1.bf16.msra.mxu0 %v6387
        %6663 = vmatprep.subr.bf16.mxu0 %v6390
        %6664 = vmatpush1.bf16.msra.mxu0 %v6389
        %6665 = vmatprep.subr.bf16.mxu0 %v6392
        %6666 = vmatpush1.bf16.msra.mxu0 %v6391
        %6667 = vmatprep.subr.bf16.mxu0 %v6394
        %6668 = vmatpush1.bf16.msra.mxu0 %v6393
        %6669 = vmatprep.subr.bf16.mxu0 %v6396
        %6670 = vmatpush1.bf16.msra.mxu0 %v6395
        %6671 = vmatprep.subr.bf16.mxu0 %v6398
        %6672 = vmatpush1.bf16.msra.mxu0 %v6397
        %6673 = vmatprep.subr.bf16.mxu0 %v6400
        %6674 = vmatpush1.bf16.msra.mxu0 %v6399
        %6675 = vmatprep.subr.bf16.mxu0 %v6402
        %6676 = vmatpush1.bf16.msra.mxu0 %v6401
        %6677 = vmatprep.subr.bf16.mxu0 %v6404
        %6678 = vmatpush1.bf16.msra.mxu0 %v6403
        %6679 = vmatprep.subr.bf16.mxu0 %v6406
        %6680 = vmatpush1.bf16.msra.mxu0 %v6405
        %6681 = vmatprep.subr.bf16.mxu0 %v6408
        %6682 = vmatpush1.bf16.msra.mxu0 %v6407
        %6683 = vmatprep.subr.bf16.mxu0 %v6410
        %6684 = vmatpush1.bf16.msra.mxu0 %v6409
        %6685 = vmatprep.subr.bf16.mxu0 %v6412
        %6686 = vmatpush1.bf16.msra.mxu0 %v6411
        %6687 = vmatprep.mubr.bf16.mxu0 %v5790
        %6688 = vmatmul.mubr.bf16.gmra.mrb[0].mxu0 %v5789
        %v6689 = vpop.f32.mrb[0].mxu0
        %v6690 = vadd.f32 %v6649, %v6689
        %v6691 = vpop.f32.mrb[0].mxu0
        %v6692 = vadd.f32 %v6651, %v6691
        %v6693 = vpop.f32.mrb[0].mxu0
        %v6694 = vpop.f32.mrb[0].mxu0
        %6695 = vdwg.mxu0
        %6696 = vmatprep.subr.bf16.mxu0 %v6414
        %6697 = vmatpush1.bf16.msra.mxu0 %v6413
        %6698 = vmatprep.subr.bf16.mxu0 %v6416
        %6699 = vmatpush1.bf16.msra.mxu0 %v6415
        %6700 = vmatprep.subr.bf16.mxu0 %v6418
        %6701 = vmatpush1.bf16.msra.mxu0 %v6417
        %6702 = vmatprep.subr.bf16.mxu0 %v6420
        %6703 = vmatpush1.bf16.msra.mxu0 %v6419
        %6704 = vmatprep.subr.bf16.mxu0 %v6422
        %6705 = vmatpush1.bf16.msra.mxu0 %v6421
        %6706 = vmatprep.subr.bf16.mxu0 %v6424
        %6707 = vmatpush1.bf16.msra.mxu0 %v6423
        %6708 = vmatprep.subr.bf16.mxu0 %v6426
        %6709 = vmatpush1.bf16.msra.mxu0 %v6425
        %6710 = vmatprep.subr.bf16.mxu0 %v6428
        %6711 = vmatpush1.bf16.msra.mxu0 %v6427
        %6712 = vmatprep.subr.bf16.mxu0 %v6430
        %6713 = vmatpush1.bf16.msra.mxu0 %v6429
        %6714 = vmatprep.subr.bf16.mxu0 %v6432
        %6715 = vmatpush1.bf16.msra.mxu0 %v6431
        %6716 = vmatprep.subr.bf16.mxu0 %v6434
        %6717 = vmatpush1.bf16.msra.mxu0 %v6433
        %6718 = vmatprep.subr.bf16.mxu0 %v6436
        %6719 = vmatpush1.bf16.msra.mxu0 %v6435
        %6720 = vmatprep.subr.bf16.mxu0 %v6438
        %6721 = vmatpush1.bf16.msra.mxu0 %v6437
        %6722 = vmatprep.subr.bf16.mxu0 %v6440
        %6723 = vmatpush1.bf16.msra.mxu0 %v6439
        %6724 = vmatprep.subr.bf16.mxu0 %v6442
        %6725 = vmatpush1.bf16.msra.mxu0 %v6441
        %6726 = vmatprep.subr.bf16.mxu0 %v6444
        %6727 = vmatpush1.bf16.msra.mxu0 %v6443
        %6728 = vmatprep.mubr.bf16.mxu0 %v5792
        %6729 = vmatmul.mubr.bf16.gmra.mrb[0].mxu0 %v5791
        %v6730 = vpop.f32.mrb[0].mxu0
        %v6731 = vadd.f32 %v6690, %v6730
        %v6732 = vpop.f32.mrb[0].mxu0
        %v6733 = vadd.f32 %v6692, %v6732
        %v6734 = vpop.f32.mrb[0].mxu0
        %v6735 = vpop.f32.mrb[0].mxu0
        %6736 = vdwg.mxu0
        %v6737 = vadd.f32 %v4690, %v6731
        %v6738 = vadd.f32 %v4691, %v6733
        %6739 = vst [vmem:[%s627] sm:$0xff] %v6737
        %6740 = vst [vmem:[%s627 + $0x8] sm:$0xff] %v6738
        %p6741 = scmp.lt.s32.totalorder %s32, 1
        %s6742 = scalar_select %p6741, %s32, 1
        %p6743 = scmp.lt.s32.totalorder %s33, 0
        %s6744 = scalar_select %p6743, %s33, 0
        %s6745 = smul.addr %s6744, 2
        %s6746 = smul.addr %s6742, 2
        %s6747 = sadd.s32 %s6745, %s6746
        %s6748 = smul.addr %s6747, 8
        %s6749 = scalar_lea.vmem %s12, %s6748
        // Predicated region
        $region101: #{gpt_forward.27} parent=67 // pred_check
          %p6750 = pneg %p336
        $region102: #{gpt_forward.27} parent=67 // pred_check_branch
          %6752 = sbr.rel (%p6750) target = $region104
        $region103: #{gpt_forward.27} parent=67 // pred_region
          _
        $region104: #{gpt_forward.27} parent=67 // pred_fallthru
          _
      $region68: #{gpt_forward.27} parent=5 // pred_fallthru
        _
      %p6753 = scmp.le.s32.totalorder 2, %s23
      // Predicated region
      $region105: #{gpt_forward.27} parent=5 // pred_check
        %p6754 = pneg %p6753
      $region106: #{gpt_forward.27} parent=5 // pred_check_branch
        %6756 = sbr.rel (%p6754) target = $region108
      $region107: #{gpt_forward.27} parent=5 // pred_region
        %s6757 = ssub.s32 %s23, 2
        // Predicated region
        $region109: #{gpt_forward.27} parent=107 // pred_check
          %p6758 = pneg %p342
        $region110: #{gpt_forward.27} parent=107 // pred_check_branch
          %6760 = sbr.rel (%p6758) target = $region112
        $region111: #{gpt_forward.27} parent=107 // pred_region
          %p6761 = scmp.lt.s32.totalorder %s34, 1
          %s6762 = scalar_select %p6761, %s34, 1
          %p6763 = scmp.lt.s32.totalorder %s35, 0
          %s6764 = scalar_select %p6763, %s35, 0
          %s6765 = smul.addr %s6764, 2
          %s6766 = smul.addr %s6762, 2
          %s6767 = sadd.s32 %s6765, %s6766
          %s6768 = smul.addr %s6767, 8
          %s6769 = scalar_lea.vmem %s12, %s6768
        $region112: #{gpt_forward.27} parent=107 // pred_fallthru
          _
      $region108: #{gpt_forward.27} parent=5 // pred_fallthru
        _
    $region6: #{gpt_forward.27} parent=1 // loop_footer
      %s27 = sadd.s32 1, %s23
    $region7: #{gpt_forward.27} parent=1 // loop_footer_branch
      %22 = sbr.rel target = $region3
    $region8: #{gpt_forward.27} parent=1 // loop_exit
      _
    %6770 = vsyncpa [#allocation3], 1
    %s6771 = scalar_lea.sflag [#allocation3], 1
    %6772 = vsyncpa %s6771, 1
    %6773 = vsyncpa [#allocation5], 1
    %6774 = vsyncpa [#allocation8], 1
    %6775 = vsyncpa [#allocation11], 1
    %6776 = vsyncpa [#allocation14], 1

</llo_original>
